<compile_context>
chip_gen: v7x
topology: tpu7x:2x2x1
jax: 0.10.0
libtpu: 0.0.40
codegen_flags: <defaults>
</compile_context>

<pallas_src>
import functools

import jax
import jax.numpy as jnp
from jax import lax
from jax.experimental import pallas as pl
from jax.experimental.pallas import tpu as pltpu

K1 = 101          # conv1 kernel size (from the nn.Module definition)
GRU_UNROLL = 8    # deeper unroll: hide the two dependent tanh EUP latencies


def _sigmoid(x):
    # EUP-form sigmoid: tanh runs in the (otherwise idle) EUP slot and avoids
    # an f32 divide on the VPU critical path of the sequential GRU.
    return 0.5 * jnp.tanh(0.5 * x) + 0.5


def _discriminator_kernel(
    # SMEM scalar inputs
    w1_ref, b1_ref,                      # conv1 taps (K1,), bias (1,)
    # VMEM inputs
    ph_ref,                              # (n_phase, BB8, L_ph) deinterleaved |sound|
    wih_ref, whh_ref, bih_ref, bhn_ref,  # GRU packed: (24,1) (24,3) (24,1) (8,1)
    h0_ref,                              # (8, B) GRU h0 (rows 0:3 used)
    w2_ref, b2_ref,                      # fused conv2: (96,8) (96,1)
    w3_ref, b3_ref,                      # fused conv3: (16,96) (16,1)
    wli_ref, wly_ref, bl_ref,            # split linear: (10,1) (10,16) (10,1)
    wlx_ref, wlh_ref, blstm_ref,         # LSTMCell packed: (64,10) (64,10) (64,1)
    itv_ref, hp_ref, cp_ref,             # interval (1,B), h_prev (10,B), c_prev (16,B)
    # outputs
    hout_ref, cout_ref,                  # (16, B) each (rows 0:10 valid)
    # scratch
    pre_ref,                             # (L_out, 24, B) precomputed GRU input terms
):
    n_phase, BB8, _ = ph_ref.shape
    L_out, _, BQ = pre_ref.shape
    nk = w1_ref.shape[0]

    # ---- conv1: Conv1d(1->1, k=101, stride=s) on |sound| --------------------
    # Tap k reads a contiguous lane window of phase (k % s) at offset k // s,
    # so no im2col slab is ever materialized.  Four independent accumulators
    # expose ILP across the VALU slots (no serial acc dependence chain).
    accs = [jnp.zeros((BB8, L_out), jnp.float32) for _ in range(4)]
    for k in range(nk):                        # static tap loop, fully unrolled
        win = ph_ref[k % n_phase, :, pl.ds(k // n_phase, L_out)]
        accs[k % 4] = accs[k % 4] + w1_ref[k] * win
    acc = (accs[0] + accs[1]) + (accs[2] + accs[3]) + b1_ref[0]   # (BB8, L_out)

    # One XLU transpose into (time, batch); drop zero-padded batch rows.
    x_lb = jnp.transpose(acc)[:, 0:BQ]         # (L_out, BQ)

    # ---- GRU(1 -> 3): precompute every h-independent term ------------------
    # pre[t] uses the sublane-aligned 24-row gate layout:
    #   rows  0: 8  W_ir*x_t + b_ir + b_hr     (r gate, rows 0:3 used)
    #   rows  8:16  W_iz*x_t + b_iz + b_hz     (z gate)
    #   rows 16:24  W_in*x_t + b_in            (n gate; b_hn applied in-loop)
    pre_ref[...] = (wih_ref[...][None, :, :] * x_lb[:, None, :]
                    + bih_ref[...][None, :, :])

    # Hoisted loop invariants.
    whh = whh_ref[...]                         # (24,3) packed W_hr/W_hz/W_hn
    whh0 = whh[:, 0:1]
    whh1 = whh[:, 1:2]
    whh2 = whh[:, 2:3]
    bhn = bhn_ref[...]                         # (8,1), rows 0:3 = b_hn

    def gru_step(t, h8):                       # h8: (8,BQ), rows 0:3 live, 3:8 == 0
        pre = pre_ref[t]                       # (24,BQ) leading-axis dynamic load
        hh = whh0 * h8[0:1] + whh1 * h8[1:2] + whh2 * h8[2:3]   # (24,BQ)
        rz = _sigmoid(pre[0:16] + hh[0:16])    # tile-aligned 16-row slice
        r = rz[0:8]
        z = rz[8:16]
        n = jnp.tanh(pre[16:24] + r * (hh[16:24] + bhn))
        return n + z * (h8 - n)                # = (1-z)*n + z*h; pad rows stay 0

    n_main = (L_out // GRU_UNROLL) * GRU_UNROLL

    def gru_block(q, h8):                      # manual 8-wide unroll
        t0 = q * GRU_UNROLL
        for j in range(GRU_UNROLL):
            h8 = gru_step(t0 + j, h8)
        return h8

    ht8 = lax.fori_loop(0, L_out // GRU_UNROLL, gru_block, h0_ref[...])
    for t in range(n_main, L_out):             # static remainder (if any)
        ht8 = gru_step(t, ht8)

    # ---- conv2(1->32,k=3,pad=1)+ReLU and conv3(32->16,k=3): fused dots ------
    y2 = jnp.maximum(
        jnp.dot(w2_ref[...], ht8, preferred_element_type=jnp.float32)
        + b2_ref[...], 0.0)                                        # (96,BQ)
    y3 = (jnp.dot(w3_ref[...], y2, preferred_element_type=jnp.float32)
          + b3_ref[...])                                           # (16,BQ)
    # (PyTorch forward never applies relu3 after conv3, so neither do we.)

    # ---- Linear(17 -> 10): interval column split out, no concat scratch -----
    x10 = (wli_ref[...] * itv_ref[...]
           + jnp.dot(wly_ref[...], y3, preferred_element_type=jnp.float32)
           + bl_ref[...])                                          # (10,BQ)

    # ---- LSTMCell(10 -> 10): split x/h dots, 16-row-aligned gates ----------
    gates = (jnp.dot(wlx_ref[...], x10, preferred_element_type=jnp.float32)
             + jnp.dot(wlh_ref[...], hp_ref[...],
                       preferred_element_type=jnp.float32)
             + blstm_ref[...])                                     # (64,BQ)
    i_g = _sigmoid(gates[0:16])
    f_g = _sigmoid(gates[16:32])
    g_g = jnp.tanh(gates[32:48])
    o_g = _sigmoid(gates[48:64])
    c16 = f_g * cp_ref[...] + i_g * g_g        # pad rows/cols stay 0
    h16 = o_g * jnp.tanh(c16)

    hout_ref[...] = h16
    cout_ref[...] = c16


def _pack_conv2_conv3(conv2_w, conv2_b, conv3_w, conv3_b):
    """Fold conv2(k=3,pad=1) on a length-3 signal and conv3(k=3) into dense mats."""
    w2 = conv2_w.reshape(32, 3).astype(jnp.float32)     # torch (32,1,3)
    z = jnp.zeros((32, 1), jnp.float32)
    # conv2 output position p taps the zero-padded [0,h0,h1,h2,0]:
    #   p=0: w[1]*h0 + w[2]*h1 ; p=1: w[0]*h0 + w[1]*h1 + w[2]*h2 ; p=2: w[0]*h1 + w[1]*h2
    w2b = jnp.concatenate(
        [jnp.concatenate([w2[:, 1:2], w2[:, 2:3], z], axis=1),
         w2,
         jnp.concatenate([z, w2[:, 0:1], w2[:, 1:2]], axis=1)], axis=0)   # (96,3)
    # Pad the contraction dim to 8 so the kernel dots straight against the
    # 8-row GRU state (padded rows multiply by zero).
    w2b8 = jnp.zeros((96, 8), jnp.float32).at[:, 0:3].set(w2b)
    b2t = jnp.tile(conv2_b.reshape(32, 1).astype(jnp.float32), (3, 1))    # (96,1)
    # conv3 weight (16,32,3)[o,c,p] -> (16,96)[o, p*32+c] to match stacked y2.
    w3s = jnp.transpose(conv3_w.astype(jnp.float32), (0, 2, 1)).reshape(16, 96)
    b3 = conv3_b.reshape(16, 1).astype(jnp.float32)
    return w2b8, b2t, w3s, b3


def _pack_gru(params):
    """PyTorch GRU params -> sublane-aligned 24-row (8 rows per gate) layout."""
    w_ih = params["gru_w_ih"].astype(jnp.float32)             # (9,1), gate order r,z,n
    w_hh = params["gru_w_hh"].astype(jnp.float32)             # (9,3)
    b_ih = params["gru_b_ih"].astype(jnp.float32)             # (9,)
    b_hh = params["gru_b_hh"].astype(jnp.float32)             # (9,)

    def pad_gate_rows(x):                                     # (9,C) -> (24,C)
        out = jnp.zeros((24, x.shape[1]), jnp.float32)
        for g in range(3):
            out = out.at[g * 8:g * 8 + 3].set(x[g * 3:(g + 1) * 3])
        return out

    wih24 = pad_gate_rows(w_ih)
    whh24 = pad_gate_rows(w_hh)
    # r,z gates take the fused (b_ih+b_hh) bias; the n gate keeps only b_ih
    # here because b_hn must stay inside the r*(...) term (passed separately).
    bias9 = jnp.concatenate([b_ih[0:6] + b_hh[0:6], b_ih[6:9]]).reshape(9, 1)
    bias24 = pad_gate_rows(bias9)
    bhn8 = jnp.zeros((8, 1), jnp.float32).at[0:3, 0].set(b_hh[6:9])
    return wih24, whh24, bias24, bhn8


def _pack_lstm(params):
    """PyTorch LSTMCell params -> 16-row-aligned gate groups, split x/h dots."""
    w_ih = params["lstm_w_ih"].astype(jnp.float32)            # (40,10), gates i,f,g,o
    w_hh = params["lstm_w_hh"].astype(jnp.float32)            # (40,10)
    b = (params["lstm_b_ih"] + params["lstm_b_hh"]).astype(jnp.float32).reshape(40, 1)

    def pad16(x):                                             # (40,C) -> (64,C)
        out = jnp.zeros((64, x.shape[1]), jnp.float32)
        for g in range(4):
            out = out.at[g * 16:g * 16 + 10].set(x[g * 10:(g + 1) * 10])
        return out

    return pad16(w_ih), pad16(w_hh), pad16(b)


def discriminator_cell_forward(params, interval, sound_fragment, h_prev, c_prev,
                               gru_h0, frame_rate):
    """Functional DiscriminatorCell.forward (returns PyTorch-shaped (B,10) h, c).

    interval: (B,), sound_fragment: (B, L), h_prev/c_prev: (B, 10), gru_h0: (B, 3).
    PyTorch samples h0 = torch.randn((1, B, 3)) inside every forward; here the
    caller supplies it explicitly (sample a fresh one per call for parity).
    For throughput, stack independent invocations so B is a multiple of 128.
    """
    stride = (frame_rate - 100) // 100
    assert stride >= 1
    B, L = sound_fragment.shape
    L_out = (L - K1) // stride + 1

    # Batch tiling: one grid block when B <= 128 (demo), else 128-wide blocks.
    if B <= 128:
        blk_b, bpad = B, B
    else:
        blk_b, bpad = 128, ((B + 127) // 128) * 128
    n_blocks = bpad // blk_b
    bp8 = ((bpad + 7) // 8) * 8              # sublane-padded batch for the sound slab
    phase_blk = bp8 // n_blocks

    # --- glue: |sound| deinterleaved into `stride` phases (no 101x im2col) ---
    # conv1 tap k then reads phases[k % s, :, k//s : k//s + L_out], a contiguous
    # lane window; HBM traffic stays O(B*L).
    l_ph = -(-L // stride)                   # ceil(L / stride)
    abs_pad = jnp.zeros((bp8, l_ph * stride), jnp.float32)
    abs_pad = abs_pad.at[:B, :L].set(jnp.abs(sound_fragment).astype(jnp.float32))
    phases = jnp.transpose(abs_pad.reshape(bp8, l_ph, stride), (2, 0, 1))  # (s,BP8,Lph)

    # --- glue: pack PyTorch-layout parameters into kernel layouts -------------
    w1 = params["conv1_w"].reshape(K1).astype(jnp.float32)
    b1 = params["conv1_b"].reshape(1).astype(jnp.float32)
    wih24, whh24, bias24, bhn8 = _pack_gru(params)
    w2b8, b2t, w3s, b3 = _pack_conv2_conv3(params["conv2_w"], params["conv2_b"],
                                           params["conv3_w"], params["conv3_b"])
    wl = params["linear_w"].astype(jnp.float32)               # (10,17)
    wl_i = wl[:, 0:1]                                         # interval column
    wl_y = wl[:, 1:17]                                        # conv3-channel columns
    bl = params["linear_b"].reshape(10, 1).astype(jnp.float32)
    wlx, wlh, blstm64 = _pack_lstm(params)

    # batch-last activations (lane-dense once B is large), zero-padded to bpad
    itv = jnp.zeros((1, bpad), jnp.float32).at[0, :B].set(interval.astype(jnp.float32))
    h0_8 = jnp.zeros((8, bpad), jnp.float32).at[0:3, :B].set(gru_h0.T.astype(jnp.float32))
    hp = jnp.zeros((10, bpad), jnp.float32).at[:, :B].set(h_prev.T.astype(jnp.float32))
    cp16 = jnp.zeros((16, bpad), jnp.float32).at[0:10, :B].set(c_prev.T.astype(jnp.float32))

    smem = pl.BlockSpec(memory_space=pltpu.MemorySpace.SMEM)
    vmem = pl.BlockSpec(memory_space=pltpu.MemorySpace.VMEM)   # full array, grid-constant

    def bspec(rows):
        return pl.BlockSpec((rows, blk_b), lambda i: (0, i))

    phase_spec = pl.BlockSpec((stride, phase_blk, l_ph), lambda i: (0, i, 0))

    h16, c16 = pl.pallas_call(
        _discriminator_kernel,
        out_shape=(jax.ShapeDtypeStruct((16, bpad), jnp.float32),
                   jax.ShapeDtypeStruct((16, bpad), jnp.float32)),
        grid=(n_blocks,),
        in_specs=[smem, smem, phase_spec,
                  vmem, vmem, vmem, vmem,            # GRU weights / biases
                  bspec(8),                          # h0
                  vmem, vmem, vmem, vmem,            # conv2 / conv3
                  vmem, vmem, vmem,                  # linear
                  vmem, vmem, vmem,                  # lstm
                  bspec(1), bspec(10), bspec(16)],   # interval, h_prev, c_prev
        out_specs=(bspec(16), bspec(16)),
        scratch_shapes=[pltpu.VMEM((L_out, 24, blk_b), jnp.float32)],
        compiler_params=pltpu.CompilerParams(dimension_semantics=("parallel",)),
    )(w1, b1, phases,
      wih24, whh24, bias24, bhn8, h0_8,
      w2b8, b2t, w3s, b3, wl_i, wl_y, bl,
      wlx, wlh, blstm64,
      itv, hp, cp16)

    # back to PyTorch (B, hidden) convention (one tiny transpose outside)
    return h16[0:10, :B].T, c16[0:10, :B].T


def init_params(key):
    """Deterministic parameters in PyTorch layouts."""
    ks = jax.random.split(key, 16)
    u = lambda k, shape, s: jax.random.uniform(k, shape, jnp.float32, -s, s)
    p = {}
    p["conv1_w"] = u(ks[0], (1, 1, K1), (1.0 / K1) ** 0.5)       # Conv1d(1,1,101)
    p["conv1_b"] = u(ks[1], (1,), (1.0 / K1) ** 0.5)
    s = (1.0 / 3.0) ** 0.5
    p["gru_w_ih"] = u(ks[2], (9, 1), s)                          # GRU(1,3), gates r,z,n
    p["gru_w_hh"] = u(ks[3], (9, 3), s)
    p["gru_b_ih"] = u(ks[4], (9,), s)
    p["gru_b_hh"] = u(ks[5], (9,), s)
    s = (1.0 / 3.0) ** 0.5
    p["conv2_w"] = u(ks[6], (32, 1, 3), s)                       # Conv1d(1,32,3,pad=1)
    p["conv2_b"] = u(ks[7], (32,), s)
    s = (1.0 / 96.0) ** 0.5
    p["conv3_w"] = u(ks[8], (16, 32, 3), s)                      # Conv1d(32,16,3)
    p["conv3_b"] = u(ks[9], (16,), s)
    s = (1.0 / 17.0) ** 0.5
    p["linear_w"] = u(ks[10], (10, 17), s)                       # Linear(17,10)
    p["linear_b"] = u(ks[11], (10,), s)
    s = (1.0 / 10.0) ** 0.5
    p["lstm_w_ih"] = u(ks[12], (40, 10), s)                      # LSTMCell(10,10), i,f,g,o
    p["lstm_w_hh"] = u(ks[13], (40, 10), s)
    p["lstm_b_ih"] = u(ks[14], (40,), s)
    p["lstm_b_hh"] = u(ks[15], (40,), s)
    return p


if __name__ == "__main__":
    frame_rate = 300                    # stride = (300 - 100) // 100 = 2
    stride = (frame_rate - 100) // 100
    B = 2
    L_out = 128
    L = K1 + (L_out - 1) * stride       # 355 -> conv1 output length 128

    key = jax.random.PRNGKey(0)
    k_param, k_sound, k_itv, k_h, k_c, k_h0 = jax.random.split(key, 6)

    params = init_params(k_param)
    sound = jax.random.normal(k_sound, (B, L), jnp.float32)
    interval = jax.random.normal(k_itv, (B,), jnp.float32)
    h_prev = jax.random.normal(k_h, (B, 10), jnp.float32)
    c_prev = jax.random.normal(k_c, (B, 10), jnp.float32)
    # TODO(synk): PyTorch draws h0 = torch.randn((1,B,3)) inside every forward
    # (nondeterministic); here h0 is an explicit argument sampled once by the
    # caller from a fixed key so the run is deterministic.
    gru_h0 = jax.random.normal(k_h0, (B, 3), jnp.float32)

    fwd = jax.jit(functools.partial(discriminator_cell_forward,
                                    frame_rate=frame_rate))
    ht, ct = fwd(params, interval, sound, h_prev, c_prev, gru_h0)
    jax.block_until_ready((ht, ct))
    assert ht.shape == (B, 10) and ct.shape == (B, 10)
    assert ht.dtype == jnp.float32 and ct.dtype == jnp.float32
    print("KERNEL_OK")
</pallas_src>

<mosaic_0001>
module attributes {stable_mosaic.version = 11 : i64} {
  func.func @_discriminator_kernel(%arg0: i32, %arg1: memref<101xf32, #tpu.memory_space<smem>>, %arg2: memref<1xf32, #tpu.memory_space<smem>>, %arg3: memref<2x8x178xf32, #tpu.memory_space<vmem>>, %arg4: memref<24x1xf32, #tpu.memory_space<vmem>>, %arg5: memref<24x3xf32, #tpu.memory_space<vmem>>, %arg6: memref<24x1xf32, #tpu.memory_space<vmem>>, %arg7: memref<8x1xf32, #tpu.memory_space<vmem>>, %arg8: memref<8x2xf32, #tpu.memory_space<vmem>>, %arg9: memref<96x8xf32, #tpu.memory_space<vmem>>, %arg10: memref<96x1xf32, #tpu.memory_space<vmem>>, %arg11: memref<16x96xf32, #tpu.memory_space<vmem>>, %arg12: memref<16x1xf32, #tpu.memory_space<vmem>>, %arg13: memref<10x1xf32, #tpu.memory_space<vmem>>, %arg14: memref<10x16xf32, #tpu.memory_space<vmem>>, %arg15: memref<10x1xf32, #tpu.memory_space<vmem>>, %arg16: memref<64x10xf32, #tpu.memory_space<vmem>>, %arg17: memref<64x10xf32, #tpu.memory_space<vmem>>, %arg18: memref<64x1xf32, #tpu.memory_space<vmem>>, %arg19: memref<1x2xf32, #tpu.memory_space<vmem>>, %arg20: memref<10x2xf32, #tpu.memory_space<vmem>>, %arg21: memref<16x2xf32, #tpu.memory_space<vmem>>, %arg22: memref<16x2xf32, #tpu.memory_space<vmem>>, %arg23: memref<16x2xf32, #tpu.memory_space<vmem>>, %arg24: memref<128x24x2xf32, #tpu.memory_space<vmem>>) attributes {dimension_semantics = [#tpu.dimension_semantics<parallel>], iteration_bounds = array<i64: 1>, scalar_prefetch = 0 : i64, scratch_operands = 1 : i64, tpu.core_type = #tpu.core_type<tc>, window_params = [{transform_indices = @transform_0, window_bounds = array<i64: 101>}, {transform_indices = @transform_1, window_bounds = array<i64: 1>}, {transform_indices = @transform_2, window_bounds = array<i64: 2, 8, 178>}, {pipeline_mode = #tpu.pipeline_mode<synchronous>, transform_indices = @transform_3, window_bounds = array<i64: 24, 1>}, {pipeline_mode = #tpu.pipeline_mode<synchronous>, transform_indices = @transform_4, window_bounds = array<i64: 24, 3>}, {pipeline_mode = #tpu.pipeline_mode<synchronous>, transform_indices = @transform_5, window_bounds = array<i64: 24, 1>}, {pipeline_mode = #tpu.pipeline_mode<synchronous>, transform_indices = @transform_6, window_bounds = array<i64: 8, 1>}, {transform_indices = @transform_7, window_bounds = array<i64: 8, 2>}, {pipeline_mode = #tpu.pipeline_mode<synchronous>, transform_indices = @transform_8, window_bounds = array<i64: 96, 8>}, {pipeline_mode = #tpu.pipeline_mode<synchronous>, transform_indices = @transform_9, window_bounds = array<i64: 96, 1>}, {pipeline_mode = #tpu.pipeline_mode<synchronous>, transform_indices = @transform_10, window_bounds = array<i64: 16, 96>}, {pipeline_mode = #tpu.pipeline_mode<synchronous>, transform_indices = @transform_11, window_bounds = array<i64: 16, 1>}, {pipeline_mode = #tpu.pipeline_mode<synchronous>, transform_indices = @transform_12, window_bounds = array<i64: 10, 1>}, {pipeline_mode = #tpu.pipeline_mode<synchronous>, transform_indices = @transform_13, window_bounds = array<i64: 10, 16>}, {pipeline_mode = #tpu.pipeline_mode<synchronous>, transform_indices = @transform_14, window_bounds = array<i64: 10, 1>}, {pipeline_mode = #tpu.pipeline_mode<synchronous>, transform_indices = @transform_15, window_bounds = array<i64: 64, 10>}, {pipeline_mode = #tpu.pipeline_mode<synchronous>, transform_indices = @transform_16, window_bounds = array<i64: 64, 10>}, {pipeline_mode = #tpu.pipeline_mode<synchronous>, transform_indices = @transform_17, window_bounds = array<i64: 64, 1>}, {transform_indices = @transform_18, window_bounds = array<i64: 1, 2>}, {transform_indices = @transform_19, window_bounds = array<i64: 10, 2>}, {transform_indices = @transform_20, window_bounds = array<i64: 16, 2>}, {transform_indices = @transform_21, window_bounds = array<i64: 16, 2>}, {transform_indices = @transform_22, window_bounds = array<i64: 16, 2>}]} {
    %cst = arith.constant 0.000000e+00 : f32
    %0 = vector.broadcast %cst : f32 to vector<8x128xf32>
    %cst_0 = arith.constant 0.000000e+00 : f32
    %1 = vector.broadcast %cst_0 : f32 to vector<8x128xf32>
    %cst_1 = arith.constant 0.000000e+00 : f32
    %2 = vector.broadcast %cst_1 : f32 to vector<8x128xf32>
    %cst_2 = arith.constant 0.000000e+00 : f32
    %3 = vector.broadcast %cst_2 : f32 to vector<8x128xf32>
    %c0 = arith.constant 0 : index
    %c0_3 = arith.constant 0 : index
    %c0_4 = arith.constant 0 : index
    %4 = vector.load %arg3[%c0, %c0_3, %c0_4] : memref<2x8x178xf32, #tpu.memory_space<vmem>>, vector<1x8x128xf32>
    %5 = vector.shape_cast %4 : vector<1x8x128xf32> to vector<8x128xf32>
    %c0_5 = arith.constant 0 : index
    %6 = memref.load %arg1[%c0_5] : memref<101xf32, #tpu.memory_space<smem>>
    %7 = vector.broadcast %6 : f32 to vector<8x128xf32>
    %8 = arith.mulf %7, %5 : vector<8x128xf32>
    %9 = arith.addf %0, %8 : vector<8x128xf32>
    %c1 = arith.constant 1 : index
    %c0_6 = arith.constant 0 : index
    %c0_7 = arith.constant 0 : index
    %10 = vector.load %arg3[%c1, %c0_6, %c0_7] : memref<2x8x178xf32, #tpu.memory_space<vmem>>, vector<1x8x128xf32>
    %11 = vector.shape_cast %10 : vector<1x8x128xf32> to vector<8x128xf32>
    %c1_8 = arith.constant 1 : index
    %12 = memref.load %arg1[%c1_8] : memref<101xf32, #tpu.memory_space<smem>>
    %13 = vector.broadcast %12 : f32 to vector<8x128xf32>
    %14 = arith.mulf %13, %11 : vector<8x128xf32>
    %15 = arith.addf %1, %14 : vector<8x128xf32>
    %c0_9 = arith.constant 0 : index
    %c0_10 = arith.constant 0 : index
    %c1_11 = arith.constant 1 : index
    %16 = vector.load %arg3[%c0_9, %c0_10, %c1_11] : memref<2x8x178xf32, #tpu.memory_space<vmem>>, vector<1x8x128xf32>
    %17 = vector.shape_cast %16 : vector<1x8x128xf32> to vector<8x128xf32>
    %c2 = arith.constant 2 : index
    %18 = memref.load %arg1[%c2] : memref<101xf32, #tpu.memory_space<smem>>
    %19 = vector.broadcast %18 : f32 to vector<8x128xf32>
    %20 = arith.mulf %19, %17 : vector<8x128xf32>
    %21 = arith.addf %2, %20 : vector<8x128xf32>
    %c1_12 = arith.constant 1 : index
    %c0_13 = arith.constant 0 : index
    %c1_14 = arith.constant 1 : index
    %22 = vector.load %arg3[%c1_12, %c0_13, %c1_14] : memref<2x8x178xf32, #tpu.memory_space<vmem>>, vector<1x8x128xf32>
    %23 = vector.shape_cast %22 : vector<1x8x128xf32> to vector<8x128xf32>
    %c3 = arith.constant 3 : index
    %24 = memref.load %arg1[%c3] : memref<101xf32, #tpu.memory_space<smem>>
    %25 = vector.broadcast %24 : f32 to vector<8x128xf32>
    %26 = arith.mulf %25, %23 : vector<8x128xf32>
    %27 = arith.addf %3, %26 : vector<8x128xf32>
    %c0_15 = arith.constant 0 : index
    %c0_16 = arith.constant 0 : index
    %c2_17 = arith.constant 2 : index
    %28 = vector.load %arg3[%c0_15, %c0_16, %c2_17] : memref<2x8x178xf32, #tpu.memory_space<vmem>>, vector<1x8x128xf32>
    %29 = vector.shape_cast %28 : vector<1x8x128xf32> to vector<8x128xf32>
    %c4 = arith.constant 4 : index
    %30 = memref.load %arg1[%c4] : memref<101xf32, #tpu.memory_space<smem>>
    %31 = vector.broadcast %30 : f32 to vector<8x128xf32>
    %32 = arith.mulf %31, %29 : vector<8x128xf32>
    %33 = arith.addf %9, %32 : vector<8x128xf32>
    %c1_18 = arith.constant 1 : index
    %c0_19 = arith.constant 0 : index
    %c2_20 = arith.constant 2 : index
    %34 = vector.load %arg3[%c1_18, %c0_19, %c2_20] : memref<2x8x178xf32, #tpu.memory_space<vmem>>, vector<1x8x128xf32>
    %35 = vector.shape_cast %34 : vector<1x8x128xf32> to vector<8x128xf32>
    %c5 = arith.constant 5 : index
    %36 = memref.load %arg1[%c5] : memref<101xf32, #tpu.memory_space<smem>>
    %37 = vector.broadcast %36 : f32 to vector<8x128xf32>
    %38 = arith.mulf %37, %35 : vector<8x128xf32>
    %39 = arith.addf %15, %38 : vector<8x128xf32>
    %c0_21 = arith.constant 0 : index
    %c0_22 = arith.constant 0 : index
    %c3_23 = arith.constant 3 : index
    %40 = vector.load %arg3[%c0_21, %c0_22, %c3_23] : memref<2x8x178xf32, #tpu.memory_space<vmem>>, vector<1x8x128xf32>
    %41 = vector.shape_cast %40 : vector<1x8x128xf32> to vector<8x128xf32>
    %c6 = arith.constant 6 : index
    %42 = memref.load %arg1[%c6] : memref<101xf32, #tpu.memory_space<smem>>
    %43 = vector.broadcast %42 : f32 to vector<8x128xf32>
    %44 = arith.mulf %43, %41 : vector<8x128xf32>
    %45 = arith.addf %21, %44 : vector<8x128xf32>
    %c1_24 = arith.constant 1 : index
    %c0_25 = arith.constant 0 : index
    %c3_26 = arith.constant 3 : index
    %46 = vector.load %arg3[%c1_24, %c0_25, %c3_26] : memref<2x8x178xf32, #tpu.memory_space<vmem>>, vector<1x8x128xf32>
    %47 = vector.shape_cast %46 : vector<1x8x128xf32> to vector<8x128xf32>
    %c7 = arith.constant 7 : index
    %48 = memref.load %arg1[%c7] : memref<101xf32, #tpu.memory_space<smem>>
    %49 = vector.broadcast %48 : f32 to vector<8x128xf32>
    %50 = arith.mulf %49, %47 : vector<8x128xf32>
    %51 = arith.addf %27, %50 : vector<8x128xf32>
    %c0_27 = arith.constant 0 : index
    %c0_28 = arith.constant 0 : index
    %c4_29 = arith.constant 4 : index
    %52 = vector.load %arg3[%c0_27, %c0_28, %c4_29] : memref<2x8x178xf32, #tpu.memory_space<vmem>>, vector<1x8x128xf32>
    %53 = vector.shape_cast %52 : vector<1x8x128xf32> to vector<8x128xf32>
    %c8 = arith.constant 8 : index
    %54 = memref.load %arg1[%c8] : memref<101xf32, #tpu.memory_space<smem>>
    %55 = vector.broadcast %54 : f32 to vector<8x128xf32>
    %56 = arith.mulf %55, %53 : vector<8x128xf32>
    %57 = arith.addf %33, %56 : vector<8x128xf32>
    %c1_30 = arith.constant 1 : index
    %c0_31 = arith.constant 0 : index
    %c4_32 = arith.constant 4 : index
    %58 = vector.load %arg3[%c1_30, %c0_31, %c4_32] : memref<2x8x178xf32, #tpu.memory_space<vmem>>, vector<1x8x128xf32>
    %59 = vector.shape_cast %58 : vector<1x8x128xf32> to vector<8x128xf32>
    %c9 = arith.constant 9 : index
    %60 = memref.load %arg1[%c9] : memref<101xf32, #tpu.memory_space<smem>>
    %61 = vector.broadcast %60 : f32 to vector<8x128xf32>
    %62 = arith.mulf %61, %59 : vector<8x128xf32>
    %63 = arith.addf %39, %62 : vector<8x128xf32>
    %c0_33 = arith.constant 0 : index
    %c0_34 = arith.constant 0 : index
    %c5_35 = arith.constant 5 : index
    %64 = vector.load %arg3[%c0_33, %c0_34, %c5_35] : memref<2x8x178xf32, #tpu.memory_space<vmem>>, vector<1x8x128xf32>
    %65 = vector.shape_cast %64 : vector<1x8x128xf32> to vector<8x128xf32>
    %c10 = arith.constant 10 : index
    %66 = memref.load %arg1[%c10] : memref<101xf32, #tpu.memory_space<smem>>
    %67 = vector.broadcast %66 : f32 to vector<8x128xf32>
    %68 = arith.mulf %67, %65 : vector<8x128xf32>
    %69 = arith.addf %45, %68 : vector<8x128xf32>
    %c1_36 = arith.constant 1 : index
    %c0_37 = arith.constant 0 : index
    %c5_38 = arith.constant 5 : index
    %70 = vector.load %arg3[%c1_36, %c0_37, %c5_38] : memref<2x8x178xf32, #tpu.memory_space<vmem>>, vector<1x8x128xf32>
    %71 = vector.shape_cast %70 : vector<1x8x128xf32> to vector<8x128xf32>
    %c11 = arith.constant 11 : index
    %72 = memref.load %arg1[%c11] : memref<101xf32, #tpu.memory_space<smem>>
    %73 = vector.broadcast %72 : f32 to vector<8x128xf32>
    %74 = arith.mulf %73, %71 : vector<8x128xf32>
    %75 = arith.addf %51, %74 : vector<8x128xf32>
    %c0_39 = arith.constant 0 : index
    %c0_40 = arith.constant 0 : index
    %c6_41 = arith.constant 6 : index
    %76 = vector.load %arg3[%c0_39, %c0_40, %c6_41] : memref<2x8x178xf32, #tpu.memory_space<vmem>>, vector<1x8x128xf32>
    %77 = vector.shape_cast %76 : vector<1x8x128xf32> to vector<8x128xf32>
    %c12 = arith.constant 12 : index
    %78 = memref.load %arg1[%c12] : memref<101xf32, #tpu.memory_space<smem>>
    %79 = vector.broadcast %78 : f32 to vector<8x128xf32>
    %80 = arith.mulf %79, %77 : vector<8x128xf32>
    %81 = arith.addf %57, %80 : vector<8x128xf32>
    %c1_42 = arith.constant 1 : index
    %c0_43 = arith.constant 0 : index
    %c6_44 = arith.constant 6 : index
    %82 = vector.load %arg3[%c1_42, %c0_43, %c6_44] : memref<2x8x178xf32, #tpu.memory_space<vmem>>, vector<1x8x128xf32>
    %83 = vector.shape_cast %82 : vector<1x8x128xf32> to vector<8x128xf32>
    %c13 = arith.constant 13 : index
    %84 = memref.load %arg1[%c13] : memref<101xf32, #tpu.memory_space<smem>>
    %85 = vector.broadcast %84 : f32 to vector<8x128xf32>
    %86 = arith.mulf %85, %83 : vector<8x128xf32>
    %87 = arith.addf %63, %86 : vector<8x128xf32>
    %c0_45 = arith.constant 0 : index
    %c0_46 = arith.constant 0 : index
    %c7_47 = arith.constant 7 : index
    %88 = vector.load %arg3[%c0_45, %c0_46, %c7_47] : memref<2x8x178xf32, #tpu.memory_space<vmem>>, vector<1x8x128xf32>
    %89 = vector.shape_cast %88 : vector<1x8x128xf32> to vector<8x128xf32>
    %c14 = arith.constant 14 : index
    %90 = memref.load %arg1[%c14] : memref<101xf32, #tpu.memory_space<smem>>
    %91 = vector.broadcast %90 : f32 to vector<8x128xf32>
    %92 = arith.mulf %91, %89 : vector<8x128xf32>
    %93 = arith.addf %69, %92 : vector<8x128xf32>
    %c1_48 = arith.constant 1 : index
    %c0_49 = arith.constant 0 : index
    %c7_50 = arith.constant 7 : index
    %94 = vector.load %arg3[%c1_48, %c0_49, %c7_50] : memref<2x8x178xf32, #tpu.memory_space<vmem>>, vector<1x8x128xf32>
    %95 = vector.shape_cast %94 : vector<1x8x128xf32> to vector<8x128xf32>
    %c15 = arith.constant 15 : index
    %96 = memref.load %arg1[%c15] : memref<101xf32, #tpu.memory_space<smem>>
    %97 = vector.broadcast %96 : f32 to vector<8x128xf32>
    %98 = arith.mulf %97, %95 : vector<8x128xf32>
    %99 = arith.addf %75, %98 : vector<8x128xf32>
    %c0_51 = arith.constant 0 : index
    %c0_52 = arith.constant 0 : index
    %c8_53 = arith.constant 8 : index
    %100 = vector.load %arg3[%c0_51, %c0_52, %c8_53] : memref<2x8x178xf32, #tpu.memory_space<vmem>>, vector<1x8x128xf32>
    %101 = vector.shape_cast %100 : vector<1x8x128xf32> to vector<8x128xf32>
    %c16 = arith.constant 16 : index
    %102 = memref.load %arg1[%c16] : memref<101xf32, #tpu.memory_space<smem>>
    %103 = vector.broadcast %102 : f32 to vector<8x128xf32>
    %104 = arith.mulf %103, %101 : vector<8x128xf32>
    %105 = arith.addf %81, %104 : vector<8x128xf32>
    %c1_54 = arith.constant 1 : index
    %c0_55 = arith.constant 0 : index
    %c8_56 = arith.constant 8 : index
    %106 = vector.load %arg3[%c1_54, %c0_55, %c8_56] : memref<2x8x178xf32, #tpu.memory_space<vmem>>, vector<1x8x128xf32>
    %107 = vector.shape_cast %106 : vector<1x8x128xf32> to vector<8x128xf32>
    %c17 = arith.constant 17 : index
    %108 = memref.load %arg1[%c17] : memref<101xf32, #tpu.memory_space<smem>>
    %109 = vector.broadcast %108 : f32 to vector<8x128xf32>
    %110 = arith.mulf %109, %107 : vector<8x128xf32>
    %111 = arith.addf %87, %110 : vector<8x128xf32>
    %c0_57 = arith.constant 0 : index
    %c0_58 = arith.constant 0 : index
    %c9_59 = arith.constant 9 : index
    %112 = vector.load %arg3[%c0_57, %c0_58, %c9_59] : memref<2x8x178xf32, #tpu.memory_space<vmem>>, vector<1x8x128xf32>
    %113 = vector.shape_cast %112 : vector<1x8x128xf32> to vector<8x128xf32>
    %c18 = arith.constant 18 : index
    %114 = memref.load %arg1[%c18] : memref<101xf32, #tpu.memory_space<smem>>
    %115 = vector.broadcast %114 : f32 to vector<8x128xf32>
    %116 = arith.mulf %115, %113 : vector<8x128xf32>
    %117 = arith.addf %93, %116 : vector<8x128xf32>
    %c1_60 = arith.constant 1 : index
    %c0_61 = arith.constant 0 : index
    %c9_62 = arith.constant 9 : index
    %118 = vector.load %arg3[%c1_60, %c0_61, %c9_62] : memref<2x8x178xf32, #tpu.memory_space<vmem>>, vector<1x8x128xf32>
    %119 = vector.shape_cast %118 : vector<1x8x128xf32> to vector<8x128xf32>
    %c19 = arith.constant 19 : index
    %120 = memref.load %arg1[%c19] : memref<101xf32, #tpu.memory_space<smem>>
    %121 = vector.broadcast %120 : f32 to vector<8x128xf32>
    %122 = arith.mulf %121, %119 : vector<8x128xf32>
    %123 = arith.addf %99, %122 : vector<8x128xf32>
    %c0_63 = arith.constant 0 : index
    %c0_64 = arith.constant 0 : index
    %c10_65 = arith.constant 10 : index
    %124 = vector.load %arg3[%c0_63, %c0_64, %c10_65] : memref<2x8x178xf32, #tpu.memory_space<vmem>>, vector<1x8x128xf32>
    %125 = vector.shape_cast %124 : vector<1x8x128xf32> to vector<8x128xf32>
    %c20 = arith.constant 20 : index
    %126 = memref.load %arg1[%c20] : memref<101xf32, #tpu.memory_space<smem>>
    %127 = vector.broadcast %126 : f32 to vector<8x128xf32>
    %128 = arith.mulf %127, %125 : vector<8x128xf32>
    %129 = arith.addf %105, %128 : vector<8x128xf32>
    %c1_66 = arith.constant 1 : index
    %c0_67 = arith.constant 0 : index
    %c10_68 = arith.constant 10 : index
    %130 = vector.load %arg3[%c1_66, %c0_67, %c10_68] : memref<2x8x178xf32, #tpu.memory_space<vmem>>, vector<1x8x128xf32>
    %131 = vector.shape_cast %130 : vector<1x8x128xf32> to vector<8x128xf32>
    %c21 = arith.constant 21 : index
    %132 = memref.load %arg1[%c21] : memref<101xf32, #tpu.memory_space<smem>>
    %133 = vector.broadcast %132 : f32 to vector<8x128xf32>
    %134 = arith.mulf %133, %131 : vector<8x128xf32>
    %135 = arith.addf %111, %134 : vector<8x128xf32>
    %c0_69 = arith.constant 0 : index
    %c0_70 = arith.constant 0 : index
    %c11_71 = arith.constant 11 : index
    %136 = vector.load %arg3[%c0_69, %c0_70, %c11_71] : memref<2x8x178xf32, #tpu.memory_space<vmem>>, vector<1x8x128xf32>
    %137 = vector.shape_cast %136 : vector<1x8x128xf32> to vector<8x128xf32>
    %c22 = arith.constant 22 : index
    %138 = memref.load %arg1[%c22] : memref<101xf32, #tpu.memory_space<smem>>
    %139 = vector.broadcast %138 : f32 to vector<8x128xf32>
    %140 = arith.mulf %139, %137 : vector<8x128xf32>
    %141 = arith.addf %117, %140 : vector<8x128xf32>
    %c1_72 = arith.constant 1 : index
    %c0_73 = arith.constant 0 : index
    %c11_74 = arith.constant 11 : index
    %142 = vector.load %arg3[%c1_72, %c0_73, %c11_74] : memref<2x8x178xf32, #tpu.memory_space<vmem>>, vector<1x8x128xf32>
    %143 = vector.shape_cast %142 : vector<1x8x128xf32> to vector<8x128xf32>
    %c23 = arith.constant 23 : index
    %144 = memref.load %arg1[%c23] : memref<101xf32, #tpu.memory_space<smem>>
    %145 = vector.broadcast %144 : f32 to vector<8x128xf32>
    %146 = arith.mulf %145, %143 : vector<8x128xf32>
    %147 = arith.addf %123, %146 : vector<8x128xf32>
    %c0_75 = arith.constant 0 : index
    %c0_76 = arith.constant 0 : index
    %c12_77 = arith.constant 12 : index
    %148 = vector.load %arg3[%c0_75, %c0_76, %c12_77] : memref<2x8x178xf32, #tpu.memory_space<vmem>>, vector<1x8x128xf32>
    %149 = vector.shape_cast %148 : vector<1x8x128xf32> to vector<8x128xf32>
    %c24 = arith.constant 24 : index
    %150 = memref.load %arg1[%c24] : memref<101xf32, #tpu.memory_space<smem>>
    %151 = vector.broadcast %150 : f32 to vector<8x128xf32>
    %152 = arith.mulf %151, %149 : vector<8x128xf32>
    %153 = arith.addf %129, %152 : vector<8x128xf32>
    %c1_78 = arith.constant 1 : index
    %c0_79 = arith.constant 0 : index
    %c12_80 = arith.constant 12 : index
    %154 = vector.load %arg3[%c1_78, %c0_79, %c12_80] : memref<2x8x178xf32, #tpu.memory_space<vmem>>, vector<1x8x128xf32>
    %155 = vector.shape_cast %154 : vector<1x8x128xf32> to vector<8x128xf32>
    %c25 = arith.constant 25 : index
    %156 = memref.load %arg1[%c25] : memref<101xf32, #tpu.memory_space<smem>>
    %157 = vector.broadcast %156 : f32 to vector<8x128xf32>
    %158 = arith.mulf %157, %155 : vector<8x128xf32>
    %159 = arith.addf %135, %158 : vector<8x128xf32>
    %c0_81 = arith.constant 0 : index
    %c0_82 = arith.constant 0 : index
    %c13_83 = arith.constant 13 : index
    %160 = vector.load %arg3[%c0_81, %c0_82, %c13_83] : memref<2x8x178xf32, #tpu.memory_space<vmem>>, vector<1x8x128xf32>
    %161 = vector.shape_cast %160 : vector<1x8x128xf32> to vector<8x128xf32>
    %c26 = arith.constant 26 : index
    %162 = memref.load %arg1[%c26] : memref<101xf32, #tpu.memory_space<smem>>
    %163 = vector.broadcast %162 : f32 to vector<8x128xf32>
    %164 = arith.mulf %163, %161 : vector<8x128xf32>
    %165 = arith.addf %141, %164 : vector<8x128xf32>
    %c1_84 = arith.constant 1 : index
    %c0_85 = arith.constant 0 : index
    %c13_86 = arith.constant 13 : index
    %166 = vector.load %arg3[%c1_84, %c0_85, %c13_86] : memref<2x8x178xf32, #tpu.memory_space<vmem>>, vector<1x8x128xf32>
    %167 = vector.shape_cast %166 : vector<1x8x128xf32> to vector<8x128xf32>
    %c27 = arith.constant 27 : index
    %168 = memref.load %arg1[%c27] : memref<101xf32, #tpu.memory_space<smem>>
    %169 = vector.broadcast %168 : f32 to vector<8x128xf32>
    %170 = arith.mulf %169, %167 : vector<8x128xf32>
    %171 = arith.addf %147, %170 : vector<8x128xf32>
    %c0_87 = arith.constant 0 : index
    %c0_88 = arith.constant 0 : index
    %c14_89 = arith.constant 14 : index
    %172 = vector.load %arg3[%c0_87, %c0_88, %c14_89] : memref<2x8x178xf32, #tpu.memory_space<vmem>>, vector<1x8x128xf32>
    %173 = vector.shape_cast %172 : vector<1x8x128xf32> to vector<8x128xf32>
    %c28 = arith.constant 28 : index
    %174 = memref.load %arg1[%c28] : memref<101xf32, #tpu.memory_space<smem>>
    %175 = vector.broadcast %174 : f32 to vector<8x128xf32>
    %176 = arith.mulf %175, %173 : vector<8x128xf32>
    %177 = arith.addf %153, %176 : vector<8x128xf32>
    %c1_90 = arith.constant 1 : index
    %c0_91 = arith.constant 0 : index
    %c14_92 = arith.constant 14 : index
    %178 = vector.load %arg3[%c1_90, %c0_91, %c14_92] : memref<2x8x178xf32, #tpu.memory_space<vmem>>, vector<1x8x128xf32>
    %179 = vector.shape_cast %178 : vector<1x8x128xf32> to vector<8x128xf32>
    %c29 = arith.constant 29 : index
    %180 = memref.load %arg1[%c29] : memref<101xf32, #tpu.memory_space<smem>>
    %181 = vector.broadcast %180 : f32 to vector<8x128xf32>
    %182 = arith.mulf %181, %179 : vector<8x128xf32>
    %183 = arith.addf %159, %182 : vector<8x128xf32>
    %c0_93 = arith.constant 0 : index
    %c0_94 = arith.constant 0 : index
    %c15_95 = arith.constant 15 : index
    %184 = vector.load %arg3[%c0_93, %c0_94, %c15_95] : memref<2x8x178xf32, #tpu.memory_space<vmem>>, vector<1x8x128xf32>
    %185 = vector.shape_cast %184 : vector<1x8x128xf32> to vector<8x128xf32>
    %c30 = arith.constant 30 : index
    %186 = memref.load %arg1[%c30] : memref<101xf32, #tpu.memory_space<smem>>
    %187 = vector.broadcast %186 : f32 to vector<8x128xf32>
    %188 = arith.mulf %187, %185 : vector<8x128xf32>
    %189 = arith.addf %165, %188 : vector<8x128xf32>
    %c1_96 = arith.constant 1 : index
    %c0_97 = arith.constant 0 : index
    %c15_98 = arith.constant 15 : index
    %190 = vector.load %arg3[%c1_96, %c0_97, %c15_98] : memref<2x8x178xf32, #tpu.memory_space<vmem>>, vector<1x8x128xf32>
    %191 = vector.shape_cast %190 : vector<1x8x128xf32> to vector<8x128xf32>
    %c31 = arith.constant 31 : index
    %192 = memref.load %arg1[%c31] : memref<101xf32, #tpu.memory_space<smem>>
    %193 = vector.broadcast %192 : f32 to vector<8x128xf32>
    %194 = arith.mulf %193, %191 : vector<8x128xf32>
    %195 = arith.addf %171, %194 : vector<8x128xf32>
    %c0_99 = arith.constant 0 : index
    %c0_100 = arith.constant 0 : index
    %c16_101 = arith.constant 16 : index
    %196 = vector.load %arg3[%c0_99, %c0_100, %c16_101] : memref<2x8x178xf32, #tpu.memory_space<vmem>>, vector<1x8x128xf32>
    %197 = vector.shape_cast %196 : vector<1x8x128xf32> to vector<8x128xf32>
    %c32 = arith.constant 32 : index
    %198 = memref.load %arg1[%c32] : memref<101xf32, #tpu.memory_space<smem>>
    %199 = vector.broadcast %198 : f32 to vector<8x128xf32>
    %200 = arith.mulf %199, %197 : vector<8x128xf32>
    %201 = arith.addf %177, %200 : vector<8x128xf32>
    %c1_102 = arith.constant 1 : index
    %c0_103 = arith.constant 0 : index
    %c16_104 = arith.constant 16 : index
    %202 = vector.load %arg3[%c1_102, %c0_103, %c16_104] : memref<2x8x178xf32, #tpu.memory_space<vmem>>, vector<1x8x128xf32>
    %203 = vector.shape_cast %202 : vector<1x8x128xf32> to vector<8x128xf32>
    %c33 = arith.constant 33 : index
    %204 = memref.load %arg1[%c33] : memref<101xf32, #tpu.memory_space<smem>>
    %205 = vector.broadcast %204 : f32 to vector<8x128xf32>
    %206 = arith.mulf %205, %203 : vector<8x128xf32>
    %207 = arith.addf %183, %206 : vector<8x128xf32>
    %c0_105 = arith.constant 0 : index
    %c0_106 = arith.constant 0 : index
    %c17_107 = arith.constant 17 : index
    %208 = vector.load %arg3[%c0_105, %c0_106, %c17_107] : memref<2x8x178xf32, #tpu.memory_space<vmem>>, vector<1x8x128xf32>
    %209 = vector.shape_cast %208 : vector<1x8x128xf32> to vector<8x128xf32>
    %c34 = arith.constant 34 : index
    %210 = memref.load %arg1[%c34] : memref<101xf32, #tpu.memory_space<smem>>
    %211 = vector.broadcast %210 : f32 to vector<8x128xf32>
    %212 = arith.mulf %211, %209 : vector<8x128xf32>
    %213 = arith.addf %189, %212 : vector<8x128xf32>
    %c1_108 = arith.constant 1 : index
    %c0_109 = arith.constant 0 : index
    %c17_110 = arith.constant 17 : index
    %214 = vector.load %arg3[%c1_108, %c0_109, %c17_110] : memref<2x8x178xf32, #tpu.memory_space<vmem>>, vector<1x8x128xf32>
    %215 = vector.shape_cast %214 : vector<1x8x128xf32> to vector<8x128xf32>
    %c35 = arith.constant 35 : index
    %216 = memref.load %arg1[%c35] : memref<101xf32, #tpu.memory_space<smem>>
    %217 = vector.broadcast %216 : f32 to vector<8x128xf32>
    %218 = arith.mulf %217, %215 : vector<8x128xf32>
    %219 = arith.addf %195, %218 : vector<8x128xf32>
    %c0_111 = arith.constant 0 : index
    %c0_112 = arith.constant 0 : index
    %c18_113 = arith.constant 18 : index
    %220 = vector.load %arg3[%c0_111, %c0_112, %c18_113] : memref<2x8x178xf32, #tpu.memory_space<vmem>>, vector<1x8x128xf32>
    %221 = vector.shape_cast %220 : vector<1x8x128xf32> to vector<8x128xf32>
    %c36 = arith.constant 36 : index
    %222 = memref.load %arg1[%c36] : memref<101xf32, #tpu.memory_space<smem>>
    %223 = vector.broadcast %222 : f32 to vector<8x128xf32>
    %224 = arith.mulf %223, %221 : vector<8x128xf32>
    %225 = arith.addf %201, %224 : vector<8x128xf32>
    %c1_114 = arith.constant 1 : index
    %c0_115 = arith.constant 0 : index
    %c18_116 = arith.constant 18 : index
    %226 = vector.load %arg3[%c1_114, %c0_115, %c18_116] : memref<2x8x178xf32, #tpu.memory_space<vmem>>, vector<1x8x128xf32>
    %227 = vector.shape_cast %226 : vector<1x8x128xf32> to vector<8x128xf32>
    %c37 = arith.constant 37 : index
    %228 = memref.load %arg1[%c37] : memref<101xf32, #tpu.memory_space<smem>>
    %229 = vector.broadcast %228 : f32 to vector<8x128xf32>
    %230 = arith.mulf %229, %227 : vector<8x128xf32>
    %231 = arith.addf %207, %230 : vector<8x128xf32>
    %c0_117 = arith.constant 0 : index
    %c0_118 = arith.constant 0 : index
    %c19_119 = arith.constant 19 : index
    %232 = vector.load %arg3[%c0_117, %c0_118, %c19_119] : memref<2x8x178xf32, #tpu.memory_space<vmem>>, vector<1x8x128xf32>
    %233 = vector.shape_cast %232 : vector<1x8x128xf32> to vector<8x128xf32>
    %c38 = arith.constant 38 : index
    %234 = memref.load %arg1[%c38] : memref<101xf32, #tpu.memory_space<smem>>
    %235 = vector.broadcast %234 : f32 to vector<8x128xf32>
    %236 = arith.mulf %235, %233 : vector<8x128xf32>
    %237 = arith.addf %213, %236 : vector<8x128xf32>
    %c1_120 = arith.constant 1 : index
    %c0_121 = arith.constant 0 : index
    %c19_122 = arith.constant 19 : index
    %238 = vector.load %arg3[%c1_120, %c0_121, %c19_122] : memref<2x8x178xf32, #tpu.memory_space<vmem>>, vector<1x8x128xf32>
    %239 = vector.shape_cast %238 : vector<1x8x128xf32> to vector<8x128xf32>
    %c39 = arith.constant 39 : index
    %240 = memref.load %arg1[%c39] : memref<101xf32, #tpu.memory_space<smem>>
    %241 = vector.broadcast %240 : f32 to vector<8x128xf32>
    %242 = arith.mulf %241, %239 : vector<8x128xf32>
    %243 = arith.addf %219, %242 : vector<8x128xf32>
    %c0_123 = arith.constant 0 : index
    %c0_124 = arith.constant 0 : index
    %c20_125 = arith.constant 20 : index
    %244 = vector.load %arg3[%c0_123, %c0_124, %c20_125] : memref<2x8x178xf32, #tpu.memory_space<vmem>>, vector<1x8x128xf32>
    %245 = vector.shape_cast %244 : vector<1x8x128xf32> to vector<8x128xf32>
    %c40 = arith.constant 40 : index
    %246 = memref.load %arg1[%c40] : memref<101xf32, #tpu.memory_space<smem>>
    %247 = vector.broadcast %246 : f32 to vector<8x128xf32>
    %248 = arith.mulf %247, %245 : vector<8x128xf32>
    %249 = arith.addf %225, %248 : vector<8x128xf32>
    %c1_126 = arith.constant 1 : index
    %c0_127 = arith.constant 0 : index
    %c20_128 = arith.constant 20 : index
    %250 = vector.load %arg3[%c1_126, %c0_127, %c20_128] : memref<2x8x178xf32, #tpu.memory_space<vmem>>, vector<1x8x128xf32>
    %251 = vector.shape_cast %250 : vector<1x8x128xf32> to vector<8x128xf32>
    %c41 = arith.constant 41 : index
    %252 = memref.load %arg1[%c41] : memref<101xf32, #tpu.memory_space<smem>>
    %253 = vector.broadcast %252 : f32 to vector<8x128xf32>
    %254 = arith.mulf %253, %251 : vector<8x128xf32>
    %255 = arith.addf %231, %254 : vector<8x128xf32>
    %c0_129 = arith.constant 0 : index
    %c0_130 = arith.constant 0 : index
    %c21_131 = arith.constant 21 : index
    %256 = vector.load %arg3[%c0_129, %c0_130, %c21_131] : memref<2x8x178xf32, #tpu.memory_space<vmem>>, vector<1x8x128xf32>
    %257 = vector.shape_cast %256 : vector<1x8x128xf32> to vector<8x128xf32>
    %c42 = arith.constant 42 : index
    %258 = memref.load %arg1[%c42] : memref<101xf32, #tpu.memory_space<smem>>
    %259 = vector.broadcast %258 : f32 to vector<8x128xf32>
    %260 = arith.mulf %259, %257 : vector<8x128xf32>
    %261 = arith.addf %237, %260 : vector<8x128xf32>
    %c1_132 = arith.constant 1 : index
    %c0_133 = arith.constant 0 : index
    %c21_134 = arith.constant 21 : index
    %262 = vector.load %arg3[%c1_132, %c0_133, %c21_134] : memref<2x8x178xf32, #tpu.memory_space<vmem>>, vector<1x8x128xf32>
    %263 = vector.shape_cast %262 : vector<1x8x128xf32> to vector<8x128xf32>
    %c43 = arith.constant 43 : index
    %264 = memref.load %arg1[%c43] : memref<101xf32, #tpu.memory_space<smem>>
    %265 = vector.broadcast %264 : f32 to vector<8x128xf32>
    %266 = arith.mulf %265, %263 : vector<8x128xf32>
    %267 = arith.addf %243, %266 : vector<8x128xf32>
    %c0_135 = arith.constant 0 : index
    %c0_136 = arith.constant 0 : index
    %c22_137 = arith.constant 22 : index
    %268 = vector.load %arg3[%c0_135, %c0_136, %c22_137] : memref<2x8x178xf32, #tpu.memory_space<vmem>>, vector<1x8x128xf32>
    %269 = vector.shape_cast %268 : vector<1x8x128xf32> to vector<8x128xf32>
    %c44 = arith.constant 44 : index
    %270 = memref.load %arg1[%c44] : memref<101xf32, #tpu.memory_space<smem>>
    %271 = vector.broadcast %270 : f32 to vector<8x128xf32>
    %272 = arith.mulf %271, %269 : vector<8x128xf32>
    %273 = arith.addf %249, %272 : vector<8x128xf32>
    %c1_138 = arith.constant 1 : index
    %c0_139 = arith.constant 0 : index
    %c22_140 = arith.constant 22 : index
    %274 = vector.load %arg3[%c1_138, %c0_139, %c22_140] : memref<2x8x178xf32, #tpu.memory_space<vmem>>, vector<1x8x128xf32>
    %275 = vector.shape_cast %274 : vector<1x8x128xf32> to vector<8x128xf32>
    %c45 = arith.constant 45 : index
    %276 = memref.load %arg1[%c45] : memref<101xf32, #tpu.memory_space<smem>>
    %277 = vector.broadcast %276 : f32 to vector<8x128xf32>
    %278 = arith.mulf %277, %275 : vector<8x128xf32>
    %279 = arith.addf %255, %278 : vector<8x128xf32>
    %c0_141 = arith.constant 0 : index
    %c0_142 = arith.constant 0 : index
    %c23_143 = arith.constant 23 : index
    %280 = vector.load %arg3[%c0_141, %c0_142, %c23_143] : memref<2x8x178xf32, #tpu.memory_space<vmem>>, vector<1x8x128xf32>
    %281 = vector.shape_cast %280 : vector<1x8x128xf32> to vector<8x128xf32>
    %c46 = arith.constant 46 : index
    %282 = memref.load %arg1[%c46] : memref<101xf32, #tpu.memory_space<smem>>
    %283 = vector.broadcast %282 : f32 to vector<8x128xf32>
    %284 = arith.mulf %283, %281 : vector<8x128xf32>
    %285 = arith.addf %261, %284 : vector<8x128xf32>
    %c1_144 = arith.constant 1 : index
    %c0_145 = arith.constant 0 : index
    %c23_146 = arith.constant 23 : index
    %286 = vector.load %arg3[%c1_144, %c0_145, %c23_146] : memref<2x8x178xf32, #tpu.memory_space<vmem>>, vector<1x8x128xf32>
    %287 = vector.shape_cast %286 : vector<1x8x128xf32> to vector<8x128xf32>
    %c47 = arith.constant 47 : index
    %288 = memref.load %arg1[%c47] : memref<101xf32, #tpu.memory_space<smem>>
    %289 = vector.broadcast %288 : f32 to vector<8x128xf32>
    %290 = arith.mulf %289, %287 : vector<8x128xf32>
    %291 = arith.addf %267, %290 : vector<8x128xf32>
    %c0_147 = arith.constant 0 : index
    %c0_148 = arith.constant 0 : index
    %c24_149 = arith.constant 24 : index
    %292 = vector.load %arg3[%c0_147, %c0_148, %c24_149] : memref<2x8x178xf32, #tpu.memory_space<vmem>>, vector<1x8x128xf32>
    %293 = vector.shape_cast %292 : vector<1x8x128xf32> to vector<8x128xf32>
    %c48 = arith.constant 48 : index
    %294 = memref.load %arg1[%c48] : memref<101xf32, #tpu.memory_space<smem>>
    %295 = vector.broadcast %294 : f32 to vector<8x128xf32>
    %296 = arith.mulf %295, %293 : vector<8x128xf32>
    %297 = arith.addf %273, %296 : vector<8x128xf32>
    %c1_150 = arith.constant 1 : index
    %c0_151 = arith.constant 0 : index
    %c24_152 = arith.constant 24 : index
    %298 = vector.load %arg3[%c1_150, %c0_151, %c24_152] : memref<2x8x178xf32, #tpu.memory_space<vmem>>, vector<1x8x128xf32>
    %299 = vector.shape_cast %298 : vector<1x8x128xf32> to vector<8x128xf32>
    %c49 = arith.constant 49 : index
    %300 = memref.load %arg1[%c49] : memref<101xf32, #tpu.memory_space<smem>>
    %301 = vector.broadcast %300 : f32 to vector<8x128xf32>
    %302 = arith.mulf %301, %299 : vector<8x128xf32>
    %303 = arith.addf %279, %302 : vector<8x128xf32>
    %c0_153 = arith.constant 0 : index
    %c0_154 = arith.constant 0 : index
    %c25_155 = arith.constant 25 : index
    %304 = vector.load %arg3[%c0_153, %c0_154, %c25_155] : memref<2x8x178xf32, #tpu.memory_space<vmem>>, vector<1x8x128xf32>
    %305 = vector.shape_cast %304 : vector<1x8x128xf32> to vector<8x128xf32>
    %c50 = arith.constant 50 : index
    %306 = memref.load %arg1[%c50] : memref<101xf32, #tpu.memory_space<smem>>
    %307 = vector.broadcast %306 : f32 to vector<8x128xf32>
    %308 = arith.mulf %307, %305 : vector<8x128xf32>
    %309 = arith.addf %285, %308 : vector<8x128xf32>
    %c1_156 = arith.constant 1 : index
    %c0_157 = arith.constant 0 : index
    %c25_158 = arith.constant 25 : index
    %310 = vector.load %arg3[%c1_156, %c0_157, %c25_158] : memref<2x8x178xf32, #tpu.memory_space<vmem>>, vector<1x8x128xf32>
    %311 = vector.shape_cast %310 : vector<1x8x128xf32> to vector<8x128xf32>
    %c51 = arith.constant 51 : index
    %312 = memref.load %arg1[%c51] : memref<101xf32, #tpu.memory_space<smem>>
    %313 = vector.broadcast %312 : f32 to vector<8x128xf32>
    %314 = arith.mulf %313, %311 : vector<8x128xf32>
    %315 = arith.addf %291, %314 : vector<8x128xf32>
    %c0_159 = arith.constant 0 : index
    %c0_160 = arith.constant 0 : index
    %c26_161 = arith.constant 26 : index
    %316 = vector.load %arg3[%c0_159, %c0_160, %c26_161] : memref<2x8x178xf32, #tpu.memory_space<vmem>>, vector<1x8x128xf32>
    %317 = vector.shape_cast %316 : vector<1x8x128xf32> to vector<8x128xf32>
    %c52 = arith.constant 52 : index
    %318 = memref.load %arg1[%c52] : memref<101xf32, #tpu.memory_space<smem>>
    %319 = vector.broadcast %318 : f32 to vector<8x128xf32>
    %320 = arith.mulf %319, %317 : vector<8x128xf32>
    %321 = arith.addf %297, %320 : vector<8x128xf32>
    %c1_162 = arith.constant 1 : index
    %c0_163 = arith.constant 0 : index
    %c26_164 = arith.constant 26 : index
    %322 = vector.load %arg3[%c1_162, %c0_163, %c26_164] : memref<2x8x178xf32, #tpu.memory_space<vmem>>, vector<1x8x128xf32>
    %323 = vector.shape_cast %322 : vector<1x8x128xf32> to vector<8x128xf32>
    %c53 = arith.constant 53 : index
    %324 = memref.load %arg1[%c53] : memref<101xf32, #tpu.memory_space<smem>>
    %325 = vector.broadcast %324 : f32 to vector<8x128xf32>
    %326 = arith.mulf %325, %323 : vector<8x128xf32>
    %327 = arith.addf %303, %326 : vector<8x128xf32>
    %c0_165 = arith.constant 0 : index
    %c0_166 = arith.constant 0 : index
    %c27_167 = arith.constant 27 : index
    %328 = vector.load %arg3[%c0_165, %c0_166, %c27_167] : memref<2x8x178xf32, #tpu.memory_space<vmem>>, vector<1x8x128xf32>
    %329 = vector.shape_cast %328 : vector<1x8x128xf32> to vector<8x128xf32>
    %c54 = arith.constant 54 : index
    %330 = memref.load %arg1[%c54] : memref<101xf32, #tpu.memory_space<smem>>
    %331 = vector.broadcast %330 : f32 to vector<8x128xf32>
    %332 = arith.mulf %331, %329 : vector<8x128xf32>
    %333 = arith.addf %309, %332 : vector<8x128xf32>
    %c1_168 = arith.constant 1 : index
    %c0_169 = arith.constant 0 : index
    %c27_170 = arith.constant 27 : index
    %334 = vector.load %arg3[%c1_168, %c0_169, %c27_170] : memref<2x8x178xf32, #tpu.memory_space<vmem>>, vector<1x8x128xf32>
    %335 = vector.shape_cast %334 : vector<1x8x128xf32> to vector<8x128xf32>
    %c55 = arith.constant 55 : index
    %336 = memref.load %arg1[%c55] : memref<101xf32, #tpu.memory_space<smem>>
    %337 = vector.broadcast %336 : f32 to vector<8x128xf32>
    %338 = arith.mulf %337, %335 : vector<8x128xf32>
    %339 = arith.addf %315, %338 : vector<8x128xf32>
    %c0_171 = arith.constant 0 : index
    %c0_172 = arith.constant 0 : index
    %c28_173 = arith.constant 28 : index
    %340 = vector.load %arg3[%c0_171, %c0_172, %c28_173] : memref<2x8x178xf32, #tpu.memory_space<vmem>>, vector<1x8x128xf32>
    %341 = vector.shape_cast %340 : vector<1x8x128xf32> to vector<8x128xf32>
    %c56 = arith.constant 56 : index
    %342 = memref.load %arg1[%c56] : memref<101xf32, #tpu.memory_space<smem>>
    %343 = vector.broadcast %342 : f32 to vector<8x128xf32>
    %344 = arith.mulf %343, %341 : vector<8x128xf32>
    %345 = arith.addf %321, %344 : vector<8x128xf32>
    %c1_174 = arith.constant 1 : index
    %c0_175 = arith.constant 0 : index
    %c28_176 = arith.constant 28 : index
    %346 = vector.load %arg3[%c1_174, %c0_175, %c28_176] : memref<2x8x178xf32, #tpu.memory_space<vmem>>, vector<1x8x128xf32>
    %347 = vector.shape_cast %346 : vector<1x8x128xf32> to vector<8x128xf32>
    %c57 = arith.constant 57 : index
    %348 = memref.load %arg1[%c57] : memref<101xf32, #tpu.memory_space<smem>>
    %349 = vector.broadcast %348 : f32 to vector<8x128xf32>
    %350 = arith.mulf %349, %347 : vector<8x128xf32>
    %351 = arith.addf %327, %350 : vector<8x128xf32>
    %c0_177 = arith.constant 0 : index
    %c0_178 = arith.constant 0 : index
    %c29_179 = arith.constant 29 : index
    %352 = vector.load %arg3[%c0_177, %c0_178, %c29_179] : memref<2x8x178xf32, #tpu.memory_space<vmem>>, vector<1x8x128xf32>
    %353 = vector.shape_cast %352 : vector<1x8x128xf32> to vector<8x128xf32>
    %c58 = arith.constant 58 : index
    %354 = memref.load %arg1[%c58] : memref<101xf32, #tpu.memory_space<smem>>
    %355 = vector.broadcast %354 : f32 to vector<8x128xf32>
    %356 = arith.mulf %355, %353 : vector<8x128xf32>
    %357 = arith.addf %333, %356 : vector<8x128xf32>
    %c1_180 = arith.constant 1 : index
    %c0_181 = arith.constant 0 : index
    %c29_182 = arith.constant 29 : index
    %358 = vector.load %arg3[%c1_180, %c0_181, %c29_182] : memref<2x8x178xf32, #tpu.memory_space<vmem>>, vector<1x8x128xf32>
    %359 = vector.shape_cast %358 : vector<1x8x128xf32> to vector<8x128xf32>
    %c59 = arith.constant 59 : index
    %360 = memref.load %arg1[%c59] : memref<101xf32, #tpu.memory_space<smem>>
    %361 = vector.broadcast %360 : f32 to vector<8x128xf32>
    %362 = arith.mulf %361, %359 : vector<8x128xf32>
    %363 = arith.addf %339, %362 : vector<8x128xf32>
    %c0_183 = arith.constant 0 : index
    %c0_184 = arith.constant 0 : index
    %c30_185 = arith.constant 30 : index
    %364 = vector.load %arg3[%c0_183, %c0_184, %c30_185] : memref<2x8x178xf32, #tpu.memory_space<vmem>>, vector<1x8x128xf32>
    %365 = vector.shape_cast %364 : vector<1x8x128xf32> to vector<8x128xf32>
    %c60 = arith.constant 60 : index
    %366 = memref.load %arg1[%c60] : memref<101xf32, #tpu.memory_space<smem>>
    %367 = vector.broadcast %366 : f32 to vector<8x128xf32>
    %368 = arith.mulf %367, %365 : vector<8x128xf32>
    %369 = arith.addf %345, %368 : vector<8x128xf32>
    %c1_186 = arith.constant 1 : index
    %c0_187 = arith.constant 0 : index
    %c30_188 = arith.constant 30 : index
    %370 = vector.load %arg3[%c1_186, %c0_187, %c30_188] : memref<2x8x178xf32, #tpu.memory_space<vmem>>, vector<1x8x128xf32>
    %371 = vector.shape_cast %370 : vector<1x8x128xf32> to vector<8x128xf32>
    %c61 = arith.constant 61 : index
    %372 = memref.load %arg1[%c61] : memref<101xf32, #tpu.memory_space<smem>>
    %373 = vector.broadcast %372 : f32 to vector<8x128xf32>
    %374 = arith.mulf %373, %371 : vector<8x128xf32>
    %375 = arith.addf %351, %374 : vector<8x128xf32>
    %c0_189 = arith.constant 0 : index
    %c0_190 = arith.constant 0 : index
    %c31_191 = arith.constant 31 : index
    %376 = vector.load %arg3[%c0_189, %c0_190, %c31_191] : memref<2x8x178xf32, #tpu.memory_space<vmem>>, vector<1x8x128xf32>
    %377 = vector.shape_cast %376 : vector<1x8x128xf32> to vector<8x128xf32>
    %c62 = arith.constant 62 : index
    %378 = memref.load %arg1[%c62] : memref<101xf32, #tpu.memory_space<smem>>
    %379 = vector.broadcast %378 : f32 to vector<8x128xf32>
    %380 = arith.mulf %379, %377 : vector<8x128xf32>
    %381 = arith.addf %357, %380 : vector<8x128xf32>
    %c1_192 = arith.constant 1 : index
    %c0_193 = arith.constant 0 : index
    %c31_194 = arith.constant 31 : index
    %382 = vector.load %arg3[%c1_192, %c0_193, %c31_194] : memref<2x8x178xf32, #tpu.memory_space<vmem>>, vector<1x8x128xf32>
    %383 = vector.shape_cast %382 : vector<1x8x128xf32> to vector<8x128xf32>
    %c63 = arith.constant 63 : index
    %384 = memref.load %arg1[%c63] : memref<101xf32, #tpu.memory_space<smem>>
    %385 = vector.broadcast %384 : f32 to vector<8x128xf32>
    %386 = arith.mulf %385, %383 : vector<8x128xf32>
    %387 = arith.addf %363, %386 : vector<8x128xf32>
    %c0_195 = arith.constant 0 : index
    %c0_196 = arith.constant 0 : index
    %c32_197 = arith.constant 32 : index
    %388 = vector.load %arg3[%c0_195, %c0_196, %c32_197] : memref<2x8x178xf32, #tpu.memory_space<vmem>>, vector<1x8x128xf32>
    %389 = vector.shape_cast %388 : vector<1x8x128xf32> to vector<8x128xf32>
    %c64 = arith.constant 64 : index
    %390 = memref.load %arg1[%c64] : memref<101xf32, #tpu.memory_space<smem>>
    %391 = vector.broadcast %390 : f32 to vector<8x128xf32>
    %392 = arith.mulf %391, %389 : vector<8x128xf32>
    %393 = arith.addf %369, %392 : vector<8x128xf32>
    %c1_198 = arith.constant 1 : index
    %c0_199 = arith.constant 0 : index
    %c32_200 = arith.constant 32 : index
    %394 = vector.load %arg3[%c1_198, %c0_199, %c32_200] : memref<2x8x178xf32, #tpu.memory_space<vmem>>, vector<1x8x128xf32>
    %395 = vector.shape_cast %394 : vector<1x8x128xf32> to vector<8x128xf32>
    %c65 = arith.constant 65 : index
    %396 = memref.load %arg1[%c65] : memref<101xf32, #tpu.memory_space<smem>>
    %397 = vector.broadcast %396 : f32 to vector<8x128xf32>
    %398 = arith.mulf %397, %395 : vector<8x128xf32>
    %399 = arith.addf %375, %398 : vector<8x128xf32>
    %c0_201 = arith.constant 0 : index
    %c0_202 = arith.constant 0 : index
    %c33_203 = arith.constant 33 : index
    %400 = vector.load %arg3[%c0_201, %c0_202, %c33_203] : memref<2x8x178xf32, #tpu.memory_space<vmem>>, vector<1x8x128xf32>
    %401 = vector.shape_cast %400 : vector<1x8x128xf32> to vector<8x128xf32>
    %c66 = arith.constant 66 : index
    %402 = memref.load %arg1[%c66] : memref<101xf32, #tpu.memory_space<smem>>
    %403 = vector.broadcast %402 : f32 to vector<8x128xf32>
    %404 = arith.mulf %403, %401 : vector<8x128xf32>
    %405 = arith.addf %381, %404 : vector<8x128xf32>
    %c1_204 = arith.constant 1 : index
    %c0_205 = arith.constant 0 : index
    %c33_206 = arith.constant 33 : index
    %406 = vector.load %arg3[%c1_204, %c0_205, %c33_206] : memref<2x8x178xf32, #tpu.memory_space<vmem>>, vector<1x8x128xf32>
    %407 = vector.shape_cast %406 : vector<1x8x128xf32> to vector<8x128xf32>
    %c67 = arith.constant 67 : index
    %408 = memref.load %arg1[%c67] : memref<101xf32, #tpu.memory_space<smem>>
    %409 = vector.broadcast %408 : f32 to vector<8x128xf32>
    %410 = arith.mulf %409, %407 : vector<8x128xf32>
    %411 = arith.addf %387, %410 : vector<8x128xf32>
    %c0_207 = arith.constant 0 : index
    %c0_208 = arith.constant 0 : index
    %c34_209 = arith.constant 34 : index
    %412 = vector.load %arg3[%c0_207, %c0_208, %c34_209] : memref<2x8x178xf32, #tpu.memory_space<vmem>>, vector<1x8x128xf32>
    %413 = vector.shape_cast %412 : vector<1x8x128xf32> to vector<8x128xf32>
    %c68 = arith.constant 68 : index
    %414 = memref.load %arg1[%c68] : memref<101xf32, #tpu.memory_space<smem>>
    %415 = vector.broadcast %414 : f32 to vector<8x128xf32>
    %416 = arith.mulf %415, %413 : vector<8x128xf32>
    %417 = arith.addf %393, %416 : vector<8x128xf32>
    %c1_210 = arith.constant 1 : index
    %c0_211 = arith.constant 0 : index
    %c34_212 = arith.constant 34 : index
    %418 = vector.load %arg3[%c1_210, %c0_211, %c34_212] : memref<2x8x178xf32, #tpu.memory_space<vmem>>, vector<1x8x128xf32>
    %419 = vector.shape_cast %418 : vector<1x8x128xf32> to vector<8x128xf32>
    %c69 = arith.constant 69 : index
    %420 = memref.load %arg1[%c69] : memref<101xf32, #tpu.memory_space<smem>>
    %421 = vector.broadcast %420 : f32 to vector<8x128xf32>
    %422 = arith.mulf %421, %419 : vector<8x128xf32>
    %423 = arith.addf %399, %422 : vector<8x128xf32>
    %c0_213 = arith.constant 0 : index
    %c0_214 = arith.constant 0 : index
    %c35_215 = arith.constant 35 : index
    %424 = vector.load %arg3[%c0_213, %c0_214, %c35_215] : memref<2x8x178xf32, #tpu.memory_space<vmem>>, vector<1x8x128xf32>
    %425 = vector.shape_cast %424 : vector<1x8x128xf32> to vector<8x128xf32>
    %c70 = arith.constant 70 : index
    %426 = memref.load %arg1[%c70] : memref<101xf32, #tpu.memory_space<smem>>
    %427 = vector.broadcast %426 : f32 to vector<8x128xf32>
    %428 = arith.mulf %427, %425 : vector<8x128xf32>
    %429 = arith.addf %405, %428 : vector<8x128xf32>
    %c1_216 = arith.constant 1 : index
    %c0_217 = arith.constant 0 : index
    %c35_218 = arith.constant 35 : index
    %430 = vector.load %arg3[%c1_216, %c0_217, %c35_218] : memref<2x8x178xf32, #tpu.memory_space<vmem>>, vector<1x8x128xf32>
    %431 = vector.shape_cast %430 : vector<1x8x128xf32> to vector<8x128xf32>
    %c71 = arith.constant 71 : index
    %432 = memref.load %arg1[%c71] : memref<101xf32, #tpu.memory_space<smem>>
    %433 = vector.broadcast %432 : f32 to vector<8x128xf32>
    %434 = arith.mulf %433, %431 : vector<8x128xf32>
    %435 = arith.addf %411, %434 : vector<8x128xf32>
    %c0_219 = arith.constant 0 : index
    %c0_220 = arith.constant 0 : index
    %c36_221 = arith.constant 36 : index
    %436 = vector.load %arg3[%c0_219, %c0_220, %c36_221] : memref<2x8x178xf32, #tpu.memory_space<vmem>>, vector<1x8x128xf32>
    %437 = vector.shape_cast %436 : vector<1x8x128xf32> to vector<8x128xf32>
    %c72 = arith.constant 72 : index
    %438 = memref.load %arg1[%c72] : memref<101xf32, #tpu.memory_space<smem>>
    %439 = vector.broadcast %438 : f32 to vector<8x128xf32>
    %440 = arith.mulf %439, %437 : vector<8x128xf32>
    %441 = arith.addf %417, %440 : vector<8x128xf32>
    %c1_222 = arith.constant 1 : index
    %c0_223 = arith.constant 0 : index
    %c36_224 = arith.constant 36 : index
    %442 = vector.load %arg3[%c1_222, %c0_223, %c36_224] : memref<2x8x178xf32, #tpu.memory_space<vmem>>, vector<1x8x128xf32>
    %443 = vector.shape_cast %442 : vector<1x8x128xf32> to vector<8x128xf32>
    %c73 = arith.constant 73 : index
    %444 = memref.load %arg1[%c73] : memref<101xf32, #tpu.memory_space<smem>>
    %445 = vector.broadcast %444 : f32 to vector<8x128xf32>
    %446 = arith.mulf %445, %443 : vector<8x128xf32>
    %447 = arith.addf %423, %446 : vector<8x128xf32>
    %c0_225 = arith.constant 0 : index
    %c0_226 = arith.constant 0 : index
    %c37_227 = arith.constant 37 : index
    %448 = vector.load %arg3[%c0_225, %c0_226, %c37_227] : memref<2x8x178xf32, #tpu.memory_space<vmem>>, vector<1x8x128xf32>
    %449 = vector.shape_cast %448 : vector<1x8x128xf32> to vector<8x128xf32>
    %c74 = arith.constant 74 : index
    %450 = memref.load %arg1[%c74] : memref<101xf32, #tpu.memory_space<smem>>
    %451 = vector.broadcast %450 : f32 to vector<8x128xf32>
    %452 = arith.mulf %451, %449 : vector<8x128xf32>
    %453 = arith.addf %429, %452 : vector<8x128xf32>
    %c1_228 = arith.constant 1 : index
    %c0_229 = arith.constant 0 : index
    %c37_230 = arith.constant 37 : index
    %454 = vector.load %arg3[%c1_228, %c0_229, %c37_230] : memref<2x8x178xf32, #tpu.memory_space<vmem>>, vector<1x8x128xf32>
    %455 = vector.shape_cast %454 : vector<1x8x128xf32> to vector<8x128xf32>
    %c75 = arith.constant 75 : index
    %456 = memref.load %arg1[%c75] : memref<101xf32, #tpu.memory_space<smem>>
    %457 = vector.broadcast %456 : f32 to vector<8x128xf32>
    %458 = arith.mulf %457, %455 : vector<8x128xf32>
    %459 = arith.addf %435, %458 : vector<8x128xf32>
    %c0_231 = arith.constant 0 : index
    %c0_232 = arith.constant 0 : index
    %c38_233 = arith.constant 38 : index
    %460 = vector.load %arg3[%c0_231, %c0_232, %c38_233] : memref<2x8x178xf32, #tpu.memory_space<vmem>>, vector<1x8x128xf32>
    %461 = vector.shape_cast %460 : vector<1x8x128xf32> to vector<8x128xf32>
    %c76 = arith.constant 76 : index
    %462 = memref.load %arg1[%c76] : memref<101xf32, #tpu.memory_space<smem>>
    %463 = vector.broadcast %462 : f32 to vector<8x128xf32>
    %464 = arith.mulf %463, %461 : vector<8x128xf32>
    %465 = arith.addf %441, %464 : vector<8x128xf32>
    %c1_234 = arith.constant 1 : index
    %c0_235 = arith.constant 0 : index
    %c38_236 = arith.constant 38 : index
    %466 = vector.load %arg3[%c1_234, %c0_235, %c38_236] : memref<2x8x178xf32, #tpu.memory_space<vmem>>, vector<1x8x128xf32>
    %467 = vector.shape_cast %466 : vector<1x8x128xf32> to vector<8x128xf32>
    %c77 = arith.constant 77 : index
    %468 = memref.load %arg1[%c77] : memref<101xf32, #tpu.memory_space<smem>>
    %469 = vector.broadcast %468 : f32 to vector<8x128xf32>
    %470 = arith.mulf %469, %467 : vector<8x128xf32>
    %471 = arith.addf %447, %470 : vector<8x128xf32>
    %c0_237 = arith.constant 0 : index
    %c0_238 = arith.constant 0 : index
    %c39_239 = arith.constant 39 : index
    %472 = vector.load %arg3[%c0_237, %c0_238, %c39_239] : memref<2x8x178xf32, #tpu.memory_space<vmem>>, vector<1x8x128xf32>
    %473 = vector.shape_cast %472 : vector<1x8x128xf32> to vector<8x128xf32>
    %c78 = arith.constant 78 : index
    %474 = memref.load %arg1[%c78] : memref<101xf32, #tpu.memory_space<smem>>
    %475 = vector.broadcast %474 : f32 to vector<8x128xf32>
    %476 = arith.mulf %475, %473 : vector<8x128xf32>
    %477 = arith.addf %453, %476 : vector<8x128xf32>
    %c1_240 = arith.constant 1 : index
    %c0_241 = arith.constant 0 : index
    %c39_242 = arith.constant 39 : index
    %478 = vector.load %arg3[%c1_240, %c0_241, %c39_242] : memref<2x8x178xf32, #tpu.memory_space<vmem>>, vector<1x8x128xf32>
    %479 = vector.shape_cast %478 : vector<1x8x128xf32> to vector<8x128xf32>
    %c79 = arith.constant 79 : index
    %480 = memref.load %arg1[%c79] : memref<101xf32, #tpu.memory_space<smem>>
    %481 = vector.broadcast %480 : f32 to vector<8x128xf32>
    %482 = arith.mulf %481, %479 : vector<8x128xf32>
    %483 = arith.addf %459, %482 : vector<8x128xf32>
    %c0_243 = arith.constant 0 : index
    %c0_244 = arith.constant 0 : index
    %c40_245 = arith.constant 40 : index
    %484 = vector.load %arg3[%c0_243, %c0_244, %c40_245] : memref<2x8x178xf32, #tpu.memory_space<vmem>>, vector<1x8x128xf32>
    %485 = vector.shape_cast %484 : vector<1x8x128xf32> to vector<8x128xf32>
    %c80 = arith.constant 80 : index
    %486 = memref.load %arg1[%c80] : memref<101xf32, #tpu.memory_space<smem>>
    %487 = vector.broadcast %486 : f32 to vector<8x128xf32>
    %488 = arith.mulf %487, %485 : vector<8x128xf32>
    %489 = arith.addf %465, %488 : vector<8x128xf32>
    %c1_246 = arith.constant 1 : index
    %c0_247 = arith.constant 0 : index
    %c40_248 = arith.constant 40 : index
    %490 = vector.load %arg3[%c1_246, %c0_247, %c40_248] : memref<2x8x178xf32, #tpu.memory_space<vmem>>, vector<1x8x128xf32>
    %491 = vector.shape_cast %490 : vector<1x8x128xf32> to vector<8x128xf32>
    %c81 = arith.constant 81 : index
    %492 = memref.load %arg1[%c81] : memref<101xf32, #tpu.memory_space<smem>>
    %493 = vector.broadcast %492 : f32 to vector<8x128xf32>
    %494 = arith.mulf %493, %491 : vector<8x128xf32>
    %495 = arith.addf %471, %494 : vector<8x128xf32>
    %c0_249 = arith.constant 0 : index
    %c0_250 = arith.constant 0 : index
    %c41_251 = arith.constant 41 : index
    %496 = vector.load %arg3[%c0_249, %c0_250, %c41_251] : memref<2x8x178xf32, #tpu.memory_space<vmem>>, vector<1x8x128xf32>
    %497 = vector.shape_cast %496 : vector<1x8x128xf32> to vector<8x128xf32>
    %c82 = arith.constant 82 : index
    %498 = memref.load %arg1[%c82] : memref<101xf32, #tpu.memory_space<smem>>
    %499 = vector.broadcast %498 : f32 to vector<8x128xf32>
    %500 = arith.mulf %499, %497 : vector<8x128xf32>
    %501 = arith.addf %477, %500 : vector<8x128xf32>
    %c1_252 = arith.constant 1 : index
    %c0_253 = arith.constant 0 : index
    %c41_254 = arith.constant 41 : index
    %502 = vector.load %arg3[%c1_252, %c0_253, %c41_254] : memref<2x8x178xf32, #tpu.memory_space<vmem>>, vector<1x8x128xf32>
    %503 = vector.shape_cast %502 : vector<1x8x128xf32> to vector<8x128xf32>
    %c83 = arith.constant 83 : index
    %504 = memref.load %arg1[%c83] : memref<101xf32, #tpu.memory_space<smem>>
    %505 = vector.broadcast %504 : f32 to vector<8x128xf32>
    %506 = arith.mulf %505, %503 : vector<8x128xf32>
    %507 = arith.addf %483, %506 : vector<8x128xf32>
    %c0_255 = arith.constant 0 : index
    %c0_256 = arith.constant 0 : index
    %c42_257 = arith.constant 42 : index
    %508 = vector.load %arg3[%c0_255, %c0_256, %c42_257] : memref<2x8x178xf32, #tpu.memory_space<vmem>>, vector<1x8x128xf32>
    %509 = vector.shape_cast %508 : vector<1x8x128xf32> to vector<8x128xf32>
    %c84 = arith.constant 84 : index
    %510 = memref.load %arg1[%c84] : memref<101xf32, #tpu.memory_space<smem>>
    %511 = vector.broadcast %510 : f32 to vector<8x128xf32>
    %512 = arith.mulf %511, %509 : vector<8x128xf32>
    %513 = arith.addf %489, %512 : vector<8x128xf32>
    %c1_258 = arith.constant 1 : index
    %c0_259 = arith.constant 0 : index
    %c42_260 = arith.constant 42 : index
    %514 = vector.load %arg3[%c1_258, %c0_259, %c42_260] : memref<2x8x178xf32, #tpu.memory_space<vmem>>, vector<1x8x128xf32>
    %515 = vector.shape_cast %514 : vector<1x8x128xf32> to vector<8x128xf32>
    %c85 = arith.constant 85 : index
    %516 = memref.load %arg1[%c85] : memref<101xf32, #tpu.memory_space<smem>>
    %517 = vector.broadcast %516 : f32 to vector<8x128xf32>
    %518 = arith.mulf %517, %515 : vector<8x128xf32>
    %519 = arith.addf %495, %518 : vector<8x128xf32>
    %c0_261 = arith.constant 0 : index
    %c0_262 = arith.constant 0 : index
    %c43_263 = arith.constant 43 : index
    %520 = vector.load %arg3[%c0_261, %c0_262, %c43_263] : memref<2x8x178xf32, #tpu.memory_space<vmem>>, vector<1x8x128xf32>
    %521 = vector.shape_cast %520 : vector<1x8x128xf32> to vector<8x128xf32>
    %c86 = arith.constant 86 : index
    %522 = memref.load %arg1[%c86] : memref<101xf32, #tpu.memory_space<smem>>
    %523 = vector.broadcast %522 : f32 to vector<8x128xf32>
    %524 = arith.mulf %523, %521 : vector<8x128xf32>
    %525 = arith.addf %501, %524 : vector<8x128xf32>
    %c1_264 = arith.constant 1 : index
    %c0_265 = arith.constant 0 : index
    %c43_266 = arith.constant 43 : index
    %526 = vector.load %arg3[%c1_264, %c0_265, %c43_266] : memref<2x8x178xf32, #tpu.memory_space<vmem>>, vector<1x8x128xf32>
    %527 = vector.shape_cast %526 : vector<1x8x128xf32> to vector<8x128xf32>
    %c87 = arith.constant 87 : index
    %528 = memref.load %arg1[%c87] : memref<101xf32, #tpu.memory_space<smem>>
    %529 = vector.broadcast %528 : f32 to vector<8x128xf32>
    %530 = arith.mulf %529, %527 : vector<8x128xf32>
    %531 = arith.addf %507, %530 : vector<8x128xf32>
    %c0_267 = arith.constant 0 : index
    %c0_268 = arith.constant 0 : index
    %c44_269 = arith.constant 44 : index
    %532 = vector.load %arg3[%c0_267, %c0_268, %c44_269] : memref<2x8x178xf32, #tpu.memory_space<vmem>>, vector<1x8x128xf32>
    %533 = vector.shape_cast %532 : vector<1x8x128xf32> to vector<8x128xf32>
    %c88 = arith.constant 88 : index
    %534 = memref.load %arg1[%c88] : memref<101xf32, #tpu.memory_space<smem>>
    %535 = vector.broadcast %534 : f32 to vector<8x128xf32>
    %536 = arith.mulf %535, %533 : vector<8x128xf32>
    %537 = arith.addf %513, %536 : vector<8x128xf32>
    %c1_270 = arith.constant 1 : index
    %c0_271 = arith.constant 0 : index
    %c44_272 = arith.constant 44 : index
    %538 = vector.load %arg3[%c1_270, %c0_271, %c44_272] : memref<2x8x178xf32, #tpu.memory_space<vmem>>, vector<1x8x128xf32>
    %539 = vector.shape_cast %538 : vector<1x8x128xf32> to vector<8x128xf32>
    %c89 = arith.constant 89 : index
    %540 = memref.load %arg1[%c89] : memref<101xf32, #tpu.memory_space<smem>>
    %541 = vector.broadcast %540 : f32 to vector<8x128xf32>
    %542 = arith.mulf %541, %539 : vector<8x128xf32>
    %543 = arith.addf %519, %542 : vector<8x128xf32>
    %c0_273 = arith.constant 0 : index
    %c0_274 = arith.constant 0 : index
    %c45_275 = arith.constant 45 : index
    %544 = vector.load %arg3[%c0_273, %c0_274, %c45_275] : memref<2x8x178xf32, #tpu.memory_space<vmem>>, vector<1x8x128xf32>
    %545 = vector.shape_cast %544 : vector<1x8x128xf32> to vector<8x128xf32>
    %c90 = arith.constant 90 : index
    %546 = memref.load %arg1[%c90] : memref<101xf32, #tpu.memory_space<smem>>
    %547 = vector.broadcast %546 : f32 to vector<8x128xf32>
    %548 = arith.mulf %547, %545 : vector<8x128xf32>
    %549 = arith.addf %525, %548 : vector<8x128xf32>
    %c1_276 = arith.constant 1 : index
    %c0_277 = arith.constant 0 : index
    %c45_278 = arith.constant 45 : index
    %550 = vector.load %arg3[%c1_276, %c0_277, %c45_278] : memref<2x8x178xf32, #tpu.memory_space<vmem>>, vector<1x8x128xf32>
    %551 = vector.shape_cast %550 : vector<1x8x128xf32> to vector<8x128xf32>
    %c91 = arith.constant 91 : index
    %552 = memref.load %arg1[%c91] : memref<101xf32, #tpu.memory_space<smem>>
    %553 = vector.broadcast %552 : f32 to vector<8x128xf32>
    %554 = arith.mulf %553, %551 : vector<8x128xf32>
    %555 = arith.addf %531, %554 : vector<8x128xf32>
    %c0_279 = arith.constant 0 : index
    %c0_280 = arith.constant 0 : index
    %c46_281 = arith.constant 46 : index
    %556 = vector.load %arg3[%c0_279, %c0_280, %c46_281] : memref<2x8x178xf32, #tpu.memory_space<vmem>>, vector<1x8x128xf32>
    %557 = vector.shape_cast %556 : vector<1x8x128xf32> to vector<8x128xf32>
    %c92 = arith.constant 92 : index
    %558 = memref.load %arg1[%c92] : memref<101xf32, #tpu.memory_space<smem>>
    %559 = vector.broadcast %558 : f32 to vector<8x128xf32>
    %560 = arith.mulf %559, %557 : vector<8x128xf32>
    %561 = arith.addf %537, %560 : vector<8x128xf32>
    %c1_282 = arith.constant 1 : index
    %c0_283 = arith.constant 0 : index
    %c46_284 = arith.constant 46 : index
    %562 = vector.load %arg3[%c1_282, %c0_283, %c46_284] : memref<2x8x178xf32, #tpu.memory_space<vmem>>, vector<1x8x128xf32>
    %563 = vector.shape_cast %562 : vector<1x8x128xf32> to vector<8x128xf32>
    %c93 = arith.constant 93 : index
    %564 = memref.load %arg1[%c93] : memref<101xf32, #tpu.memory_space<smem>>
    %565 = vector.broadcast %564 : f32 to vector<8x128xf32>
    %566 = arith.mulf %565, %563 : vector<8x128xf32>
    %567 = arith.addf %543, %566 : vector<8x128xf32>
    %c0_285 = arith.constant 0 : index
    %c0_286 = arith.constant 0 : index
    %c47_287 = arith.constant 47 : index
    %568 = vector.load %arg3[%c0_285, %c0_286, %c47_287] : memref<2x8x178xf32, #tpu.memory_space<vmem>>, vector<1x8x128xf32>
    %569 = vector.shape_cast %568 : vector<1x8x128xf32> to vector<8x128xf32>
    %c94 = arith.constant 94 : index
    %570 = memref.load %arg1[%c94] : memref<101xf32, #tpu.memory_space<smem>>
    %571 = vector.broadcast %570 : f32 to vector<8x128xf32>
    %572 = arith.mulf %571, %569 : vector<8x128xf32>
    %573 = arith.addf %549, %572 : vector<8x128xf32>
    %c1_288 = arith.constant 1 : index
    %c0_289 = arith.constant 0 : index
    %c47_290 = arith.constant 47 : index
    %574 = vector.load %arg3[%c1_288, %c0_289, %c47_290] : memref<2x8x178xf32, #tpu.memory_space<vmem>>, vector<1x8x128xf32>
    %575 = vector.shape_cast %574 : vector<1x8x128xf32> to vector<8x128xf32>
    %c95 = arith.constant 95 : index
    %576 = memref.load %arg1[%c95] : memref<101xf32, #tpu.memory_space<smem>>
    %577 = vector.broadcast %576 : f32 to vector<8x128xf32>
    %578 = arith.mulf %577, %575 : vector<8x128xf32>
    %579 = arith.addf %555, %578 : vector<8x128xf32>
    %c0_291 = arith.constant 0 : index
    %c0_292 = arith.constant 0 : index
    %c48_293 = arith.constant 48 : index
    %580 = vector.load %arg3[%c0_291, %c0_292, %c48_293] : memref<2x8x178xf32, #tpu.memory_space<vmem>>, vector<1x8x128xf32>
    %581 = vector.shape_cast %580 : vector<1x8x128xf32> to vector<8x128xf32>
    %c96 = arith.constant 96 : index
    %582 = memref.load %arg1[%c96] : memref<101xf32, #tpu.memory_space<smem>>
    %583 = vector.broadcast %582 : f32 to vector<8x128xf32>
    %584 = arith.mulf %583, %581 : vector<8x128xf32>
    %585 = arith.addf %561, %584 : vector<8x128xf32>
    %c1_294 = arith.constant 1 : index
    %c0_295 = arith.constant 0 : index
    %c48_296 = arith.constant 48 : index
    %586 = vector.load %arg3[%c1_294, %c0_295, %c48_296] : memref<2x8x178xf32, #tpu.memory_space<vmem>>, vector<1x8x128xf32>
    %587 = vector.shape_cast %586 : vector<1x8x128xf32> to vector<8x128xf32>
    %c97 = arith.constant 97 : index
    %588 = memref.load %arg1[%c97] : memref<101xf32, #tpu.memory_space<smem>>
    %589 = vector.broadcast %588 : f32 to vector<8x128xf32>
    %590 = arith.mulf %589, %587 : vector<8x128xf32>
    %591 = arith.addf %567, %590 : vector<8x128xf32>
    %c0_297 = arith.constant 0 : index
    %c0_298 = arith.constant 0 : index
    %c49_299 = arith.constant 49 : index
    %592 = vector.load %arg3[%c0_297, %c0_298, %c49_299] : memref<2x8x178xf32, #tpu.memory_space<vmem>>, vector<1x8x128xf32>
    %593 = vector.shape_cast %592 : vector<1x8x128xf32> to vector<8x128xf32>
    %c98 = arith.constant 98 : index
    %594 = memref.load %arg1[%c98] : memref<101xf32, #tpu.memory_space<smem>>
    %595 = vector.broadcast %594 : f32 to vector<8x128xf32>
    %596 = arith.mulf %595, %593 : vector<8x128xf32>
    %597 = arith.addf %573, %596 : vector<8x128xf32>
    %c1_300 = arith.constant 1 : index
    %c0_301 = arith.constant 0 : index
    %c49_302 = arith.constant 49 : index
    %598 = vector.load %arg3[%c1_300, %c0_301, %c49_302] : memref<2x8x178xf32, #tpu.memory_space<vmem>>, vector<1x8x128xf32>
    %599 = vector.shape_cast %598 : vector<1x8x128xf32> to vector<8x128xf32>
    %c99 = arith.constant 99 : index
    %600 = memref.load %arg1[%c99] : memref<101xf32, #tpu.memory_space<smem>>
    %601 = vector.broadcast %600 : f32 to vector<8x128xf32>
    %602 = arith.mulf %601, %599 : vector<8x128xf32>
    %603 = arith.addf %579, %602 : vector<8x128xf32>
    %c0_303 = arith.constant 0 : index
    %c0_304 = arith.constant 0 : index
    %c50_305 = arith.constant 50 : index
    %604 = vector.load %arg3[%c0_303, %c0_304, %c50_305] : memref<2x8x178xf32, #tpu.memory_space<vmem>>, vector<1x8x128xf32>
    %605 = vector.shape_cast %604 : vector<1x8x128xf32> to vector<8x128xf32>
    %c100 = arith.constant 100 : index
    %606 = memref.load %arg1[%c100] : memref<101xf32, #tpu.memory_space<smem>>
    %607 = vector.broadcast %606 : f32 to vector<8x128xf32>
    %608 = arith.mulf %607, %605 : vector<8x128xf32>
    %609 = arith.addf %585, %608 : vector<8x128xf32>
    %610 = arith.addf %609, %591 : vector<8x128xf32>
    %611 = arith.addf %597, %603 : vector<8x128xf32>
    %612 = arith.addf %610, %611 : vector<8x128xf32>
    %c0_306 = arith.constant 0 : index
    %613 = memref.load %arg2[%c0_306] : memref<1xf32, #tpu.memory_space<smem>>
    %614 = vector.broadcast %613 : f32 to vector<8x128xf32>
    %615 = arith.addf %612, %614 : vector<8x128xf32>
    %616 = tpu.transpose %615, [1, 0] : vector<8x128xf32> -> vector<128x8xf32>
    %617 = vector.extract_strided_slice %616 {offsets = [0, 0], sizes = [128, 2], strides = [1, 1]} : vector<128x8xf32> to vector<128x2xf32>
    %c0_307 = arith.constant 0 : index
    %c0_308 = arith.constant 0 : index
    %618 = vector.load %arg4[%c0_307, %c0_308] : memref<24x1xf32, #tpu.memory_space<vmem>>, vector<24x1xf32>
    %619 = vector.shape_cast %618 : vector<24x1xf32> to vector<1x24x1xf32>
    %620 = vector.shape_cast %617 : vector<128x2xf32> to vector<128x1x2xf32>
    %621 = vector.broadcast %619 : vector<1x24x1xf32> to vector<128x24x2xf32>
    %622 = vector.broadcast %620 : vector<128x1x2xf32> to vector<128x24x2xf32>
    %623 = arith.mulf %621, %622 : vector<128x24x2xf32>
    %c0_309 = arith.constant 0 : index
    %c0_310 = arith.constant 0 : index
    %624 = vector.load %arg6[%c0_309, %c0_310] : memref<24x1xf32, #tpu.memory_space<vmem>>, vector<24x1xf32>
    %625 = vector.shape_cast %624 : vector<24x1xf32> to vector<1x24x1xf32>
    %626 = vector.broadcast %625 : vector<1x24x1xf32> to vector<128x24x2xf32>
    %627 = arith.addf %623, %626 : vector<128x24x2xf32>
    %c0_311 = arith.constant 0 : index
    %c0_312 = arith.constant 0 : index
    %c0_313 = arith.constant 0 : index
    %628 = vector.load %arg24[%c0_311, %c0_312, %c0_313] : memref<128x24x2xf32, #tpu.memory_space<vmem>>, vector<128x24x2xf32>
    tpu.vector_store %arg24[%c0_311, %c0_312, %c0_313], %627 {strides = array<i32>} : memref<128x24x2xf32, #tpu.memory_space<vmem>>, vector<128x24x2xf32>,
    %c0_314 = arith.constant 0 : index
    %c0_315 = arith.constant 0 : index
    %629 = vector.load %arg5[%c0_314, %c0_315] : memref<24x3xf32, #tpu.memory_space<vmem>>, vector<24x3xf32>
    %630 = vector.extract_strided_slice %629 {offsets = [0, 0], sizes = [24, 1], strides = [1, 1]} : vector<24x3xf32> to vector<24x1xf32>
    %631 = vector.extract_strided_slice %629 {offsets = [0, 1], sizes = [24, 1], strides = [1, 1]} : vector<24x3xf32> to vector<24x1xf32>
    %632 = vector.extract_strided_slice %629 {offsets = [0, 2], sizes = [24, 1], strides = [1, 1]} : vector<24x3xf32> to vector<24x1xf32>
    %c0_316 = arith.constant 0 : index
    %c0_317 = arith.constant 0 : index
    %633 = vector.load %arg7[%c0_316, %c0_317] : memref<8x1xf32, #tpu.memory_space<vmem>>, vector<8x1xf32>
    %c0_318 = arith.constant 0 : index
    %c0_319 = arith.constant 0 : index
    %634 = vector.load %arg8[%c0_318, %c0_319] : memref<8x2xf32, #tpu.memory_space<vmem>>, vector<8x2xf32>
    %c0_i32 = arith.constant 0 : i32
    %c16_i32 = arith.constant 16 : i32
    %635 = arith.addi %c0_i32, %c16_i32 : i32
    %c1_i32 = arith.constant 1 : i32
    %636 = scf.for %arg25 = %c0_i32 to %635 step %c1_i32 iter_args(%arg26 = %634) -> (vector<8x2xf32>)  : i32 {
      %c8_i32 = arith.constant 8 : i32
      %703 = arith.muli %arg25, %c8_i32 : i32
      %c0_i32_366 = arith.constant 0 : i32
      %704 = arith.addi %703, %c0_i32_366 : i32
      %705 = arith.index_cast %704 : i32 to index
      %c0_367 = arith.constant 0 : index
      %c0_368 = arith.constant 0 : index
      %706 = vector.load %arg24[%705, %c0_367, %c0_368] : memref<128x24x2xf32, #tpu.memory_space<vmem>>, vector<1x24x2xf32>
      %707 = vector.shape_cast %706 : vector<1x24x2xf32> to vector<24x2xf32>
      %708 = vector.extract_strided_slice %arg26 {offsets = [0, 0], sizes = [1, 2], strides = [1, 1]} : vector<8x2xf32> to vector<1x2xf32>
      %709 = vector.broadcast %630 : vector<24x1xf32> to vector<24x2xf32>
      %710 = vector.broadcast %708 : vector<1x2xf32> to vector<24x2xf32>
      %711 = arith.mulf %709, %710 : vector<24x2xf32>
      %712 = vector.extract_strided_slice %arg26 {offsets = [1, 0], sizes = [1, 2], strides = [1, 1]} : vector<8x2xf32> to vector<1x2xf32>
      %713 = vector.broadcast %631 : vector<24x1xf32> to vector<24x2xf32>
      %714 = vector.broadcast %712 : vector<1x2xf32> to vector<24x2xf32>
      %715 = arith.mulf %713, %714 : vector<24x2xf32>
      %716 = arith.addf %711, %715 : vector<24x2xf32>
      %717 = vector.extract_strided_slice %arg26 {offsets = [2, 0], sizes = [1, 2], strides = [1, 1]} : vector<8x2xf32> to vector<1x2xf32>
      %718 = vector.broadcast %632 : vector<24x1xf32> to vector<24x2xf32>
      %719 = vector.broadcast %717 : vector<1x2xf32> to vector<24x2xf32>
      %720 = arith.mulf %718, %719 : vector<24x2xf32>
      %721 = arith.addf %716, %720 : vector<24x2xf32>
      %722 = vector.extract_strided_slice %707 {offsets = [0, 0], sizes = [16, 2], strides = [1, 1]} : vector<24x2xf32> to vector<16x2xf32>
      %723 = vector.extract_strided_slice %721 {offsets = [0, 0], sizes = [16, 2], strides = [1, 1]} : vector<24x2xf32> to vector<16x2xf32>
      %724 = arith.addf %722, %723 : vector<16x2xf32>
      %cst_369 = arith.constant 5.000000e-01 : f32
      %725 = vector.broadcast %cst_369 : f32 to vector<16x2xf32>
      %726 = arith.mulf %725, %724 : vector<16x2xf32>
      %727 = math.tanh %726 : vector<16x2xf32>
      %cst_370 = arith.constant 5.000000e-01 : f32
      %728 = vector.broadcast %cst_370 : f32 to vector<16x2xf32>
      %729 = arith.mulf %728, %727 : vector<16x2xf32>
      %cst_371 = arith.constant 5.000000e-01 : f32
      %730 = vector.broadcast %cst_371 : f32 to vector<16x2xf32>
      %731 = arith.addf %729, %730 : vector<16x2xf32>
      %732 = vector.extract_strided_slice %731 {offsets = [0, 0], sizes = [8, 2], strides = [1, 1]} : vector<16x2xf32> to vector<8x2xf32>
      %733 = vector.extract_strided_slice %731 {offsets = [8, 0], sizes = [8, 2], strides = [1, 1]} : vector<16x2xf32> to vector<8x2xf32>
      %734 = vector.extract_strided_slice %707 {offsets = [16, 0], sizes = [8, 2], strides = [1, 1]} : vector<24x2xf32> to vector<8x2xf32>
      %735 = vector.extract_strided_slice %721 {offsets = [16, 0], sizes = [8, 2], strides = [1, 1]} : vector<24x2xf32> to vector<8x2xf32>
      %736 = vector.broadcast %633 : vector<8x1xf32> to vector<8x2xf32>
      %737 = arith.addf %735, %736 : vector<8x2xf32>
      %738 = arith.mulf %732, %737 : vector<8x2xf32>
      %739 = arith.addf %734, %738 : vector<8x2xf32>
      %740 = math.tanh %739 : vector<8x2xf32>
      %741 = arith.subf %arg26, %740 : vector<8x2xf32>
      %742 = arith.mulf %733, %741 : vector<8x2xf32>
      %743 = arith.addf %740, %742 : vector<8x2xf32>
      %c1_i32_372 = arith.constant 1 : i32
      %744 = arith.addi %703, %c1_i32_372 : i32
      %745 = arith.index_cast %744 : i32 to index
      %c0_373 = arith.constant 0 : index
      %c0_374 = arith.constant 0 : index
      %746 = vector.load %arg24[%745, %c0_373, %c0_374] : memref<128x24x2xf32, #tpu.memory_space<vmem>>, vector<1x24x2xf32>
      %747 = vector.shape_cast %746 : vector<1x24x2xf32> to vector<24x2xf32>
      %748 = vector.extract_strided_slice %743 {offsets = [0, 0], sizes = [1, 2], strides = [1, 1]} : vector<8x2xf32> to vector<1x2xf32>
      %749 = vector.broadcast %630 : vector<24x1xf32> to vector<24x2xf32>
      %750 = vector.broadcast %748 : vector<1x2xf32> to vector<24x2xf32>
      %751 = arith.mulf %749, %750 : vector<24x2xf32>
      %752 = vector.extract_strided_slice %743 {offsets = [1, 0], sizes = [1, 2], strides = [1, 1]} : vector<8x2xf32> to vector<1x2xf32>
      %753 = vector.broadcast %631 : vector<24x1xf32> to vector<24x2xf32>
      %754 = vector.broadcast %752 : vector<1x2xf32> to vector<24x2xf32>
      %755 = arith.mulf %753, %754 : vector<24x2xf32>
      %756 = arith.addf %751, %755 : vector<24x2xf32>
      %757 = vector.extract_strided_slice %743 {offsets = [2, 0], sizes = [1, 2], strides = [1, 1]} : vector<8x2xf32> to vector<1x2xf32>
      %758 = vector.broadcast %632 : vector<24x1xf32> to vector<24x2xf32>
      %759 = vector.broadcast %757 : vector<1x2xf32> to vector<24x2xf32>
      %760 = arith.mulf %758, %759 : vector<24x2xf32>
      %761 = arith.addf %756, %760 : vector<24x2xf32>
      %762 = vector.extract_strided_slice %747 {offsets = [0, 0], sizes = [16, 2], strides = [1, 1]} : vector<24x2xf32> to vector<16x2xf32>
      %763 = vector.extract_strided_slice %761 {offsets = [0, 0], sizes = [16, 2], strides = [1, 1]} : vector<24x2xf32> to vector<16x2xf32>
      %764 = arith.addf %762, %763 : vector<16x2xf32>
      %cst_375 = arith.constant 5.000000e-01 : f32
      %765 = vector.broadcast %cst_375 : f32 to vector<16x2xf32>
      %766 = arith.mulf %765, %764 : vector<16x2xf32>
      %767 = math.tanh %766 : vector<16x2xf32>
      %cst_376 = arith.constant 5.000000e-01 : f32
      %768 = vector.broadcast %cst_376 : f32 to vector<16x2xf32>
      %769 = arith.mulf %768, %767 : vector<16x2xf32>
      %cst_377 = arith.constant 5.000000e-01 : f32
      %770 = vector.broadcast %cst_377 : f32 to vector<16x2xf32>
      %771 = arith.addf %769, %770 : vector<16x2xf32>
      %772 = vector.extract_strided_slice %771 {offsets = [0, 0], sizes = [8, 2], strides = [1, 1]} : vector<16x2xf32> to vector<8x2xf32>
      %773 = vector.extract_strided_slice %771 {offsets = [8, 0], sizes = [8, 2], strides = [1, 1]} : vector<16x2xf32> to vector<8x2xf32>
      %774 = vector.extract_strided_slice %747 {offsets = [16, 0], sizes = [8, 2], strides = [1, 1]} : vector<24x2xf32> to vector<8x2xf32>
      %775 = vector.extract_strided_slice %761 {offsets = [16, 0], sizes = [8, 2], strides = [1, 1]} : vector<24x2xf32> to vector<8x2xf32>
      %776 = vector.broadcast %633 : vector<8x1xf32> to vector<8x2xf32>
      %777 = arith.addf %775, %776 : vector<8x2xf32>
      %778 = arith.mulf %772, %777 : vector<8x2xf32>
      %779 = arith.addf %774, %778 : vector<8x2xf32>
      %780 = math.tanh %779 : vector<8x2xf32>
      %781 = arith.subf %743, %780 : vector<8x2xf32>
      %782 = arith.mulf %773, %781 : vector<8x2xf32>
      %783 = arith.addf %780, %782 : vector<8x2xf32>
      %c2_i32 = arith.constant 2 : i32
      %784 = arith.addi %703, %c2_i32 : i32
      %785 = arith.index_cast %784 : i32 to index
      %c0_378 = arith.constant 0 : index
      %c0_379 = arith.constant 0 : index
      %786 = vector.load %arg24[%785, %c0_378, %c0_379] : memref<128x24x2xf32, #tpu.memory_space<vmem>>, vector<1x24x2xf32>
      %787 = vector.shape_cast %786 : vector<1x24x2xf32> to vector<24x2xf32>
      %788 = vector.extract_strided_slice %783 {offsets = [0, 0], sizes = [1, 2], strides = [1, 1]} : vector<8x2xf32> to vector<1x2xf32>
      %789 = vector.broadcast %630 : vector<24x1xf32> to vector<24x2xf32>
      %790 = vector.broadcast %788 : vector<1x2xf32> to vector<24x2xf32>
      %791 = arith.mulf %789, %790 : vector<24x2xf32>
      %792 = vector.extract_strided_slice %783 {offsets = [1, 0], sizes = [1, 2], strides = [1, 1]} : vector<8x2xf32> to vector<1x2xf32>
      %793 = vector.broadcast %631 : vector<24x1xf32> to vector<24x2xf32>
      %794 = vector.broadcast %792 : vector<1x2xf32> to vector<24x2xf32>
      %795 = arith.mulf %793, %794 : vector<24x2xf32>
      %796 = arith.addf %791, %795 : vector<24x2xf32>
      %797 = vector.extract_strided_slice %783 {offsets = [2, 0], sizes = [1, 2], strides = [1, 1]} : vector<8x2xf32> to vector<1x2xf32>
      %798 = vector.broadcast %632 : vector<24x1xf32> to vector<24x2xf32>
      %799 = vector.broadcast %797 : vector<1x2xf32> to vector<24x2xf32>
      %800 = arith.mulf %798, %799 : vector<24x2xf32>
      %801 = arith.addf %796, %800 : vector<24x2xf32>
      %802 = vector.extract_strided_slice %787 {offsets = [0, 0], sizes = [16, 2], strides = [1, 1]} : vector<24x2xf32> to vector<16x2xf32>
      %803 = vector.extract_strided_slice %801 {offsets = [0, 0], sizes = [16, 2], strides = [1, 1]} : vector<24x2xf32> to vector<16x2xf32>
      %804 = arith.addf %802, %803 : vector<16x2xf32>
      %cst_380 = arith.constant 5.000000e-01 : f32
      %805 = vector.broadcast %cst_380 : f32 to vector<16x2xf32>
      %806 = arith.mulf %805, %804 : vector<16x2xf32>
      %807 = math.tanh %806 : vector<16x2xf32>
      %cst_381 = arith.constant 5.000000e-01 : f32
      %808 = vector.broadcast %cst_381 : f32 to vector<16x2xf32>
      %809 = arith.mulf %808, %807 : vector<16x2xf32>
      %cst_382 = arith.constant 5.000000e-01 : f32
      %810 = vector.broadcast %cst_382 : f32 to vector<16x2xf32>
      %811 = arith.addf %809, %810 : vector<16x2xf32>
      %812 = vector.extract_strided_slice %811 {offsets = [0, 0], sizes = [8, 2], strides = [1, 1]} : vector<16x2xf32> to vector<8x2xf32>
      %813 = vector.extract_strided_slice %811 {offsets = [8, 0], sizes = [8, 2], strides = [1, 1]} : vector<16x2xf32> to vector<8x2xf32>
      %814 = vector.extract_strided_slice %787 {offsets = [16, 0], sizes = [8, 2], strides = [1, 1]} : vector<24x2xf32> to vector<8x2xf32>
      %815 = vector.extract_strided_slice %801 {offsets = [16, 0], sizes = [8, 2], strides = [1, 1]} : vector<24x2xf32> to vector<8x2xf32>
      %816 = vector.broadcast %633 : vector<8x1xf32> to vector<8x2xf32>
      %817 = arith.addf %815, %816 : vector<8x2xf32>
      %818 = arith.mulf %812, %817 : vector<8x2xf32>
      %819 = arith.addf %814, %818 : vector<8x2xf32>
      %820 = math.tanh %819 : vector<8x2xf32>
      %821 = arith.subf %783, %820 : vector<8x2xf32>
      %822 = arith.mulf %813, %821 : vector<8x2xf32>
      %823 = arith.addf %820, %822 : vector<8x2xf32>
      %c3_i32 = arith.constant 3 : i32
      %824 = arith.addi %703, %c3_i32 : i32
      %825 = arith.index_cast %824 : i32 to index
      %c0_383 = arith.constant 0 : index
      %c0_384 = arith.constant 0 : index
      %826 = vector.load %arg24[%825, %c0_383, %c0_384] : memref<128x24x2xf32, #tpu.memory_space<vmem>>, vector<1x24x2xf32>
      %827 = vector.shape_cast %826 : vector<1x24x2xf32> to vector<24x2xf32>
      %828 = vector.extract_strided_slice %823 {offsets = [0, 0], sizes = [1, 2], strides = [1, 1]} : vector<8x2xf32> to vector<1x2xf32>
      %829 = vector.broadcast %630 : vector<24x1xf32> to vector<24x2xf32>
      %830 = vector.broadcast %828 : vector<1x2xf32> to vector<24x2xf32>
      %831 = arith.mulf %829, %830 : vector<24x2xf32>
      %832 = vector.extract_strided_slice %823 {offsets = [1, 0], sizes = [1, 2], strides = [1, 1]} : vector<8x2xf32> to vector<1x2xf32>
      %833 = vector.broadcast %631 : vector<24x1xf32> to vector<24x2xf32>
      %834 = vector.broadcast %832 : vector<1x2xf32> to vector<24x2xf32>
      %835 = arith.mulf %833, %834 : vector<24x2xf32>
      %836 = arith.addf %831, %835 : vector<24x2xf32>
      %837 = vector.extract_strided_slice %823 {offsets = [2, 0], sizes = [1, 2], strides = [1, 1]} : vector<8x2xf32> to vector<1x2xf32>
      %838 = vector.broadcast %632 : vector<24x1xf32> to vector<24x2xf32>
      %839 = vector.broadcast %837 : vector<1x2xf32> to vector<24x2xf32>
      %840 = arith.mulf %838, %839 : vector<24x2xf32>
      %841 = arith.addf %836, %840 : vector<24x2xf32>
      %842 = vector.extract_strided_slice %827 {offsets = [0, 0], sizes = [16, 2], strides = [1, 1]} : vector<24x2xf32> to vector<16x2xf32>
      %843 = vector.extract_strided_slice %841 {offsets = [0, 0], sizes = [16, 2], strides = [1, 1]} : vector<24x2xf32> to vector<16x2xf32>
      %844 = arith.addf %842, %843 : vector<16x2xf32>
      %cst_385 = arith.constant 5.000000e-01 : f32
      %845 = vector.broadcast %cst_385 : f32 to vector<16x2xf32>
      %846 = arith.mulf %845, %844 : vector<16x2xf32>
      %847 = math.tanh %846 : vector<16x2xf32>
      %cst_386 = arith.constant 5.000000e-01 : f32
      %848 = vector.broadcast %cst_386 : f32 to vector<16x2xf32>
      %849 = arith.mulf %848, %847 : vector<16x2xf32>
      %cst_387 = arith.constant 5.000000e-01 : f32
      %850 = vector.broadcast %cst_387 : f32 to vector<16x2xf32>
      %851 = arith.addf %849, %850 : vector<16x2xf32>
      %852 = vector.extract_strided_slice %851 {offsets = [0, 0], sizes = [8, 2], strides = [1, 1]} : vector<16x2xf32> to vector<8x2xf32>
      %853 = vector.extract_strided_slice %851 {offsets = [8, 0], sizes = [8, 2], strides = [1, 1]} : vector<16x2xf32> to vector<8x2xf32>
      %854 = vector.extract_strided_slice %827 {offsets = [16, 0], sizes = [8, 2], strides = [1, 1]} : vector<24x2xf32> to vector<8x2xf32>
      %855 = vector.extract_strided_slice %841 {offsets = [16, 0], sizes = [8, 2], strides = [1, 1]} : vector<24x2xf32> to vector<8x2xf32>
      %856 = vector.broadcast %633 : vector<8x1xf32> to vector<8x2xf32>
      %857 = arith.addf %855, %856 : vector<8x2xf32>
      %858 = arith.mulf %852, %857 : vector<8x2xf32>
      %859 = arith.addf %854, %858 : vector<8x2xf32>
      %860 = math.tanh %859 : vector<8x2xf32>
      %861 = arith.subf %823, %860 : vector<8x2xf32>
      %862 = arith.mulf %853, %861 : vector<8x2xf32>
      %863 = arith.addf %860, %862 : vector<8x2xf32>
      %c4_i32 = arith.constant 4 : i32
      %864 = arith.addi %703, %c4_i32 : i32
      %865 = arith.index_cast %864 : i32 to index
      %c0_388 = arith.constant 0 : index
      %c0_389 = arith.constant 0 : index
      %866 = vector.load %arg24[%865, %c0_388, %c0_389] : memref<128x24x2xf32, #tpu.memory_space<vmem>>, vector<1x24x2xf32>
      %867 = vector.shape_cast %866 : vector<1x24x2xf32> to vector<24x2xf32>
      %868 = vector.extract_strided_slice %863 {offsets = [0, 0], sizes = [1, 2], strides = [1, 1]} : vector<8x2xf32> to vector<1x2xf32>
      %869 = vector.broadcast %630 : vector<24x1xf32> to vector<24x2xf32>
      %870 = vector.broadcast %868 : vector<1x2xf32> to vector<24x2xf32>
      %871 = arith.mulf %869, %870 : vector<24x2xf32>
      %872 = vector.extract_strided_slice %863 {offsets = [1, 0], sizes = [1, 2], strides = [1, 1]} : vector<8x2xf32> to vector<1x2xf32>
      %873 = vector.broadcast %631 : vector<24x1xf32> to vector<24x2xf32>
      %874 = vector.broadcast %872 : vector<1x2xf32> to vector<24x2xf32>
      %875 = arith.mulf %873, %874 : vector<24x2xf32>
      %876 = arith.addf %871, %875 : vector<24x2xf32>
      %877 = vector.extract_strided_slice %863 {offsets = [2, 0], sizes = [1, 2], strides = [1, 1]} : vector<8x2xf32> to vector<1x2xf32>
      %878 = vector.broadcast %632 : vector<24x1xf32> to vector<24x2xf32>
      %879 = vector.broadcast %877 : vector<1x2xf32> to vector<24x2xf32>
      %880 = arith.mulf %878, %879 : vector<24x2xf32>
      %881 = arith.addf %876, %880 : vector<24x2xf32>
      %882 = vector.extract_strided_slice %867 {offsets = [0, 0], sizes = [16, 2], strides = [1, 1]} : vector<24x2xf32> to vector<16x2xf32>
      %883 = vector.extract_strided_slice %881 {offsets = [0, 0], sizes = [16, 2], strides = [1, 1]} : vector<24x2xf32> to vector<16x2xf32>
      %884 = arith.addf %882, %883 : vector<16x2xf32>
      %cst_390 = arith.constant 5.000000e-01 : f32
      %885 = vector.broadcast %cst_390 : f32 to vector<16x2xf32>
      %886 = arith.mulf %885, %884 : vector<16x2xf32>
      %887 = math.tanh %886 : vector<16x2xf32>
      %cst_391 = arith.constant 5.000000e-01 : f32
      %888 = vector.broadcast %cst_391 : f32 to vector<16x2xf32>
      %889 = arith.mulf %888, %887 : vector<16x2xf32>
      %cst_392 = arith.constant 5.000000e-01 : f32
      %890 = vector.broadcast %cst_392 : f32 to vector<16x2xf32>
      %891 = arith.addf %889, %890 : vector<16x2xf32>
      %892 = vector.extract_strided_slice %891 {offsets = [0, 0], sizes = [8, 2], strides = [1, 1]} : vector<16x2xf32> to vector<8x2xf32>
      %893 = vector.extract_strided_slice %891 {offsets = [8, 0], sizes = [8, 2], strides = [1, 1]} : vector<16x2xf32> to vector<8x2xf32>
      %894 = vector.extract_strided_slice %867 {offsets = [16, 0], sizes = [8, 2], strides = [1, 1]} : vector<24x2xf32> to vector<8x2xf32>
      %895 = vector.extract_strided_slice %881 {offsets = [16, 0], sizes = [8, 2], strides = [1, 1]} : vector<24x2xf32> to vector<8x2xf32>
      %896 = vector.broadcast %633 : vector<8x1xf32> to vector<8x2xf32>
      %897 = arith.addf %895, %896 : vector<8x2xf32>
      %898 = arith.mulf %892, %897 : vector<8x2xf32>
      %899 = arith.addf %894, %898 : vector<8x2xf32>
      %900 = math.tanh %899 : vector<8x2xf32>
      %901 = arith.subf %863, %900 : vector<8x2xf32>
      %902 = arith.mulf %893, %901 : vector<8x2xf32>
      %903 = arith.addf %900, %902 : vector<8x2xf32>
      %c5_i32 = arith.constant 5 : i32
      %904 = arith.addi %703, %c5_i32 : i32
      %905 = arith.index_cast %904 : i32 to index
      %c0_393 = arith.constant 0 : index
      %c0_394 = arith.constant 0 : index
      %906 = vector.load %arg24[%905, %c0_393, %c0_394] : memref<128x24x2xf32, #tpu.memory_space<vmem>>, vector<1x24x2xf32>
      %907 = vector.shape_cast %906 : vector<1x24x2xf32> to vector<24x2xf32>
      %908 = vector.extract_strided_slice %903 {offsets = [0, 0], sizes = [1, 2], strides = [1, 1]} : vector<8x2xf32> to vector<1x2xf32>
      %909 = vector.broadcast %630 : vector<24x1xf32> to vector<24x2xf32>
      %910 = vector.broadcast %908 : vector<1x2xf32> to vector<24x2xf32>
      %911 = arith.mulf %909, %910 : vector<24x2xf32>
      %912 = vector.extract_strided_slice %903 {offsets = [1, 0], sizes = [1, 2], strides = [1, 1]} : vector<8x2xf32> to vector<1x2xf32>
      %913 = vector.broadcast %631 : vector<24x1xf32> to vector<24x2xf32>
      %914 = vector.broadcast %912 : vector<1x2xf32> to vector<24x2xf32>
      %915 = arith.mulf %913, %914 : vector<24x2xf32>
      %916 = arith.addf %911, %915 : vector<24x2xf32>
      %917 = vector.extract_strided_slice %903 {offsets = [2, 0], sizes = [1, 2], strides = [1, 1]} : vector<8x2xf32> to vector<1x2xf32>
      %918 = vector.broadcast %632 : vector<24x1xf32> to vector<24x2xf32>
      %919 = vector.broadcast %917 : vector<1x2xf32> to vector<24x2xf32>
      %920 = arith.mulf %918, %919 : vector<24x2xf32>
      %921 = arith.addf %916, %920 : vector<24x2xf32>
      %922 = vector.extract_strided_slice %907 {offsets = [0, 0], sizes = [16, 2], strides = [1, 1]} : vector<24x2xf32> to vector<16x2xf32>
      %923 = vector.extract_strided_slice %921 {offsets = [0, 0], sizes = [16, 2], strides = [1, 1]} : vector<24x2xf32> to vector<16x2xf32>
      %924 = arith.addf %922, %923 : vector<16x2xf32>
      %cst_395 = arith.constant 5.000000e-01 : f32
      %925 = vector.broadcast %cst_395 : f32 to vector<16x2xf32>
      %926 = arith.mulf %925, %924 : vector<16x2xf32>
      %927 = math.tanh %926 : vector<16x2xf32>
      %cst_396 = arith.constant 5.000000e-01 : f32
      %928 = vector.broadcast %cst_396 : f32 to vector<16x2xf32>
      %929 = arith.mulf %928, %927 : vector<16x2xf32>
      %cst_397 = arith.constant 5.000000e-01 : f32
      %930 = vector.broadcast %cst_397 : f32 to vector<16x2xf32>
      %931 = arith.addf %929, %930 : vector<16x2xf32>
      %932 = vector.extract_strided_slice %931 {offsets = [0, 0], sizes = [8, 2], strides = [1, 1]} : vector<16x2xf32> to vector<8x2xf32>
      %933 = vector.extract_strided_slice %931 {offsets = [8, 0], sizes = [8, 2], strides = [1, 1]} : vector<16x2xf32> to vector<8x2xf32>
      %934 = vector.extract_strided_slice %907 {offsets = [16, 0], sizes = [8, 2], strides = [1, 1]} : vector<24x2xf32> to vector<8x2xf32>
      %935 = vector.extract_strided_slice %921 {offsets = [16, 0], sizes = [8, 2], strides = [1, 1]} : vector<24x2xf32> to vector<8x2xf32>
      %936 = vector.broadcast %633 : vector<8x1xf32> to vector<8x2xf32>
      %937 = arith.addf %935, %936 : vector<8x2xf32>
      %938 = arith.mulf %932, %937 : vector<8x2xf32>
      %939 = arith.addf %934, %938 : vector<8x2xf32>
      %940 = math.tanh %939 : vector<8x2xf32>
      %941 = arith.subf %903, %940 : vector<8x2xf32>
      %942 = arith.mulf %933, %941 : vector<8x2xf32>
      %943 = arith.addf %940, %942 : vector<8x2xf32>
      %c6_i32 = arith.constant 6 : i32
      %944 = arith.addi %703, %c6_i32 : i32
      %945 = arith.index_cast %944 : i32 to index
      %c0_398 = arith.constant 0 : index
      %c0_399 = arith.constant 0 : index
      %946 = vector.load %arg24[%945, %c0_398, %c0_399] : memref<128x24x2xf32, #tpu.memory_space<vmem>>, vector<1x24x2xf32>
      %947 = vector.shape_cast %946 : vector<1x24x2xf32> to vector<24x2xf32>
      %948 = vector.extract_strided_slice %943 {offsets = [0, 0], sizes = [1, 2], strides = [1, 1]} : vector<8x2xf32> to vector<1x2xf32>
      %949 = vector.broadcast %630 : vector<24x1xf32> to vector<24x2xf32>
      %950 = vector.broadcast %948 : vector<1x2xf32> to vector<24x2xf32>
      %951 = arith.mulf %949, %950 : vector<24x2xf32>
      %952 = vector.extract_strided_slice %943 {offsets = [1, 0], sizes = [1, 2], strides = [1, 1]} : vector<8x2xf32> to vector<1x2xf32>
      %953 = vector.broadcast %631 : vector<24x1xf32> to vector<24x2xf32>
      %954 = vector.broadcast %952 : vector<1x2xf32> to vector<24x2xf32>
      %955 = arith.mulf %953, %954 : vector<24x2xf32>
      %956 = arith.addf %951, %955 : vector<24x2xf32>
      %957 = vector.extract_strided_slice %943 {offsets = [2, 0], sizes = [1, 2], strides = [1, 1]} : vector<8x2xf32> to vector<1x2xf32>
      %958 = vector.broadcast %632 : vector<24x1xf32> to vector<24x2xf32>
      %959 = vector.broadcast %957 : vector<1x2xf32> to vector<24x2xf32>
      %960 = arith.mulf %958, %959 : vector<24x2xf32>
      %961 = arith.addf %956, %960 : vector<24x2xf32>
      %962 = vector.extract_strided_slice %947 {offsets = [0, 0], sizes = [16, 2], strides = [1, 1]} : vector<24x2xf32> to vector<16x2xf32>
      %963 = vector.extract_strided_slice %961 {offsets = [0, 0], sizes = [16, 2], strides = [1, 1]} : vector<24x2xf32> to vector<16x2xf32>
      %964 = arith.addf %962, %963 : vector<16x2xf32>
      %cst_400 = arith.constant 5.000000e-01 : f32
      %965 = vector.broadcast %cst_400 : f32 to vector<16x2xf32>
      %966 = arith.mulf %965, %964 : vector<16x2xf32>
      %967 = math.tanh %966 : vector<16x2xf32>
      %cst_401 = arith.constant 5.000000e-01 : f32
      %968 = vector.broadcast %cst_401 : f32 to vector<16x2xf32>
      %969 = arith.mulf %968, %967 : vector<16x2xf32>
      %cst_402 = arith.constant 5.000000e-01 : f32
      %970 = vector.broadcast %cst_402 : f32 to vector<16x2xf32>
      %971 = arith.addf %969, %970 : vector<16x2xf32>
      %972 = vector.extract_strided_slice %971 {offsets = [0, 0], sizes = [8, 2], strides = [1, 1]} : vector<16x2xf32> to vector<8x2xf32>
      %973 = vector.extract_strided_slice %971 {offsets = [8, 0], sizes = [8, 2], strides = [1, 1]} : vector<16x2xf32> to vector<8x2xf32>
      %974 = vector.extract_strided_slice %947 {offsets = [16, 0], sizes = [8, 2], strides = [1, 1]} : vector<24x2xf32> to vector<8x2xf32>
      %975 = vector.extract_strided_slice %961 {offsets = [16, 0], sizes = [8, 2], strides = [1, 1]} : vector<24x2xf32> to vector<8x2xf32>
      %976 = vector.broadcast %633 : vector<8x1xf32> to vector<8x2xf32>
      %977 = arith.addf %975, %976 : vector<8x2xf32>
      %978 = arith.mulf %972, %977 : vector<8x2xf32>
      %979 = arith.addf %974, %978 : vector<8x2xf32>
      %980 = math.tanh %979 : vector<8x2xf32>
      %981 = arith.subf %943, %980 : vector<8x2xf32>
      %982 = arith.mulf %973, %981 : vector<8x2xf32>
      %983 = arith.addf %980, %982 : vector<8x2xf32>
      %c7_i32 = arith.constant 7 : i32
      %984 = arith.addi %703, %c7_i32 : i32
      %985 = arith.index_cast %984 : i32 to index
      %c0_403 = arith.constant 0 : index
      %c0_404 = arith.constant 0 : index
      %986 = vector.load %arg24[%985, %c0_403, %c0_404] : memref<128x24x2xf32, #tpu.memory_space<vmem>>, vector<1x24x2xf32>
      %987 = vector.shape_cast %986 : vector<1x24x2xf32> to vector<24x2xf32>
      %988 = vector.extract_strided_slice %983 {offsets = [0, 0], sizes = [1, 2], strides = [1, 1]} : vector<8x2xf32> to vector<1x2xf32>
      %989 = vector.broadcast %630 : vector<24x1xf32> to vector<24x2xf32>
      %990 = vector.broadcast %988 : vector<1x2xf32> to vector<24x2xf32>
      %991 = arith.mulf %989, %990 : vector<24x2xf32>
      %992 = vector.extract_strided_slice %983 {offsets = [1, 0], sizes = [1, 2], strides = [1, 1]} : vector<8x2xf32> to vector<1x2xf32>
      %993 = vector.broadcast %631 : vector<24x1xf32> to vector<24x2xf32>
      %994 = vector.broadcast %992 : vector<1x2xf32> to vector<24x2xf32>
      %995 = arith.mulf %993, %994 : vector<24x2xf32>
      %996 = arith.addf %991, %995 : vector<24x2xf32>
      %997 = vector.extract_strided_slice %983 {offsets = [2, 0], sizes = [1, 2], strides = [1, 1]} : vector<8x2xf32> to vector<1x2xf32>
      %998 = vector.broadcast %632 : vector<24x1xf32> to vector<24x2xf32>
      %999 = vector.broadcast %997 : vector<1x2xf32> to vector<24x2xf32>
      %1000 = arith.mulf %998, %999 : vector<24x2xf32>
      %1001 = arith.addf %996, %1000 : vector<24x2xf32>
      %1002 = vector.extract_strided_slice %987 {offsets = [0, 0], sizes = [16, 2], strides = [1, 1]} : vector<24x2xf32> to vector<16x2xf32>
      %1003 = vector.extract_strided_slice %1001 {offsets = [0, 0], sizes = [16, 2], strides = [1, 1]} : vector<24x2xf32> to vector<16x2xf32>
      %1004 = arith.addf %1002, %1003 : vector<16x2xf32>
      %cst_405 = arith.constant 5.000000e-01 : f32
      %1005 = vector.broadcast %cst_405 : f32 to vector<16x2xf32>
      %1006 = arith.mulf %1005, %1004 : vector<16x2xf32>
      %1007 = math.tanh %1006 : vector<16x2xf32>
      %cst_406 = arith.constant 5.000000e-01 : f32
      %1008 = vector.broadcast %cst_406 : f32 to vector<16x2xf32>
      %1009 = arith.mulf %1008, %1007 : vector<16x2xf32>
      %cst_407 = arith.constant 5.000000e-01 : f32
      %1010 = vector.broadcast %cst_407 : f32 to vector<16x2xf32>
      %1011 = arith.addf %1009, %1010 : vector<16x2xf32>
      %1012 = vector.extract_strided_slice %1011 {offsets = [0, 0], sizes = [8, 2], strides = [1, 1]} : vector<16x2xf32> to vector<8x2xf32>
      %1013 = vector.extract_strided_slice %1011 {offsets = [8, 0], sizes = [8, 2], strides = [1, 1]} : vector<16x2xf32> to vector<8x2xf32>
      %1014 = vector.extract_strided_slice %987 {offsets = [16, 0], sizes = [8, 2], strides = [1, 1]} : vector<24x2xf32> to vector<8x2xf32>
      %1015 = vector.extract_strided_slice %1001 {offsets = [16, 0], sizes = [8, 2], strides = [1, 1]} : vector<24x2xf32> to vector<8x2xf32>
      %1016 = vector.broadcast %633 : vector<8x1xf32> to vector<8x2xf32>
      %1017 = arith.addf %1015, %1016 : vector<8x2xf32>
      %1018 = arith.mulf %1012, %1017 : vector<8x2xf32>
      %1019 = arith.addf %1014, %1018 : vector<8x2xf32>
      %1020 = math.tanh %1019 : vector<8x2xf32>
      %1021 = arith.subf %983, %1020 : vector<8x2xf32>
      %1022 = arith.mulf %1013, %1021 : vector<8x2xf32>
      %1023 = arith.addf %1020, %1022 : vector<8x2xf32>
      scf.yield %1023 : vector<8x2xf32>
    }
    %c16_i32_320 = arith.constant 16 : i32
    %c0_321 = arith.constant 0 : index
    %c0_322 = arith.constant 0 : index
    %637 = vector.load %arg9[%c0_321, %c0_322] : memref<96x8xf32, #tpu.memory_space<vmem>>, vector<96x8xf32>
    %cst_323 = arith.constant dense<0.000000e+00> : vector<96x2xf32>
    %638 = tpu.matmul %637, %636, %cst_323 {dimension_numbers = #tpu.dot_dimension_numbers<[1], [0], [0], [1], [0, 0, 1, 1], [], []>} : vector<96x8xf32>, vector<8x2xf32>, vector<96x2xf32> -> vector<96x2xf32>
    %c0_324 = arith.constant 0 : index
    %c0_325 = arith.constant 0 : index
    %639 = vector.load %arg10[%c0_324, %c0_325] : memref<96x1xf32, #tpu.memory_space<vmem>>, vector<96x1xf32>
    %640 = vector.broadcast %639 : vector<96x1xf32> to vector<96x2xf32>
    %641 = arith.addf %638, %640 : vector<96x2xf32>
    %cst_326 = arith.constant 0.000000e+00 : f32
    %642 = vector.broadcast %cst_326 : f32 to vector<96x2xf32>
    %643 = arith.maximumf %641, %642 : vector<96x2xf32>
    %c0_327 = arith.constant 0 : index
    %c0_328 = arith.constant 0 : index
    %644 = vector.load %arg11[%c0_327, %c0_328] : memref<16x96xf32, #tpu.memory_space<vmem>>, vector<16x96xf32>
    %cst_329 = arith.constant dense<0.000000e+00> : vector<16x2xf32>
    %645 = tpu.matmul %644, %643, %cst_329 {dimension_numbers = #tpu.dot_dimension_numbers<[1], [0], [0], [1], [0, 0, 1, 1], [], []>} : vector<16x96xf32>, vector<96x2xf32>, vector<16x2xf32> -> vector<16x2xf32>
    %c0_330 = arith.constant 0 : index
    %c0_331 = arith.constant 0 : index
    %646 = vector.load %arg12[%c0_330, %c0_331] : memref<16x1xf32, #tpu.memory_space<vmem>>, vector<16x1xf32>
    %647 = vector.broadcast %646 : vector<16x1xf32> to vector<16x2xf32>
    %648 = arith.addf %645, %647 : vector<16x2xf32>
    %c0_332 = arith.constant 0 : index
    %c0_333 = arith.constant 0 : index
    %649 = vector.load %arg13[%c0_332, %c0_333] : memref<10x1xf32, #tpu.memory_space<vmem>>, vector<10x1xf32>
    %c0_334 = arith.constant 0 : index
    %c0_335 = arith.constant 0 : index
    %650 = vector.load %arg19[%c0_334, %c0_335] : memref<1x2xf32, #tpu.memory_space<vmem>>, vector<1x2xf32>
    %651 = vector.broadcast %649 : vector<10x1xf32> to vector<10x2xf32>
    %652 = vector.broadcast %650 : vector<1x2xf32> to vector<10x2xf32>
    %653 = arith.mulf %651, %652 : vector<10x2xf32>
    %c0_336 = arith.constant 0 : index
    %c0_337 = arith.constant 0 : index
    %654 = vector.load %arg14[%c0_336, %c0_337] : memref<10x16xf32, #tpu.memory_space<vmem>>, vector<10x16xf32>
    %cst_338 = arith.constant dense<0.000000e+00> : vector<10x2xf32>
    %655 = tpu.matmul %654, %648, %cst_338 {dimension_numbers = #tpu.dot_dimension_numbers<[1], [0], [0], [1], [0, 0, 1, 1], [], []>} : vector<10x16xf32>, vector<16x2xf32>, vector<10x2xf32> -> vector<10x2xf32>
    %656 = arith.addf %653, %655 : vector<10x2xf32>
    %c0_339 = arith.constant 0 : index
    %c0_340 = arith.constant 0 : index
    %657 = vector.load %arg15[%c0_339, %c0_340] : memref<10x1xf32, #tpu.memory_space<vmem>>, vector<10x1xf32>
    %658 = vector.broadcast %657 : vector<10x1xf32> to vector<10x2xf32>
    %659 = arith.addf %656, %658 : vector<10x2xf32>
    %c0_341 = arith.constant 0 : index
    %c0_342 = arith.constant 0 : index
    %660 = vector.load %arg16[%c0_341, %c0_342] : memref<64x10xf32, #tpu.memory_space<vmem>>, vector<64x10xf32>
    %cst_343 = arith.constant dense<0.000000e+00> : vector<64x2xf32>
    %661 = tpu.matmul %660, %659, %cst_343 {dimension_numbers = #tpu.dot_dimension_numbers<[1], [0], [0], [1], [0, 0, 1, 1], [], []>} : vector<64x10xf32>, vector<10x2xf32>, vector<64x2xf32> -> vector<64x2xf32>
    %c0_344 = arith.constant 0 : index
    %c0_345 = arith.constant 0 : index
    %662 = vector.load %arg17[%c0_344, %c0_345] : memref<64x10xf32, #tpu.memory_space<vmem>>, vector<64x10xf32>
    %c0_346 = arith.constant 0 : index
    %c0_347 = arith.constant 0 : index
    %663 = vector.load %arg20[%c0_346, %c0_347] : memref<10x2xf32, #tpu.memory_space<vmem>>, vector<10x2xf32>
    %cst_348 = arith.constant dense<0.000000e+00> : vector<64x2xf32>
    %664 = tpu.matmul %662, %663, %cst_348 {dimension_numbers = #tpu.dot_dimension_numbers<[1], [0], [0], [1], [0, 0, 1, 1], [], []>} : vector<64x10xf32>, vector<10x2xf32>, vector<64x2xf32> -> vector<64x2xf32>
    %665 = arith.addf %661, %664 : vector<64x2xf32>
    %c0_349 = arith.constant 0 : index
    %c0_350 = arith.constant 0 : index
    %666 = vector.load %arg18[%c0_349, %c0_350] : memref<64x1xf32, #tpu.memory_space<vmem>>, vector<64x1xf32>
    %667 = vector.broadcast %666 : vector<64x1xf32> to vector<64x2xf32>
    %668 = arith.addf %665, %667 : vector<64x2xf32>
    %669 = vector.extract_strided_slice %668 {offsets = [0, 0], sizes = [16, 2], strides = [1, 1]} : vector<64x2xf32> to vector<16x2xf32>
    %cst_351 = arith.constant 5.000000e-01 : f32
    %670 = vector.broadcast %cst_351 : f32 to vector<16x2xf32>
    %671 = arith.mulf %670, %669 : vector<16x2xf32>
    %672 = math.tanh %671 : vector<16x2xf32>
    %cst_352 = arith.constant 5.000000e-01 : f32
    %673 = vector.broadcast %cst_352 : f32 to vector<16x2xf32>
    %674 = arith.mulf %673, %672 : vector<16x2xf32>
    %cst_353 = arith.constant 5.000000e-01 : f32
    %675 = vector.broadcast %cst_353 : f32 to vector<16x2xf32>
    %676 = arith.addf %674, %675 : vector<16x2xf32>
    %677 = vector.extract_strided_slice %668 {offsets = [16, 0], sizes = [16, 2], strides = [1, 1]} : vector<64x2xf32> to vector<16x2xf32>
    %cst_354 = arith.constant 5.000000e-01 : f32
    %678 = vector.broadcast %cst_354 : f32 to vector<16x2xf32>
    %679 = arith.mulf %678, %677 : vector<16x2xf32>
    %680 = math.tanh %679 : vector<16x2xf32>
    %cst_355 = arith.constant 5.000000e-01 : f32
    %681 = vector.broadcast %cst_355 : f32 to vector<16x2xf32>
    %682 = arith.mulf %681, %680 : vector<16x2xf32>
    %cst_356 = arith.constant 5.000000e-01 : f32
    %683 = vector.broadcast %cst_356 : f32 to vector<16x2xf32>
    %684 = arith.addf %682, %683 : vector<16x2xf32>
    %685 = vector.extract_strided_slice %668 {offsets = [32, 0], sizes = [16, 2], strides = [1, 1]} : vector<64x2xf32> to vector<16x2xf32>
    %686 = math.tanh %685 : vector<16x2xf32>
    %687 = vector.extract_strided_slice %668 {offsets = [48, 0], sizes = [16, 2], strides = [1, 1]} : vector<64x2xf32> to vector<16x2xf32>
    %cst_357 = arith.constant 5.000000e-01 : f32
    %688 = vector.broadcast %cst_357 : f32 to vector<16x2xf32>
    %689 = arith.mulf %688, %687 : vector<16x2xf32>
    %690 = math.tanh %689 : vector<16x2xf32>
    %cst_358 = arith.constant 5.000000e-01 : f32
    %691 = vector.broadcast %cst_358 : f32 to vector<16x2xf32>
    %692 = arith.mulf %691, %690 : vector<16x2xf32>
    %cst_359 = arith.constant 5.000000e-01 : f32
    %693 = vector.broadcast %cst_359 : f32 to vector<16x2xf32>
    %694 = arith.addf %692, %693 : vector<16x2xf32>
    %c0_360 = arith.constant 0 : index
    %c0_361 = arith.constant 0 : index
    %695 = vector.load %arg21[%c0_360, %c0_361] : memref<16x2xf32, #tpu.memory_space<vmem>>, vector<16x2xf32>
    %696 = arith.mulf %684, %695 : vector<16x2xf32>
    %697 = arith.mulf %676, %686 : vector<16x2xf32>
    %698 = arith.addf %696, %697 : vector<16x2xf32>
    %699 = math.tanh %698 : vector<16x2xf32>
    %700 = arith.mulf %694, %699 : vector<16x2xf32>
    %c0_362 = arith.constant 0 : index
    %c0_363 = arith.constant 0 : index
    %701 = vector.load %arg22[%c0_362, %c0_363] : memref<16x2xf32, #tpu.memory_space<vmem>>, vector<16x2xf32>
    tpu.vector_store %arg22[%c0_362, %c0_363], %700 {strides = array<i32>} : memref<16x2xf32, #tpu.memory_space<vmem>>, vector<16x2xf32>,
    %c0_364 = arith.constant 0 : index
    %c0_365 = arith.constant 0 : index
    %702 = vector.load %arg23[%c0_364, %c0_365] : memref<16x2xf32, #tpu.memory_space<vmem>>, vector<16x2xf32>
    tpu.vector_store %arg23[%c0_364, %c0_365], %698 {strides = array<i32>} : memref<16x2xf32, #tpu.memory_space<vmem>>, vector<16x2xf32>,
    return
  }
  func.func @transform_0(%arg0: i32) -> i32 {
    %c0_i32 = arith.constant 0 : i32
    %c0_i32_0 = arith.constant 0 : i32
    return %c0_i32 : i32
  }
  func.func @transform_1(%arg0: i32) -> i32 {
    %c0_i32 = arith.constant 0 : i32
    %c0_i32_0 = arith.constant 0 : i32
    return %c0_i32 : i32
  }
  func.func @transform_2(%arg0: i32) -> (i32, i32, i32) {
    %c0_i32 = arith.constant 0 : i32
    %c0_i32_0 = arith.constant 0 : i32
    %c0_i32_1 = arith.constant 0 : i32
    return %c0_i32, %arg0, %c0_i32_0 : i32, i32, i32
  }
  func.func @transform_3(%arg0: i32) -> (i32, i32) {
    %c0_i32 = arith.constant 0 : i32
    %c0_i32_0 = arith.constant 0 : i32
    %c0_i32_1 = arith.constant 0 : i32
    return %c0_i32, %c0_i32_0 : i32, i32
  }
  func.func @transform_4(%arg0: i32) -> (i32, i32) {
    %c0_i32 = arith.constant 0 : i32
    %c0_i32_0 = arith.constant 0 : i32
    %c0_i32_1 = arith.constant 0 : i32
    return %c0_i32, %c0_i32_0 : i32, i32
  }
  func.func @transform_5(%arg0: i32) -> (i32, i32) {
    %c0_i32 = arith.constant 0 : i32
    %c0_i32_0 = arith.constant 0 : i32
    %c0_i32_1 = arith.constant 0 : i32
    return %c0_i32, %c0_i32_0 : i32, i32
  }
  func.func @transform_6(%arg0: i32) -> (i32, i32) {
    %c0_i32 = arith.constant 0 : i32
    %c0_i32_0 = arith.constant 0 : i32
    %c0_i32_1 = arith.constant 0 : i32
    return %c0_i32, %c0_i32_0 : i32, i32
  }
  func.func @transform_7(%arg0: i32) -> (i32, i32) {
    %c0_i32 = arith.constant 0 : i32
    %c0_i32_0 = arith.constant 0 : i32
    return %c0_i32, %arg0 : i32, i32
  }
  func.func @transform_8(%arg0: i32) -> (i32, i32) {
    %c0_i32 = arith.constant 0 : i32
    %c0_i32_0 = arith.constant 0 : i32
    %c0_i32_1 = arith.constant 0 : i32
    return %c0_i32, %c0_i32_0 : i32, i32
  }
  func.func @transform_9(%arg0: i32) -> (i32, i32) {
    %c0_i32 = arith.constant 0 : i32
    %c0_i32_0 = arith.constant 0 : i32
    %c0_i32_1 = arith.constant 0 : i32
    return %c0_i32, %c0_i32_0 : i32, i32
  }
  func.func @transform_10(%arg0: i32) -> (i32, i32) {
    %c0_i32 = arith.constant 0 : i32
    %c0_i32_0 = arith.constant 0 : i32
    %c0_i32_1 = arith.constant 0 : i32
    return %c0_i32, %c0_i32_0 : i32, i32
  }
  func.func @transform_11(%arg0: i32) -> (i32, i32) {
    %c0_i32 = arith.constant 0 : i32
    %c0_i32_0 = arith.constant 0 : i32
    %c0_i32_1 = arith.constant 0 : i32
    return %c0_i32, %c0_i32_0 : i32, i32
  }
  func.func @transform_12(%arg0: i32) -> (i32, i32) {
    %c0_i32 = arith.constant 0 : i32
    %c0_i32_0 = arith.constant 0 : i32
    %c0_i32_1 = arith.constant 0 : i32
    return %c0_i32, %c0_i32_0 : i32, i32
  }
  func.func @transform_13(%arg0: i32) -> (i32, i32) {
    %c0_i32 = arith.constant 0 : i32
    %c0_i32_0 = arith.constant 0 : i32
    %c0_i32_1 = arith.constant 0 : i32
    return %c0_i32, %c0_i32_0 : i32, i32
  }
  func.func @transform_14(%arg0: i32) -> (i32, i32) {
    %c0_i32 = arith.constant 0 : i32
    %c0_i32_0 = arith.constant 0 : i32
    %c0_i32_1 = arith.constant 0 : i32
    return %c0_i32, %c0_i32_0 : i32, i32
  }
  func.func @transform_15(%arg0: i32) -> (i32, i32) {
    %c0_i32 = arith.constant 0 : i32
    %c0_i32_0 = arith.constant 0 : i32
    %c0_i32_1 = arith.constant 0 : i32
    return %c0_i32, %c0_i32_0 : i32, i32
  }
  func.func @transform_16(%arg0: i32) -> (i32, i32) {
    %c0_i32 = arith.constant 0 : i32
    %c0_i32_0 = arith.constant 0 : i32
    %c0_i32_1 = arith.constant 0 : i32
    return %c0_i32, %c0_i32_0 : i32, i32
  }
  func.func @transform_17(%arg0: i32) -> (i32, i32) {
    %c0_i32 = arith.constant 0 : i32
    %c0_i32_0 = arith.constant 0 : i32
    %c0_i32_1 = arith.constant 0 : i32
    return %c0_i32, %c0_i32_0 : i32, i32
  }
  func.func @transform_18(%arg0: i32) -> (i32, i32) {
    %c0_i32 = arith.constant 0 : i32
    %c0_i32_0 = arith.constant 0 : i32
    return %c0_i32, %arg0 : i32, i32
  }
  func.func @transform_19(%arg0: i32) -> (i32, i32) {
    %c0_i32 = arith.constant 0 : i32
    %c0_i32_0 = arith.constant 0 : i32
    return %c0_i32, %arg0 : i32, i32
  }
  func.func @transform_20(%arg0: i32) -> (i32, i32) {
    %c0_i32 = arith.constant 0 : i32
    %c0_i32_0 = arith.constant 0 : i32
    return %c0_i32, %arg0 : i32, i32
  }
  func.func @transform_21(%arg0: i32) -> (i32, i32) {
    %c0_i32 = arith.constant 0 : i32
    %c0_i32_0 = arith.constant 0 : i32
    return %c0_i32, %arg0 : i32, i32
  }
  func.func @transform_22(%arg0: i32) -> (i32, i32) {
    %c0_i32 = arith.constant 0 : i32
    %c0_i32_0 = arith.constant 0 : i32
    return %c0_i32, %arg0 : i32, i32
  }
}

</mosaic_0001>

<llo_original>
// kernel: discriminator_cell_forward.1
$region0: #{discriminator_cell_forward.1}
  #allocation0 [shape = 'u32[]', space=smem, size = 0x4, offset = 0x4, fixed_abs, tag = 'smem constant byte address 0x4 - core index']
  #allocation1 [shape = 'u32[144,128]{1,0:T(1,128)}', space=vmem, size = 0x12000, scoped, tag = 'internal scratch']
  #allocation2 [shape = 'f32[128,24,2]{2,1,0:T(8,128)}', space=vmem, size = 0x180000, scoped, tag = 'scratch operand']
  #allocation3 [shape = 'f32[1]{0:T(128)S(6)}', space=smem, size = 0x200, scoped, tag = 'scoped memory for discriminator_cell_forward.1']
  %s0 = inlined_call_operand.vmem [shape: f32[101], index: 0, kind: input, shape index: {}]
  %s1 = inlined_call_operand.<no memory space> [shape: f32[1], index: 1, kind: input, shape index: {}]
  %s2 = inlined_call_operand.vmem [shape: f32[2,8,178], index: 2, kind: input, shape index: {}]
  %s3 = inlined_call_operand.vmem [shape: f32[24,1], index: 3, kind: input, shape index: {}]
  %s4 = inlined_call_operand.vmem [shape: f32[24,3], index: 4, kind: input, shape index: {}]
  %s5 = inlined_call_operand.vmem [shape: f32[24,1], index: 5, kind: input, shape index: {}]
  %s6 = inlined_call_operand.vmem [shape: f32[8,1], index: 6, kind: input, shape index: {}]
  %s7 = inlined_call_operand.vmem [shape: f32[8,2], index: 7, kind: input, shape index: {}]
  %s8 = inlined_call_operand.vmem [shape: f32[96,8], index: 8, kind: input, shape index: {}]
  %s9 = inlined_call_operand.vmem [shape: f32[96,1], index: 9, kind: input, shape index: {}]
  %s10 = inlined_call_operand.vmem [shape: f32[16,96], index: 10, kind: input, shape index: {}]
  %s11 = inlined_call_operand.vmem [shape: f32[16,1], index: 11, kind: input, shape index: {}]
  %s12 = inlined_call_operand.vmem [shape: f32[10,1], index: 12, kind: input, shape index: {}]
  %s13 = inlined_call_operand.vmem [shape: f32[10,16], index: 13, kind: input, shape index: {}]
  %s14 = inlined_call_operand.vmem [shape: f32[10,1], index: 14, kind: input, shape index: {}]
  %s15 = inlined_call_operand.vmem [shape: f32[64,10], index: 15, kind: input, shape index: {}]
  %s16 = inlined_call_operand.vmem [shape: f32[64,10], index: 16, kind: input, shape index: {}]
  %s17 = inlined_call_operand.vmem [shape: f32[64,1], index: 17, kind: input, shape index: {}]
  %s18 = inlined_call_operand.vmem [shape: f32[1,2], index: 18, kind: input, shape index: {}]
  %s19 = inlined_call_operand.vmem [shape: f32[10,2], index: 19, kind: input, shape index: {}]
  %s20 = inlined_call_operand.vmem [shape: f32[16,2], index: 20, kind: input, shape index: {}]
  %s21 = inlined_call_operand.vmem [shape: f32[16,2], index: 21, kind: output, shape index: {0}]
  %s22 = inlined_call_operand.vmem [shape: f32[16,2], index: 22, kind: output, shape index: {1}]
  %23 = xla_tuple %s21, %s22
  %s24 = sld [smem:[#allocation0]]
  $region113: #{discriminator_cell_forward.1} parent=0
    _
  %s26 = ssub.s32 1, %s24
  %s27 = scalar_select 0, %s26, %s24
  %28 = sst [smem:[#allocation3]] %s1
  $region1: #{discriminator_cell_forward.1} parent=0
    #allocation4 [shape = 'u8[512]{0}', space=smem, size = 0x200, scoped, tag = 'input window, operand 0, single buffered']
    #allocation5 [shape = 's32[1]{0}', space=sflag, size = 0x4, scoped, tag = 'scoped memory for discriminator_cell_forward.1']
    %29 = vsyncpa [#allocation5], 0
    // Predicated region
    $region2: #{discriminator_cell_forward.1} parent=1 // pred_check
      _
    $region3: #{discriminator_cell_forward.1} parent=1 // pred_check_branch
      %31 = sbr.rel (0) target = $region5
    $region4: #{discriminator_cell_forward.1} parent=1 // pred_region
      %s33 = ssub.s32 16, 16
      %34 = vsyncadd [#allocation5], %s33
      %s36 = sshll.u32 %s0, 4
      %s37 = int_to_ptr.vmem [resolvable:$true] %s36
      %39 = dma.vmem_to_smem %s37, 16, [#allocation4], [#allocation5]
    $region5: #{discriminator_cell_forward.1} parent=1 // pred_fallthru
      _
    // Predicated region
    $region6: #{discriminator_cell_forward.1} parent=1 // pred_check
      _
    $region7: #{discriminator_cell_forward.1} parent=1 // pred_check_branch
      %41 = sbr.rel (0) target = $region9
    $region8: #{discriminator_cell_forward.1} parent=1 // pred_region
      _
    $region9: #{discriminator_cell_forward.1} parent=1 // pred_fallthru
      _
    // Predicated region
    $region10: #{discriminator_cell_forward.1} parent=1 // pred_check
      _
    $region11: #{discriminator_cell_forward.1} parent=1 // pred_check_branch
      %43 = sbr.rel (0) target = $region13
    $region12: #{discriminator_cell_forward.1} parent=1 // pred_region
      _
    $region13: #{discriminator_cell_forward.1} parent=1 // pred_fallthru
      _
    // Predicated region
    $region14: #{discriminator_cell_forward.1} parent=1 // pred_check
      _
    $region15: #{discriminator_cell_forward.1} parent=1 // pred_check_branch
      %45 = sbr.rel (0) target = $region17
    $region16: #{discriminator_cell_forward.1} parent=1 // pred_region
      _
    $region17: #{discriminator_cell_forward.1} parent=1 // pred_fallthru
      _
    // Predicated region
    $region18: #{discriminator_cell_forward.1} parent=1 // pred_check
      _
    $region19: #{discriminator_cell_forward.1} parent=1 // pred_check_branch
      %47 = sbr.rel (0) target = $region21
    $region20: #{discriminator_cell_forward.1} parent=1 // pred_region
      _
    $region21: #{discriminator_cell_forward.1} parent=1 // pred_fallthru
      _
    // Predicated region
    $region22: #{discriminator_cell_forward.1} parent=1 // pred_check
      _
    $region23: #{discriminator_cell_forward.1} parent=1 // pred_check_branch
      %49 = sbr.rel (0) target = $region25
    $region24: #{discriminator_cell_forward.1} parent=1 // pred_region
      _
    $region25: #{discriminator_cell_forward.1} parent=1 // pred_fallthru
      _
    // Predicated region
    $region26: #{discriminator_cell_forward.1} parent=1 // pred_check
      _
    $region27: #{discriminator_cell_forward.1} parent=1 // pred_check_branch
      %51 = sbr.rel (0) target = $region29
    $region28: #{discriminator_cell_forward.1} parent=1 // pred_region
      _
    $region29: #{discriminator_cell_forward.1} parent=1 // pred_fallthru
      _
    // Predicated region
    $region30: #{discriminator_cell_forward.1} parent=1 // pred_check
      _
    $region31: #{discriminator_cell_forward.1} parent=1 // pred_check_branch
      %53 = sbr.rel (0) target = $region33
    $region32: #{discriminator_cell_forward.1} parent=1 // pred_region
      _
    $region33: #{discriminator_cell_forward.1} parent=1 // pred_fallthru
      _
    // Predicated region
    $region34: #{discriminator_cell_forward.1} parent=1 // pred_check
      _
    $region35: #{discriminator_cell_forward.1} parent=1 // pred_check_branch
      %55 = sbr.rel (0) target = $region37
    $region36: #{discriminator_cell_forward.1} parent=1 // pred_region
      _
    $region37: #{discriminator_cell_forward.1} parent=1 // pred_fallthru
      _
    // Predicated region
    $region38: #{discriminator_cell_forward.1} parent=1 // pred_check
      _
    $region39: #{discriminator_cell_forward.1} parent=1 // pred_check_branch
      %57 = sbr.rel (0) target = $region41
    $region40: #{discriminator_cell_forward.1} parent=1 // pred_region
      _
    $region41: #{discriminator_cell_forward.1} parent=1 // pred_fallthru
      _
    // Predicated region
    $region42: #{discriminator_cell_forward.1} parent=1 // pred_check
      _
    $region43: #{discriminator_cell_forward.1} parent=1 // pred_check_branch
      %59 = sbr.rel (0) target = $region45
    $region44: #{discriminator_cell_forward.1} parent=1 // pred_region
      _
    $region45: #{discriminator_cell_forward.1} parent=1 // pred_fallthru
      _
    // Predicated region
    $region46: #{discriminator_cell_forward.1} parent=1 // pred_check
      _
    $region47: #{discriminator_cell_forward.1} parent=1 // pred_check_branch
      %61 = sbr.rel (0) target = $region49
    $region48: #{discriminator_cell_forward.1} parent=1 // pred_region
      _
    $region49: #{discriminator_cell_forward.1} parent=1 // pred_fallthru
      _
    // Predicated region
    $region50: #{discriminator_cell_forward.1} parent=1 // pred_check
      _
    $region51: #{discriminator_cell_forward.1} parent=1 // pred_check_branch
      %63 = sbr.rel (0) target = $region53
    $region52: #{discriminator_cell_forward.1} parent=1 // pred_region
      _
    $region53: #{discriminator_cell_forward.1} parent=1 // pred_fallthru
      _
    // Predicated region
    $region54: #{discriminator_cell_forward.1} parent=1 // pred_check
      _
    $region55: #{discriminator_cell_forward.1} parent=1 // pred_check_branch
      %65 = sbr.rel (0) target = $region57
    $region56: #{discriminator_cell_forward.1} parent=1 // pred_region
      _
    $region57: #{discriminator_cell_forward.1} parent=1 // pred_fallthru
      _
    // Predicated region
    $region58: #{discriminator_cell_forward.1} parent=1 // pred_check
      _
    $region59: #{discriminator_cell_forward.1} parent=1 // pred_check_branch
      %67 = sbr.rel (0) target = $region61
    $region60: #{discriminator_cell_forward.1} parent=1 // pred_region
      _
    $region61: #{discriminator_cell_forward.1} parent=1 // pred_fallthru
      _
    // Predicated region
    $region62: #{discriminator_cell_forward.1} parent=1 // pred_check
      _
    $region63: #{discriminator_cell_forward.1} parent=1 // pred_check_branch
      %69 = sbr.rel (0) target = $region65
    $region64: #{discriminator_cell_forward.1} parent=1 // pred_region
      _
    $region65: #{discriminator_cell_forward.1} parent=1 // pred_fallthru
      _
    // Predicated region
    $region66: #{discriminator_cell_forward.1} parent=1 // pred_check
      _
    $region67: #{discriminator_cell_forward.1} parent=1 // pred_check_branch
      %71 = sbr.rel (0) target = $region69
    $region68: #{discriminator_cell_forward.1} parent=1 // pred_region
      _
    $region69: #{discriminator_cell_forward.1} parent=1 // pred_fallthru
      _
    // Predicated region
    $region70: #{discriminator_cell_forward.1} parent=1 // pred_check
      _
    $region71: #{discriminator_cell_forward.1} parent=1 // pred_check_branch
      %73 = sbr.rel (0) target = $region73
    $region72: #{discriminator_cell_forward.1} parent=1 // pred_region
      _
    $region73: #{discriminator_cell_forward.1} parent=1 // pred_fallthru
      _
    // Predicated region
    $region74: #{discriminator_cell_forward.1} parent=1 // pred_check
      _
    $region75: #{discriminator_cell_forward.1} parent=1 // pred_check_branch
      %75 = sbr.rel (0) target = $region77
    $region76: #{discriminator_cell_forward.1} parent=1 // pred_region
      _
    $region77: #{discriminator_cell_forward.1} parent=1 // pred_fallthru
      _
    // Predicated region
    $region78: #{discriminator_cell_forward.1} parent=1 // pred_check
      _
    $region79: #{discriminator_cell_forward.1} parent=1 // pred_check_branch
      %77 = sbr.rel (0) target = $region81
    $region80: #{discriminator_cell_forward.1} parent=1 // pred_region
      _
    $region81: #{discriminator_cell_forward.1} parent=1 // pred_fallthru
      _
    // Predicated region
    $region82: #{discriminator_cell_forward.1} parent=1 // pred_check
      _
    $region83: #{discriminator_cell_forward.1} parent=1 // pred_check_branch
      %79 = sbr.rel (0) target = $region85
    $region84: #{discriminator_cell_forward.1} parent=1 // pred_region
      _
    $region85: #{discriminator_cell_forward.1} parent=1 // pred_fallthru
      _
    // Predicated region
    $region86: #{discriminator_cell_forward.1} parent=1 // pred_check
      _
    $region87: #{discriminator_cell_forward.1} parent=1 // pred_check_branch
      %81 = sbr.rel (0) target = $region89
    $region88: #{discriminator_cell_forward.1} parent=1 // pred_region
      %82 = dma.done [#allocation5], 16
    $region89: #{discriminator_cell_forward.1} parent=1 // pred_fallthru
      _
    %83 = sfence
    %v84 = vld [vmem:[%s2] sm:$0xff]
    %s85 = sld [smem:[#allocation4]]
    %v86 = vstv %s85
    %v87 = vmul.f32 %v86, %v84
    %v88 = vadd.f32 %v87, 0.0
    %s89 = scalar_lea.vmem %s2, 16
    %v90 = vld [vmem:[%s89] sm:$0xff]
    %s91 = sld [smem:[#allocation4 + $0x1]]
    %v92 = vstv %s91
    %v93 = vmul.f32 %v92, %v90
    %v94 = vadd.f32 %v93, 0.0
    %v95 = vld [vmem:[%s2] sm:$0xff]
    %v96 = vld [vmem:[%s2 + $0x8] sm:$0xff]
    %s97 = sld [smem:[#allocation4 + $0x2]]
    %v98 = vstv %s97
    %v99 = vmul.f32 %v98, %v95
    %v100 = vmul.f32 %v98, %v96
    %v101 = vadd.f32 %v99, 0.0
    %v102 = vadd.f32 %v100, 0.0
    %v103 = vld [vmem:[%s89] sm:$0xff]
    %v104 = vld [vmem:[%s89 + $0x8] sm:$0xff]
    %s105 = sld [smem:[#allocation4 + $0x3]]
    %v106 = vstv %s105
    %v107 = vmul.f32 %v106, %v103
    %v108 = vmul.f32 %v106, %v104
    %v109 = vadd.f32 %v107, 0.0
    %v110 = vadd.f32 %v108, 0.0
    %s111 = sld [smem:[#allocation4 + $0x4]]
    %v112 = vstv %s111
    %v113 = vmul.f32 %v112, %v95
    %v114 = vmul.f32 %v112, %v96
    %117 = vrot.lane.b32.xlu0 %v113, 126
    %v118 = vpop.permute.xlu0 %117
    %119 = vrot.lane.b32.xlu0 %v114, 126
    %v120 = vpop.permute.xlu0 %119
    %vm121 = vcmask 1031168
    %v122 = vsel %vm121, %v118, %v120
    %v124 = vadd.f32 %v88, %v122
    %s125 = sld [smem:[#allocation4 + $0x5]]
    %v126 = vstv %s125
    %v127 = vmul.f32 %v126, %v103
    %v128 = vmul.f32 %v126, %v104
    %131 = vrot.lane.b32.xlu0 %v127, 126
    %v132 = vpop.permute.xlu0 %131
    %133 = vrot.lane.b32.xlu0 %v128, 126
    %v134 = vpop.permute.xlu0 %133
    %v135 = vsel %vm121, %v132, %v134
    %v137 = vadd.f32 %v94, %v135
    %s138 = sld [smem:[#allocation4 + $0x6]]
    %v139 = vstv %s138
    %v140 = vmul.f32 %v139, %v95
    %v141 = vmul.f32 %v139, %v96
    %144 = vrot.lane.b32.xlu0 %v140, 126
    %v145 = vpop.permute.xlu0 %144
    %146 = vrot.lane.b32.xlu0 %v141, 126
    %v147 = vpop.permute.xlu0 %146
    %v148 = vsel %vm121, %v145, %v147
    %v151 = vadd.f32 %v101, %v148
    %v152 = vadd.f32 %v102, %v147
    %s153 = sld [smem:[#allocation4 + $0x7]]
    %v154 = vstv %s153
    %v155 = vmul.f32 %v154, %v103
    %v156 = vmul.f32 %v154, %v104
    %159 = vrot.lane.b32.xlu0 %v155, 126
    %v160 = vpop.permute.xlu0 %159
    %161 = vrot.lane.b32.xlu0 %v156, 126
    %v162 = vpop.permute.xlu0 %161
    %v163 = vsel %vm121, %v160, %v162
    %v166 = vadd.f32 %v109, %v163
    %v167 = vadd.f32 %v110, %v162
    %s168 = sld [smem:[#allocation4 + $0x8]]
    %v169 = vstv %s168
    %v170 = vmul.f32 %v169, %v95
    %v171 = vmul.f32 %v169, %v96
    %174 = vrot.lane.b32.xlu0 %v170, 124
    %v175 = vpop.permute.xlu0 %174
    %176 = vrot.lane.b32.xlu0 %v171, 124
    %v177 = vpop.permute.xlu0 %176
    %vm178 = vcmask 1014784
    %v179 = vsel %vm178, %v175, %v177
    %v181 = vadd.f32 %v124, %v179
    %s182 = sld [smem:[#allocation4 + $0x9]]
    %v183 = vstv %s182
    %v184 = vmul.f32 %v183, %v103
    %v185 = vmul.f32 %v183, %v104
    %188 = vrot.lane.b32.xlu0 %v184, 124
    %v189 = vpop.permute.xlu0 %188
    %190 = vrot.lane.b32.xlu0 %v185, 124
    %v191 = vpop.permute.xlu0 %190
    %v192 = vsel %vm178, %v189, %v191
    %v194 = vadd.f32 %v137, %v192
    %s195 = sld [smem:[#allocation4 + $0xa]]
    %v196 = vstv %s195
    %v197 = vmul.f32 %v196, %v95
    %v198 = vmul.f32 %v196, %v96
    %201 = vrot.lane.b32.xlu0 %v197, 124
    %v202 = vpop.permute.xlu0 %201
    %203 = vrot.lane.b32.xlu0 %v198, 124
    %v204 = vpop.permute.xlu0 %203
    %v205 = vsel %vm178, %v202, %v204
    %v208 = vadd.f32 %v151, %v205
    %v209 = vadd.f32 %v152, %v204
    %s210 = sld [smem:[#allocation4 + $0xb]]
    %v211 = vstv %s210
    %v212 = vmul.f32 %v211, %v103
    %v213 = vmul.f32 %v211, %v104
    %216 = vrot.lane.b32.xlu0 %v212, 124
    %v217 = vpop.permute.xlu0 %216
    %218 = vrot.lane.b32.xlu0 %v213, 124
    %v219 = vpop.permute.xlu0 %218
    %v220 = vsel %vm178, %v217, %v219
    %v223 = vadd.f32 %v166, %v220
    %v224 = vadd.f32 %v167, %v219
    %s225 = sld [smem:[#allocation4 + $0xc]]
    %v226 = vstv %s225
    %v227 = vmul.f32 %v226, %v95
    %v228 = vmul.f32 %v226, %v96
    %231 = vrot.lane.b32.xlu0 %v227, 122
    %v232 = vpop.permute.xlu0 %231
    %233 = vrot.lane.b32.xlu0 %v228, 122
    %v234 = vpop.permute.xlu0 %233
    %vm235 = vcmask 998400
    %v236 = vsel %vm235, %v232, %v234
    %v238 = vadd.f32 %v181, %v236
    %s239 = sld [smem:[#allocation4 + $0xd]]
    %v240 = vstv %s239
    %v241 = vmul.f32 %v240, %v103
    %v242 = vmul.f32 %v240, %v104
    %245 = vrot.lane.b32.xlu0 %v241, 122
    %v246 = vpop.permute.xlu0 %245
    %247 = vrot.lane.b32.xlu0 %v242, 122
    %v248 = vpop.permute.xlu0 %247
    %v249 = vsel %vm235, %v246, %v248
    %v251 = vadd.f32 %v194, %v249
    %s252 = sld [smem:[#allocation4 + $0xe]]
    %v253 = vstv %s252
    %v254 = vmul.f32 %v253, %v95
    %v255 = vmul.f32 %v253, %v96
    %258 = vrot.lane.b32.xlu0 %v254, 122
    %v259 = vpop.permute.xlu0 %258
    %260 = vrot.lane.b32.xlu0 %v255, 122
    %v261 = vpop.permute.xlu0 %260
    %v262 = vsel %vm235, %v259, %v261
    %v265 = vadd.f32 %v208, %v262
    %v266 = vadd.f32 %v209, %v261
    %s267 = sld [smem:[#allocation4 + $0xf]]
    %v268 = vstv %s267
    %v269 = vmul.f32 %v268, %v103
    %v270 = vmul.f32 %v268, %v104
    %273 = vrot.lane.b32.xlu0 %v269, 122
    %v274 = vpop.permute.xlu0 %273
    %275 = vrot.lane.b32.xlu0 %v270, 122
    %v276 = vpop.permute.xlu0 %275
    %v277 = vsel %vm235, %v274, %v276
    %v280 = vadd.f32 %v223, %v277
    %v281 = vadd.f32 %v224, %v276
    %s282 = sld [smem:[#allocation4 + $0x10]]
    %v283 = vstv %s282
    %v284 = vmul.f32 %v283, %v95
    %v285 = vmul.f32 %v283, %v96
    %288 = vrot.lane.b32.xlu0 %v284, 120
    %v289 = vpop.permute.xlu0 %288
    %290 = vrot.lane.b32.xlu0 %v285, 120
    %v291 = vpop.permute.xlu0 %290
    %vm292 = vcmask 982016
    %v293 = vsel %vm292, %v289, %v291
    %v295 = vadd.f32 %v238, %v293
    %s296 = sld [smem:[#allocation4 + $0x11]]
    %v297 = vstv %s296
    %v298 = vmul.f32 %v297, %v103
    %v299 = vmul.f32 %v297, %v104
    %302 = vrot.lane.b32.xlu0 %v298, 120
    %v303 = vpop.permute.xlu0 %302
    %304 = vrot.lane.b32.xlu0 %v299, 120
    %v305 = vpop.permute.xlu0 %304
    %v306 = vsel %vm292, %v303, %v305
    %v308 = vadd.f32 %v251, %v306
    %s309 = sld [smem:[#allocation4 + $0x12]]
    %v310 = vstv %s309
    %v311 = vmul.f32 %v310, %v95
    %v312 = vmul.f32 %v310, %v96
    %315 = vrot.lane.b32.xlu0 %v311, 120
    %v316 = vpop.permute.xlu0 %315
    %317 = vrot.lane.b32.xlu0 %v312, 120
    %v318 = vpop.permute.xlu0 %317
    %v319 = vsel %vm292, %v316, %v318
    %v322 = vadd.f32 %v265, %v319
    %v323 = vadd.f32 %v266, %v318
    %s324 = sld [smem:[#allocation4 + $0x13]]
    %v325 = vstv %s324
    %v326 = vmul.f32 %v325, %v103
    %v327 = vmul.f32 %v325, %v104
    %330 = vrot.lane.b32.xlu0 %v326, 120
    %v331 = vpop.permute.xlu0 %330
    %332 = vrot.lane.b32.xlu0 %v327, 120
    %v333 = vpop.permute.xlu0 %332
    %v334 = vsel %vm292, %v331, %v333
    %v337 = vadd.f32 %v280, %v334
    %v338 = vadd.f32 %v281, %v333
    %s339 = sld [smem:[#allocation4 + $0x14]]
    %v340 = vstv %s339
    %v341 = vmul.f32 %v340, %v95
    %v342 = vmul.f32 %v340, %v96
    %345 = vrot.lane.b32.xlu0 %v341, 118
    %v346 = vpop.permute.xlu0 %345
    %347 = vrot.lane.b32.xlu0 %v342, 118
    %v348 = vpop.permute.xlu0 %347
    %vm349 = vcmask 965632
    %v350 = vsel %vm349, %v346, %v348
    %v352 = vadd.f32 %v295, %v350
    %s353 = sld [smem:[#allocation4 + $0x15]]
    %v354 = vstv %s353
    %v355 = vmul.f32 %v354, %v103
    %v356 = vmul.f32 %v354, %v104
    %359 = vrot.lane.b32.xlu0 %v355, 118
    %v360 = vpop.permute.xlu0 %359
    %361 = vrot.lane.b32.xlu0 %v356, 118
    %v362 = vpop.permute.xlu0 %361
    %v363 = vsel %vm349, %v360, %v362
    %v365 = vadd.f32 %v308, %v363
    %s366 = sld [smem:[#allocation4 + $0x16]]
    %v367 = vstv %s366
    %v368 = vmul.f32 %v367, %v95
    %v369 = vmul.f32 %v367, %v96
    %372 = vrot.lane.b32.xlu0 %v368, 118
    %v373 = vpop.permute.xlu0 %372
    %374 = vrot.lane.b32.xlu0 %v369, 118
    %v375 = vpop.permute.xlu0 %374
    %v376 = vsel %vm349, %v373, %v375
    %v379 = vadd.f32 %v322, %v376
    %v380 = vadd.f32 %v323, %v375
    %s381 = sld [smem:[#allocation4 + $0x17]]
    %v382 = vstv %s381
    %v383 = vmul.f32 %v382, %v103
    %v384 = vmul.f32 %v382, %v104
    %387 = vrot.lane.b32.xlu0 %v383, 118
    %v388 = vpop.permute.xlu0 %387
    %389 = vrot.lane.b32.xlu0 %v384, 118
    %v390 = vpop.permute.xlu0 %389
    %v391 = vsel %vm349, %v388, %v390
    %v394 = vadd.f32 %v337, %v391
    %v395 = vadd.f32 %v338, %v390
    %s396 = sld [smem:[#allocation4 + $0x18]]
    %v397 = vstv %s396
    %v398 = vmul.f32 %v397, %v95
    %v399 = vmul.f32 %v397, %v96
    %402 = vrot.lane.b32.xlu0 %v398, 116
    %v403 = vpop.permute.xlu0 %402
    %404 = vrot.lane.b32.xlu0 %v399, 116
    %v405 = vpop.permute.xlu0 %404
    %vm406 = vcmask 949248
    %v407 = vsel %vm406, %v403, %v405
    %v409 = vadd.f32 %v352, %v407
    %s410 = sld [smem:[#allocation4 + $0x19]]
    %v411 = vstv %s410
    %v412 = vmul.f32 %v411, %v103
    %v413 = vmul.f32 %v411, %v104
    %416 = vrot.lane.b32.xlu0 %v412, 116
    %v417 = vpop.permute.xlu0 %416
    %418 = vrot.lane.b32.xlu0 %v413, 116
    %v419 = vpop.permute.xlu0 %418
    %v420 = vsel %vm406, %v417, %v419
    %v422 = vadd.f32 %v365, %v420
    %s423 = sld [smem:[#allocation4 + $0x1a]]
    %v424 = vstv %s423
    %v425 = vmul.f32 %v424, %v95
    %v426 = vmul.f32 %v424, %v96
    %429 = vrot.lane.b32.xlu0 %v425, 116
    %v430 = vpop.permute.xlu0 %429
    %431 = vrot.lane.b32.xlu0 %v426, 116
    %v432 = vpop.permute.xlu0 %431
    %v433 = vsel %vm406, %v430, %v432
    %v436 = vadd.f32 %v379, %v433
    %v437 = vadd.f32 %v380, %v432
    %s438 = sld [smem:[#allocation4 + $0x1b]]
    %v439 = vstv %s438
    %v440 = vmul.f32 %v439, %v103
    %v441 = vmul.f32 %v439, %v104
    %444 = vrot.lane.b32.xlu0 %v440, 116
    %v445 = vpop.permute.xlu0 %444
    %446 = vrot.lane.b32.xlu0 %v441, 116
    %v447 = vpop.permute.xlu0 %446
    %v448 = vsel %vm406, %v445, %v447
    %v451 = vadd.f32 %v394, %v448
    %v452 = vadd.f32 %v395, %v447
    %s453 = sld [smem:[#allocation4 + $0x1c]]
    %v454 = vstv %s453
    %v455 = vmul.f32 %v454, %v95
    %v456 = vmul.f32 %v454, %v96
    %459 = vrot.lane.b32.xlu0 %v455, 114
    %v460 = vpop.permute.xlu0 %459
    %461 = vrot.lane.b32.xlu0 %v456, 114
    %v462 = vpop.permute.xlu0 %461
    %vm463 = vcmask 932864
    %v464 = vsel %vm463, %v460, %v462
    %v466 = vadd.f32 %v409, %v464
    %s467 = sld [smem:[#allocation4 + $0x1d]]
    %v468 = vstv %s467
    %v469 = vmul.f32 %v468, %v103
    %v470 = vmul.f32 %v468, %v104
    %473 = vrot.lane.b32.xlu0 %v469, 114
    %v474 = vpop.permute.xlu0 %473
    %475 = vrot.lane.b32.xlu0 %v470, 114
    %v476 = vpop.permute.xlu0 %475
    %v477 = vsel %vm463, %v474, %v476
    %v479 = vadd.f32 %v422, %v477
    %s480 = sld [smem:[#allocation4 + $0x1e]]
    %v481 = vstv %s480
    %v482 = vmul.f32 %v481, %v95
    %v483 = vmul.f32 %v481, %v96
    %486 = vrot.lane.b32.xlu0 %v482, 114
    %v487 = vpop.permute.xlu0 %486
    %488 = vrot.lane.b32.xlu0 %v483, 114
    %v489 = vpop.permute.xlu0 %488
    %v490 = vsel %vm463, %v487, %v489
    %v493 = vadd.f32 %v436, %v490
    %v494 = vadd.f32 %v437, %v489
    %s495 = sld [smem:[#allocation4 + $0x1f]]
    %v496 = vstv %s495
    %v497 = vmul.f32 %v496, %v103
    %v498 = vmul.f32 %v496, %v104
    %501 = vrot.lane.b32.xlu0 %v497, 114
    %v502 = vpop.permute.xlu0 %501
    %503 = vrot.lane.b32.xlu0 %v498, 114
    %v504 = vpop.permute.xlu0 %503
    %v505 = vsel %vm463, %v502, %v504
    %v508 = vadd.f32 %v451, %v505
    %v509 = vadd.f32 %v452, %v504
    %s510 = sld [smem:[#allocation4 + $0x20]]
    %v511 = vstv %s510
    %v512 = vmul.f32 %v511, %v95
    %v513 = vmul.f32 %v511, %v96
    %516 = vrot.lane.b32.xlu0 %v512, 112
    %v517 = vpop.permute.xlu0 %516
    %518 = vrot.lane.b32.xlu0 %v513, 112
    %v519 = vpop.permute.xlu0 %518
    %vm520 = vcmask 916480
    %v521 = vsel %vm520, %v517, %v519
    %v523 = vadd.f32 %v466, %v521
    %s524 = sld [smem:[#allocation4 + $0x21]]
    %v525 = vstv %s524
    %v526 = vmul.f32 %v525, %v103
    %v527 = vmul.f32 %v525, %v104
    %530 = vrot.lane.b32.xlu0 %v526, 112
    %v531 = vpop.permute.xlu0 %530
    %532 = vrot.lane.b32.xlu0 %v527, 112
    %v533 = vpop.permute.xlu0 %532
    %v534 = vsel %vm520, %v531, %v533
    %v536 = vadd.f32 %v479, %v534
    %s537 = sld [smem:[#allocation4 + $0x22]]
    %v538 = vstv %s537
    %v539 = vmul.f32 %v538, %v95
    %v540 = vmul.f32 %v538, %v96
    %543 = vrot.lane.b32.xlu0 %v539, 112
    %v544 = vpop.permute.xlu0 %543
    %545 = vrot.lane.b32.xlu0 %v540, 112
    %v546 = vpop.permute.xlu0 %545
    %v547 = vsel %vm520, %v544, %v546
    %v550 = vadd.f32 %v493, %v547
    %v551 = vadd.f32 %v494, %v546
    %s552 = sld [smem:[#allocation4 + $0x23]]
    %v553 = vstv %s552
    %v554 = vmul.f32 %v553, %v103
    %v555 = vmul.f32 %v553, %v104
    %558 = vrot.lane.b32.xlu0 %v554, 112
    %v559 = vpop.permute.xlu0 %558
    %560 = vrot.lane.b32.xlu0 %v555, 112
    %v561 = vpop.permute.xlu0 %560
    %v562 = vsel %vm520, %v559, %v561
    %v565 = vadd.f32 %v508, %v562
    %v566 = vadd.f32 %v509, %v561
    %s567 = sld [smem:[#allocation4 + $0x24]]
    %v568 = vstv %s567
    %v569 = vmul.f32 %v568, %v95
    %v570 = vmul.f32 %v568, %v96
    %573 = vrot.lane.b32.xlu0 %v569, 110
    %v574 = vpop.permute.xlu0 %573
    %575 = vrot.lane.b32.xlu0 %v570, 110
    %v576 = vpop.permute.xlu0 %575
    %vm577 = vcmask 900096
    %v578 = vsel %vm577, %v574, %v576
    %v580 = vadd.f32 %v523, %v578
    %s581 = sld [smem:[#allocation4 + $0x25]]
    %v582 = vstv %s581
    %v583 = vmul.f32 %v582, %v103
    %v584 = vmul.f32 %v582, %v104
    %587 = vrot.lane.b32.xlu0 %v583, 110
    %v588 = vpop.permute.xlu0 %587
    %589 = vrot.lane.b32.xlu0 %v584, 110
    %v590 = vpop.permute.xlu0 %589
    %v591 = vsel %vm577, %v588, %v590
    %v593 = vadd.f32 %v536, %v591
    %s594 = sld [smem:[#allocation4 + $0x26]]
    %v595 = vstv %s594
    %v596 = vmul.f32 %v595, %v95
    %v597 = vmul.f32 %v595, %v96
    %600 = vrot.lane.b32.xlu0 %v596, 110
    %v601 = vpop.permute.xlu0 %600
    %602 = vrot.lane.b32.xlu0 %v597, 110
    %v603 = vpop.permute.xlu0 %602
    %v604 = vsel %vm577, %v601, %v603
    %v607 = vadd.f32 %v550, %v604
    %v608 = vadd.f32 %v551, %v603
    %s609 = sld [smem:[#allocation4 + $0x27]]
    %v610 = vstv %s609
    %v611 = vmul.f32 %v610, %v103
    %v612 = vmul.f32 %v610, %v104
    %615 = vrot.lane.b32.xlu0 %v611, 110
    %v616 = vpop.permute.xlu0 %615
    %617 = vrot.lane.b32.xlu0 %v612, 110
    %v618 = vpop.permute.xlu0 %617
    %v619 = vsel %vm577, %v616, %v618
    %v622 = vadd.f32 %v565, %v619
    %v623 = vadd.f32 %v566, %v618
    %s624 = sld [smem:[#allocation4 + $0x28]]
    %v625 = vstv %s624
    %v626 = vmul.f32 %v625, %v95
    %v627 = vmul.f32 %v625, %v96
    %630 = vrot.lane.b32.xlu0 %v626, 108
    %v631 = vpop.permute.xlu0 %630
    %632 = vrot.lane.b32.xlu0 %v627, 108
    %v633 = vpop.permute.xlu0 %632
    %vm634 = vcmask 883712
    %v635 = vsel %vm634, %v631, %v633
    %v637 = vadd.f32 %v580, %v635
    %s638 = sld [smem:[#allocation4 + $0x29]]
    %v639 = vstv %s638
    %v640 = vmul.f32 %v639, %v103
    %v641 = vmul.f32 %v639, %v104
    %644 = vrot.lane.b32.xlu0 %v640, 108
    %v645 = vpop.permute.xlu0 %644
    %646 = vrot.lane.b32.xlu0 %v641, 108
    %v647 = vpop.permute.xlu0 %646
    %v648 = vsel %vm634, %v645, %v647
    %v650 = vadd.f32 %v593, %v648
    %s651 = sld [smem:[#allocation4 + $0x2a]]
    %v652 = vstv %s651
    %v653 = vmul.f32 %v652, %v95
    %v654 = vmul.f32 %v652, %v96
    %657 = vrot.lane.b32.xlu0 %v653, 108
    %v658 = vpop.permute.xlu0 %657
    %659 = vrot.lane.b32.xlu0 %v654, 108
    %v660 = vpop.permute.xlu0 %659
    %v661 = vsel %vm634, %v658, %v660
    %v664 = vadd.f32 %v607, %v661
    %v665 = vadd.f32 %v608, %v660
    %s666 = sld [smem:[#allocation4 + $0x2b]]
    %v667 = vstv %s666
    %v668 = vmul.f32 %v667, %v103
    %v669 = vmul.f32 %v667, %v104
    %672 = vrot.lane.b32.xlu0 %v668, 108
    %v673 = vpop.permute.xlu0 %672
    %674 = vrot.lane.b32.xlu0 %v669, 108
    %v675 = vpop.permute.xlu0 %674
    %v676 = vsel %vm634, %v673, %v675
    %v679 = vadd.f32 %v622, %v676
    %v680 = vadd.f32 %v623, %v675
    %s681 = sld [smem:[#allocation4 + $0x2c]]
    %v682 = vstv %s681
    %v683 = vmul.f32 %v682, %v95
    %v684 = vmul.f32 %v682, %v96
    %687 = vrot.lane.b32.xlu0 %v683, 106
    %v688 = vpop.permute.xlu0 %687
    %689 = vrot.lane.b32.xlu0 %v684, 106
    %v690 = vpop.permute.xlu0 %689
    %vm691 = vcmask 867328
    %v692 = vsel %vm691, %v688, %v690
    %v694 = vadd.f32 %v637, %v692
    %s695 = sld [smem:[#allocation4 + $0x2d]]
    %v696 = vstv %s695
    %v697 = vmul.f32 %v696, %v103
    %v698 = vmul.f32 %v696, %v104
    %701 = vrot.lane.b32.xlu0 %v697, 106
    %v702 = vpop.permute.xlu0 %701
    %703 = vrot.lane.b32.xlu0 %v698, 106
    %v704 = vpop.permute.xlu0 %703
    %v705 = vsel %vm691, %v702, %v704
    %v707 = vadd.f32 %v650, %v705
    %s708 = sld [smem:[#allocation4 + $0x2e]]
    %v709 = vstv %s708
    %v710 = vmul.f32 %v709, %v95
    %v711 = vmul.f32 %v709, %v96
    %714 = vrot.lane.b32.xlu0 %v710, 106
    %v715 = vpop.permute.xlu0 %714
    %716 = vrot.lane.b32.xlu0 %v711, 106
    %v717 = vpop.permute.xlu0 %716
    %v718 = vsel %vm691, %v715, %v717
    %v721 = vadd.f32 %v664, %v718
    %v722 = vadd.f32 %v665, %v717
    %s723 = sld [smem:[#allocation4 + $0x2f]]
    %v724 = vstv %s723
    %v725 = vmul.f32 %v724, %v103
    %v726 = vmul.f32 %v724, %v104
    %729 = vrot.lane.b32.xlu0 %v725, 106
    %v730 = vpop.permute.xlu0 %729
    %731 = vrot.lane.b32.xlu0 %v726, 106
    %v732 = vpop.permute.xlu0 %731
    %v733 = vsel %vm691, %v730, %v732
    %v736 = vadd.f32 %v679, %v733
    %v737 = vadd.f32 %v680, %v732
    %s738 = sld [smem:[#allocation4 + $0x30]]
    %v739 = vstv %s738
    %v740 = vmul.f32 %v739, %v95
    %v741 = vmul.f32 %v739, %v96
    %744 = vrot.lane.b32.xlu0 %v740, 104
    %v745 = vpop.permute.xlu0 %744
    %746 = vrot.lane.b32.xlu0 %v741, 104
    %v747 = vpop.permute.xlu0 %746
    %vm748 = vcmask 850944
    %v749 = vsel %vm748, %v745, %v747
    %v751 = vadd.f32 %v694, %v749
    %s752 = sld [smem:[#allocation4 + $0x31]]
    %v753 = vstv %s752
    %v754 = vmul.f32 %v753, %v103
    %v755 = vmul.f32 %v753, %v104
    %758 = vrot.lane.b32.xlu0 %v754, 104
    %v759 = vpop.permute.xlu0 %758
    %760 = vrot.lane.b32.xlu0 %v755, 104
    %v761 = vpop.permute.xlu0 %760
    %v762 = vsel %vm748, %v759, %v761
    %v764 = vadd.f32 %v707, %v762
    %s765 = sld [smem:[#allocation4 + $0x32]]
    %v766 = vstv %s765
    %v767 = vmul.f32 %v766, %v95
    %v768 = vmul.f32 %v766, %v96
    %771 = vrot.lane.b32.xlu0 %v767, 104
    %v772 = vpop.permute.xlu0 %771
    %773 = vrot.lane.b32.xlu0 %v768, 104
    %v774 = vpop.permute.xlu0 %773
    %v775 = vsel %vm748, %v772, %v774
    %v778 = vadd.f32 %v721, %v775
    %v779 = vadd.f32 %v722, %v774
    %s780 = sld [smem:[#allocation4 + $0x33]]
    %v781 = vstv %s780
    %v782 = vmul.f32 %v781, %v103
    %v783 = vmul.f32 %v781, %v104
    %786 = vrot.lane.b32.xlu0 %v782, 104
    %v787 = vpop.permute.xlu0 %786
    %788 = vrot.lane.b32.xlu0 %v783, 104
    %v789 = vpop.permute.xlu0 %788
    %v790 = vsel %vm748, %v787, %v789
    %v793 = vadd.f32 %v736, %v790
    %v794 = vadd.f32 %v737, %v789
    %s795 = sld [smem:[#allocation4 + $0x34]]
    %v796 = vstv %s795
    %v797 = vmul.f32 %v796, %v95
    %v798 = vmul.f32 %v796, %v96
    %801 = vrot.lane.b32.xlu0 %v797, 102
    %v802 = vpop.permute.xlu0 %801
    %803 = vrot.lane.b32.xlu0 %v798, 102
    %v804 = vpop.permute.xlu0 %803
    %vm805 = vcmask 834560
    %v806 = vsel %vm805, %v802, %v804
    %v808 = vadd.f32 %v751, %v806
    %s809 = sld [smem:[#allocation4 + $0x35]]
    %v810 = vstv %s809
    %v811 = vmul.f32 %v810, %v103
    %v812 = vmul.f32 %v810, %v104
    %815 = vrot.lane.b32.xlu0 %v811, 102
    %v816 = vpop.permute.xlu0 %815
    %817 = vrot.lane.b32.xlu0 %v812, 102
    %v818 = vpop.permute.xlu0 %817
    %v819 = vsel %vm805, %v816, %v818
    %v821 = vadd.f32 %v764, %v819
    %s822 = sld [smem:[#allocation4 + $0x36]]
    %v823 = vstv %s822
    %v824 = vmul.f32 %v823, %v95
    %v825 = vmul.f32 %v823, %v96
    %828 = vrot.lane.b32.xlu0 %v824, 102
    %v829 = vpop.permute.xlu0 %828
    %830 = vrot.lane.b32.xlu0 %v825, 102
    %v831 = vpop.permute.xlu0 %830
    %v832 = vsel %vm805, %v829, %v831
    %v835 = vadd.f32 %v778, %v832
    %v836 = vadd.f32 %v779, %v831
    %s837 = sld [smem:[#allocation4 + $0x37]]
    %v838 = vstv %s837
    %v839 = vmul.f32 %v838, %v103
    %v840 = vmul.f32 %v838, %v104
    %843 = vrot.lane.b32.xlu0 %v839, 102
    %v844 = vpop.permute.xlu0 %843
    %845 = vrot.lane.b32.xlu0 %v840, 102
    %v846 = vpop.permute.xlu0 %845
    %v847 = vsel %vm805, %v844, %v846
    %v850 = vadd.f32 %v793, %v847
    %v851 = vadd.f32 %v794, %v846
    %s852 = sld [smem:[#allocation4 + $0x38]]
    %v853 = vstv %s852
    %v854 = vmul.f32 %v853, %v95
    %v855 = vmul.f32 %v853, %v96
    %858 = vrot.lane.b32.xlu0 %v854, 100
    %v859 = vpop.permute.xlu0 %858
    %860 = vrot.lane.b32.xlu0 %v855, 100
    %v861 = vpop.permute.xlu0 %860
    %vm862 = vcmask 818176
    %v863 = vsel %vm862, %v859, %v861
    %v865 = vadd.f32 %v808, %v863
    %s866 = sld [smem:[#allocation4 + $0x39]]
    %v867 = vstv %s866
    %v868 = vmul.f32 %v867, %v103
    %v869 = vmul.f32 %v867, %v104
    %872 = vrot.lane.b32.xlu0 %v868, 100
    %v873 = vpop.permute.xlu0 %872
    %874 = vrot.lane.b32.xlu0 %v869, 100
    %v875 = vpop.permute.xlu0 %874
    %v876 = vsel %vm862, %v873, %v875
    %v878 = vadd.f32 %v821, %v876
    %s879 = sld [smem:[#allocation4 + $0x3a]]
    %v880 = vstv %s879
    %v881 = vmul.f32 %v880, %v95
    %v882 = vmul.f32 %v880, %v96
    %885 = vrot.lane.b32.xlu0 %v881, 100
    %v886 = vpop.permute.xlu0 %885
    %887 = vrot.lane.b32.xlu0 %v882, 100
    %v888 = vpop.permute.xlu0 %887
    %v889 = vsel %vm862, %v886, %v888
    %v892 = vadd.f32 %v835, %v889
    %v893 = vadd.f32 %v836, %v888
    %s894 = sld [smem:[#allocation4 + $0x3b]]
    %v895 = vstv %s894
    %v896 = vmul.f32 %v895, %v103
    %v897 = vmul.f32 %v895, %v104
    %900 = vrot.lane.b32.xlu0 %v896, 100
    %v901 = vpop.permute.xlu0 %900
    %902 = vrot.lane.b32.xlu0 %v897, 100
    %v903 = vpop.permute.xlu0 %902
    %v904 = vsel %vm862, %v901, %v903
    %v907 = vadd.f32 %v850, %v904
    %v908 = vadd.f32 %v851, %v903
    %s909 = sld [smem:[#allocation4 + $0x3c]]
    %v910 = vstv %s909
    %v911 = vmul.f32 %v910, %v95
    %v912 = vmul.f32 %v910, %v96
    %915 = vrot.lane.b32.xlu0 %v911, 98
    %v916 = vpop.permute.xlu0 %915
    %917 = vrot.lane.b32.xlu0 %v912, 98
    %v918 = vpop.permute.xlu0 %917
    %vm919 = vcmask 801792
    %v920 = vsel %vm919, %v916, %v918
    %v922 = vadd.f32 %v865, %v920
    %s923 = sld [smem:[#allocation4 + $0x3d]]
    %v924 = vstv %s923
    %v925 = vmul.f32 %v924, %v103
    %v926 = vmul.f32 %v924, %v104
    %929 = vrot.lane.b32.xlu0 %v925, 98
    %v930 = vpop.permute.xlu0 %929
    %931 = vrot.lane.b32.xlu0 %v926, 98
    %v932 = vpop.permute.xlu0 %931
    %v933 = vsel %vm919, %v930, %v932
    %v935 = vadd.f32 %v878, %v933
    %s936 = sld [smem:[#allocation4 + $0x3e]]
    %v937 = vstv %s936
    %v938 = vmul.f32 %v937, %v95
    %v939 = vmul.f32 %v937, %v96
    %942 = vrot.lane.b32.xlu0 %v938, 98
    %v943 = vpop.permute.xlu0 %942
    %944 = vrot.lane.b32.xlu0 %v939, 98
    %v945 = vpop.permute.xlu0 %944
    %v946 = vsel %vm919, %v943, %v945
    %v949 = vadd.f32 %v892, %v946
    %v950 = vadd.f32 %v893, %v945
    %s951 = sld [smem:[#allocation4 + $0x3f]]
    %v952 = vstv %s951
    %v953 = vmul.f32 %v952, %v103
    %v954 = vmul.f32 %v952, %v104
    %957 = vrot.lane.b32.xlu0 %v953, 98
    %v958 = vpop.permute.xlu0 %957
    %959 = vrot.lane.b32.xlu0 %v954, 98
    %v960 = vpop.permute.xlu0 %959
    %v961 = vsel %vm919, %v958, %v960
    %v964 = vadd.f32 %v907, %v961
    %v965 = vadd.f32 %v908, %v960
    %s966 = sld [smem:[#allocation4 + $0x40]]
    %v967 = vstv %s966
    %v968 = vmul.f32 %v967, %v95
    %v969 = vmul.f32 %v967, %v96
    %972 = vrot.lane.b32.xlu0 %v968, 96
    %v973 = vpop.permute.xlu0 %972
    %974 = vrot.lane.b32.xlu0 %v969, 96
    %v975 = vpop.permute.xlu0 %974
    %vm976 = vcmask 785408
    %v977 = vsel %vm976, %v973, %v975
    %v979 = vadd.f32 %v922, %v977
    %s980 = sld [smem:[#allocation4 + $0x41]]
    %v981 = vstv %s980
    %v982 = vmul.f32 %v981, %v103
    %v983 = vmul.f32 %v981, %v104
    %986 = vrot.lane.b32.xlu0 %v982, 96
    %v987 = vpop.permute.xlu0 %986
    %988 = vrot.lane.b32.xlu0 %v983, 96
    %v989 = vpop.permute.xlu0 %988
    %v990 = vsel %vm976, %v987, %v989
    %v992 = vadd.f32 %v935, %v990
    %s993 = sld [smem:[#allocation4 + $0x42]]
    %v994 = vstv %s993
    %v995 = vmul.f32 %v994, %v95
    %v996 = vmul.f32 %v994, %v96
    %999 = vrot.lane.b32.xlu0 %v995, 96
    %v1000 = vpop.permute.xlu0 %999
    %1001 = vrot.lane.b32.xlu0 %v996, 96
    %v1002 = vpop.permute.xlu0 %1001
    %v1003 = vsel %vm976, %v1000, %v1002
    %v1006 = vadd.f32 %v949, %v1003
    %v1007 = vadd.f32 %v950, %v1002
    %s1008 = sld [smem:[#allocation4 + $0x43]]
    %v1009 = vstv %s1008
    %v1010 = vmul.f32 %v1009, %v103
    %v1011 = vmul.f32 %v1009, %v104
    %1014 = vrot.lane.b32.xlu0 %v1010, 96
    %v1015 = vpop.permute.xlu0 %1014
    %1016 = vrot.lane.b32.xlu0 %v1011, 96
    %v1017 = vpop.permute.xlu0 %1016
    %v1018 = vsel %vm976, %v1015, %v1017
    %v1021 = vadd.f32 %v964, %v1018
    %v1022 = vadd.f32 %v965, %v1017
    %s1023 = sld [smem:[#allocation4 + $0x44]]
    %v1024 = vstv %s1023
    %v1025 = vmul.f32 %v1024, %v95
    %v1026 = vmul.f32 %v1024, %v96
    %1029 = vrot.lane.b32.xlu0 %v1025, 94
    %v1030 = vpop.permute.xlu0 %1029
    %1031 = vrot.lane.b32.xlu0 %v1026, 94
    %v1032 = vpop.permute.xlu0 %1031
    %vm1033 = vcmask 769024
    %v1034 = vsel %vm1033, %v1030, %v1032
    %v1036 = vadd.f32 %v979, %v1034
    %s1037 = sld [smem:[#allocation4 + $0x45]]
    %v1038 = vstv %s1037
    %v1039 = vmul.f32 %v1038, %v103
    %v1040 = vmul.f32 %v1038, %v104
    %1043 = vrot.lane.b32.xlu0 %v1039, 94
    %v1044 = vpop.permute.xlu0 %1043
    %1045 = vrot.lane.b32.xlu0 %v1040, 94
    %v1046 = vpop.permute.xlu0 %1045
    %v1047 = vsel %vm1033, %v1044, %v1046
    %v1049 = vadd.f32 %v992, %v1047
    %s1050 = sld [smem:[#allocation4 + $0x46]]
    %v1051 = vstv %s1050
    %v1052 = vmul.f32 %v1051, %v95
    %v1053 = vmul.f32 %v1051, %v96
    %1056 = vrot.lane.b32.xlu0 %v1052, 94
    %v1057 = vpop.permute.xlu0 %1056
    %1058 = vrot.lane.b32.xlu0 %v1053, 94
    %v1059 = vpop.permute.xlu0 %1058
    %v1060 = vsel %vm1033, %v1057, %v1059
    %v1063 = vadd.f32 %v1006, %v1060
    %v1064 = vadd.f32 %v1007, %v1059
    %s1065 = sld [smem:[#allocation4 + $0x47]]
    %v1066 = vstv %s1065
    %v1067 = vmul.f32 %v1066, %v103
    %v1068 = vmul.f32 %v1066, %v104
    %1071 = vrot.lane.b32.xlu0 %v1067, 94
    %v1072 = vpop.permute.xlu0 %1071
    %1073 = vrot.lane.b32.xlu0 %v1068, 94
    %v1074 = vpop.permute.xlu0 %1073
    %v1075 = vsel %vm1033, %v1072, %v1074
    %v1078 = vadd.f32 %v1021, %v1075
    %v1079 = vadd.f32 %v1022, %v1074
    %s1080 = sld [smem:[#allocation4 + $0x48]]
    %v1081 = vstv %s1080
    %v1082 = vmul.f32 %v1081, %v95
    %v1083 = vmul.f32 %v1081, %v96
    %1086 = vrot.lane.b32.xlu0 %v1082, 92
    %v1087 = vpop.permute.xlu0 %1086
    %1088 = vrot.lane.b32.xlu0 %v1083, 92
    %v1089 = vpop.permute.xlu0 %1088
    %vm1090 = vcmask 752640
    %v1091 = vsel %vm1090, %v1087, %v1089
    %v1093 = vadd.f32 %v1036, %v1091
    %s1094 = sld [smem:[#allocation4 + $0x49]]
    %v1095 = vstv %s1094
    %v1096 = vmul.f32 %v1095, %v103
    %v1097 = vmul.f32 %v1095, %v104
    %1100 = vrot.lane.b32.xlu0 %v1096, 92
    %v1101 = vpop.permute.xlu0 %1100
    %1102 = vrot.lane.b32.xlu0 %v1097, 92
    %v1103 = vpop.permute.xlu0 %1102
    %v1104 = vsel %vm1090, %v1101, %v1103
    %v1106 = vadd.f32 %v1049, %v1104
    %s1107 = sld [smem:[#allocation4 + $0x4a]]
    %v1108 = vstv %s1107
    %v1109 = vmul.f32 %v1108, %v95
    %v1110 = vmul.f32 %v1108, %v96
    %1113 = vrot.lane.b32.xlu0 %v1109, 92
    %v1114 = vpop.permute.xlu0 %1113
    %1115 = vrot.lane.b32.xlu0 %v1110, 92
    %v1116 = vpop.permute.xlu0 %1115
    %v1117 = vsel %vm1090, %v1114, %v1116
    %v1120 = vadd.f32 %v1063, %v1117
    %v1121 = vadd.f32 %v1064, %v1116
    %s1122 = sld [smem:[#allocation4 + $0x4b]]
    %v1123 = vstv %s1122
    %v1124 = vmul.f32 %v1123, %v103
    %v1125 = vmul.f32 %v1123, %v104
    %1128 = vrot.lane.b32.xlu0 %v1124, 92
    %v1129 = vpop.permute.xlu0 %1128
    %1130 = vrot.lane.b32.xlu0 %v1125, 92
    %v1131 = vpop.permute.xlu0 %1130
    %v1132 = vsel %vm1090, %v1129, %v1131
    %v1135 = vadd.f32 %v1078, %v1132
    %v1136 = vadd.f32 %v1079, %v1131
    %s1137 = sld [smem:[#allocation4 + $0x4c]]
    %v1138 = vstv %s1137
    %v1139 = vmul.f32 %v1138, %v95
    %v1140 = vmul.f32 %v1138, %v96
    %1143 = vrot.lane.b32.xlu0 %v1139, 90
    %v1144 = vpop.permute.xlu0 %1143
    %1145 = vrot.lane.b32.xlu0 %v1140, 90
    %v1146 = vpop.permute.xlu0 %1145
    %vm1147 = vcmask 736256
    %v1148 = vsel %vm1147, %v1144, %v1146
    %v1150 = vadd.f32 %v1093, %v1148
    %s1151 = sld [smem:[#allocation4 + $0x4d]]
    %v1152 = vstv %s1151
    %v1153 = vmul.f32 %v1152, %v103
    %v1154 = vmul.f32 %v1152, %v104
    %1157 = vrot.lane.b32.xlu0 %v1153, 90
    %v1158 = vpop.permute.xlu0 %1157
    %1159 = vrot.lane.b32.xlu0 %v1154, 90
    %v1160 = vpop.permute.xlu0 %1159
    %v1161 = vsel %vm1147, %v1158, %v1160
    %v1163 = vadd.f32 %v1106, %v1161
    %s1164 = sld [smem:[#allocation4 + $0x4e]]
    %v1165 = vstv %s1164
    %v1166 = vmul.f32 %v1165, %v95
    %v1167 = vmul.f32 %v1165, %v96
    %1170 = vrot.lane.b32.xlu0 %v1166, 90
    %v1171 = vpop.permute.xlu0 %1170
    %1172 = vrot.lane.b32.xlu0 %v1167, 90
    %v1173 = vpop.permute.xlu0 %1172
    %v1174 = vsel %vm1147, %v1171, %v1173
    %v1177 = vadd.f32 %v1120, %v1174
    %v1178 = vadd.f32 %v1121, %v1173
    %s1179 = sld [smem:[#allocation4 + $0x4f]]
    %v1180 = vstv %s1179
    %v1181 = vmul.f32 %v1180, %v103
    %v1182 = vmul.f32 %v1180, %v104
    %1185 = vrot.lane.b32.xlu0 %v1181, 90
    %v1186 = vpop.permute.xlu0 %1185
    %1187 = vrot.lane.b32.xlu0 %v1182, 90
    %v1188 = vpop.permute.xlu0 %1187
    %v1189 = vsel %vm1147, %v1186, %v1188
    %v1192 = vadd.f32 %v1135, %v1189
    %v1193 = vadd.f32 %v1136, %v1188
    %s1194 = sld [smem:[#allocation4 + $0x50]]
    %v1195 = vstv %s1194
    %v1196 = vmul.f32 %v1195, %v95
    %v1197 = vmul.f32 %v1195, %v96
    %1200 = vrot.lane.b32.xlu0 %v1196, 88
    %v1201 = vpop.permute.xlu0 %1200
    %1202 = vrot.lane.b32.xlu0 %v1197, 88
    %v1203 = vpop.permute.xlu0 %1202
    %vm1204 = vcmask 719872
    %v1205 = vsel %vm1204, %v1201, %v1203
    %v1207 = vadd.f32 %v1150, %v1205
    %s1208 = sld [smem:[#allocation4 + $0x51]]
    %v1209 = vstv %s1208
    %v1210 = vmul.f32 %v1209, %v103
    %v1211 = vmul.f32 %v1209, %v104
    %1214 = vrot.lane.b32.xlu0 %v1210, 88
    %v1215 = vpop.permute.xlu0 %1214
    %1216 = vrot.lane.b32.xlu0 %v1211, 88
    %v1217 = vpop.permute.xlu0 %1216
    %v1218 = vsel %vm1204, %v1215, %v1217
    %v1220 = vadd.f32 %v1163, %v1218
    %s1221 = sld [smem:[#allocation4 + $0x52]]
    %v1222 = vstv %s1221
    %v1223 = vmul.f32 %v1222, %v95
    %v1224 = vmul.f32 %v1222, %v96
    %1227 = vrot.lane.b32.xlu0 %v1223, 88
    %v1228 = vpop.permute.xlu0 %1227
    %1229 = vrot.lane.b32.xlu0 %v1224, 88
    %v1230 = vpop.permute.xlu0 %1229
    %v1231 = vsel %vm1204, %v1228, %v1230
    %v1234 = vadd.f32 %v1177, %v1231
    %v1235 = vadd.f32 %v1178, %v1230
    %s1236 = sld [smem:[#allocation4 + $0x53]]
    %v1237 = vstv %s1236
    %v1238 = vmul.f32 %v1237, %v103
    %v1239 = vmul.f32 %v1237, %v104
    %1242 = vrot.lane.b32.xlu0 %v1238, 88
    %v1243 = vpop.permute.xlu0 %1242
    %1244 = vrot.lane.b32.xlu0 %v1239, 88
    %v1245 = vpop.permute.xlu0 %1244
    %v1246 = vsel %vm1204, %v1243, %v1245
    %v1249 = vadd.f32 %v1192, %v1246
    %v1250 = vadd.f32 %v1193, %v1245
    %s1251 = sld [smem:[#allocation4 + $0x54]]
    %v1252 = vstv %s1251
    %v1253 = vmul.f32 %v1252, %v95
    %v1254 = vmul.f32 %v1252, %v96
    %1257 = vrot.lane.b32.xlu0 %v1253, 86
    %v1258 = vpop.permute.xlu0 %1257
    %1259 = vrot.lane.b32.xlu0 %v1254, 86
    %v1260 = vpop.permute.xlu0 %1259
    %vm1261 = vcmask 703488
    %v1262 = vsel %vm1261, %v1258, %v1260
    %v1264 = vadd.f32 %v1207, %v1262
    %s1265 = sld [smem:[#allocation4 + $0x55]]
    %v1266 = vstv %s1265
    %v1267 = vmul.f32 %v1266, %v103
    %v1268 = vmul.f32 %v1266, %v104
    %1271 = vrot.lane.b32.xlu0 %v1267, 86
    %v1272 = vpop.permute.xlu0 %1271
    %1273 = vrot.lane.b32.xlu0 %v1268, 86
    %v1274 = vpop.permute.xlu0 %1273
    %v1275 = vsel %vm1261, %v1272, %v1274
    %v1277 = vadd.f32 %v1220, %v1275
    %s1278 = sld [smem:[#allocation4 + $0x56]]
    %v1279 = vstv %s1278
    %v1280 = vmul.f32 %v1279, %v95
    %v1281 = vmul.f32 %v1279, %v96
    %1284 = vrot.lane.b32.xlu0 %v1280, 86
    %v1285 = vpop.permute.xlu0 %1284
    %1286 = vrot.lane.b32.xlu0 %v1281, 86
    %v1287 = vpop.permute.xlu0 %1286
    %v1288 = vsel %vm1261, %v1285, %v1287
    %v1291 = vadd.f32 %v1234, %v1288
    %v1292 = vadd.f32 %v1235, %v1287
    %s1293 = sld [smem:[#allocation4 + $0x57]]
    %v1294 = vstv %s1293
    %v1295 = vmul.f32 %v1294, %v103
    %v1296 = vmul.f32 %v1294, %v104
    %1299 = vrot.lane.b32.xlu0 %v1295, 86
    %v1300 = vpop.permute.xlu0 %1299
    %1301 = vrot.lane.b32.xlu0 %v1296, 86
    %v1302 = vpop.permute.xlu0 %1301
    %v1303 = vsel %vm1261, %v1300, %v1302
    %v1306 = vadd.f32 %v1249, %v1303
    %v1307 = vadd.f32 %v1250, %v1302
    %s1308 = sld [smem:[#allocation4 + $0x58]]
    %v1309 = vstv %s1308
    %v1310 = vmul.f32 %v1309, %v95
    %v1311 = vmul.f32 %v1309, %v96
    %1314 = vrot.lane.b32.xlu0 %v1310, 84
    %v1315 = vpop.permute.xlu0 %1314
    %1316 = vrot.lane.b32.xlu0 %v1311, 84
    %v1317 = vpop.permute.xlu0 %1316
    %vm1318 = vcmask 687104
    %v1319 = vsel %vm1318, %v1315, %v1317
    %v1321 = vadd.f32 %v1264, %v1319
    %s1322 = sld [smem:[#allocation4 + $0x59]]
    %v1323 = vstv %s1322
    %v1324 = vmul.f32 %v1323, %v103
    %v1325 = vmul.f32 %v1323, %v104
    %1328 = vrot.lane.b32.xlu0 %v1324, 84
    %v1329 = vpop.permute.xlu0 %1328
    %1330 = vrot.lane.b32.xlu0 %v1325, 84
    %v1331 = vpop.permute.xlu0 %1330
    %v1332 = vsel %vm1318, %v1329, %v1331
    %v1334 = vadd.f32 %v1277, %v1332
    %s1335 = sld [smem:[#allocation4 + $0x5a]]
    %v1336 = vstv %s1335
    %v1337 = vmul.f32 %v1336, %v95
    %v1338 = vmul.f32 %v1336, %v96
    %1341 = vrot.lane.b32.xlu0 %v1337, 84
    %v1342 = vpop.permute.xlu0 %1341
    %1343 = vrot.lane.b32.xlu0 %v1338, 84
    %v1344 = vpop.permute.xlu0 %1343
    %v1345 = vsel %vm1318, %v1342, %v1344
    %v1348 = vadd.f32 %v1291, %v1345
    %v1349 = vadd.f32 %v1292, %v1344
    %s1350 = sld [smem:[#allocation4 + $0x5b]]
    %v1351 = vstv %s1350
    %v1352 = vmul.f32 %v1351, %v103
    %v1353 = vmul.f32 %v1351, %v104
    %1356 = vrot.lane.b32.xlu0 %v1352, 84
    %v1357 = vpop.permute.xlu0 %1356
    %1358 = vrot.lane.b32.xlu0 %v1353, 84
    %v1359 = vpop.permute.xlu0 %1358
    %v1360 = vsel %vm1318, %v1357, %v1359
    %v1363 = vadd.f32 %v1306, %v1360
    %v1364 = vadd.f32 %v1307, %v1359
    %s1365 = sld [smem:[#allocation4 + $0x5c]]
    %v1366 = vstv %s1365
    %v1367 = vmul.f32 %v1366, %v95
    %v1368 = vmul.f32 %v1366, %v96
    %1371 = vrot.lane.b32.xlu0 %v1367, 82
    %v1372 = vpop.permute.xlu0 %1371
    %1373 = vrot.lane.b32.xlu0 %v1368, 82
    %v1374 = vpop.permute.xlu0 %1373
    %vm1375 = vcmask 670720
    %v1376 = vsel %vm1375, %v1372, %v1374
    %v1378 = vadd.f32 %v1321, %v1376
    %s1379 = sld [smem:[#allocation4 + $0x5d]]
    %v1380 = vstv %s1379
    %v1381 = vmul.f32 %v1380, %v103
    %v1382 = vmul.f32 %v1380, %v104
    %1385 = vrot.lane.b32.xlu0 %v1381, 82
    %v1386 = vpop.permute.xlu0 %1385
    %1387 = vrot.lane.b32.xlu0 %v1382, 82
    %v1388 = vpop.permute.xlu0 %1387
    %v1389 = vsel %vm1375, %v1386, %v1388
    %v1391 = vadd.f32 %v1334, %v1389
    %s1392 = sld [smem:[#allocation4 + $0x5e]]
    %v1393 = vstv %s1392
    %v1394 = vmul.f32 %v1393, %v95
    %v1395 = vmul.f32 %v1393, %v96
    %1398 = vrot.lane.b32.xlu0 %v1394, 82
    %v1399 = vpop.permute.xlu0 %1398
    %1400 = vrot.lane.b32.xlu0 %v1395, 82
    %v1401 = vpop.permute.xlu0 %1400
    %v1402 = vsel %vm1375, %v1399, %v1401
    %v1405 = vadd.f32 %v1348, %v1402
    %v1406 = vadd.f32 %v1349, %v1401
    %s1407 = sld [smem:[#allocation4 + $0x5f]]
    %v1408 = vstv %s1407
    %v1409 = vmul.f32 %v1408, %v103
    %v1410 = vmul.f32 %v1408, %v104
    %1413 = vrot.lane.b32.xlu0 %v1409, 82
    %v1414 = vpop.permute.xlu0 %1413
    %1415 = vrot.lane.b32.xlu0 %v1410, 82
    %v1416 = vpop.permute.xlu0 %1415
    %v1417 = vsel %vm1375, %v1414, %v1416
    %v1420 = vadd.f32 %v1363, %v1417
    %v1421 = vadd.f32 %v1364, %v1416
    %s1422 = sld [smem:[#allocation4 + $0x60]]
    %v1423 = vstv %s1422
    %v1424 = vmul.f32 %v1423, %v95
    %v1425 = vmul.f32 %v1423, %v96
    %1428 = vrot.lane.b32.xlu0 %v1424, 80
    %v1429 = vpop.permute.xlu0 %1428
    %1430 = vrot.lane.b32.xlu0 %v1425, 80
    %v1431 = vpop.permute.xlu0 %1430
    %vm1432 = vcmask 654336
    %v1433 = vsel %vm1432, %v1429, %v1431
    %v1435 = vadd.f32 %v1378, %v1433
    %s1436 = sld [smem:[#allocation4 + $0x61]]
    %v1437 = vstv %s1436
    %v1438 = vmul.f32 %v1437, %v103
    %v1439 = vmul.f32 %v1437, %v104
    %1442 = vrot.lane.b32.xlu0 %v1438, 80
    %v1443 = vpop.permute.xlu0 %1442
    %1444 = vrot.lane.b32.xlu0 %v1439, 80
    %v1445 = vpop.permute.xlu0 %1444
    %v1446 = vsel %vm1432, %v1443, %v1445
    %v1448 = vadd.f32 %v1391, %v1446
    %s1449 = sld [smem:[#allocation4 + $0x62]]
    %v1450 = vstv %s1449
    %v1451 = vmul.f32 %v1450, %v95
    %v1452 = vmul.f32 %v1450, %v96
    %1455 = vrot.lane.b32.xlu0 %v1451, 80
    %v1456 = vpop.permute.xlu0 %1455
    %1457 = vrot.lane.b32.xlu0 %v1452, 80
    %v1458 = vpop.permute.xlu0 %1457
    %v1459 = vsel %vm1432, %v1456, %v1458
    %v1462 = vadd.f32 %v1405, %v1459
    %v1463 = vadd.f32 %v1406, %v1458
    %s1464 = sld [smem:[#allocation4 + $0x63]]
    %v1465 = vstv %s1464
    %v1466 = vmul.f32 %v1465, %v103
    %v1467 = vmul.f32 %v1465, %v104
    %1470 = vrot.lane.b32.xlu0 %v1466, 80
    %v1471 = vpop.permute.xlu0 %1470
    %1472 = vrot.lane.b32.xlu0 %v1467, 80
    %v1473 = vpop.permute.xlu0 %1472
    %v1474 = vsel %vm1432, %v1471, %v1473
    %v1477 = vadd.f32 %v1420, %v1474
    %v1478 = vadd.f32 %v1421, %v1473
    %s1479 = sld [smem:[#allocation4 + $0x64]]
    %v1480 = vstv %s1479
    %v1481 = vmul.f32 %v1480, %v95
    %v1482 = vmul.f32 %v1480, %v96
    %1485 = vrot.lane.b32.xlu0 %v1481, 78
    %v1486 = vpop.permute.xlu0 %1485
    %1487 = vrot.lane.b32.xlu0 %v1482, 78
    %v1488 = vpop.permute.xlu0 %1487
    %vm1489 = vcmask 637952
    %v1490 = vsel %vm1489, %v1486, %v1488
    %v1492 = vadd.f32 %v1435, %v1490
    %v1493 = vadd.f32 %v1492, %v1448
    %v1494 = vadd.f32 %v1462, %v1477
    %v1495 = vadd.f32 %v1463, %v1478
    %1498 = vrot.lane.b32.xlu0 %v1494, 127
    %v1499 = vpop.permute.xlu0 %1498
    %1500 = vrot.lane.b32.xlu0 %v1495, 127
    %v1501 = vpop.permute.xlu0 %1500
    %vm1502 = vcmask 1039360
    %v1503 = vsel %vm1502, %v1499, %v1501
    %v1505 = vadd.f32 %v1493, %v1503
    %s1506 = sld [smem:[#allocation3]]
    %v1507 = vstv %s1506
    %v1508 = vadd.f32 %v1505, %v1507
    %1509 = vxpose.xlu0.b32.start [1/16] %v1508, 128
    %1510 = vxpose.xlu0.b32.cont [2/16] 0.0, 128
    %1511 = vxpose.xlu0.b32.cont [3/16] 0.0, 128
    %1512 = vxpose.xlu0.b32.cont [4/16] 0.0, 128
    %1513 = vxpose.xlu0.b32.cont [5/16] 0.0, 128
    %1514 = vxpose.xlu0.b32.cont [6/16] 0.0, 128
    %1515 = vxpose.xlu0.b32.cont [7/16] 0.0, 128
    %1516 = vxpose.xlu0.b32.cont [8/16] 0.0, 128
    %1517 = vxpose.xlu0.b32.cont [9/16] 0.0, 128
    %1518 = vxpose.xlu0.b32.cont [10/16] 0.0, 128
    %1519 = vxpose.xlu0.b32.cont [11/16] 0.0, 128
    %1520 = vxpose.xlu0.b32.cont [12/16] 0.0, 128
    %1521 = vxpose.xlu0.b32.cont [13/16] 0.0, 128
    %1522 = vxpose.xlu0.b32.cont [14/16] 0.0, 128
    %1523 = vxpose.xlu0.b32.cont [15/16] 0.0, 128
    %1524 = vxpose.xlu0.b32.end [16/16] 0.0, 128
    %v1525 = vpop.trf.xlu0
    %v1526 = vpop.trf.xlu0
    %v1527 = vpop.trf.xlu0
    %v1528 = vpop.trf.xlu0
    %v1529 = vpop.trf.xlu0
    %v1530 = vpop.trf.xlu0
    %v1531 = vpop.trf.xlu0
    %v1532 = vpop.trf.xlu0
    %v1533 = vpop.trf.xlu0
    %v1534 = vpop.trf.xlu0
    %v1535 = vpop.trf.xlu0
    %v1536 = vpop.trf.xlu0
    %v1537 = vpop.trf.xlu0
    %v1538 = vpop.trf.xlu0
    %v1539 = vpop.trf.xlu0
    %v1540 = vpop.trf.xlu0
    %v1541 = vld [vmem:[%s3] sm:$0xff]
    %v1542 = vld [vmem:[%s3 + $0x8] sm:$0xff]
    %v1543 = vld [vmem:[%s3 + $0x10] sm:$0xff]
    %v1560 = vcombine.high %v1525, %v1525
    %v1562 = vunpack.c.l.s4 1966171168
    %v1563 = vunpack.c.0.s8 %v1562
    %v1564 = vlaneseq
    %v1565 = vshrl.u32 %v1564, 7
    %v1566 = vsub.s32 %v1563, %v1565
    %v1567 = vrot.slane %v1525, %v1566
    %v1569 = vunpack.c.l.s4 1966171168
    %v1570 = vunpack.c.0.s8 %v1569
    %v1571 = vlaneseq
    %v1572 = vshrl.u32 %v1571, 7
    %v1573 = vsub.s32 %v1570, %v1572
    %v1574 = vrot.slane %v1560, %v1573
    %v1575 = vcombine.high %v1567, %v1567
    %v1576 = vcombine.high %v1574, %v1574
    %v1578 = vunpack.c.l.s4 1966171168
    %v1579 = vunpack.c.0.s8 %v1578
    %v1580 = vlaneseq
    %v1581 = vshrl.u32 %v1580, 7
    %v1582 = vsub.s32 %v1579, %v1581
    %v1583 = vrot.slane %v1567, %v1582
    %v1585 = vunpack.c.l.s4 1966171168
    %v1586 = vunpack.c.0.s8 %v1585
    %v1587 = vlaneseq
    %v1588 = vshrl.u32 %v1587, 7
    %v1589 = vsub.s32 %v1586, %v1588
    %v1590 = vrot.slane %v1574, %v1589
    %v1592 = vunpack.c.l.s4 1966171168
    %v1593 = vunpack.c.0.s8 %v1592
    %v1594 = vlaneseq
    %v1595 = vshrl.u32 %v1594, 7
    %v1596 = vsub.s32 %v1593, %v1595
    %v1597 = vrot.slane %v1575, %v1596
    %v1599 = vunpack.c.l.s4 1966171168
    %v1600 = vunpack.c.0.s8 %v1599
    %v1601 = vlaneseq
    %v1602 = vshrl.u32 %v1601, 7
    %v1603 = vsub.s32 %v1600, %v1602
    %v1604 = vrot.slane %v1576, %v1603
    %v1605 = vcombine.high %v1583, %v1583
    %v1606 = vcombine.high %v1590, %v1590
    %v1607 = vcombine.high %v1597, %v1597
    %v1608 = vcombine.high %v1604, %v1604
    %v1609 = vcombine.high %v1526, %v1526
    %v1611 = vunpack.c.l.s4 1966171168
    %v1612 = vunpack.c.0.s8 %v1611
    %v1613 = vlaneseq
    %v1614 = vshrl.u32 %v1613, 7
    %v1615 = vsub.s32 %v1612, %v1614
    %v1616 = vrot.slane %v1526, %v1615
    %v1618 = vunpack.c.l.s4 1966171168
    %v1619 = vunpack.c.0.s8 %v1618
    %v1620 = vlaneseq
    %v1621 = vshrl.u32 %v1620, 7
    %v1622 = vsub.s32 %v1619, %v1621
    %v1623 = vrot.slane %v1609, %v1622
    %v1624 = vcombine.high %v1616, %v1616
    %v1625 = vcombine.high %v1623, %v1623
    %v1627 = vunpack.c.l.s4 1966171168
    %v1628 = vunpack.c.0.s8 %v1627
    %v1629 = vlaneseq
    %v1630 = vshrl.u32 %v1629, 7
    %v1631 = vsub.s32 %v1628, %v1630
    %v1632 = vrot.slane %v1616, %v1631
    %v1634 = vunpack.c.l.s4 1966171168
    %v1635 = vunpack.c.0.s8 %v1634
    %v1636 = vlaneseq
    %v1637 = vshrl.u32 %v1636, 7
    %v1638 = vsub.s32 %v1635, %v1637
    %v1639 = vrot.slane %v1623, %v1638
    %v1641 = vunpack.c.l.s4 1966171168
    %v1642 = vunpack.c.0.s8 %v1641
    %v1643 = vlaneseq
    %v1644 = vshrl.u32 %v1643, 7
    %v1645 = vsub.s32 %v1642, %v1644
    %v1646 = vrot.slane %v1624, %v1645
    %v1648 = vunpack.c.l.s4 1966171168
    %v1649 = vunpack.c.0.s8 %v1648
    %v1650 = vlaneseq
    %v1651 = vshrl.u32 %v1650, 7
    %v1652 = vsub.s32 %v1649, %v1651
    %v1653 = vrot.slane %v1625, %v1652
    %v1654 = vcombine.high %v1632, %v1632
    %v1655 = vcombine.high %v1639, %v1639
    %v1656 = vcombine.high %v1646, %v1646
    %v1657 = vcombine.high %v1653, %v1653
    %v1658 = vcombine.high %v1527, %v1527
    %v1660 = vunpack.c.l.s4 1966171168
    %v1661 = vunpack.c.0.s8 %v1660
    %v1662 = vlaneseq
    %v1663 = vshrl.u32 %v1662, 7
    %v1664 = vsub.s32 %v1661, %v1663
    %v1665 = vrot.slane %v1527, %v1664
    %v1667 = vunpack.c.l.s4 1966171168
    %v1668 = vunpack.c.0.s8 %v1667
    %v1669 = vlaneseq
    %v1670 = vshrl.u32 %v1669, 7
    %v1671 = vsub.s32 %v1668, %v1670
    %v1672 = vrot.slane %v1658, %v1671
    %v1673 = vcombine.high %v1665, %v1665
    %v1674 = vcombine.high %v1672, %v1672
    %v1676 = vunpack.c.l.s4 1966171168
    %v1677 = vunpack.c.0.s8 %v1676
    %v1678 = vlaneseq
    %v1679 = vshrl.u32 %v1678, 7
    %v1680 = vsub.s32 %v1677, %v1679
    %v1681 = vrot.slane %v1665, %v1680
    %v1683 = vunpack.c.l.s4 1966171168
    %v1684 = vunpack.c.0.s8 %v1683
    %v1685 = vlaneseq
    %v1686 = vshrl.u32 %v1685, 7
    %v1687 = vsub.s32 %v1684, %v1686
    %v1688 = vrot.slane %v1672, %v1687
    %v1690 = vunpack.c.l.s4 1966171168
    %v1691 = vunpack.c.0.s8 %v1690
    %v1692 = vlaneseq
    %v1693 = vshrl.u32 %v1692, 7
    %v1694 = vsub.s32 %v1691, %v1693
    %v1695 = vrot.slane %v1673, %v1694
    %v1697 = vunpack.c.l.s4 1966171168
    %v1698 = vunpack.c.0.s8 %v1697
    %v1699 = vlaneseq
    %v1700 = vshrl.u32 %v1699, 7
    %v1701 = vsub.s32 %v1698, %v1700
    %v1702 = vrot.slane %v1674, %v1701
    %v1703 = vcombine.high %v1681, %v1681
    %v1704 = vcombine.high %v1688, %v1688
    %v1705 = vcombine.high %v1695, %v1695
    %v1706 = vcombine.high %v1702, %v1702
    %v1707 = vcombine.high %v1528, %v1528
    %v1709 = vunpack.c.l.s4 1966171168
    %v1710 = vunpack.c.0.s8 %v1709
    %v1711 = vlaneseq
    %v1712 = vshrl.u32 %v1711, 7
    %v1713 = vsub.s32 %v1710, %v1712
    %v1714 = vrot.slane %v1528, %v1713
    %v1716 = vunpack.c.l.s4 1966171168
    %v1717 = vunpack.c.0.s8 %v1716
    %v1718 = vlaneseq
    %v1719 = vshrl.u32 %v1718, 7
    %v1720 = vsub.s32 %v1717, %v1719
    %v1721 = vrot.slane %v1707, %v1720
    %v1722 = vcombine.high %v1714, %v1714
    %v1723 = vcombine.high %v1721, %v1721
    %v1725 = vunpack.c.l.s4 1966171168
    %v1726 = vunpack.c.0.s8 %v1725
    %v1727 = vlaneseq
    %v1728 = vshrl.u32 %v1727, 7
    %v1729 = vsub.s32 %v1726, %v1728
    %v1730 = vrot.slane %v1714, %v1729
    %v1732 = vunpack.c.l.s4 1966171168
    %v1733 = vunpack.c.0.s8 %v1732
    %v1734 = vlaneseq
    %v1735 = vshrl.u32 %v1734, 7
    %v1736 = vsub.s32 %v1733, %v1735
    %v1737 = vrot.slane %v1721, %v1736
    %v1739 = vunpack.c.l.s4 1966171168
    %v1740 = vunpack.c.0.s8 %v1739
    %v1741 = vlaneseq
    %v1742 = vshrl.u32 %v1741, 7
    %v1743 = vsub.s32 %v1740, %v1742
    %v1744 = vrot.slane %v1722, %v1743
    %v1746 = vunpack.c.l.s4 1966171168
    %v1747 = vunpack.c.0.s8 %v1746
    %v1748 = vlaneseq
    %v1749 = vshrl.u32 %v1748, 7
    %v1750 = vsub.s32 %v1747, %v1749
    %v1751 = vrot.slane %v1723, %v1750
    %v1752 = vcombine.high %v1730, %v1730
    %v1753 = vcombine.high %v1737, %v1737
    %v1754 = vcombine.high %v1744, %v1744
    %v1755 = vcombine.high %v1751, %v1751
    %v1756 = vcombine.high %v1529, %v1529
    %v1758 = vunpack.c.l.s4 1966171168
    %v1759 = vunpack.c.0.s8 %v1758
    %v1760 = vlaneseq
    %v1761 = vshrl.u32 %v1760, 7
    %v1762 = vsub.s32 %v1759, %v1761
    %v1763 = vrot.slane %v1529, %v1762
    %v1765 = vunpack.c.l.s4 1966171168
    %v1766 = vunpack.c.0.s8 %v1765
    %v1767 = vlaneseq
    %v1768 = vshrl.u32 %v1767, 7
    %v1769 = vsub.s32 %v1766, %v1768
    %v1770 = vrot.slane %v1756, %v1769
    %v1771 = vcombine.high %v1763, %v1763
    %v1772 = vcombine.high %v1770, %v1770
    %v1774 = vunpack.c.l.s4 1966171168
    %v1775 = vunpack.c.0.s8 %v1774
    %v1776 = vlaneseq
    %v1777 = vshrl.u32 %v1776, 7
    %v1778 = vsub.s32 %v1775, %v1777
    %v1779 = vrot.slane %v1763, %v1778
    %v1781 = vunpack.c.l.s4 1966171168
    %v1782 = vunpack.c.0.s8 %v1781
    %v1783 = vlaneseq
    %v1784 = vshrl.u32 %v1783, 7
    %v1785 = vsub.s32 %v1782, %v1784
    %v1786 = vrot.slane %v1770, %v1785
    %v1788 = vunpack.c.l.s4 1966171168
    %v1789 = vunpack.c.0.s8 %v1788
    %v1790 = vlaneseq
    %v1791 = vshrl.u32 %v1790, 7
    %v1792 = vsub.s32 %v1789, %v1791
    %v1793 = vrot.slane %v1771, %v1792
    %v1795 = vunpack.c.l.s4 1966171168
    %v1796 = vunpack.c.0.s8 %v1795
    %v1797 = vlaneseq
    %v1798 = vshrl.u32 %v1797, 7
    %v1799 = vsub.s32 %v1796, %v1798
    %v1800 = vrot.slane %v1772, %v1799
    %v1801 = vcombine.high %v1779, %v1779
    %v1802 = vcombine.high %v1786, %v1786
    %v1803 = vcombine.high %v1793, %v1793
    %v1804 = vcombine.high %v1800, %v1800
    %v1805 = vcombine.high %v1530, %v1530
    %v1807 = vunpack.c.l.s4 1966171168
    %v1808 = vunpack.c.0.s8 %v1807
    %v1809 = vlaneseq
    %v1810 = vshrl.u32 %v1809, 7
    %v1811 = vsub.s32 %v1808, %v1810
    %v1812 = vrot.slane %v1530, %v1811
    %v1814 = vunpack.c.l.s4 1966171168
    %v1815 = vunpack.c.0.s8 %v1814
    %v1816 = vlaneseq
    %v1817 = vshrl.u32 %v1816, 7
    %v1818 = vsub.s32 %v1815, %v1817
    %v1819 = vrot.slane %v1805, %v1818
    %v1820 = vcombine.high %v1812, %v1812
    %v1821 = vcombine.high %v1819, %v1819
    %v1823 = vunpack.c.l.s4 1966171168
    %v1824 = vunpack.c.0.s8 %v1823
    %v1825 = vlaneseq
    %v1826 = vshrl.u32 %v1825, 7
    %v1827 = vsub.s32 %v1824, %v1826
    %v1828 = vrot.slane %v1812, %v1827
    %v1830 = vunpack.c.l.s4 1966171168
    %v1831 = vunpack.c.0.s8 %v1830
    %v1832 = vlaneseq
    %v1833 = vshrl.u32 %v1832, 7
    %v1834 = vsub.s32 %v1831, %v1833
    %v1835 = vrot.slane %v1819, %v1834
    %v1837 = vunpack.c.l.s4 1966171168
    %v1838 = vunpack.c.0.s8 %v1837
    %v1839 = vlaneseq
    %v1840 = vshrl.u32 %v1839, 7
    %v1841 = vsub.s32 %v1838, %v1840
    %v1842 = vrot.slane %v1820, %v1841
    %v1844 = vunpack.c.l.s4 1966171168
    %v1845 = vunpack.c.0.s8 %v1844
    %v1846 = vlaneseq
    %v1847 = vshrl.u32 %v1846, 7
    %v1848 = vsub.s32 %v1845, %v1847
    %v1849 = vrot.slane %v1821, %v1848
    %v1850 = vcombine.high %v1828, %v1828
    %v1851 = vcombine.high %v1835, %v1835
    %v1852 = vcombine.high %v1842, %v1842
    %v1853 = vcombine.high %v1849, %v1849
    %v1854 = vcombine.high %v1531, %v1531
    %v1856 = vunpack.c.l.s4 1966171168
    %v1857 = vunpack.c.0.s8 %v1856
    %v1858 = vlaneseq
    %v1859 = vshrl.u32 %v1858, 7
    %v1860 = vsub.s32 %v1857, %v1859
    %v1861 = vrot.slane %v1531, %v1860
    %v1863 = vunpack.c.l.s4 1966171168
    %v1864 = vunpack.c.0.s8 %v1863
    %v1865 = vlaneseq
    %v1866 = vshrl.u32 %v1865, 7
    %v1867 = vsub.s32 %v1864, %v1866
    %v1868 = vrot.slane %v1854, %v1867
    %v1869 = vcombine.high %v1861, %v1861
    %v1870 = vcombine.high %v1868, %v1868
    %v1872 = vunpack.c.l.s4 1966171168
    %v1873 = vunpack.c.0.s8 %v1872
    %v1874 = vlaneseq
    %v1875 = vshrl.u32 %v1874, 7
    %v1876 = vsub.s32 %v1873, %v1875
    %v1877 = vrot.slane %v1861, %v1876
    %v1879 = vunpack.c.l.s4 1966171168
    %v1880 = vunpack.c.0.s8 %v1879
    %v1881 = vlaneseq
    %v1882 = vshrl.u32 %v1881, 7
    %v1883 = vsub.s32 %v1880, %v1882
    %v1884 = vrot.slane %v1868, %v1883
    %v1886 = vunpack.c.l.s4 1966171168
    %v1887 = vunpack.c.0.s8 %v1886
    %v1888 = vlaneseq
    %v1889 = vshrl.u32 %v1888, 7
    %v1890 = vsub.s32 %v1887, %v1889
    %v1891 = vrot.slane %v1869, %v1890
    %v1893 = vunpack.c.l.s4 1966171168
    %v1894 = vunpack.c.0.s8 %v1893
    %v1895 = vlaneseq
    %v1896 = vshrl.u32 %v1895, 7
    %v1897 = vsub.s32 %v1894, %v1896
    %v1898 = vrot.slane %v1870, %v1897
    %v1899 = vcombine.high %v1877, %v1877
    %v1900 = vcombine.high %v1884, %v1884
    %v1901 = vcombine.high %v1891, %v1891
    %v1902 = vcombine.high %v1898, %v1898
    %v1903 = vcombine.high %v1532, %v1532
    %v1905 = vunpack.c.l.s4 1966171168
    %v1906 = vunpack.c.0.s8 %v1905
    %v1907 = vlaneseq
    %v1908 = vshrl.u32 %v1907, 7
    %v1909 = vsub.s32 %v1906, %v1908
    %v1910 = vrot.slane %v1532, %v1909
    %v1912 = vunpack.c.l.s4 1966171168
    %v1913 = vunpack.c.0.s8 %v1912
    %v1914 = vlaneseq
    %v1915 = vshrl.u32 %v1914, 7
    %v1916 = vsub.s32 %v1913, %v1915
    %v1917 = vrot.slane %v1903, %v1916
    %v1918 = vcombine.high %v1910, %v1910
    %v1919 = vcombine.high %v1917, %v1917
    %v1921 = vunpack.c.l.s4 1966171168
    %v1922 = vunpack.c.0.s8 %v1921
    %v1923 = vlaneseq
    %v1924 = vshrl.u32 %v1923, 7
    %v1925 = vsub.s32 %v1922, %v1924
    %v1926 = vrot.slane %v1910, %v1925
    %v1928 = vunpack.c.l.s4 1966171168
    %v1929 = vunpack.c.0.s8 %v1928
    %v1930 = vlaneseq
    %v1931 = vshrl.u32 %v1930, 7
    %v1932 = vsub.s32 %v1929, %v1931
    %v1933 = vrot.slane %v1917, %v1932
    %v1935 = vunpack.c.l.s4 1966171168
    %v1936 = vunpack.c.0.s8 %v1935
    %v1937 = vlaneseq
    %v1938 = vshrl.u32 %v1937, 7
    %v1939 = vsub.s32 %v1936, %v1938
    %v1940 = vrot.slane %v1918, %v1939
    %v1942 = vunpack.c.l.s4 1966171168
    %v1943 = vunpack.c.0.s8 %v1942
    %v1944 = vlaneseq
    %v1945 = vshrl.u32 %v1944, 7
    %v1946 = vsub.s32 %v1943, %v1945
    %v1947 = vrot.slane %v1919, %v1946
    %v1948 = vcombine.high %v1926, %v1926
    %v1949 = vcombine.high %v1933, %v1933
    %v1950 = vcombine.high %v1940, %v1940
    %v1951 = vcombine.high %v1947, %v1947
    %v1952 = vcombine.high %v1533, %v1533
    %v1954 = vunpack.c.l.s4 1966171168
    %v1955 = vunpack.c.0.s8 %v1954
    %v1956 = vlaneseq
    %v1957 = vshrl.u32 %v1956, 7
    %v1958 = vsub.s32 %v1955, %v1957
    %v1959 = vrot.slane %v1533, %v1958
    %v1961 = vunpack.c.l.s4 1966171168
    %v1962 = vunpack.c.0.s8 %v1961
    %v1963 = vlaneseq
    %v1964 = vshrl.u32 %v1963, 7
    %v1965 = vsub.s32 %v1962, %v1964
    %v1966 = vrot.slane %v1952, %v1965
    %v1967 = vcombine.high %v1959, %v1959
    %v1968 = vcombine.high %v1966, %v1966
    %v1970 = vunpack.c.l.s4 1966171168
    %v1971 = vunpack.c.0.s8 %v1970
    %v1972 = vlaneseq
    %v1973 = vshrl.u32 %v1972, 7
    %v1974 = vsub.s32 %v1971, %v1973
    %v1975 = vrot.slane %v1959, %v1974
    %v1977 = vunpack.c.l.s4 1966171168
    %v1978 = vunpack.c.0.s8 %v1977
    %v1979 = vlaneseq
    %v1980 = vshrl.u32 %v1979, 7
    %v1981 = vsub.s32 %v1978, %v1980
    %v1982 = vrot.slane %v1966, %v1981
    %v1984 = vunpack.c.l.s4 1966171168
    %v1985 = vunpack.c.0.s8 %v1984
    %v1986 = vlaneseq
    %v1987 = vshrl.u32 %v1986, 7
    %v1988 = vsub.s32 %v1985, %v1987
    %v1989 = vrot.slane %v1967, %v1988
    %v1991 = vunpack.c.l.s4 1966171168
    %v1992 = vunpack.c.0.s8 %v1991
    %v1993 = vlaneseq
    %v1994 = vshrl.u32 %v1993, 7
    %v1995 = vsub.s32 %v1992, %v1994
    %v1996 = vrot.slane %v1968, %v1995
    %v1997 = vcombine.high %v1975, %v1975
    %v1998 = vcombine.high %v1982, %v1982
    %v1999 = vcombine.high %v1989, %v1989
    %v2000 = vcombine.high %v1996, %v1996
    %v2001 = vcombine.high %v1534, %v1534
    %v2003 = vunpack.c.l.s4 1966171168
    %v2004 = vunpack.c.0.s8 %v2003
    %v2005 = vlaneseq
    %v2006 = vshrl.u32 %v2005, 7
    %v2007 = vsub.s32 %v2004, %v2006
    %v2008 = vrot.slane %v1534, %v2007
    %v2010 = vunpack.c.l.s4 1966171168
    %v2011 = vunpack.c.0.s8 %v2010
    %v2012 = vlaneseq
    %v2013 = vshrl.u32 %v2012, 7
    %v2014 = vsub.s32 %v2011, %v2013
    %v2015 = vrot.slane %v2001, %v2014
    %v2016 = vcombine.high %v2008, %v2008
    %v2017 = vcombine.high %v2015, %v2015
    %v2019 = vunpack.c.l.s4 1966171168
    %v2020 = vunpack.c.0.s8 %v2019
    %v2021 = vlaneseq
    %v2022 = vshrl.u32 %v2021, 7
    %v2023 = vsub.s32 %v2020, %v2022
    %v2024 = vrot.slane %v2008, %v2023
    %v2026 = vunpack.c.l.s4 1966171168
    %v2027 = vunpack.c.0.s8 %v2026
    %v2028 = vlaneseq
    %v2029 = vshrl.u32 %v2028, 7
    %v2030 = vsub.s32 %v2027, %v2029
    %v2031 = vrot.slane %v2015, %v2030
    %v2033 = vunpack.c.l.s4 1966171168
    %v2034 = vunpack.c.0.s8 %v2033
    %v2035 = vlaneseq
    %v2036 = vshrl.u32 %v2035, 7
    %v2037 = vsub.s32 %v2034, %v2036
    %v2038 = vrot.slane %v2016, %v2037
    %v2040 = vunpack.c.l.s4 1966171168
    %v2041 = vunpack.c.0.s8 %v2040
    %v2042 = vlaneseq
    %v2043 = vshrl.u32 %v2042, 7
    %v2044 = vsub.s32 %v2041, %v2043
    %v2045 = vrot.slane %v2017, %v2044
    %v2046 = vcombine.high %v2024, %v2024
    %v2047 = vcombine.high %v2031, %v2031
    %v2048 = vcombine.high %v2038, %v2038
    %v2049 = vcombine.high %v2045, %v2045
    %v2050 = vcombine.high %v1535, %v1535
    %v2052 = vunpack.c.l.s4 1966171168
    %v2053 = vunpack.c.0.s8 %v2052
    %v2054 = vlaneseq
    %v2055 = vshrl.u32 %v2054, 7
    %v2056 = vsub.s32 %v2053, %v2055
    %v2057 = vrot.slane %v1535, %v2056
    %v2059 = vunpack.c.l.s4 1966171168
    %v2060 = vunpack.c.0.s8 %v2059
    %v2061 = vlaneseq
    %v2062 = vshrl.u32 %v2061, 7
    %v2063 = vsub.s32 %v2060, %v2062
    %v2064 = vrot.slane %v2050, %v2063
    %v2065 = vcombine.high %v2057, %v2057
    %v2066 = vcombine.high %v2064, %v2064
    %v2068 = vunpack.c.l.s4 1966171168
    %v2069 = vunpack.c.0.s8 %v2068
    %v2070 = vlaneseq
    %v2071 = vshrl.u32 %v2070, 7
    %v2072 = vsub.s32 %v2069, %v2071
    %v2073 = vrot.slane %v2057, %v2072
    %v2075 = vunpack.c.l.s4 1966171168
    %v2076 = vunpack.c.0.s8 %v2075
    %v2077 = vlaneseq
    %v2078 = vshrl.u32 %v2077, 7
    %v2079 = vsub.s32 %v2076, %v2078
    %v2080 = vrot.slane %v2064, %v2079
    %v2082 = vunpack.c.l.s4 1966171168
    %v2083 = vunpack.c.0.s8 %v2082
    %v2084 = vlaneseq
    %v2085 = vshrl.u32 %v2084, 7
    %v2086 = vsub.s32 %v2083, %v2085
    %v2087 = vrot.slane %v2065, %v2086
    %v2089 = vunpack.c.l.s4 1966171168
    %v2090 = vunpack.c.0.s8 %v2089
    %v2091 = vlaneseq
    %v2092 = vshrl.u32 %v2091, 7
    %v2093 = vsub.s32 %v2090, %v2092
    %v2094 = vrot.slane %v2066, %v2093
    %v2095 = vcombine.high %v2073, %v2073
    %v2096 = vcombine.high %v2080, %v2080
    %v2097 = vcombine.high %v2087, %v2087
    %v2098 = vcombine.high %v2094, %v2094
    %v2099 = vcombine.high %v1536, %v1536
    %v2101 = vunpack.c.l.s4 1966171168
    %v2102 = vunpack.c.0.s8 %v2101
    %v2103 = vlaneseq
    %v2104 = vshrl.u32 %v2103, 7
    %v2105 = vsub.s32 %v2102, %v2104
    %v2106 = vrot.slane %v1536, %v2105
    %v2108 = vunpack.c.l.s4 1966171168
    %v2109 = vunpack.c.0.s8 %v2108
    %v2110 = vlaneseq
    %v2111 = vshrl.u32 %v2110, 7
    %v2112 = vsub.s32 %v2109, %v2111
    %v2113 = vrot.slane %v2099, %v2112
    %v2114 = vcombine.high %v2106, %v2106
    %v2115 = vcombine.high %v2113, %v2113
    %v2117 = vunpack.c.l.s4 1966171168
    %v2118 = vunpack.c.0.s8 %v2117
    %v2119 = vlaneseq
    %v2120 = vshrl.u32 %v2119, 7
    %v2121 = vsub.s32 %v2118, %v2120
    %v2122 = vrot.slane %v2106, %v2121
    %v2124 = vunpack.c.l.s4 1966171168
    %v2125 = vunpack.c.0.s8 %v2124
    %v2126 = vlaneseq
    %v2127 = vshrl.u32 %v2126, 7
    %v2128 = vsub.s32 %v2125, %v2127
    %v2129 = vrot.slane %v2113, %v2128
    %v2131 = vunpack.c.l.s4 1966171168
    %v2132 = vunpack.c.0.s8 %v2131
    %v2133 = vlaneseq
    %v2134 = vshrl.u32 %v2133, 7
    %v2135 = vsub.s32 %v2132, %v2134
    %v2136 = vrot.slane %v2114, %v2135
    %v2138 = vunpack.c.l.s4 1966171168
    %v2139 = vunpack.c.0.s8 %v2138
    %v2140 = vlaneseq
    %v2141 = vshrl.u32 %v2140, 7
    %v2142 = vsub.s32 %v2139, %v2141
    %v2143 = vrot.slane %v2115, %v2142
    %v2144 = vcombine.high %v2122, %v2122
    %v2145 = vcombine.high %v2129, %v2129
    %v2146 = vcombine.high %v2136, %v2136
    %v2147 = vcombine.high %v2143, %v2143
    %v2148 = vcombine.high %v1537, %v1537
    %v2150 = vunpack.c.l.s4 1966171168
    %v2151 = vunpack.c.0.s8 %v2150
    %v2152 = vlaneseq
    %v2153 = vshrl.u32 %v2152, 7
    %v2154 = vsub.s32 %v2151, %v2153
    %v2155 = vrot.slane %v1537, %v2154
    %v2157 = vunpack.c.l.s4 1966171168
    %v2158 = vunpack.c.0.s8 %v2157
    %v2159 = vlaneseq
    %v2160 = vshrl.u32 %v2159, 7
    %v2161 = vsub.s32 %v2158, %v2160
    %v2162 = vrot.slane %v2148, %v2161
    %v2163 = vcombine.high %v2155, %v2155
    %v2164 = vcombine.high %v2162, %v2162
    %v2166 = vunpack.c.l.s4 1966171168
    %v2167 = vunpack.c.0.s8 %v2166
    %v2168 = vlaneseq
    %v2169 = vshrl.u32 %v2168, 7
    %v2170 = vsub.s32 %v2167, %v2169
    %v2171 = vrot.slane %v2155, %v2170
    %v2173 = vunpack.c.l.s4 1966171168
    %v2174 = vunpack.c.0.s8 %v2173
    %v2175 = vlaneseq
    %v2176 = vshrl.u32 %v2175, 7
    %v2177 = vsub.s32 %v2174, %v2176
    %v2178 = vrot.slane %v2162, %v2177
    %v2180 = vunpack.c.l.s4 1966171168
    %v2181 = vunpack.c.0.s8 %v2180
    %v2182 = vlaneseq
    %v2183 = vshrl.u32 %v2182, 7
    %v2184 = vsub.s32 %v2181, %v2183
    %v2185 = vrot.slane %v2163, %v2184
    %v2187 = vunpack.c.l.s4 1966171168
    %v2188 = vunpack.c.0.s8 %v2187
    %v2189 = vlaneseq
    %v2190 = vshrl.u32 %v2189, 7
    %v2191 = vsub.s32 %v2188, %v2190
    %v2192 = vrot.slane %v2164, %v2191
    %v2193 = vcombine.high %v2171, %v2171
    %v2194 = vcombine.high %v2178, %v2178
    %v2195 = vcombine.high %v2185, %v2185
    %v2196 = vcombine.high %v2192, %v2192
    %v2197 = vcombine.high %v1538, %v1538
    %v2199 = vunpack.c.l.s4 1966171168
    %v2200 = vunpack.c.0.s8 %v2199
    %v2201 = vlaneseq
    %v2202 = vshrl.u32 %v2201, 7
    %v2203 = vsub.s32 %v2200, %v2202
    %v2204 = vrot.slane %v1538, %v2203
    %v2206 = vunpack.c.l.s4 1966171168
    %v2207 = vunpack.c.0.s8 %v2206
    %v2208 = vlaneseq
    %v2209 = vshrl.u32 %v2208, 7
    %v2210 = vsub.s32 %v2207, %v2209
    %v2211 = vrot.slane %v2197, %v2210
    %v2212 = vcombine.high %v2204, %v2204
    %v2213 = vcombine.high %v2211, %v2211
    %v2215 = vunpack.c.l.s4 1966171168
    %v2216 = vunpack.c.0.s8 %v2215
    %v2217 = vlaneseq
    %v2218 = vshrl.u32 %v2217, 7
    %v2219 = vsub.s32 %v2216, %v2218
    %v2220 = vrot.slane %v2204, %v2219
    %v2222 = vunpack.c.l.s4 1966171168
    %v2223 = vunpack.c.0.s8 %v2222
    %v2224 = vlaneseq
    %v2225 = vshrl.u32 %v2224, 7
    %v2226 = vsub.s32 %v2223, %v2225
    %v2227 = vrot.slane %v2211, %v2226
    %v2229 = vunpack.c.l.s4 1966171168
    %v2230 = vunpack.c.0.s8 %v2229
    %v2231 = vlaneseq
    %v2232 = vshrl.u32 %v2231, 7
    %v2233 = vsub.s32 %v2230, %v2232
    %v2234 = vrot.slane %v2212, %v2233
    %v2236 = vunpack.c.l.s4 1966171168
    %v2237 = vunpack.c.0.s8 %v2236
    %v2238 = vlaneseq
    %v2239 = vshrl.u32 %v2238, 7
    %v2240 = vsub.s32 %v2237, %v2239
    %v2241 = vrot.slane %v2213, %v2240
    %v2242 = vcombine.high %v2220, %v2220
    %v2243 = vcombine.high %v2227, %v2227
    %v2244 = vcombine.high %v2234, %v2234
    %v2245 = vcombine.high %v2241, %v2241
    %v2246 = vcombine.high %v1539, %v1539
    %v2248 = vunpack.c.l.s4 1966171168
    %v2249 = vunpack.c.0.s8 %v2248
    %v2250 = vlaneseq
    %v2251 = vshrl.u32 %v2250, 7
    %v2252 = vsub.s32 %v2249, %v2251
    %v2253 = vrot.slane %v1539, %v2252
    %v2255 = vunpack.c.l.s4 1966171168
    %v2256 = vunpack.c.0.s8 %v2255
    %v2257 = vlaneseq
    %v2258 = vshrl.u32 %v2257, 7
    %v2259 = vsub.s32 %v2256, %v2258
    %v2260 = vrot.slane %v2246, %v2259
    %v2261 = vcombine.high %v2253, %v2253
    %v2262 = vcombine.high %v2260, %v2260
    %v2264 = vunpack.c.l.s4 1966171168
    %v2265 = vunpack.c.0.s8 %v2264
    %v2266 = vlaneseq
    %v2267 = vshrl.u32 %v2266, 7
    %v2268 = vsub.s32 %v2265, %v2267
    %v2269 = vrot.slane %v2253, %v2268
    %v2271 = vunpack.c.l.s4 1966171168
    %v2272 = vunpack.c.0.s8 %v2271
    %v2273 = vlaneseq
    %v2274 = vshrl.u32 %v2273, 7
    %v2275 = vsub.s32 %v2272, %v2274
    %v2276 = vrot.slane %v2260, %v2275
    %v2278 = vunpack.c.l.s4 1966171168
    %v2279 = vunpack.c.0.s8 %v2278
    %v2280 = vlaneseq
    %v2281 = vshrl.u32 %v2280, 7
    %v2282 = vsub.s32 %v2279, %v2281
    %v2283 = vrot.slane %v2261, %v2282
    %v2285 = vunpack.c.l.s4 1966171168
    %v2286 = vunpack.c.0.s8 %v2285
    %v2287 = vlaneseq
    %v2288 = vshrl.u32 %v2287, 7
    %v2289 = vsub.s32 %v2286, %v2288
    %v2290 = vrot.slane %v2262, %v2289
    %v2291 = vcombine.high %v2269, %v2269
    %v2292 = vcombine.high %v2276, %v2276
    %v2293 = vcombine.high %v2283, %v2283
    %v2294 = vcombine.high %v2290, %v2290
    %v2295 = vcombine.high %v1540, %v1540
    %v2297 = vunpack.c.l.s4 1966171168
    %v2298 = vunpack.c.0.s8 %v2297
    %v2299 = vlaneseq
    %v2300 = vshrl.u32 %v2299, 7
    %v2301 = vsub.s32 %v2298, %v2300
    %v2302 = vrot.slane %v1540, %v2301
    %v2304 = vunpack.c.l.s4 1966171168
    %v2305 = vunpack.c.0.s8 %v2304
    %v2306 = vlaneseq
    %v2307 = vshrl.u32 %v2306, 7
    %v2308 = vsub.s32 %v2305, %v2307
    %v2309 = vrot.slane %v2295, %v2308
    %v2310 = vcombine.high %v2302, %v2302
    %v2311 = vcombine.high %v2309, %v2309
    %v2313 = vunpack.c.l.s4 1966171168
    %v2314 = vunpack.c.0.s8 %v2313
    %v2315 = vlaneseq
    %v2316 = vshrl.u32 %v2315, 7
    %v2317 = vsub.s32 %v2314, %v2316
    %v2318 = vrot.slane %v2302, %v2317
    %v2320 = vunpack.c.l.s4 1966171168
    %v2321 = vunpack.c.0.s8 %v2320
    %v2322 = vlaneseq
    %v2323 = vshrl.u32 %v2322, 7
    %v2324 = vsub.s32 %v2321, %v2323
    %v2325 = vrot.slane %v2309, %v2324
    %v2327 = vunpack.c.l.s4 1966171168
    %v2328 = vunpack.c.0.s8 %v2327
    %v2329 = vlaneseq
    %v2330 = vshrl.u32 %v2329, 7
    %v2331 = vsub.s32 %v2328, %v2330
    %v2332 = vrot.slane %v2310, %v2331
    %v2334 = vunpack.c.l.s4 1966171168
    %v2335 = vunpack.c.0.s8 %v2334
    %v2336 = vlaneseq
    %v2337 = vshrl.u32 %v2336, 7
    %v2338 = vsub.s32 %v2335, %v2337
    %v2339 = vrot.slane %v2311, %v2338
    %v2340 = vcombine.high %v2318, %v2318
    %v2341 = vcombine.high %v2325, %v2325
    %v2342 = vcombine.high %v2332, %v2332
    %v2343 = vcombine.high %v2339, %v2339
    %2345 = vset.pattern.permute.xlu0 0
    %2346 = vperm.xlu0 %2345, %v1541
    %v2347 = vpop.permute.xlu0 %2346
    %2350 = vset.pattern.permute.xlu0 0
    %2351 = vperm.xlu0 %2350, %v1542
    %v2352 = vpop.permute.xlu0 %2351
    %2355 = vset.pattern.permute.xlu0 0
    %2356 = vperm.xlu0 %2355, %v1543
    %v2357 = vpop.permute.xlu0 %2356
    %v2359 = vlaneseq
    %v2360 = vshrl.u32 %v2359, 7
    %v2361 = vsub.s32 0, %v2360
    %v2362 = vrot.slane %v1583, %v2361
    %v2363 = vlaneseq
    %v2364 = vshrl.u32 %v2363, 7
    %v2365 = vsub.s32 0, %v2364
    %v2366 = vrot.slane %v1597, %v2365
    %v2367 = vlaneseq
    %v2368 = vshrl.u32 %v2367, 7
    %v2369 = vsub.s32 0, %v2368
    %v2370 = vrot.slane %v1605, %v2369
    %v2371 = vlaneseq
    %v2372 = vshrl.u32 %v2371, 7
    %v2373 = vsub.s32 0, %v2372
    %v2374 = vrot.slane %v1607, %v2373
    %v2375 = vlaneseq
    %v2376 = vshrl.u32 %v2375, 7
    %v2377 = vsub.s32 0, %v2376
    %v2378 = vrot.slane %v1590, %v2377
    %v2379 = vlaneseq
    %v2380 = vshrl.u32 %v2379, 7
    %v2381 = vsub.s32 0, %v2380
    %v2382 = vrot.slane %v1604, %v2381
    %v2383 = vlaneseq
    %v2384 = vshrl.u32 %v2383, 7
    %v2385 = vsub.s32 0, %v2384
    %v2386 = vrot.slane %v1606, %v2385
    %v2387 = vlaneseq
    %v2388 = vshrl.u32 %v2387, 7
    %v2389 = vsub.s32 0, %v2388
    %v2390 = vrot.slane %v1608, %v2389
    %v2391 = vlaneseq
    %v2392 = vshrl.u32 %v2391, 7
    %v2393 = vsub.s32 0, %v2392
    %v2394 = vrot.slane %v1632, %v2393
    %v2395 = vlaneseq
    %v2396 = vshrl.u32 %v2395, 7
    %v2397 = vsub.s32 0, %v2396
    %v2398 = vrot.slane %v1646, %v2397
    %v2399 = vlaneseq
    %v2400 = vshrl.u32 %v2399, 7
    %v2401 = vsub.s32 0, %v2400
    %v2402 = vrot.slane %v1654, %v2401
    %v2403 = vlaneseq
    %v2404 = vshrl.u32 %v2403, 7
    %v2405 = vsub.s32 0, %v2404
    %v2406 = vrot.slane %v1656, %v2405
    %v2407 = vlaneseq
    %v2408 = vshrl.u32 %v2407, 7
    %v2409 = vsub.s32 0, %v2408
    %v2410 = vrot.slane %v1639, %v2409
    %v2411 = vlaneseq
    %v2412 = vshrl.u32 %v2411, 7
    %v2413 = vsub.s32 0, %v2412
    %v2414 = vrot.slane %v1653, %v2413
    %v2415 = vlaneseq
    %v2416 = vshrl.u32 %v2415, 7
    %v2417 = vsub.s32 0, %v2416
    %v2418 = vrot.slane %v1655, %v2417
    %v2419 = vlaneseq
    %v2420 = vshrl.u32 %v2419, 7
    %v2421 = vsub.s32 0, %v2420
    %v2422 = vrot.slane %v1657, %v2421
    %v2423 = vlaneseq
    %v2424 = vshrl.u32 %v2423, 7
    %v2425 = vsub.s32 0, %v2424
    %v2426 = vrot.slane %v1681, %v2425
    %v2427 = vlaneseq
    %v2428 = vshrl.u32 %v2427, 7
    %v2429 = vsub.s32 0, %v2428
    %v2430 = vrot.slane %v1695, %v2429
    %v2431 = vlaneseq
    %v2432 = vshrl.u32 %v2431, 7
    %v2433 = vsub.s32 0, %v2432
    %v2434 = vrot.slane %v1703, %v2433
    %v2435 = vlaneseq
    %v2436 = vshrl.u32 %v2435, 7
    %v2437 = vsub.s32 0, %v2436
    %v2438 = vrot.slane %v1705, %v2437
    %v2439 = vlaneseq
    %v2440 = vshrl.u32 %v2439, 7
    %v2441 = vsub.s32 0, %v2440
    %v2442 = vrot.slane %v1688, %v2441
    %v2443 = vlaneseq
    %v2444 = vshrl.u32 %v2443, 7
    %v2445 = vsub.s32 0, %v2444
    %v2446 = vrot.slane %v1702, %v2445
    %v2447 = vlaneseq
    %v2448 = vshrl.u32 %v2447, 7
    %v2449 = vsub.s32 0, %v2448
    %v2450 = vrot.slane %v1704, %v2449
    %v2451 = vlaneseq
    %v2452 = vshrl.u32 %v2451, 7
    %v2453 = vsub.s32 0, %v2452
    %v2454 = vrot.slane %v1706, %v2453
    %v2455 = vlaneseq
    %v2456 = vshrl.u32 %v2455, 7
    %v2457 = vsub.s32 0, %v2456
    %v2458 = vrot.slane %v1730, %v2457
    %v2459 = vlaneseq
    %v2460 = vshrl.u32 %v2459, 7
    %v2461 = vsub.s32 0, %v2460
    %v2462 = vrot.slane %v1744, %v2461
    %v2463 = vlaneseq
    %v2464 = vshrl.u32 %v2463, 7
    %v2465 = vsub.s32 0, %v2464
    %v2466 = vrot.slane %v1752, %v2465
    %v2467 = vlaneseq
    %v2468 = vshrl.u32 %v2467, 7
    %v2469 = vsub.s32 0, %v2468
    %v2470 = vrot.slane %v1754, %v2469
    %v2471 = vlaneseq
    %v2472 = vshrl.u32 %v2471, 7
    %v2473 = vsub.s32 0, %v2472
    %v2474 = vrot.slane %v1737, %v2473
    %v2475 = vlaneseq
    %v2476 = vshrl.u32 %v2475, 7
    %v2477 = vsub.s32 0, %v2476
    %v2478 = vrot.slane %v1751, %v2477
    %v2479 = vlaneseq
    %v2480 = vshrl.u32 %v2479, 7
    %v2481 = vsub.s32 0, %v2480
    %v2482 = vrot.slane %v1753, %v2481
    %v2483 = vlaneseq
    %v2484 = vshrl.u32 %v2483, 7
    %v2485 = vsub.s32 0, %v2484
    %v2486 = vrot.slane %v1755, %v2485
    %v2487 = vlaneseq
    %v2488 = vshrl.u32 %v2487, 7
    %v2489 = vsub.s32 0, %v2488
    %v2490 = vrot.slane %v1779, %v2489
    %v2491 = vlaneseq
    %v2492 = vshrl.u32 %v2491, 7
    %v2493 = vsub.s32 0, %v2492
    %v2494 = vrot.slane %v1793, %v2493
    %v2495 = vlaneseq
    %v2496 = vshrl.u32 %v2495, 7
    %v2497 = vsub.s32 0, %v2496
    %v2498 = vrot.slane %v1801, %v2497
    %v2499 = vlaneseq
    %v2500 = vshrl.u32 %v2499, 7
    %v2501 = vsub.s32 0, %v2500
    %v2502 = vrot.slane %v1803, %v2501
    %v2503 = vlaneseq
    %v2504 = vshrl.u32 %v2503, 7
    %v2505 = vsub.s32 0, %v2504
    %v2506 = vrot.slane %v1786, %v2505
    %v2507 = vlaneseq
    %v2508 = vshrl.u32 %v2507, 7
    %v2509 = vsub.s32 0, %v2508
    %v2510 = vrot.slane %v1800, %v2509
    %v2511 = vlaneseq
    %v2512 = vshrl.u32 %v2511, 7
    %v2513 = vsub.s32 0, %v2512
    %v2514 = vrot.slane %v1802, %v2513
    %v2515 = vlaneseq
    %v2516 = vshrl.u32 %v2515, 7
    %v2517 = vsub.s32 0, %v2516
    %v2518 = vrot.slane %v1804, %v2517
    %v2519 = vlaneseq
    %v2520 = vshrl.u32 %v2519, 7
    %v2521 = vsub.s32 0, %v2520
    %v2522 = vrot.slane %v1828, %v2521
    %v2523 = vlaneseq
    %v2524 = vshrl.u32 %v2523, 7
    %v2525 = vsub.s32 0, %v2524
    %v2526 = vrot.slane %v1842, %v2525
    %v2527 = vlaneseq
    %v2528 = vshrl.u32 %v2527, 7
    %v2529 = vsub.s32 0, %v2528
    %v2530 = vrot.slane %v1850, %v2529
    %v2531 = vlaneseq
    %v2532 = vshrl.u32 %v2531, 7
    %v2533 = vsub.s32 0, %v2532
    %v2534 = vrot.slane %v1852, %v2533
    %v2535 = vlaneseq
    %v2536 = vshrl.u32 %v2535, 7
    %v2537 = vsub.s32 0, %v2536
    %v2538 = vrot.slane %v1835, %v2537
    %v2539 = vlaneseq
    %v2540 = vshrl.u32 %v2539, 7
    %v2541 = vsub.s32 0, %v2540
    %v2542 = vrot.slane %v1849, %v2541
    %v2543 = vlaneseq
    %v2544 = vshrl.u32 %v2543, 7
    %v2545 = vsub.s32 0, %v2544
    %v2546 = vrot.slane %v1851, %v2545
    %v2547 = vlaneseq
    %v2548 = vshrl.u32 %v2547, 7
    %v2549 = vsub.s32 0, %v2548
    %v2550 = vrot.slane %v1853, %v2549
    %v2551 = vlaneseq
    %v2552 = vshrl.u32 %v2551, 7
    %v2553 = vsub.s32 0, %v2552
    %v2554 = vrot.slane %v1877, %v2553
    %v2555 = vlaneseq
    %v2556 = vshrl.u32 %v2555, 7
    %v2557 = vsub.s32 0, %v2556
    %v2558 = vrot.slane %v1891, %v2557
    %v2559 = vlaneseq
    %v2560 = vshrl.u32 %v2559, 7
    %v2561 = vsub.s32 0, %v2560
    %v2562 = vrot.slane %v1899, %v2561
    %v2563 = vlaneseq
    %v2564 = vshrl.u32 %v2563, 7
    %v2565 = vsub.s32 0, %v2564
    %v2566 = vrot.slane %v1901, %v2565
    %v2567 = vlaneseq
    %v2568 = vshrl.u32 %v2567, 7
    %v2569 = vsub.s32 0, %v2568
    %v2570 = vrot.slane %v1884, %v2569
    %v2571 = vlaneseq
    %v2572 = vshrl.u32 %v2571, 7
    %v2573 = vsub.s32 0, %v2572
    %v2574 = vrot.slane %v1898, %v2573
    %v2575 = vlaneseq
    %v2576 = vshrl.u32 %v2575, 7
    %v2577 = vsub.s32 0, %v2576
    %v2578 = vrot.slane %v1900, %v2577
    %v2579 = vlaneseq
    %v2580 = vshrl.u32 %v2579, 7
    %v2581 = vsub.s32 0, %v2580
    %v2582 = vrot.slane %v1902, %v2581
    %v2583 = vlaneseq
    %v2584 = vshrl.u32 %v2583, 7
    %v2585 = vsub.s32 0, %v2584
    %v2586 = vrot.slane %v1926, %v2585
    %v2587 = vlaneseq
    %v2588 = vshrl.u32 %v2587, 7
    %v2589 = vsub.s32 0, %v2588
    %v2590 = vrot.slane %v1940, %v2589
    %v2591 = vlaneseq
    %v2592 = vshrl.u32 %v2591, 7
    %v2593 = vsub.s32 0, %v2592
    %v2594 = vrot.slane %v1948, %v2593
    %v2595 = vlaneseq
    %v2596 = vshrl.u32 %v2595, 7
    %v2597 = vsub.s32 0, %v2596
    %v2598 = vrot.slane %v1950, %v2597
    %v2599 = vlaneseq
    %v2600 = vshrl.u32 %v2599, 7
    %v2601 = vsub.s32 0, %v2600
    %v2602 = vrot.slane %v1933, %v2601
    %v2603 = vlaneseq
    %v2604 = vshrl.u32 %v2603, 7
    %v2605 = vsub.s32 0, %v2604
    %v2606 = vrot.slane %v1947, %v2605
    %v2607 = vlaneseq
    %v2608 = vshrl.u32 %v2607, 7
    %v2609 = vsub.s32 0, %v2608
    %v2610 = vrot.slane %v1949, %v2609
    %v2611 = vlaneseq
    %v2612 = vshrl.u32 %v2611, 7
    %v2613 = vsub.s32 0, %v2612
    %v2614 = vrot.slane %v1951, %v2613
    %v2615 = vlaneseq
    %v2616 = vshrl.u32 %v2615, 7
    %v2617 = vsub.s32 0, %v2616
    %v2618 = vrot.slane %v1975, %v2617
    %v2619 = vlaneseq
    %v2620 = vshrl.u32 %v2619, 7
    %v2621 = vsub.s32 0, %v2620
    %v2622 = vrot.slane %v1989, %v2621
    %v2623 = vlaneseq
    %v2624 = vshrl.u32 %v2623, 7
    %v2625 = vsub.s32 0, %v2624
    %v2626 = vrot.slane %v1997, %v2625
    %v2627 = vlaneseq
    %v2628 = vshrl.u32 %v2627, 7
    %v2629 = vsub.s32 0, %v2628
    %v2630 = vrot.slane %v1999, %v2629
    %v2631 = vlaneseq
    %v2632 = vshrl.u32 %v2631, 7
    %v2633 = vsub.s32 0, %v2632
    %v2634 = vrot.slane %v1982, %v2633
    %v2635 = vlaneseq
    %v2636 = vshrl.u32 %v2635, 7
    %v2637 = vsub.s32 0, %v2636
    %v2638 = vrot.slane %v1996, %v2637
    %v2639 = vlaneseq
    %v2640 = vshrl.u32 %v2639, 7
    %v2641 = vsub.s32 0, %v2640
    %v2642 = vrot.slane %v1998, %v2641
    %v2643 = vlaneseq
    %v2644 = vshrl.u32 %v2643, 7
    %v2645 = vsub.s32 0, %v2644
    %v2646 = vrot.slane %v2000, %v2645
    %v2647 = vlaneseq
    %v2648 = vshrl.u32 %v2647, 7
    %v2649 = vsub.s32 0, %v2648
    %v2650 = vrot.slane %v2024, %v2649
    %v2651 = vlaneseq
    %v2652 = vshrl.u32 %v2651, 7
    %v2653 = vsub.s32 0, %v2652
    %v2654 = vrot.slane %v2038, %v2653
    %v2655 = vlaneseq
    %v2656 = vshrl.u32 %v2655, 7
    %v2657 = vsub.s32 0, %v2656
    %v2658 = vrot.slane %v2046, %v2657
    %v2659 = vlaneseq
    %v2660 = vshrl.u32 %v2659, 7
    %v2661 = vsub.s32 0, %v2660
    %v2662 = vrot.slane %v2048, %v2661
    %v2663 = vlaneseq
    %v2664 = vshrl.u32 %v2663, 7
    %v2665 = vsub.s32 0, %v2664
    %v2666 = vrot.slane %v2031, %v2665
    %v2667 = vlaneseq
    %v2668 = vshrl.u32 %v2667, 7
    %v2669 = vsub.s32 0, %v2668
    %v2670 = vrot.slane %v2045, %v2669
    %v2671 = vlaneseq
    %v2672 = vshrl.u32 %v2671, 7
    %v2673 = vsub.s32 0, %v2672
    %v2674 = vrot.slane %v2047, %v2673
    %v2675 = vlaneseq
    %v2676 = vshrl.u32 %v2675, 7
    %v2677 = vsub.s32 0, %v2676
    %v2678 = vrot.slane %v2049, %v2677
    %v2679 = vlaneseq
    %v2680 = vshrl.u32 %v2679, 7
    %v2681 = vsub.s32 0, %v2680
    %v2682 = vrot.slane %v2073, %v2681
    %v2683 = vlaneseq
    %v2684 = vshrl.u32 %v2683, 7
    %v2685 = vsub.s32 0, %v2684
    %v2686 = vrot.slane %v2087, %v2685
    %v2687 = vlaneseq
    %v2688 = vshrl.u32 %v2687, 7
    %v2689 = vsub.s32 0, %v2688
    %v2690 = vrot.slane %v2095, %v2689
    %v2691 = vlaneseq
    %v2692 = vshrl.u32 %v2691, 7
    %v2693 = vsub.s32 0, %v2692
    %v2694 = vrot.slane %v2097, %v2693
    %v2695 = vlaneseq
    %v2696 = vshrl.u32 %v2695, 7
    %v2697 = vsub.s32 0, %v2696
    %v2698 = vrot.slane %v2080, %v2697
    %v2699 = vlaneseq
    %v2700 = vshrl.u32 %v2699, 7
    %v2701 = vsub.s32 0, %v2700
    %v2702 = vrot.slane %v2094, %v2701
    %v2703 = vlaneseq
    %v2704 = vshrl.u32 %v2703, 7
    %v2705 = vsub.s32 0, %v2704
    %v2706 = vrot.slane %v2096, %v2705
    %v2707 = vlaneseq
    %v2708 = vshrl.u32 %v2707, 7
    %v2709 = vsub.s32 0, %v2708
    %v2710 = vrot.slane %v2098, %v2709
    %v2711 = vlaneseq
    %v2712 = vshrl.u32 %v2711, 7
    %v2713 = vsub.s32 0, %v2712
    %v2714 = vrot.slane %v2122, %v2713
    %v2715 = vlaneseq
    %v2716 = vshrl.u32 %v2715, 7
    %v2717 = vsub.s32 0, %v2716
    %v2718 = vrot.slane %v2136, %v2717
    %v2719 = vlaneseq
    %v2720 = vshrl.u32 %v2719, 7
    %v2721 = vsub.s32 0, %v2720
    %v2722 = vrot.slane %v2144, %v2721
    %v2723 = vlaneseq
    %v2724 = vshrl.u32 %v2723, 7
    %v2725 = vsub.s32 0, %v2724
    %v2726 = vrot.slane %v2146, %v2725
    %v2727 = vlaneseq
    %v2728 = vshrl.u32 %v2727, 7
    %v2729 = vsub.s32 0, %v2728
    %v2730 = vrot.slane %v2129, %v2729
    %v2731 = vlaneseq
    %v2732 = vshrl.u32 %v2731, 7
    %v2733 = vsub.s32 0, %v2732
    %v2734 = vrot.slane %v2143, %v2733
    %v2735 = vlaneseq
    %v2736 = vshrl.u32 %v2735, 7
    %v2737 = vsub.s32 0, %v2736
    %v2738 = vrot.slane %v2145, %v2737
    %v2739 = vlaneseq
    %v2740 = vshrl.u32 %v2739, 7
    %v2741 = vsub.s32 0, %v2740
    %v2742 = vrot.slane %v2147, %v2741
    %v2743 = vlaneseq
    %v2744 = vshrl.u32 %v2743, 7
    %v2745 = vsub.s32 0, %v2744
    %v2746 = vrot.slane %v2171, %v2745
    %v2747 = vlaneseq
    %v2748 = vshrl.u32 %v2747, 7
    %v2749 = vsub.s32 0, %v2748
    %v2750 = vrot.slane %v2185, %v2749
    %v2751 = vlaneseq
    %v2752 = vshrl.u32 %v2751, 7
    %v2753 = vsub.s32 0, %v2752
    %v2754 = vrot.slane %v2193, %v2753
    %v2755 = vlaneseq
    %v2756 = vshrl.u32 %v2755, 7
    %v2757 = vsub.s32 0, %v2756
    %v2758 = vrot.slane %v2195, %v2757
    %v2759 = vlaneseq
    %v2760 = vshrl.u32 %v2759, 7
    %v2761 = vsub.s32 0, %v2760
    %v2762 = vrot.slane %v2178, %v2761
    %v2763 = vlaneseq
    %v2764 = vshrl.u32 %v2763, 7
    %v2765 = vsub.s32 0, %v2764
    %v2766 = vrot.slane %v2192, %v2765
    %v2767 = vlaneseq
    %v2768 = vshrl.u32 %v2767, 7
    %v2769 = vsub.s32 0, %v2768
    %v2770 = vrot.slane %v2194, %v2769
    %v2771 = vlaneseq
    %v2772 = vshrl.u32 %v2771, 7
    %v2773 = vsub.s32 0, %v2772
    %v2774 = vrot.slane %v2196, %v2773
    %v2775 = vlaneseq
    %v2776 = vshrl.u32 %v2775, 7
    %v2777 = vsub.s32 0, %v2776
    %v2778 = vrot.slane %v2220, %v2777
    %v2779 = vlaneseq
    %v2780 = vshrl.u32 %v2779, 7
    %v2781 = vsub.s32 0, %v2780
    %v2782 = vrot.slane %v2234, %v2781
    %v2783 = vlaneseq
    %v2784 = vshrl.u32 %v2783, 7
    %v2785 = vsub.s32 0, %v2784
    %v2786 = vrot.slane %v2242, %v2785
    %v2787 = vlaneseq
    %v2788 = vshrl.u32 %v2787, 7
    %v2789 = vsub.s32 0, %v2788
    %v2790 = vrot.slane %v2244, %v2789
    %v2791 = vlaneseq
    %v2792 = vshrl.u32 %v2791, 7
    %v2793 = vsub.s32 0, %v2792
    %v2794 = vrot.slane %v2227, %v2793
    %v2795 = vlaneseq
    %v2796 = vshrl.u32 %v2795, 7
    %v2797 = vsub.s32 0, %v2796
    %v2798 = vrot.slane %v2241, %v2797
    %v2799 = vlaneseq
    %v2800 = vshrl.u32 %v2799, 7
    %v2801 = vsub.s32 0, %v2800
    %v2802 = vrot.slane %v2243, %v2801
    %v2803 = vlaneseq
    %v2804 = vshrl.u32 %v2803, 7
    %v2805 = vsub.s32 0, %v2804
    %v2806 = vrot.slane %v2245, %v2805
    %v2807 = vlaneseq
    %v2808 = vshrl.u32 %v2807, 7
    %v2809 = vsub.s32 0, %v2808
    %v2810 = vrot.slane %v2269, %v2809
    %v2811 = vlaneseq
    %v2812 = vshrl.u32 %v2811, 7
    %v2813 = vsub.s32 0, %v2812
    %v2814 = vrot.slane %v2283, %v2813
    %v2815 = vlaneseq
    %v2816 = vshrl.u32 %v2815, 7
    %v2817 = vsub.s32 0, %v2816
    %v2818 = vrot.slane %v2291, %v2817
    %v2819 = vlaneseq
    %v2820 = vshrl.u32 %v2819, 7
    %v2821 = vsub.s32 0, %v2820
    %v2822 = vrot.slane %v2293, %v2821
    %v2823 = vlaneseq
    %v2824 = vshrl.u32 %v2823, 7
    %v2825 = vsub.s32 0, %v2824
    %v2826 = vrot.slane %v2276, %v2825
    %v2827 = vlaneseq
    %v2828 = vshrl.u32 %v2827, 7
    %v2829 = vsub.s32 0, %v2828
    %v2830 = vrot.slane %v2290, %v2829
    %v2831 = vlaneseq
    %v2832 = vshrl.u32 %v2831, 7
    %v2833 = vsub.s32 0, %v2832
    %v2834 = vrot.slane %v2292, %v2833
    %v2835 = vlaneseq
    %v2836 = vshrl.u32 %v2835, 7
    %v2837 = vsub.s32 0, %v2836
    %v2838 = vrot.slane %v2294, %v2837
    %v2839 = vlaneseq
    %v2840 = vshrl.u32 %v2839, 7
    %v2841 = vsub.s32 0, %v2840
    %v2842 = vrot.slane %v2318, %v2841
    %v2843 = vlaneseq
    %v2844 = vshrl.u32 %v2843, 7
    %v2845 = vsub.s32 0, %v2844
    %v2846 = vrot.slane %v2332, %v2845
    %v2847 = vlaneseq
    %v2848 = vshrl.u32 %v2847, 7
    %v2849 = vsub.s32 0, %v2848
    %v2850 = vrot.slane %v2340, %v2849
    %v2851 = vlaneseq
    %v2852 = vshrl.u32 %v2851, 7
    %v2853 = vsub.s32 0, %v2852
    %v2854 = vrot.slane %v2342, %v2853
    %v2855 = vlaneseq
    %v2856 = vshrl.u32 %v2855, 7
    %v2857 = vsub.s32 0, %v2856
    %v2858 = vrot.slane %v2325, %v2857
    %v2859 = vlaneseq
    %v2860 = vshrl.u32 %v2859, 7
    %v2861 = vsub.s32 0, %v2860
    %v2862 = vrot.slane %v2339, %v2861
    %v2863 = vlaneseq
    %v2864 = vshrl.u32 %v2863, 7
    %v2865 = vsub.s32 0, %v2864
    %v2866 = vrot.slane %v2341, %v2865
    %v2867 = vlaneseq
    %v2868 = vshrl.u32 %v2867, 7
    %v2869 = vsub.s32 0, %v2868
    %v2870 = vrot.slane %v2343, %v2869
    %v2999 = vmul.f32 %v2347, %v2362
    %v3000 = vmul.f32 %v2352, %v2362
    %v3001 = vmul.f32 %v2357, %v2362
    %v3002 = vmul.f32 %v2347, %v2366
    %v3003 = vmul.f32 %v2352, %v2366
    %v3004 = vmul.f32 %v2357, %v2366
    %v3005 = vmul.f32 %v2347, %v2370
    %v3006 = vmul.f32 %v2352, %v2370
    %v3007 = vmul.f32 %v2357, %v2370
    %v3008 = vmul.f32 %v2347, %v2374
    %v3009 = vmul.f32 %v2352, %v2374
    %v3010 = vmul.f32 %v2357, %v2374
    %v3011 = vmul.f32 %v2347, %v2378
    %v3012 = vmul.f32 %v2352, %v2378
    %v3013 = vmul.f32 %v2357, %v2378
    %v3014 = vmul.f32 %v2347, %v2382
    %v3015 = vmul.f32 %v2352, %v2382
    %v3016 = vmul.f32 %v2357, %v2382
    %v3017 = vmul.f32 %v2347, %v2386
    %v3018 = vmul.f32 %v2352, %v2386
    %v3019 = vmul.f32 %v2357, %v2386
    %v3020 = vmul.f32 %v2347, %v2390
    %v3021 = vmul.f32 %v2352, %v2390
    %v3022 = vmul.f32 %v2357, %v2390
    %v3023 = vmul.f32 %v2347, %v2394
    %v3024 = vmul.f32 %v2352, %v2394
    %v3025 = vmul.f32 %v2357, %v2394
    %v3026 = vmul.f32 %v2347, %v2398
    %v3027 = vmul.f32 %v2352, %v2398
    %v3028 = vmul.f32 %v2357, %v2398
    %v3029 = vmul.f32 %v2347, %v2402
    %v3030 = vmul.f32 %v2352, %v2402
    %v3031 = vmul.f32 %v2357, %v2402
    %v3032 = vmul.f32 %v2347, %v2406
    %v3033 = vmul.f32 %v2352, %v2406
    %v3034 = vmul.f32 %v2357, %v2406
    %v3035 = vmul.f32 %v2347, %v2410
    %v3036 = vmul.f32 %v2352, %v2410
    %v3037 = vmul.f32 %v2357, %v2410
    %v3038 = vmul.f32 %v2347, %v2414
    %v3039 = vmul.f32 %v2352, %v2414
    %v3040 = vmul.f32 %v2357, %v2414
    %v3041 = vmul.f32 %v2347, %v2418
    %v3042 = vmul.f32 %v2352, %v2418
    %v3043 = vmul.f32 %v2357, %v2418
    %v3044 = vmul.f32 %v2347, %v2422
    %v3045 = vmul.f32 %v2352, %v2422
    %v3046 = vmul.f32 %v2357, %v2422
    %v3047 = vmul.f32 %v2347, %v2426
    %v3048 = vmul.f32 %v2352, %v2426
    %v3049 = vmul.f32 %v2357, %v2426
    %v3050 = vmul.f32 %v2347, %v2430
    %v3051 = vmul.f32 %v2352, %v2430
    %v3052 = vmul.f32 %v2357, %v2430
    %v3053 = vmul.f32 %v2347, %v2434
    %v3054 = vmul.f32 %v2352, %v2434
    %v3055 = vmul.f32 %v2357, %v2434
    %v3056 = vmul.f32 %v2347, %v2438
    %v3057 = vmul.f32 %v2352, %v2438
    %v3058 = vmul.f32 %v2357, %v2438
    %v3059 = vmul.f32 %v2347, %v2442
    %v3060 = vmul.f32 %v2352, %v2442
    %v3061 = vmul.f32 %v2357, %v2442
    %v3062 = vmul.f32 %v2347, %v2446
    %v3063 = vmul.f32 %v2352, %v2446
    %v3064 = vmul.f32 %v2357, %v2446
    %v3065 = vmul.f32 %v2347, %v2450
    %v3066 = vmul.f32 %v2352, %v2450
    %v3067 = vmul.f32 %v2357, %v2450
    %v3068 = vmul.f32 %v2347, %v2454
    %v3069 = vmul.f32 %v2352, %v2454
    %v3070 = vmul.f32 %v2357, %v2454
    %v3071 = vmul.f32 %v2347, %v2458
    %v3072 = vmul.f32 %v2352, %v2458
    %v3073 = vmul.f32 %v2357, %v2458
    %v3074 = vmul.f32 %v2347, %v2462
    %v3075 = vmul.f32 %v2352, %v2462
    %v3076 = vmul.f32 %v2357, %v2462
    %v3077 = vmul.f32 %v2347, %v2466
    %v3078 = vmul.f32 %v2352, %v2466
    %v3079 = vmul.f32 %v2357, %v2466
    %v3080 = vmul.f32 %v2347, %v2470
    %v3081 = vmul.f32 %v2352, %v2470
    %v3082 = vmul.f32 %v2357, %v2470
    %v3083 = vmul.f32 %v2347, %v2474
    %v3084 = vmul.f32 %v2352, %v2474
    %v3085 = vmul.f32 %v2357, %v2474
    %v3086 = vmul.f32 %v2347, %v2478
    %v3087 = vmul.f32 %v2352, %v2478
    %v3088 = vmul.f32 %v2357, %v2478
    %v3089 = vmul.f32 %v2347, %v2482
    %v3090 = vmul.f32 %v2352, %v2482
    %v3091 = vmul.f32 %v2357, %v2482
    %v3092 = vmul.f32 %v2347, %v2486
    %v3093 = vmul.f32 %v2352, %v2486
    %v3094 = vmul.f32 %v2357, %v2486
    %v3095 = vmul.f32 %v2347, %v2490
    %v3096 = vmul.f32 %v2352, %v2490
    %v3097 = vmul.f32 %v2357, %v2490
    %v3098 = vmul.f32 %v2347, %v2494
    %v3099 = vmul.f32 %v2352, %v2494
    %v3100 = vmul.f32 %v2357, %v2494
    %v3101 = vmul.f32 %v2347, %v2498
    %v3102 = vmul.f32 %v2352, %v2498
    %v3103 = vmul.f32 %v2357, %v2498
    %v3104 = vmul.f32 %v2347, %v2502
    %v3105 = vmul.f32 %v2352, %v2502
    %v3106 = vmul.f32 %v2357, %v2502
    %v3107 = vmul.f32 %v2347, %v2506
    %v3108 = vmul.f32 %v2352, %v2506
    %v3109 = vmul.f32 %v2357, %v2506
    %v3110 = vmul.f32 %v2347, %v2510
    %v3111 = vmul.f32 %v2352, %v2510
    %v3112 = vmul.f32 %v2357, %v2510
    %v3113 = vmul.f32 %v2347, %v2514
    %v3114 = vmul.f32 %v2352, %v2514
    %v3115 = vmul.f32 %v2357, %v2514
    %v3116 = vmul.f32 %v2347, %v2518
    %v3117 = vmul.f32 %v2352, %v2518
    %v3118 = vmul.f32 %v2357, %v2518
    %v3119 = vmul.f32 %v2347, %v2522
    %v3120 = vmul.f32 %v2352, %v2522
    %v3121 = vmul.f32 %v2357, %v2522
    %v3122 = vmul.f32 %v2347, %v2526
    %v3123 = vmul.f32 %v2352, %v2526
    %v3124 = vmul.f32 %v2357, %v2526
    %v3125 = vmul.f32 %v2347, %v2530
    %v3126 = vmul.f32 %v2352, %v2530
    %v3127 = vmul.f32 %v2357, %v2530
    %v3128 = vmul.f32 %v2347, %v2534
    %v3129 = vmul.f32 %v2352, %v2534
    %v3130 = vmul.f32 %v2357, %v2534
    %v3131 = vmul.f32 %v2347, %v2538
    %v3132 = vmul.f32 %v2352, %v2538
    %v3133 = vmul.f32 %v2357, %v2538
    %v3134 = vmul.f32 %v2347, %v2542
    %v3135 = vmul.f32 %v2352, %v2542
    %v3136 = vmul.f32 %v2357, %v2542
    %v3137 = vmul.f32 %v2347, %v2546
    %v3138 = vmul.f32 %v2352, %v2546
    %v3139 = vmul.f32 %v2357, %v2546
    %v3140 = vmul.f32 %v2347, %v2550
    %v3141 = vmul.f32 %v2352, %v2550
    %v3142 = vmul.f32 %v2357, %v2550
    %v3143 = vmul.f32 %v2347, %v2554
    %v3144 = vmul.f32 %v2352, %v2554
    %v3145 = vmul.f32 %v2357, %v2554
    %v3146 = vmul.f32 %v2347, %v2558
    %v3147 = vmul.f32 %v2352, %v2558
    %v3148 = vmul.f32 %v2357, %v2558
    %v3149 = vmul.f32 %v2347, %v2562
    %v3150 = vmul.f32 %v2352, %v2562
    %v3151 = vmul.f32 %v2357, %v2562
    %v3152 = vmul.f32 %v2347, %v2566
    %v3153 = vmul.f32 %v2352, %v2566
    %v3154 = vmul.f32 %v2357, %v2566
    %v3155 = vmul.f32 %v2347, %v2570
    %v3156 = vmul.f32 %v2352, %v2570
    %v3157 = vmul.f32 %v2357, %v2570
    %v3158 = vmul.f32 %v2347, %v2574
    %v3159 = vmul.f32 %v2352, %v2574
    %v3160 = vmul.f32 %v2357, %v2574
    %v3161 = vmul.f32 %v2347, %v2578
    %v3162 = vmul.f32 %v2352, %v2578
    %v3163 = vmul.f32 %v2357, %v2578
    %v3164 = vmul.f32 %v2347, %v2582
    %v3165 = vmul.f32 %v2352, %v2582
    %v3166 = vmul.f32 %v2357, %v2582
    %v3167 = vmul.f32 %v2347, %v2586
    %v3168 = vmul.f32 %v2352, %v2586
    %v3169 = vmul.f32 %v2357, %v2586
    %v3170 = vmul.f32 %v2347, %v2590
    %v3171 = vmul.f32 %v2352, %v2590
    %v3172 = vmul.f32 %v2357, %v2590
    %v3173 = vmul.f32 %v2347, %v2594
    %v3174 = vmul.f32 %v2352, %v2594
    %v3175 = vmul.f32 %v2357, %v2594
    %v3176 = vmul.f32 %v2347, %v2598
    %v3177 = vmul.f32 %v2352, %v2598
    %v3178 = vmul.f32 %v2357, %v2598
    %v3179 = vmul.f32 %v2347, %v2602
    %v3180 = vmul.f32 %v2352, %v2602
    %v3181 = vmul.f32 %v2357, %v2602
    %v3182 = vmul.f32 %v2347, %v2606
    %v3183 = vmul.f32 %v2352, %v2606
    %v3184 = vmul.f32 %v2357, %v2606
    %v3185 = vmul.f32 %v2347, %v2610
    %v3186 = vmul.f32 %v2352, %v2610
    %v3187 = vmul.f32 %v2357, %v2610
    %v3188 = vmul.f32 %v2347, %v2614
    %v3189 = vmul.f32 %v2352, %v2614
    %v3190 = vmul.f32 %v2357, %v2614
    %v3191 = vmul.f32 %v2347, %v2618
    %v3192 = vmul.f32 %v2352, %v2618
    %v3193 = vmul.f32 %v2357, %v2618
    %v3194 = vmul.f32 %v2347, %v2622
    %v3195 = vmul.f32 %v2352, %v2622
    %v3196 = vmul.f32 %v2357, %v2622
    %v3197 = vmul.f32 %v2347, %v2626
    %v3198 = vmul.f32 %v2352, %v2626
    %v3199 = vmul.f32 %v2357, %v2626
    %v3200 = vmul.f32 %v2347, %v2630
    %v3201 = vmul.f32 %v2352, %v2630
    %v3202 = vmul.f32 %v2357, %v2630
    %v3203 = vmul.f32 %v2347, %v2634
    %v3204 = vmul.f32 %v2352, %v2634
    %v3205 = vmul.f32 %v2357, %v2634
    %v3206 = vmul.f32 %v2347, %v2638
    %v3207 = vmul.f32 %v2352, %v2638
    %v3208 = vmul.f32 %v2357, %v2638
    %v3209 = vmul.f32 %v2347, %v2642
    %v3210 = vmul.f32 %v2352, %v2642
    %v3211 = vmul.f32 %v2357, %v2642
    %v3212 = vmul.f32 %v2347, %v2646
    %v3213 = vmul.f32 %v2352, %v2646
    %v3214 = vmul.f32 %v2357, %v2646
    %v3215 = vmul.f32 %v2347, %v2650
    %v3216 = vmul.f32 %v2352, %v2650
    %v3217 = vmul.f32 %v2357, %v2650
    %v3218 = vmul.f32 %v2347, %v2654
    %v3219 = vmul.f32 %v2352, %v2654
    %v3220 = vmul.f32 %v2357, %v2654
    %v3221 = vmul.f32 %v2347, %v2658
    %v3222 = vmul.f32 %v2352, %v2658
    %v3223 = vmul.f32 %v2357, %v2658
    %v3224 = vmul.f32 %v2347, %v2662
    %v3225 = vmul.f32 %v2352, %v2662
    %v3226 = vmul.f32 %v2357, %v2662
    %v3227 = vmul.f32 %v2347, %v2666
    %v3228 = vmul.f32 %v2352, %v2666
    %v3229 = vmul.f32 %v2357, %v2666
    %v3230 = vmul.f32 %v2347, %v2670
    %v3231 = vmul.f32 %v2352, %v2670
    %v3232 = vmul.f32 %v2357, %v2670
    %v3233 = vmul.f32 %v2347, %v2674
    %v3234 = vmul.f32 %v2352, %v2674
    %v3235 = vmul.f32 %v2357, %v2674
    %v3236 = vmul.f32 %v2347, %v2678
    %v3237 = vmul.f32 %v2352, %v2678
    %v3238 = vmul.f32 %v2357, %v2678
    %v3239 = vmul.f32 %v2347, %v2682
    %v3240 = vmul.f32 %v2352, %v2682
    %v3241 = vmul.f32 %v2357, %v2682
    %v3242 = vmul.f32 %v2347, %v2686
    %v3243 = vmul.f32 %v2352, %v2686
    %v3244 = vmul.f32 %v2357, %v2686
    %v3245 = vmul.f32 %v2347, %v2690
    %v3246 = vmul.f32 %v2352, %v2690
    %v3247 = vmul.f32 %v2357, %v2690
    %v3248 = vmul.f32 %v2347, %v2694
    %v3249 = vmul.f32 %v2352, %v2694
    %v3250 = vmul.f32 %v2357, %v2694
    %v3251 = vmul.f32 %v2347, %v2698
    %v3252 = vmul.f32 %v2352, %v2698
    %v3253 = vmul.f32 %v2357, %v2698
    %v3254 = vmul.f32 %v2347, %v2702
    %v3255 = vmul.f32 %v2352, %v2702
    %v3256 = vmul.f32 %v2357, %v2702
    %v3257 = vmul.f32 %v2347, %v2706
    %v3258 = vmul.f32 %v2352, %v2706
    %v3259 = vmul.f32 %v2357, %v2706
    %v3260 = vmul.f32 %v2347, %v2710
    %v3261 = vmul.f32 %v2352, %v2710
    %v3262 = vmul.f32 %v2357, %v2710
    %v3263 = vmul.f32 %v2347, %v2714
    %v3264 = vmul.f32 %v2352, %v2714
    %v3265 = vmul.f32 %v2357, %v2714
    %v3266 = vmul.f32 %v2347, %v2718
    %v3267 = vmul.f32 %v2352, %v2718
    %v3268 = vmul.f32 %v2357, %v2718
    %v3269 = vmul.f32 %v2347, %v2722
    %v3270 = vmul.f32 %v2352, %v2722
    %v3271 = vmul.f32 %v2357, %v2722
    %v3272 = vmul.f32 %v2347, %v2726
    %v3273 = vmul.f32 %v2352, %v2726
    %v3274 = vmul.f32 %v2357, %v2726
    %v3275 = vmul.f32 %v2347, %v2730
    %v3276 = vmul.f32 %v2352, %v2730
    %v3277 = vmul.f32 %v2357, %v2730
    %v3278 = vmul.f32 %v2347, %v2734
    %v3279 = vmul.f32 %v2352, %v2734
    %v3280 = vmul.f32 %v2357, %v2734
    %v3281 = vmul.f32 %v2347, %v2738
    %v3282 = vmul.f32 %v2352, %v2738
    %v3283 = vmul.f32 %v2357, %v2738
    %v3284 = vmul.f32 %v2347, %v2742
    %v3285 = vmul.f32 %v2352, %v2742
    %v3286 = vmul.f32 %v2357, %v2742
    %v3287 = vmul.f32 %v2347, %v2746
    %v3288 = vmul.f32 %v2352, %v2746
    %v3289 = vmul.f32 %v2357, %v2746
    %v3290 = vmul.f32 %v2347, %v2750
    %v3291 = vmul.f32 %v2352, %v2750
    %v3292 = vmul.f32 %v2357, %v2750
    %v3293 = vmul.f32 %v2347, %v2754
    %v3294 = vmul.f32 %v2352, %v2754
    %v3295 = vmul.f32 %v2357, %v2754
    %v3296 = vmul.f32 %v2347, %v2758
    %v3297 = vmul.f32 %v2352, %v2758
    %v3298 = vmul.f32 %v2357, %v2758
    %v3299 = vmul.f32 %v2347, %v2762
    %v3300 = vmul.f32 %v2352, %v2762
    %v3301 = vmul.f32 %v2357, %v2762
    %v3302 = vmul.f32 %v2347, %v2766
    %v3303 = vmul.f32 %v2352, %v2766
    %v3304 = vmul.f32 %v2357, %v2766
    %v3305 = vmul.f32 %v2347, %v2770
    %v3306 = vmul.f32 %v2352, %v2770
    %v3307 = vmul.f32 %v2357, %v2770
    %v3308 = vmul.f32 %v2347, %v2774
    %v3309 = vmul.f32 %v2352, %v2774
    %v3310 = vmul.f32 %v2357, %v2774
    %v3311 = vmul.f32 %v2347, %v2778
    %v3312 = vmul.f32 %v2352, %v2778
    %v3313 = vmul.f32 %v2357, %v2778
    %v3314 = vmul.f32 %v2347, %v2782
    %v3315 = vmul.f32 %v2352, %v2782
    %v3316 = vmul.f32 %v2357, %v2782
    %v3317 = vmul.f32 %v2347, %v2786
    %v3318 = vmul.f32 %v2352, %v2786
    %v3319 = vmul.f32 %v2357, %v2786
    %v3320 = vmul.f32 %v2347, %v2790
    %v3321 = vmul.f32 %v2352, %v2790
    %v3322 = vmul.f32 %v2357, %v2790
    %v3323 = vmul.f32 %v2347, %v2794
    %v3324 = vmul.f32 %v2352, %v2794
    %v3325 = vmul.f32 %v2357, %v2794
    %v3326 = vmul.f32 %v2347, %v2798
    %v3327 = vmul.f32 %v2352, %v2798
    %v3328 = vmul.f32 %v2357, %v2798
    %v3329 = vmul.f32 %v2347, %v2802
    %v3330 = vmul.f32 %v2352, %v2802
    %v3331 = vmul.f32 %v2357, %v2802
    %v3332 = vmul.f32 %v2347, %v2806
    %v3333 = vmul.f32 %v2352, %v2806
    %v3334 = vmul.f32 %v2357, %v2806
    %v3335 = vmul.f32 %v2347, %v2810
    %v3336 = vmul.f32 %v2352, %v2810
    %v3337 = vmul.f32 %v2357, %v2810
    %v3338 = vmul.f32 %v2347, %v2814
    %v3339 = vmul.f32 %v2352, %v2814
    %v3340 = vmul.f32 %v2357, %v2814
    %v3341 = vmul.f32 %v2347, %v2818
    %v3342 = vmul.f32 %v2352, %v2818
    %v3343 = vmul.f32 %v2357, %v2818
    %v3344 = vmul.f32 %v2347, %v2822
    %v3345 = vmul.f32 %v2352, %v2822
    %v3346 = vmul.f32 %v2357, %v2822
    %v3347 = vmul.f32 %v2347, %v2826
    %v3348 = vmul.f32 %v2352, %v2826
    %v3349 = vmul.f32 %v2357, %v2826
    %v3350 = vmul.f32 %v2347, %v2830
    %v3351 = vmul.f32 %v2352, %v2830
    %v3352 = vmul.f32 %v2357, %v2830
    %v3353 = vmul.f32 %v2347, %v2834
    %v3354 = vmul.f32 %v2352, %v2834
    %v3355 = vmul.f32 %v2357, %v2834
    %v3356 = vmul.f32 %v2347, %v2838
    %v3357 = vmul.f32 %v2352, %v2838
    %v3358 = vmul.f32 %v2357, %v2838
    %v3359 = vmul.f32 %v2347, %v2842
    %v3360 = vmul.f32 %v2352, %v2842
    %v3361 = vmul.f32 %v2357, %v2842
    %v3362 = vmul.f32 %v2347, %v2846
    %v3363 = vmul.f32 %v2352, %v2846
    %v3364 = vmul.f32 %v2357, %v2846
    %v3365 = vmul.f32 %v2347, %v2850
    %v3366 = vmul.f32 %v2352, %v2850
    %v3367 = vmul.f32 %v2357, %v2850
    %v3368 = vmul.f32 %v2347, %v2854
    %v3369 = vmul.f32 %v2352, %v2854
    %v3370 = vmul.f32 %v2357, %v2854
    %v3371 = vmul.f32 %v2347, %v2858
    %v3372 = vmul.f32 %v2352, %v2858
    %v3373 = vmul.f32 %v2357, %v2858
    %v3374 = vmul.f32 %v2347, %v2862
    %v3375 = vmul.f32 %v2352, %v2862
    %v3376 = vmul.f32 %v2357, %v2862
    %v3377 = vmul.f32 %v2347, %v2866
    %v3378 = vmul.f32 %v2352, %v2866
    %v3379 = vmul.f32 %v2357, %v2866
    %v3380 = vmul.f32 %v2347, %v2870
    %v3381 = vmul.f32 %v2352, %v2870
    %v3382 = vmul.f32 %v2357, %v2870
    %v3383 = vld [vmem:[%s5] sm:$0xff]
    %v3384 = vld [vmem:[%s5 + $0x8] sm:$0xff]
    %v3385 = vld [vmem:[%s5 + $0x10] sm:$0xff]
    %3387 = vset.pattern.permute.xlu0 0
    %3388 = vperm.xlu0 %3387, %v3383
    %v3389 = vpop.permute.xlu0 %3388
    %3392 = vset.pattern.permute.xlu0 0
    %3393 = vperm.xlu0 %3392, %v3384
    %v3394 = vpop.permute.xlu0 %3393
    %3397 = vset.pattern.permute.xlu0 0
    %3398 = vperm.xlu0 %3397, %v3385
    %v3399 = vpop.permute.xlu0 %3398
    %v3401 = vadd.f32 %v2999, %v3389
    %v3402 = vadd.f32 %v3000, %v3394
    %v3403 = vadd.f32 %v3001, %v3399
    %v3404 = vadd.f32 %v3002, %v3389
    %v3405 = vadd.f32 %v3003, %v3394
    %v3406 = vadd.f32 %v3004, %v3399
    %v3407 = vadd.f32 %v3005, %v3389
    %v3408 = vadd.f32 %v3006, %v3394
    %v3409 = vadd.f32 %v3007, %v3399
    %v3410 = vadd.f32 %v3008, %v3389
    %v3411 = vadd.f32 %v3009, %v3394
    %v3412 = vadd.f32 %v3010, %v3399
    %v3413 = vadd.f32 %v3011, %v3389
    %v3414 = vadd.f32 %v3012, %v3394
    %v3415 = vadd.f32 %v3013, %v3399
    %v3416 = vadd.f32 %v3014, %v3389
    %v3417 = vadd.f32 %v3015, %v3394
    %v3418 = vadd.f32 %v3016, %v3399
    %v3419 = vadd.f32 %v3017, %v3389
    %v3420 = vadd.f32 %v3018, %v3394
    %v3421 = vadd.f32 %v3019, %v3399
    %v3422 = vadd.f32 %v3020, %v3389
    %v3423 = vadd.f32 %v3021, %v3394
    %v3424 = vadd.f32 %v3022, %v3399
    %v3425 = vadd.f32 %v3023, %v3389
    %v3426 = vadd.f32 %v3024, %v3394
    %v3427 = vadd.f32 %v3025, %v3399
    %v3428 = vadd.f32 %v3026, %v3389
    %v3429 = vadd.f32 %v3027, %v3394
    %v3430 = vadd.f32 %v3028, %v3399
    %v3431 = vadd.f32 %v3029, %v3389
    %v3432 = vadd.f32 %v3030, %v3394
    %v3433 = vadd.f32 %v3031, %v3399
    %v3434 = vadd.f32 %v3032, %v3389
    %v3435 = vadd.f32 %v3033, %v3394
    %v3436 = vadd.f32 %v3034, %v3399
    %v3437 = vadd.f32 %v3035, %v3389
    %v3438 = vadd.f32 %v3036, %v3394
    %v3439 = vadd.f32 %v3037, %v3399
    %v3440 = vadd.f32 %v3038, %v3389
    %v3441 = vadd.f32 %v3039, %v3394
    %v3442 = vadd.f32 %v3040, %v3399
    %v3443 = vadd.f32 %v3041, %v3389
    %v3444 = vadd.f32 %v3042, %v3394
    %v3445 = vadd.f32 %v3043, %v3399
    %v3446 = vadd.f32 %v3044, %v3389
    %v3447 = vadd.f32 %v3045, %v3394
    %v3448 = vadd.f32 %v3046, %v3399
    %v3449 = vadd.f32 %v3047, %v3389
    %v3450 = vadd.f32 %v3048, %v3394
    %v3451 = vadd.f32 %v3049, %v3399
    %v3452 = vadd.f32 %v3050, %v3389
    %v3453 = vadd.f32 %v3051, %v3394
    %v3454 = vadd.f32 %v3052, %v3399
    %v3455 = vadd.f32 %v3053, %v3389
    %v3456 = vadd.f32 %v3054, %v3394
    %v3457 = vadd.f32 %v3055, %v3399
    %v3458 = vadd.f32 %v3056, %v3389
    %v3459 = vadd.f32 %v3057, %v3394
    %v3460 = vadd.f32 %v3058, %v3399
    %v3461 = vadd.f32 %v3059, %v3389
    %v3462 = vadd.f32 %v3060, %v3394
    %v3463 = vadd.f32 %v3061, %v3399
    %v3464 = vadd.f32 %v3062, %v3389
    %v3465 = vadd.f32 %v3063, %v3394
    %v3466 = vadd.f32 %v3064, %v3399
    %v3467 = vadd.f32 %v3065, %v3389
    %v3468 = vadd.f32 %v3066, %v3394
    %v3469 = vadd.f32 %v3067, %v3399
    %v3470 = vadd.f32 %v3068, %v3389
    %v3471 = vadd.f32 %v3069, %v3394
    %v3472 = vadd.f32 %v3070, %v3399
    %v3473 = vadd.f32 %v3071, %v3389
    %v3474 = vadd.f32 %v3072, %v3394
    %v3475 = vadd.f32 %v3073, %v3399
    %v3476 = vadd.f32 %v3074, %v3389
    %v3477 = vadd.f32 %v3075, %v3394
    %v3478 = vadd.f32 %v3076, %v3399
    %v3479 = vadd.f32 %v3077, %v3389
    %v3480 = vadd.f32 %v3078, %v3394
    %v3481 = vadd.f32 %v3079, %v3399
    %v3482 = vadd.f32 %v3080, %v3389
    %v3483 = vadd.f32 %v3081, %v3394
    %v3484 = vadd.f32 %v3082, %v3399
    %v3485 = vadd.f32 %v3083, %v3389
    %v3486 = vadd.f32 %v3084, %v3394
    %v3487 = vadd.f32 %v3085, %v3399
    %v3488 = vadd.f32 %v3086, %v3389
    %v3489 = vadd.f32 %v3087, %v3394
    %v3490 = vadd.f32 %v3088, %v3399
    %v3491 = vadd.f32 %v3089, %v3389
    %v3492 = vadd.f32 %v3090, %v3394
    %v3493 = vadd.f32 %v3091, %v3399
    %v3494 = vadd.f32 %v3092, %v3389
    %v3495 = vadd.f32 %v3093, %v3394
    %v3496 = vadd.f32 %v3094, %v3399
    %v3497 = vadd.f32 %v3095, %v3389
    %v3498 = vadd.f32 %v3096, %v3394
    %v3499 = vadd.f32 %v3097, %v3399
    %v3500 = vadd.f32 %v3098, %v3389
    %v3501 = vadd.f32 %v3099, %v3394
    %v3502 = vadd.f32 %v3100, %v3399
    %v3503 = vadd.f32 %v3101, %v3389
    %v3504 = vadd.f32 %v3102, %v3394
    %v3505 = vadd.f32 %v3103, %v3399
    %v3506 = vadd.f32 %v3104, %v3389
    %v3507 = vadd.f32 %v3105, %v3394
    %v3508 = vadd.f32 %v3106, %v3399
    %v3509 = vadd.f32 %v3107, %v3389
    %v3510 = vadd.f32 %v3108, %v3394
    %v3511 = vadd.f32 %v3109, %v3399
    %v3512 = vadd.f32 %v3110, %v3389
    %v3513 = vadd.f32 %v3111, %v3394
    %v3514 = vadd.f32 %v3112, %v3399
    %v3515 = vadd.f32 %v3113, %v3389
    %v3516 = vadd.f32 %v3114, %v3394
    %v3517 = vadd.f32 %v3115, %v3399
    %v3518 = vadd.f32 %v3116, %v3389
    %v3519 = vadd.f32 %v3117, %v3394
    %v3520 = vadd.f32 %v3118, %v3399
    %v3521 = vadd.f32 %v3119, %v3389
    %v3522 = vadd.f32 %v3120, %v3394
    %v3523 = vadd.f32 %v3121, %v3399
    %v3524 = vadd.f32 %v3122, %v3389
    %v3525 = vadd.f32 %v3123, %v3394
    %v3526 = vadd.f32 %v3124, %v3399
    %v3527 = vadd.f32 %v3125, %v3389
    %v3528 = vadd.f32 %v3126, %v3394
    %v3529 = vadd.f32 %v3127, %v3399
    %v3530 = vadd.f32 %v3128, %v3389
    %v3531 = vadd.f32 %v3129, %v3394
    %v3532 = vadd.f32 %v3130, %v3399
    %v3533 = vadd.f32 %v3131, %v3389
    %v3534 = vadd.f32 %v3132, %v3394
    %v3535 = vadd.f32 %v3133, %v3399
    %v3536 = vadd.f32 %v3134, %v3389
    %v3537 = vadd.f32 %v3135, %v3394
    %v3538 = vadd.f32 %v3136, %v3399
    %v3539 = vadd.f32 %v3137, %v3389
    %v3540 = vadd.f32 %v3138, %v3394
    %v3541 = vadd.f32 %v3139, %v3399
    %v3542 = vadd.f32 %v3140, %v3389
    %v3543 = vadd.f32 %v3141, %v3394
    %v3544 = vadd.f32 %v3142, %v3399
    %v3545 = vadd.f32 %v3143, %v3389
    %v3546 = vadd.f32 %v3144, %v3394
    %v3547 = vadd.f32 %v3145, %v3399
    %v3548 = vadd.f32 %v3146, %v3389
    %v3549 = vadd.f32 %v3147, %v3394
    %v3550 = vadd.f32 %v3148, %v3399
    %v3551 = vadd.f32 %v3149, %v3389
    %v3552 = vadd.f32 %v3150, %v3394
    %v3553 = vadd.f32 %v3151, %v3399
    %v3554 = vadd.f32 %v3152, %v3389
    %v3555 = vadd.f32 %v3153, %v3394
    %v3556 = vadd.f32 %v3154, %v3399
    %v3557 = vadd.f32 %v3155, %v3389
    %v3558 = vadd.f32 %v3156, %v3394
    %v3559 = vadd.f32 %v3157, %v3399
    %v3560 = vadd.f32 %v3158, %v3389
    %v3561 = vadd.f32 %v3159, %v3394
    %v3562 = vadd.f32 %v3160, %v3399
    %v3563 = vadd.f32 %v3161, %v3389
    %v3564 = vadd.f32 %v3162, %v3394
    %v3565 = vadd.f32 %v3163, %v3399
    %v3566 = vadd.f32 %v3164, %v3389
    %v3567 = vadd.f32 %v3165, %v3394
    %v3568 = vadd.f32 %v3166, %v3399
    %v3569 = vadd.f32 %v3167, %v3389
    %v3570 = vadd.f32 %v3168, %v3394
    %v3571 = vadd.f32 %v3169, %v3399
    %v3572 = vadd.f32 %v3170, %v3389
    %v3573 = vadd.f32 %v3171, %v3394
    %v3574 = vadd.f32 %v3172, %v3399
    %v3575 = vadd.f32 %v3173, %v3389
    %v3576 = vadd.f32 %v3174, %v3394
    %v3577 = vadd.f32 %v3175, %v3399
    %v3578 = vadd.f32 %v3176, %v3389
    %v3579 = vadd.f32 %v3177, %v3394
    %v3580 = vadd.f32 %v3178, %v3399
    %v3581 = vadd.f32 %v3179, %v3389
    %v3582 = vadd.f32 %v3180, %v3394
    %v3583 = vadd.f32 %v3181, %v3399
    %v3584 = vadd.f32 %v3182, %v3389
    %v3585 = vadd.f32 %v3183, %v3394
    %v3586 = vadd.f32 %v3184, %v3399
    %v3587 = vadd.f32 %v3185, %v3389
    %v3588 = vadd.f32 %v3186, %v3394
    %v3589 = vadd.f32 %v3187, %v3399
    %v3590 = vadd.f32 %v3188, %v3389
    %v3591 = vadd.f32 %v3189, %v3394
    %v3592 = vadd.f32 %v3190, %v3399
    %v3593 = vadd.f32 %v3191, %v3389
    %v3594 = vadd.f32 %v3192, %v3394
    %v3595 = vadd.f32 %v3193, %v3399
    %v3596 = vadd.f32 %v3194, %v3389
    %v3597 = vadd.f32 %v3195, %v3394
    %v3598 = vadd.f32 %v3196, %v3399
    %v3599 = vadd.f32 %v3197, %v3389
    %v3600 = vadd.f32 %v3198, %v3394
    %v3601 = vadd.f32 %v3199, %v3399
    %v3602 = vadd.f32 %v3200, %v3389
    %v3603 = vadd.f32 %v3201, %v3394
    %v3604 = vadd.f32 %v3202, %v3399
    %v3605 = vadd.f32 %v3203, %v3389
    %v3606 = vadd.f32 %v3204, %v3394
    %v3607 = vadd.f32 %v3205, %v3399
    %v3608 = vadd.f32 %v3206, %v3389
    %v3609 = vadd.f32 %v3207, %v3394
    %v3610 = vadd.f32 %v3208, %v3399
    %v3611 = vadd.f32 %v3209, %v3389
    %v3612 = vadd.f32 %v3210, %v3394
    %v3613 = vadd.f32 %v3211, %v3399
    %v3614 = vadd.f32 %v3212, %v3389
    %v3615 = vadd.f32 %v3213, %v3394
    %v3616 = vadd.f32 %v3214, %v3399
    %v3617 = vadd.f32 %v3215, %v3389
    %v3618 = vadd.f32 %v3216, %v3394
    %v3619 = vadd.f32 %v3217, %v3399
    %v3620 = vadd.f32 %v3218, %v3389
    %v3621 = vadd.f32 %v3219, %v3394
    %v3622 = vadd.f32 %v3220, %v3399
    %v3623 = vadd.f32 %v3221, %v3389
    %v3624 = vadd.f32 %v3222, %v3394
    %v3625 = vadd.f32 %v3223, %v3399
    %v3626 = vadd.f32 %v3224, %v3389
    %v3627 = vadd.f32 %v3225, %v3394
    %v3628 = vadd.f32 %v3226, %v3399
    %v3629 = vadd.f32 %v3227, %v3389
    %v3630 = vadd.f32 %v3228, %v3394
    %v3631 = vadd.f32 %v3229, %v3399
    %v3632 = vadd.f32 %v3230, %v3389
    %v3633 = vadd.f32 %v3231, %v3394
    %v3634 = vadd.f32 %v3232, %v3399
    %v3635 = vadd.f32 %v3233, %v3389
    %v3636 = vadd.f32 %v3234, %v3394
    %v3637 = vadd.f32 %v3235, %v3399
    %v3638 = vadd.f32 %v3236, %v3389
    %v3639 = vadd.f32 %v3237, %v3394
    %v3640 = vadd.f32 %v3238, %v3399
    %v3641 = vadd.f32 %v3239, %v3389
    %v3642 = vadd.f32 %v3240, %v3394
    %v3643 = vadd.f32 %v3241, %v3399
    %v3644 = vadd.f32 %v3242, %v3389
    %v3645 = vadd.f32 %v3243, %v3394
    %v3646 = vadd.f32 %v3244, %v3399
    %v3647 = vadd.f32 %v3245, %v3389
    %v3648 = vadd.f32 %v3246, %v3394
    %v3649 = vadd.f32 %v3247, %v3399
    %v3650 = vadd.f32 %v3248, %v3389
    %v3651 = vadd.f32 %v3249, %v3394
    %v3652 = vadd.f32 %v3250, %v3399
    %v3653 = vadd.f32 %v3251, %v3389
    %v3654 = vadd.f32 %v3252, %v3394
    %v3655 = vadd.f32 %v3253, %v3399
    %v3656 = vadd.f32 %v3254, %v3389
    %v3657 = vadd.f32 %v3255, %v3394
    %v3658 = vadd.f32 %v3256, %v3399
    %v3659 = vadd.f32 %v3257, %v3389
    %v3660 = vadd.f32 %v3258, %v3394
    %v3661 = vadd.f32 %v3259, %v3399
    %v3662 = vadd.f32 %v3260, %v3389
    %v3663 = vadd.f32 %v3261, %v3394
    %v3664 = vadd.f32 %v3262, %v3399
    %v3665 = vadd.f32 %v3263, %v3389
    %v3666 = vadd.f32 %v3264, %v3394
    %v3667 = vadd.f32 %v3265, %v3399
    %v3668 = vadd.f32 %v3266, %v3389
    %v3669 = vadd.f32 %v3267, %v3394
    %v3670 = vadd.f32 %v3268, %v3399
    %v3671 = vadd.f32 %v3269, %v3389
    %v3672 = vadd.f32 %v3270, %v3394
    %v3673 = vadd.f32 %v3271, %v3399
    %v3674 = vadd.f32 %v3272, %v3389
    %v3675 = vadd.f32 %v3273, %v3394
    %v3676 = vadd.f32 %v3274, %v3399
    %v3677 = vadd.f32 %v3275, %v3389
    %v3678 = vadd.f32 %v3276, %v3394
    %v3679 = vadd.f32 %v3277, %v3399
    %v3680 = vadd.f32 %v3278, %v3389
    %v3681 = vadd.f32 %v3279, %v3394
    %v3682 = vadd.f32 %v3280, %v3399
    %v3683 = vadd.f32 %v3281, %v3389
    %v3684 = vadd.f32 %v3282, %v3394
    %v3685 = vadd.f32 %v3283, %v3399
    %v3686 = vadd.f32 %v3284, %v3389
    %v3687 = vadd.f32 %v3285, %v3394
    %v3688 = vadd.f32 %v3286, %v3399
    %v3689 = vadd.f32 %v3287, %v3389
    %v3690 = vadd.f32 %v3288, %v3394
    %v3691 = vadd.f32 %v3289, %v3399
    %v3692 = vadd.f32 %v3290, %v3389
    %v3693 = vadd.f32 %v3291, %v3394
    %v3694 = vadd.f32 %v3292, %v3399
    %v3695 = vadd.f32 %v3293, %v3389
    %v3696 = vadd.f32 %v3294, %v3394
    %v3697 = vadd.f32 %v3295, %v3399
    %v3698 = vadd.f32 %v3296, %v3389
    %v3699 = vadd.f32 %v3297, %v3394
    %v3700 = vadd.f32 %v3298, %v3399
    %v3701 = vadd.f32 %v3299, %v3389
    %v3702 = vadd.f32 %v3300, %v3394
    %v3703 = vadd.f32 %v3301, %v3399
    %v3704 = vadd.f32 %v3302, %v3389
    %v3705 = vadd.f32 %v3303, %v3394
    %v3706 = vadd.f32 %v3304, %v3399
    %v3707 = vadd.f32 %v3305, %v3389
    %v3708 = vadd.f32 %v3306, %v3394
    %v3709 = vadd.f32 %v3307, %v3399
    %v3710 = vadd.f32 %v3308, %v3389
    %v3711 = vadd.f32 %v3309, %v3394
    %v3712 = vadd.f32 %v3310, %v3399
    %v3713 = vadd.f32 %v3311, %v3389
    %v3714 = vadd.f32 %v3312, %v3394
    %v3715 = vadd.f32 %v3313, %v3399
    %v3716 = vadd.f32 %v3314, %v3389
    %v3717 = vadd.f32 %v3315, %v3394
    %v3718 = vadd.f32 %v3316, %v3399
    %v3719 = vadd.f32 %v3317, %v3389
    %v3720 = vadd.f32 %v3318, %v3394
    %v3721 = vadd.f32 %v3319, %v3399
    %v3722 = vadd.f32 %v3320, %v3389
    %v3723 = vadd.f32 %v3321, %v3394
    %v3724 = vadd.f32 %v3322, %v3399
    %v3725 = vadd.f32 %v3323, %v3389
    %v3726 = vadd.f32 %v3324, %v3394
    %v3727 = vadd.f32 %v3325, %v3399
    %v3728 = vadd.f32 %v3326, %v3389
    %v3729 = vadd.f32 %v3327, %v3394
    %v3730 = vadd.f32 %v3328, %v3399
    %v3731 = vadd.f32 %v3329, %v3389
    %v3732 = vadd.f32 %v3330, %v3394
    %v3733 = vadd.f32 %v3331, %v3399
    %v3734 = vadd.f32 %v3332, %v3389
    %v3735 = vadd.f32 %v3333, %v3394
    %v3736 = vadd.f32 %v3334, %v3399
    %v3737 = vadd.f32 %v3335, %v3389
    %v3738 = vadd.f32 %v3336, %v3394
    %v3739 = vadd.f32 %v3337, %v3399
    %v3740 = vadd.f32 %v3338, %v3389
    %v3741 = vadd.f32 %v3339, %v3394
    %v3742 = vadd.f32 %v3340, %v3399
    %v3743 = vadd.f32 %v3341, %v3389
    %v3744 = vadd.f32 %v3342, %v3394
    %v3745 = vadd.f32 %v3343, %v3399
    %v3746 = vadd.f32 %v3344, %v3389
    %v3747 = vadd.f32 %v3345, %v3394
    %v3748 = vadd.f32 %v3346, %v3399
    %v3749 = vadd.f32 %v3347, %v3389
    %v3750 = vadd.f32 %v3348, %v3394
    %v3751 = vadd.f32 %v3349, %v3399
    %v3752 = vadd.f32 %v3350, %v3389
    %v3753 = vadd.f32 %v3351, %v3394
    %v3754 = vadd.f32 %v3352, %v3399
    %v3755 = vadd.f32 %v3353, %v3389
    %v3756 = vadd.f32 %v3354, %v3394
    %v3757 = vadd.f32 %v3355, %v3399
    %v3758 = vadd.f32 %v3356, %v3389
    %v3759 = vadd.f32 %v3357, %v3394
    %v3760 = vadd.f32 %v3358, %v3399
    %v3761 = vadd.f32 %v3359, %v3389
    %v3762 = vadd.f32 %v3360, %v3394
    %v3763 = vadd.f32 %v3361, %v3399
    %v3764 = vadd.f32 %v3362, %v3389
    %v3765 = vadd.f32 %v3363, %v3394
    %v3766 = vadd.f32 %v3364, %v3399
    %v3767 = vadd.f32 %v3365, %v3389
    %v3768 = vadd.f32 %v3366, %v3394
    %v3769 = vadd.f32 %v3367, %v3399
    %v3770 = vadd.f32 %v3368, %v3389
    %v3771 = vadd.f32 %v3369, %v3394
    %v3772 = vadd.f32 %v3370, %v3399
    %v3773 = vadd.f32 %v3371, %v3389
    %v3774 = vadd.f32 %v3372, %v3394
    %v3775 = vadd.f32 %v3373, %v3399
    %v3776 = vadd.f32 %v3374, %v3389
    %v3777 = vadd.f32 %v3375, %v3394
    %v3778 = vadd.f32 %v3376, %v3399
    %v3779 = vadd.f32 %v3377, %v3389
    %v3780 = vadd.f32 %v3378, %v3394
    %v3781 = vadd.f32 %v3379, %v3399
    %v3782 = vadd.f32 %v3380, %v3389
    %v3783 = vadd.f32 %v3381, %v3394
    %v3784 = vadd.f32 %v3382, %v3399
    %vm3785 = vcmask 15360
    %3786 = vst.msk [vmem:[#allocation2] sm:$0xff] %vm3785, %v3401
    %3787 = vst.msk [vmem:[#allocation2 + $0x8] sm:$0xff] %vm3785, %v3402
    %3788 = vst.msk [vmem:[#allocation2 + $0x10] sm:$0xff] %vm3785, %v3403
    %3789 = vst.msk [vmem:[#allocation2 + $0x18] sm:$0xff] %vm3785, %v3404
    %3790 = vst.msk [vmem:[#allocation2 + $0x20] sm:$0xff] %vm3785, %v3405
    %3791 = vst.msk [vmem:[#allocation2 + $0x28] sm:$0xff] %vm3785, %v3406
    %3792 = vst.msk [vmem:[#allocation2 + $0x30] sm:$0xff] %vm3785, %v3407
    %3793 = vst.msk [vmem:[#allocation2 + $0x38] sm:$0xff] %vm3785, %v3408
    %3794 = vst.msk [vmem:[#allocation2 + $0x40] sm:$0xff] %vm3785, %v3409
    %3795 = vst.msk [vmem:[#allocation2 + $0x48] sm:$0xff] %vm3785, %v3410
    %3796 = vst.msk [vmem:[#allocation2 + $0x50] sm:$0xff] %vm3785, %v3411
    %3797 = vst.msk [vmem:[#allocation2 + $0x58] sm:$0xff] %vm3785, %v3412
    %3798 = vst.msk [vmem:[#allocation2 + $0x60] sm:$0xff] %vm3785, %v3413
    %3799 = vst.msk [vmem:[#allocation2 + $0x68] sm:$0xff] %vm3785, %v3414
    %3800 = vst.msk [vmem:[#allocation2 + $0x70] sm:$0xff] %vm3785, %v3415
    %3801 = vst.msk [vmem:[#allocation2 + $0x78] sm:$0xff] %vm3785, %v3416
    %3802 = vst.msk [vmem:[#allocation2 + $0x80] sm:$0xff] %vm3785, %v3417
    %3803 = vst.msk [vmem:[#allocation2 + $0x88] sm:$0xff] %vm3785, %v3418
    %3804 = vst.msk [vmem:[#allocation2 + $0x90] sm:$0xff] %vm3785, %v3419
    %3805 = vst.msk [vmem:[#allocation2 + $0x98] sm:$0xff] %vm3785, %v3420
    %3806 = vst.msk [vmem:[#allocation2 + $0xa0] sm:$0xff] %vm3785, %v3421
    %3807 = vst.msk [vmem:[#allocation2 + $0xa8] sm:$0xff] %vm3785, %v3422
    %3808 = vst.msk [vmem:[#allocation2 + $0xb0] sm:$0xff] %vm3785, %v3423
    %3809 = vst.msk [vmem:[#allocation2 + $0xb8] sm:$0xff] %vm3785, %v3424
    %3810 = vst.msk [vmem:[#allocation2 + $0xc0] sm:$0xff] %vm3785, %v3425
    %3811 = vst.msk [vmem:[#allocation2 + $0xc8] sm:$0xff] %vm3785, %v3426
    %3812 = vst.msk [vmem:[#allocation2 + $0xd0] sm:$0xff] %vm3785, %v3427
    %3813 = vst.msk [vmem:[#allocation2 + $0xd8] sm:$0xff] %vm3785, %v3428
    %3814 = vst.msk [vmem:[#allocation2 + $0xe0] sm:$0xff] %vm3785, %v3429
    %3815 = vst.msk [vmem:[#allocation2 + $0xe8] sm:$0xff] %vm3785, %v3430
    %3816 = vst.msk [vmem:[#allocation2 + $0xf0] sm:$0xff] %vm3785, %v3431
    %3817 = vst.msk [vmem:[#allocation2 + $0xf8] sm:$0xff] %vm3785, %v3432
    %3818 = vst.msk [vmem:[#allocation2 + $0x100] sm:$0xff] %vm3785, %v3433
    %3819 = vst.msk [vmem:[#allocation2 + $0x108] sm:$0xff] %vm3785, %v3434
    %3820 = vst.msk [vmem:[#allocation2 + $0x110] sm:$0xff] %vm3785, %v3435
    %3821 = vst.msk [vmem:[#allocation2 + $0x118] sm:$0xff] %vm3785, %v3436
    %3822 = vst.msk [vmem:[#allocation2 + $0x120] sm:$0xff] %vm3785, %v3437
    %3823 = vst.msk [vmem:[#allocation2 + $0x128] sm:$0xff] %vm3785, %v3438
    %3824 = vst.msk [vmem:[#allocation2 + $0x130] sm:$0xff] %vm3785, %v3439
    %3825 = vst.msk [vmem:[#allocation2 + $0x138] sm:$0xff] %vm3785, %v3440
    %3826 = vst.msk [vmem:[#allocation2 + $0x140] sm:$0xff] %vm3785, %v3441
    %3827 = vst.msk [vmem:[#allocation2 + $0x148] sm:$0xff] %vm3785, %v3442
    %3828 = vst.msk [vmem:[#allocation2 + $0x150] sm:$0xff] %vm3785, %v3443
    %3829 = vst.msk [vmem:[#allocation2 + $0x158] sm:$0xff] %vm3785, %v3444
    %3830 = vst.msk [vmem:[#allocation2 + $0x160] sm:$0xff] %vm3785, %v3445
    %3831 = vst.msk [vmem:[#allocation2 + $0x168] sm:$0xff] %vm3785, %v3446
    %3832 = vst.msk [vmem:[#allocation2 + $0x170] sm:$0xff] %vm3785, %v3447
    %3833 = vst.msk [vmem:[#allocation2 + $0x178] sm:$0xff] %vm3785, %v3448
    %3834 = vst.msk [vmem:[#allocation2 + $0x180] sm:$0xff] %vm3785, %v3449
    %3835 = vst.msk [vmem:[#allocation2 + $0x188] sm:$0xff] %vm3785, %v3450
    %3836 = vst.msk [vmem:[#allocation2 + $0x190] sm:$0xff] %vm3785, %v3451
    %3837 = vst.msk [vmem:[#allocation2 + $0x198] sm:$0xff] %vm3785, %v3452
    %3838 = vst.msk [vmem:[#allocation2 + $0x1a0] sm:$0xff] %vm3785, %v3453
    %3839 = vst.msk [vmem:[#allocation2 + $0x1a8] sm:$0xff] %vm3785, %v3454
    %3840 = vst.msk [vmem:[#allocation2 + $0x1b0] sm:$0xff] %vm3785, %v3455
    %3841 = vst.msk [vmem:[#allocation2 + $0x1b8] sm:$0xff] %vm3785, %v3456
    %3842 = vst.msk [vmem:[#allocation2 + $0x1c0] sm:$0xff] %vm3785, %v3457
    %3843 = vst.msk [vmem:[#allocation2 + $0x1c8] sm:$0xff] %vm3785, %v3458
    %3844 = vst.msk [vmem:[#allocation2 + $0x1d0] sm:$0xff] %vm3785, %v3459
    %3845 = vst.msk [vmem:[#allocation2 + $0x1d8] sm:$0xff] %vm3785, %v3460
    %3846 = vst.msk [vmem:[#allocation2 + $0x1e0] sm:$0xff] %vm3785, %v3461
    %3847 = vst.msk [vmem:[#allocation2 + $0x1e8] sm:$0xff] %vm3785, %v3462
    %3848 = vst.msk [vmem:[#allocation2 + $0x1f0] sm:$0xff] %vm3785, %v3463
    %3849 = vst.msk [vmem:[#allocation2 + $0x1f8] sm:$0xff] %vm3785, %v3464
    %3850 = vst.msk [vmem:[#allocation2 + $0x200] sm:$0xff] %vm3785, %v3465
    %3851 = vst.msk [vmem:[#allocation2 + $0x208] sm:$0xff] %vm3785, %v3466
    %3852 = vst.msk [vmem:[#allocation2 + $0x210] sm:$0xff] %vm3785, %v3467
    %3853 = vst.msk [vmem:[#allocation2 + $0x218] sm:$0xff] %vm3785, %v3468
    %3854 = vst.msk [vmem:[#allocation2 + $0x220] sm:$0xff] %vm3785, %v3469
    %3855 = vst.msk [vmem:[#allocation2 + $0x228] sm:$0xff] %vm3785, %v3470
    %3856 = vst.msk [vmem:[#allocation2 + $0x230] sm:$0xff] %vm3785, %v3471
    %3857 = vst.msk [vmem:[#allocation2 + $0x238] sm:$0xff] %vm3785, %v3472
    %3858 = vst.msk [vmem:[#allocation2 + $0x240] sm:$0xff] %vm3785, %v3473
    %3859 = vst.msk [vmem:[#allocation2 + $0x248] sm:$0xff] %vm3785, %v3474
    %3860 = vst.msk [vmem:[#allocation2 + $0x250] sm:$0xff] %vm3785, %v3475
    %3861 = vst.msk [vmem:[#allocation2 + $0x258] sm:$0xff] %vm3785, %v3476
    %3862 = vst.msk [vmem:[#allocation2 + $0x260] sm:$0xff] %vm3785, %v3477
    %3863 = vst.msk [vmem:[#allocation2 + $0x268] sm:$0xff] %vm3785, %v3478
    %3864 = vst.msk [vmem:[#allocation2 + $0x270] sm:$0xff] %vm3785, %v3479
    %3865 = vst.msk [vmem:[#allocation2 + $0x278] sm:$0xff] %vm3785, %v3480
    %3866 = vst.msk [vmem:[#allocation2 + $0x280] sm:$0xff] %vm3785, %v3481
    %3867 = vst.msk [vmem:[#allocation2 + $0x288] sm:$0xff] %vm3785, %v3482
    %3868 = vst.msk [vmem:[#allocation2 + $0x290] sm:$0xff] %vm3785, %v3483
    %3869 = vst.msk [vmem:[#allocation2 + $0x298] sm:$0xff] %vm3785, %v3484
    %3870 = vst.msk [vmem:[#allocation2 + $0x2a0] sm:$0xff] %vm3785, %v3485
    %3871 = vst.msk [vmem:[#allocation2 + $0x2a8] sm:$0xff] %vm3785, %v3486
    %3872 = vst.msk [vmem:[#allocation2 + $0x2b0] sm:$0xff] %vm3785, %v3487
    %3873 = vst.msk [vmem:[#allocation2 + $0x2b8] sm:$0xff] %vm3785, %v3488
    %3874 = vst.msk [vmem:[#allocation2 + $0x2c0] sm:$0xff] %vm3785, %v3489
    %3875 = vst.msk [vmem:[#allocation2 + $0x2c8] sm:$0xff] %vm3785, %v3490
    %3876 = vst.msk [vmem:[#allocation2 + $0x2d0] sm:$0xff] %vm3785, %v3491
    %3877 = vst.msk [vmem:[#allocation2 + $0x2d8] sm:$0xff] %vm3785, %v3492
    %3878 = vst.msk [vmem:[#allocation2 + $0x2e0] sm:$0xff] %vm3785, %v3493
    %3879 = vst.msk [vmem:[#allocation2 + $0x2e8] sm:$0xff] %vm3785, %v3494
    %3880 = vst.msk [vmem:[#allocation2 + $0x2f0] sm:$0xff] %vm3785, %v3495
    %3881 = vst.msk [vmem:[#allocation2 + $0x2f8] sm:$0xff] %vm3785, %v3496
    %3882 = vst.msk [vmem:[#allocation2 + $0x300] sm:$0xff] %vm3785, %v3497
    %3883 = vst.msk [vmem:[#allocation2 + $0x308] sm:$0xff] %vm3785, %v3498
    %3884 = vst.msk [vmem:[#allocation2 + $0x310] sm:$0xff] %vm3785, %v3499
    %3885 = vst.msk [vmem:[#allocation2 + $0x318] sm:$0xff] %vm3785, %v3500
    %3886 = vst.msk [vmem:[#allocation2 + $0x320] sm:$0xff] %vm3785, %v3501
    %3887 = vst.msk [vmem:[#allocation2 + $0x328] sm:$0xff] %vm3785, %v3502
    %3888 = vst.msk [vmem:[#allocation2 + $0x330] sm:$0xff] %vm3785, %v3503
    %3889 = vst.msk [vmem:[#allocation2 + $0x338] sm:$0xff] %vm3785, %v3504
    %3890 = vst.msk [vmem:[#allocation2 + $0x340] sm:$0xff] %vm3785, %v3505
    %3891 = vst.msk [vmem:[#allocation2 + $0x348] sm:$0xff] %vm3785, %v3506
    %3892 = vst.msk [vmem:[#allocation2 + $0x350] sm:$0xff] %vm3785, %v3507
    %3893 = vst.msk [vmem:[#allocation2 + $0x358] sm:$0xff] %vm3785, %v3508
    %3894 = vst.msk [vmem:[#allocation2 + $0x360] sm:$0xff] %vm3785, %v3509
    %3895 = vst.msk [vmem:[#allocation2 + $0x368] sm:$0xff] %vm3785, %v3510
    %3896 = vst.msk [vmem:[#allocation2 + $0x370] sm:$0xff] %vm3785, %v3511
    %3897 = vst.msk [vmem:[#allocation2 + $0x378] sm:$0xff] %vm3785, %v3512
    %3898 = vst.msk [vmem:[#allocation2 + $0x380] sm:$0xff] %vm3785, %v3513
    %3899 = vst.msk [vmem:[#allocation2 + $0x388] sm:$0xff] %vm3785, %v3514
    %3900 = vst.msk [vmem:[#allocation2 + $0x390] sm:$0xff] %vm3785, %v3515
    %3901 = vst.msk [vmem:[#allocation2 + $0x398] sm:$0xff] %vm3785, %v3516
    %3902 = vst.msk [vmem:[#allocation2 + $0x3a0] sm:$0xff] %vm3785, %v3517
    %3903 = vst.msk [vmem:[#allocation2 + $0x3a8] sm:$0xff] %vm3785, %v3518
    %3904 = vst.msk [vmem:[#allocation2 + $0x3b0] sm:$0xff] %vm3785, %v3519
    %3905 = vst.msk [vmem:[#allocation2 + $0x3b8] sm:$0xff] %vm3785, %v3520
    %3906 = vst.msk [vmem:[#allocation2 + $0x3c0] sm:$0xff] %vm3785, %v3521
    %3907 = vst.msk [vmem:[#allocation2 + $0x3c8] sm:$0xff] %vm3785, %v3522
    %3908 = vst.msk [vmem:[#allocation2 + $0x3d0] sm:$0xff] %vm3785, %v3523
    %3909 = vst.msk [vmem:[#allocation2 + $0x3d8] sm:$0xff] %vm3785, %v3524
    %3910 = vst.msk [vmem:[#allocation2 + $0x3e0] sm:$0xff] %vm3785, %v3525
    %3911 = vst.msk [vmem:[#allocation2 + $0x3e8] sm:$0xff] %vm3785, %v3526
    %3912 = vst.msk [vmem:[#allocation2 + $0x3f0] sm:$0xff] %vm3785, %v3527
    %3913 = vst.msk [vmem:[#allocation2 + $0x3f8] sm:$0xff] %vm3785, %v3528
    %3914 = vst.msk [vmem:[#allocation2 + $0x400] sm:$0xff] %vm3785, %v3529
    %3915 = vst.msk [vmem:[#allocation2 + $0x408] sm:$0xff] %vm3785, %v3530
    %3916 = vst.msk [vmem:[#allocation2 + $0x410] sm:$0xff] %vm3785, %v3531
    %3917 = vst.msk [vmem:[#allocation2 + $0x418] sm:$0xff] %vm3785, %v3532
    %3918 = vst.msk [vmem:[#allocation2 + $0x420] sm:$0xff] %vm3785, %v3533
    %3919 = vst.msk [vmem:[#allocation2 + $0x428] sm:$0xff] %vm3785, %v3534
    %3920 = vst.msk [vmem:[#allocation2 + $0x430] sm:$0xff] %vm3785, %v3535
    %3921 = vst.msk [vmem:[#allocation2 + $0x438] sm:$0xff] %vm3785, %v3536
    %3922 = vst.msk [vmem:[#allocation2 + $0x440] sm:$0xff] %vm3785, %v3537
    %3923 = vst.msk [vmem:[#allocation2 + $0x448] sm:$0xff] %vm3785, %v3538
    %3924 = vst.msk [vmem:[#allocation2 + $0x450] sm:$0xff] %vm3785, %v3539
    %3925 = vst.msk [vmem:[#allocation2 + $0x458] sm:$0xff] %vm3785, %v3540
    %3926 = vst.msk [vmem:[#allocation2 + $0x460] sm:$0xff] %vm3785, %v3541
    %3927 = vst.msk [vmem:[#allocation2 + $0x468] sm:$0xff] %vm3785, %v3542
    %3928 = vst.msk [vmem:[#allocation2 + $0x470] sm:$0xff] %vm3785, %v3543
    %3929 = vst.msk [vmem:[#allocation2 + $0x478] sm:$0xff] %vm3785, %v3544
    %3930 = vst.msk [vmem:[#allocation2 + $0x480] sm:$0xff] %vm3785, %v3545
    %3931 = vst.msk [vmem:[#allocation2 + $0x488] sm:$0xff] %vm3785, %v3546
    %3932 = vst.msk [vmem:[#allocation2 + $0x490] sm:$0xff] %vm3785, %v3547
    %3933 = vst.msk [vmem:[#allocation2 + $0x498] sm:$0xff] %vm3785, %v3548
    %3934 = vst.msk [vmem:[#allocation2 + $0x4a0] sm:$0xff] %vm3785, %v3549
    %3935 = vst.msk [vmem:[#allocation2 + $0x4a8] sm:$0xff] %vm3785, %v3550
    %3936 = vst.msk [vmem:[#allocation2 + $0x4b0] sm:$0xff] %vm3785, %v3551
    %3937 = vst.msk [vmem:[#allocation2 + $0x4b8] sm:$0xff] %vm3785, %v3552
    %3938 = vst.msk [vmem:[#allocation2 + $0x4c0] sm:$0xff] %vm3785, %v3553
    %3939 = vst.msk [vmem:[#allocation2 + $0x4c8] sm:$0xff] %vm3785, %v3554
    %3940 = vst.msk [vmem:[#allocation2 + $0x4d0] sm:$0xff] %vm3785, %v3555
    %3941 = vst.msk [vmem:[#allocation2 + $0x4d8] sm:$0xff] %vm3785, %v3556
    %3942 = vst.msk [vmem:[#allocation2 + $0x4e0] sm:$0xff] %vm3785, %v3557
    %3943 = vst.msk [vmem:[#allocation2 + $0x4e8] sm:$0xff] %vm3785, %v3558
    %3944 = vst.msk [vmem:[#allocation2 + $0x4f0] sm:$0xff] %vm3785, %v3559
    %3945 = vst.msk [vmem:[#allocation2 + $0x4f8] sm:$0xff] %vm3785, %v3560
    %3946 = vst.msk [vmem:[#allocation2 + $0x500] sm:$0xff] %vm3785, %v3561
    %3947 = vst.msk [vmem:[#allocation2 + $0x508] sm:$0xff] %vm3785, %v3562
    %3948 = vst.msk [vmem:[#allocation2 + $0x510] sm:$0xff] %vm3785, %v3563
    %3949 = vst.msk [vmem:[#allocation2 + $0x518] sm:$0xff] %vm3785, %v3564
    %3950 = vst.msk [vmem:[#allocation2 + $0x520] sm:$0xff] %vm3785, %v3565
    %3951 = vst.msk [vmem:[#allocation2 + $0x528] sm:$0xff] %vm3785, %v3566
    %3952 = vst.msk [vmem:[#allocation2 + $0x530] sm:$0xff] %vm3785, %v3567
    %3953 = vst.msk [vmem:[#allocation2 + $0x538] sm:$0xff] %vm3785, %v3568
    %3954 = vst.msk [vmem:[#allocation2 + $0x540] sm:$0xff] %vm3785, %v3569
    %3955 = vst.msk [vmem:[#allocation2 + $0x548] sm:$0xff] %vm3785, %v3570
    %3956 = vst.msk [vmem:[#allocation2 + $0x550] sm:$0xff] %vm3785, %v3571
    %3957 = vst.msk [vmem:[#allocation2 + $0x558] sm:$0xff] %vm3785, %v3572
    %3958 = vst.msk [vmem:[#allocation2 + $0x560] sm:$0xff] %vm3785, %v3573
    %3959 = vst.msk [vmem:[#allocation2 + $0x568] sm:$0xff] %vm3785, %v3574
    %3960 = vst.msk [vmem:[#allocation2 + $0x570] sm:$0xff] %vm3785, %v3575
    %3961 = vst.msk [vmem:[#allocation2 + $0x578] sm:$0xff] %vm3785, %v3576
    %3962 = vst.msk [vmem:[#allocation2 + $0x580] sm:$0xff] %vm3785, %v3577
    %3963 = vst.msk [vmem:[#allocation2 + $0x588] sm:$0xff] %vm3785, %v3578
    %3964 = vst.msk [vmem:[#allocation2 + $0x590] sm:$0xff] %vm3785, %v3579
    %3965 = vst.msk [vmem:[#allocation2 + $0x598] sm:$0xff] %vm3785, %v3580
    %3966 = vst.msk [vmem:[#allocation2 + $0x5a0] sm:$0xff] %vm3785, %v3581
    %3967 = vst.msk [vmem:[#allocation2 + $0x5a8] sm:$0xff] %vm3785, %v3582
    %3968 = vst.msk [vmem:[#allocation2 + $0x5b0] sm:$0xff] %vm3785, %v3583
    %3969 = vst.msk [vmem:[#allocation2 + $0x5b8] sm:$0xff] %vm3785, %v3584
    %3970 = vst.msk [vmem:[#allocation2 + $0x5c0] sm:$0xff] %vm3785, %v3585
    %3971 = vst.msk [vmem:[#allocation2 + $0x5c8] sm:$0xff] %vm3785, %v3586
    %3972 = vst.msk [vmem:[#allocation2 + $0x5d0] sm:$0xff] %vm3785, %v3587
    %3973 = vst.msk [vmem:[#allocation2 + $0x5d8] sm:$0xff] %vm3785, %v3588
    %3974 = vst.msk [vmem:[#allocation2 + $0x5e0] sm:$0xff] %vm3785, %v3589
    %3975 = vst.msk [vmem:[#allocation2 + $0x5e8] sm:$0xff] %vm3785, %v3590
    %3976 = vst.msk [vmem:[#allocation2 + $0x5f0] sm:$0xff] %vm3785, %v3591
    %3977 = vst.msk [vmem:[#allocation2 + $0x5f8] sm:$0xff] %vm3785, %v3592
    %3978 = vst.msk [vmem:[#allocation2 + $0x600] sm:$0xff] %vm3785, %v3593
    %3979 = vst.msk [vmem:[#allocation2 + $0x608] sm:$0xff] %vm3785, %v3594
    %3980 = vst.msk [vmem:[#allocation2 + $0x610] sm:$0xff] %vm3785, %v3595
    %3981 = vst.msk [vmem:[#allocation2 + $0x618] sm:$0xff] %vm3785, %v3596
    %3982 = vst.msk [vmem:[#allocation2 + $0x620] sm:$0xff] %vm3785, %v3597
    %3983 = vst.msk [vmem:[#allocation2 + $0x628] sm:$0xff] %vm3785, %v3598
    %3984 = vst.msk [vmem:[#allocation2 + $0x630] sm:$0xff] %vm3785, %v3599
    %3985 = vst.msk [vmem:[#allocation2 + $0x638] sm:$0xff] %vm3785, %v3600
    %3986 = vst.msk [vmem:[#allocation2 + $0x640] sm:$0xff] %vm3785, %v3601
    %3987 = vst.msk [vmem:[#allocation2 + $0x648] sm:$0xff] %vm3785, %v3602
    %3988 = vst.msk [vmem:[#allocation2 + $0x650] sm:$0xff] %vm3785, %v3603
    %3989 = vst.msk [vmem:[#allocation2 + $0x658] sm:$0xff] %vm3785, %v3604
    %3990 = vst.msk [vmem:[#allocation2 + $0x660] sm:$0xff] %vm3785, %v3605
    %3991 = vst.msk [vmem:[#allocation2 + $0x668] sm:$0xff] %vm3785, %v3606
    %3992 = vst.msk [vmem:[#allocation2 + $0x670] sm:$0xff] %vm3785, %v3607
    %3993 = vst.msk [vmem:[#allocation2 + $0x678] sm:$0xff] %vm3785, %v3608
    %3994 = vst.msk [vmem:[#allocation2 + $0x680] sm:$0xff] %vm3785, %v3609
    %3995 = vst.msk [vmem:[#allocation2 + $0x688] sm:$0xff] %vm3785, %v3610
    %3996 = vst.msk [vmem:[#allocation2 + $0x690] sm:$0xff] %vm3785, %v3611
    %3997 = vst.msk [vmem:[#allocation2 + $0x698] sm:$0xff] %vm3785, %v3612
    %3998 = vst.msk [vmem:[#allocation2 + $0x6a0] sm:$0xff] %vm3785, %v3613
    %3999 = vst.msk [vmem:[#allocation2 + $0x6a8] sm:$0xff] %vm3785, %v3614
    %4000 = vst.msk [vmem:[#allocation2 + $0x6b0] sm:$0xff] %vm3785, %v3615
    %4001 = vst.msk [vmem:[#allocation2 + $0x6b8] sm:$0xff] %vm3785, %v3616
    %4002 = vst.msk [vmem:[#allocation2 + $0x6c0] sm:$0xff] %vm3785, %v3617
    %4003 = vst.msk [vmem:[#allocation2 + $0x6c8] sm:$0xff] %vm3785, %v3618
    %4004 = vst.msk [vmem:[#allocation2 + $0x6d0] sm:$0xff] %vm3785, %v3619
    %4005 = vst.msk [vmem:[#allocation2 + $0x6d8] sm:$0xff] %vm3785, %v3620
    %4006 = vst.msk [vmem:[#allocation2 + $0x6e0] sm:$0xff] %vm3785, %v3621
    %4007 = vst.msk [vmem:[#allocation2 + $0x6e8] sm:$0xff] %vm3785, %v3622
    %4008 = vst.msk [vmem:[#allocation2 + $0x6f0] sm:$0xff] %vm3785, %v3623
    %4009 = vst.msk [vmem:[#allocation2 + $0x6f8] sm:$0xff] %vm3785, %v3624
    %4010 = vst.msk [vmem:[#allocation2 + $0x700] sm:$0xff] %vm3785, %v3625
    %4011 = vst.msk [vmem:[#allocation2 + $0x708] sm:$0xff] %vm3785, %v3626
    %4012 = vst.msk [vmem:[#allocation2 + $0x710] sm:$0xff] %vm3785, %v3627
    %4013 = vst.msk [vmem:[#allocation2 + $0x718] sm:$0xff] %vm3785, %v3628
    %4014 = vst.msk [vmem:[#allocation2 + $0x720] sm:$0xff] %vm3785, %v3629
    %4015 = vst.msk [vmem:[#allocation2 + $0x728] sm:$0xff] %vm3785, %v3630
    %4016 = vst.msk [vmem:[#allocation2 + $0x730] sm:$0xff] %vm3785, %v3631
    %4017 = vst.msk [vmem:[#allocation2 + $0x738] sm:$0xff] %vm3785, %v3632
    %4018 = vst.msk [vmem:[#allocation2 + $0x740] sm:$0xff] %vm3785, %v3633
    %4019 = vst.msk [vmem:[#allocation2 + $0x748] sm:$0xff] %vm3785, %v3634
    %4020 = vst.msk [vmem:[#allocation2 + $0x750] sm:$0xff] %vm3785, %v3635
    %4021 = vst.msk [vmem:[#allocation2 + $0x758] sm:$0xff] %vm3785, %v3636
    %4022 = vst.msk [vmem:[#allocation2 + $0x760] sm:$0xff] %vm3785, %v3637
    %4023 = vst.msk [vmem:[#allocation2 + $0x768] sm:$0xff] %vm3785, %v3638
    %4024 = vst.msk [vmem:[#allocation2 + $0x770] sm:$0xff] %vm3785, %v3639
    %4025 = vst.msk [vmem:[#allocation2 + $0x778] sm:$0xff] %vm3785, %v3640
    %4026 = vst.msk [vmem:[#allocation2 + $0x780] sm:$0xff] %vm3785, %v3641
    %4027 = vst.msk [vmem:[#allocation2 + $0x788] sm:$0xff] %vm3785, %v3642
    %4028 = vst.msk [vmem:[#allocation2 + $0x790] sm:$0xff] %vm3785, %v3643
    %4029 = vst.msk [vmem:[#allocation2 + $0x798] sm:$0xff] %vm3785, %v3644
    %4030 = vst.msk [vmem:[#allocation2 + $0x7a0] sm:$0xff] %vm3785, %v3645
    %4031 = vst.msk [vmem:[#allocation2 + $0x7a8] sm:$0xff] %vm3785, %v3646
    %4032 = vst.msk [vmem:[#allocation2 + $0x7b0] sm:$0xff] %vm3785, %v3647
    %4033 = vst.msk [vmem:[#allocation2 + $0x7b8] sm:$0xff] %vm3785, %v3648
    %4034 = vst.msk [vmem:[#allocation2 + $0x7c0] sm:$0xff] %vm3785, %v3649
    %4035 = vst.msk [vmem:[#allocation2 + $0x7c8] sm:$0xff] %vm3785, %v3650
    %4036 = vst.msk [vmem:[#allocation2 + $0x7d0] sm:$0xff] %vm3785, %v3651
    %4037 = vst.msk [vmem:[#allocation2 + $0x7d8] sm:$0xff] %vm3785, %v3652
    %4038 = vst.msk [vmem:[#allocation2 + $0x7e0] sm:$0xff] %vm3785, %v3653
    %4039 = vst.msk [vmem:[#allocation2 + $0x7e8] sm:$0xff] %vm3785, %v3654
    %4040 = vst.msk [vmem:[#allocation2 + $0x7f0] sm:$0xff] %vm3785, %v3655
    %4041 = vst.msk [vmem:[#allocation2 + $0x7f8] sm:$0xff] %vm3785, %v3656
    %4042 = vst.msk [vmem:[#allocation2 + $0x800] sm:$0xff] %vm3785, %v3657
    %4043 = vst.msk [vmem:[#allocation2 + $0x808] sm:$0xff] %vm3785, %v3658
    %4044 = vst.msk [vmem:[#allocation2 + $0x810] sm:$0xff] %vm3785, %v3659
    %4045 = vst.msk [vmem:[#allocation2 + $0x818] sm:$0xff] %vm3785, %v3660
    %4046 = vst.msk [vmem:[#allocation2 + $0x820] sm:$0xff] %vm3785, %v3661
    %4047 = vst.msk [vmem:[#allocation2 + $0x828] sm:$0xff] %vm3785, %v3662
    %4048 = vst.msk [vmem:[#allocation2 + $0x830] sm:$0xff] %vm3785, %v3663
    %4049 = vst.msk [vmem:[#allocation2 + $0x838] sm:$0xff] %vm3785, %v3664
    %4050 = vst.msk [vmem:[#allocation2 + $0x840] sm:$0xff] %vm3785, %v3665
    %4051 = vst.msk [vmem:[#allocation2 + $0x848] sm:$0xff] %vm3785, %v3666
    %4052 = vst.msk [vmem:[#allocation2 + $0x850] sm:$0xff] %vm3785, %v3667
    %4053 = vst.msk [vmem:[#allocation2 + $0x858] sm:$0xff] %vm3785, %v3668
    %4054 = vst.msk [vmem:[#allocation2 + $0x860] sm:$0xff] %vm3785, %v3669
    %4055 = vst.msk [vmem:[#allocation2 + $0x868] sm:$0xff] %vm3785, %v3670
    %4056 = vst.msk [vmem:[#allocation2 + $0x870] sm:$0xff] %vm3785, %v3671
    %4057 = vst.msk [vmem:[#allocation2 + $0x878] sm:$0xff] %vm3785, %v3672
    %4058 = vst.msk [vmem:[#allocation2 + $0x880] sm:$0xff] %vm3785, %v3673
    %4059 = vst.msk [vmem:[#allocation2 + $0x888] sm:$0xff] %vm3785, %v3674
    %4060 = vst.msk [vmem:[#allocation2 + $0x890] sm:$0xff] %vm3785, %v3675
    %4061 = vst.msk [vmem:[#allocation2 + $0x898] sm:$0xff] %vm3785, %v3676
    %4062 = vst.msk [vmem:[#allocation2 + $0x8a0] sm:$0xff] %vm3785, %v3677
    %4063 = vst.msk [vmem:[#allocation2 + $0x8a8] sm:$0xff] %vm3785, %v3678
    %4064 = vst.msk [vmem:[#allocation2 + $0x8b0] sm:$0xff] %vm3785, %v3679
    %4065 = vst.msk [vmem:[#allocation2 + $0x8b8] sm:$0xff] %vm3785, %v3680
    %4066 = vst.msk [vmem:[#allocation2 + $0x8c0] sm:$0xff] %vm3785, %v3681
    %4067 = vst.msk [vmem:[#allocation2 + $0x8c8] sm:$0xff] %vm3785, %v3682
    %4068 = vst.msk [vmem:[#allocation2 + $0x8d0] sm:$0xff] %vm3785, %v3683
    %4069 = vst.msk [vmem:[#allocation2 + $0x8d8] sm:$0xff] %vm3785, %v3684
    %4070 = vst.msk [vmem:[#allocation2 + $0x8e0] sm:$0xff] %vm3785, %v3685
    %4071 = vst.msk [vmem:[#allocation2 + $0x8e8] sm:$0xff] %vm3785, %v3686
    %4072 = vst.msk [vmem:[#allocation2 + $0x8f0] sm:$0xff] %vm3785, %v3687
    %4073 = vst.msk [vmem:[#allocation2 + $0x8f8] sm:$0xff] %vm3785, %v3688
    %4074 = vst.msk [vmem:[#allocation2 + $0x900] sm:$0xff] %vm3785, %v3689
    %4075 = vst.msk [vmem:[#allocation2 + $0x908] sm:$0xff] %vm3785, %v3690
    %4076 = vst.msk [vmem:[#allocation2 + $0x910] sm:$0xff] %vm3785, %v3691
    %4077 = vst.msk [vmem:[#allocation2 + $0x918] sm:$0xff] %vm3785, %v3692
    %4078 = vst.msk [vmem:[#allocation2 + $0x920] sm:$0xff] %vm3785, %v3693
    %4079 = vst.msk [vmem:[#allocation2 + $0x928] sm:$0xff] %vm3785, %v3694
    %4080 = vst.msk [vmem:[#allocation2 + $0x930] sm:$0xff] %vm3785, %v3695
    %4081 = vst.msk [vmem:[#allocation2 + $0x938] sm:$0xff] %vm3785, %v3696
    %4082 = vst.msk [vmem:[#allocation2 + $0x940] sm:$0xff] %vm3785, %v3697
    %4083 = vst.msk [vmem:[#allocation2 + $0x948] sm:$0xff] %vm3785, %v3698
    %4084 = vst.msk [vmem:[#allocation2 + $0x950] sm:$0xff] %vm3785, %v3699
    %4085 = vst.msk [vmem:[#allocation2 + $0x958] sm:$0xff] %vm3785, %v3700
    %4086 = vst.msk [vmem:[#allocation2 + $0x960] sm:$0xff] %vm3785, %v3701
    %4087 = vst.msk [vmem:[#allocation2 + $0x968] sm:$0xff] %vm3785, %v3702
    %4088 = vst.msk [vmem:[#allocation2 + $0x970] sm:$0xff] %vm3785, %v3703
    %4089 = vst.msk [vmem:[#allocation2 + $0x978] sm:$0xff] %vm3785, %v3704
    %4090 = vst.msk [vmem:[#allocation2 + $0x980] sm:$0xff] %vm3785, %v3705
    %4091 = vst.msk [vmem:[#allocation2 + $0x988] sm:$0xff] %vm3785, %v3706
    %4092 = vst.msk [vmem:[#allocation2 + $0x990] sm:$0xff] %vm3785, %v3707
    %4093 = vst.msk [vmem:[#allocation2 + $0x998] sm:$0xff] %vm3785, %v3708
    %4094 = vst.msk [vmem:[#allocation2 + $0x9a0] sm:$0xff] %vm3785, %v3709
    %4095 = vst.msk [vmem:[#allocation2 + $0x9a8] sm:$0xff] %vm3785, %v3710
    %4096 = vst.msk [vmem:[#allocation2 + $0x9b0] sm:$0xff] %vm3785, %v3711
    %4097 = vst.msk [vmem:[#allocation2 + $0x9b8] sm:$0xff] %vm3785, %v3712
    %4098 = vst.msk [vmem:[#allocation2 + $0x9c0] sm:$0xff] %vm3785, %v3713
    %4099 = vst.msk [vmem:[#allocation2 + $0x9c8] sm:$0xff] %vm3785, %v3714
    %4100 = vst.msk [vmem:[#allocation2 + $0x9d0] sm:$0xff] %vm3785, %v3715
    %4101 = vst.msk [vmem:[#allocation2 + $0x9d8] sm:$0xff] %vm3785, %v3716
    %4102 = vst.msk [vmem:[#allocation2 + $0x9e0] sm:$0xff] %vm3785, %v3717
    %4103 = vst.msk [vmem:[#allocation2 + $0x9e8] sm:$0xff] %vm3785, %v3718
    %4104 = vst.msk [vmem:[#allocation2 + $0x9f0] sm:$0xff] %vm3785, %v3719
    %4105 = vst.msk [vmem:[#allocation2 + $0x9f8] sm:$0xff] %vm3785, %v3720
    %4106 = vst.msk [vmem:[#allocation2 + $0xa00] sm:$0xff] %vm3785, %v3721
    %4107 = vst.msk [vmem:[#allocation2 + $0xa08] sm:$0xff] %vm3785, %v3722
    %4108 = vst.msk [vmem:[#allocation2 + $0xa10] sm:$0xff] %vm3785, %v3723
    %4109 = vst.msk [vmem:[#allocation2 + $0xa18] sm:$0xff] %vm3785, %v3724
    %4110 = vst.msk [vmem:[#allocation2 + $0xa20] sm:$0xff] %vm3785, %v3725
    %4111 = vst.msk [vmem:[#allocation2 + $0xa28] sm:$0xff] %vm3785, %v3726
    %4112 = vst.msk [vmem:[#allocation2 + $0xa30] sm:$0xff] %vm3785, %v3727
    %4113 = vst.msk [vmem:[#allocation2 + $0xa38] sm:$0xff] %vm3785, %v3728
    %4114 = vst.msk [vmem:[#allocation2 + $0xa40] sm:$0xff] %vm3785, %v3729
    %4115 = vst.msk [vmem:[#allocation2 + $0xa48] sm:$0xff] %vm3785, %v3730
    %4116 = vst.msk [vmem:[#allocation2 + $0xa50] sm:$0xff] %vm3785, %v3731
    %4117 = vst.msk [vmem:[#allocation2 + $0xa58] sm:$0xff] %vm3785, %v3732
    %4118 = vst.msk [vmem:[#allocation2 + $0xa60] sm:$0xff] %vm3785, %v3733
    %4119 = vst.msk [vmem:[#allocation2 + $0xa68] sm:$0xff] %vm3785, %v3734
    %4120 = vst.msk [vmem:[#allocation2 + $0xa70] sm:$0xff] %vm3785, %v3735
    %4121 = vst.msk [vmem:[#allocation2 + $0xa78] sm:$0xff] %vm3785, %v3736
    %4122 = vst.msk [vmem:[#allocation2 + $0xa80] sm:$0xff] %vm3785, %v3737
    %4123 = vst.msk [vmem:[#allocation2 + $0xa88] sm:$0xff] %vm3785, %v3738
    %4124 = vst.msk [vmem:[#allocation2 + $0xa90] sm:$0xff] %vm3785, %v3739
    %4125 = vst.msk [vmem:[#allocation2 + $0xa98] sm:$0xff] %vm3785, %v3740
    %4126 = vst.msk [vmem:[#allocation2 + $0xaa0] sm:$0xff] %vm3785, %v3741
    %4127 = vst.msk [vmem:[#allocation2 + $0xaa8] sm:$0xff] %vm3785, %v3742
    %4128 = vst.msk [vmem:[#allocation2 + $0xab0] sm:$0xff] %vm3785, %v3743
    %4129 = vst.msk [vmem:[#allocation2 + $0xab8] sm:$0xff] %vm3785, %v3744
    %4130 = vst.msk [vmem:[#allocation2 + $0xac0] sm:$0xff] %vm3785, %v3745
    %4131 = vst.msk [vmem:[#allocation2 + $0xac8] sm:$0xff] %vm3785, %v3746
    %4132 = vst.msk [vmem:[#allocation2 + $0xad0] sm:$0xff] %vm3785, %v3747
    %4133 = vst.msk [vmem:[#allocation2 + $0xad8] sm:$0xff] %vm3785, %v3748
    %4134 = vst.msk [vmem:[#allocation2 + $0xae0] sm:$0xff] %vm3785, %v3749
    %4135 = vst.msk [vmem:[#allocation2 + $0xae8] sm:$0xff] %vm3785, %v3750
    %4136 = vst.msk [vmem:[#allocation2 + $0xaf0] sm:$0xff] %vm3785, %v3751
    %4137 = vst.msk [vmem:[#allocation2 + $0xaf8] sm:$0xff] %vm3785, %v3752
    %4138 = vst.msk [vmem:[#allocation2 + $0xb00] sm:$0xff] %vm3785, %v3753
    %4139 = vst.msk [vmem:[#allocation2 + $0xb08] sm:$0xff] %vm3785, %v3754
    %4140 = vst.msk [vmem:[#allocation2 + $0xb10] sm:$0xff] %vm3785, %v3755
    %4141 = vst.msk [vmem:[#allocation2 + $0xb18] sm:$0xff] %vm3785, %v3756
    %4142 = vst.msk [vmem:[#allocation2 + $0xb20] sm:$0xff] %vm3785, %v3757
    %4143 = vst.msk [vmem:[#allocation2 + $0xb28] sm:$0xff] %vm3785, %v3758
    %4144 = vst.msk [vmem:[#allocation2 + $0xb30] sm:$0xff] %vm3785, %v3759
    %4145 = vst.msk [vmem:[#allocation2 + $0xb38] sm:$0xff] %vm3785, %v3760
    %4146 = vst.msk [vmem:[#allocation2 + $0xb40] sm:$0xff] %vm3785, %v3761
    %4147 = vst.msk [vmem:[#allocation2 + $0xb48] sm:$0xff] %vm3785, %v3762
    %4148 = vst.msk [vmem:[#allocation2 + $0xb50] sm:$0xff] %vm3785, %v3763
    %4149 = vst.msk [vmem:[#allocation2 + $0xb58] sm:$0xff] %vm3785, %v3764
    %4150 = vst.msk [vmem:[#allocation2 + $0xb60] sm:$0xff] %vm3785, %v3765
    %4151 = vst.msk [vmem:[#allocation2 + $0xb68] sm:$0xff] %vm3785, %v3766
    %4152 = vst.msk [vmem:[#allocation2 + $0xb70] sm:$0xff] %vm3785, %v3767
    %4153 = vst.msk [vmem:[#allocation2 + $0xb78] sm:$0xff] %vm3785, %v3768
    %4154 = vst.msk [vmem:[#allocation2 + $0xb80] sm:$0xff] %vm3785, %v3769
    %4155 = vst.msk [vmem:[#allocation2 + $0xb88] sm:$0xff] %vm3785, %v3770
    %4156 = vst.msk [vmem:[#allocation2 + $0xb90] sm:$0xff] %vm3785, %v3771
    %4157 = vst.msk [vmem:[#allocation2 + $0xb98] sm:$0xff] %vm3785, %v3772
    %4158 = vst.msk [vmem:[#allocation2 + $0xba0] sm:$0xff] %vm3785, %v3773
    %4159 = vst.msk [vmem:[#allocation2 + $0xba8] sm:$0xff] %vm3785, %v3774
    %4160 = vst.msk [vmem:[#allocation2 + $0xbb0] sm:$0xff] %vm3785, %v3775
    %4161 = vst.msk [vmem:[#allocation2 + $0xbb8] sm:$0xff] %vm3785, %v3776
    %4162 = vst.msk [vmem:[#allocation2 + $0xbc0] sm:$0xff] %vm3785, %v3777
    %4163 = vst.msk [vmem:[#allocation2 + $0xbc8] sm:$0xff] %vm3785, %v3778
    %4164 = vst.msk [vmem:[#allocation2 + $0xbd0] sm:$0xff] %vm3785, %v3779
    %4165 = vst.msk [vmem:[#allocation2 + $0xbd8] sm:$0xff] %vm3785, %v3780
    %4166 = vst.msk [vmem:[#allocation2 + $0xbe0] sm:$0xff] %vm3785, %v3781
    %4167 = vst.msk [vmem:[#allocation2 + $0xbe8] sm:$0xff] %vm3785, %v3782
    %4168 = vst.msk [vmem:[#allocation2 + $0xbf0] sm:$0xff] %vm3785, %v3783
    %4169 = vst.msk [vmem:[#allocation2 + $0xbf8] sm:$0xff] %vm3785, %v3784
    %v4170 = vld [vmem:[%s4] sm:$0xff]
    %v4171 = vld [vmem:[%s4 + $0x8] sm:$0xff]
    %v4172 = vld [vmem:[%s4 + $0x10] sm:$0xff]
    %v4173 = vld [vmem:[%s6] sm:$0xff]
    %v4174 = vld [vmem:[%s7] sm:$0xff]
    loop: start=0, step=1, limit=16
    $region90: #{discriminator_cell_forward.1} parent=1 // loop_pre_header
      _
    $region91: #{discriminator_cell_forward.1} parent=1 // loop_header
      %s4176 = sphi 0, %s4180
      %p4177 = scmp.ge.s32.totalorder %s4176, 16
      %v4181 = vphi %v4174, %v4625
    $region92: #{discriminator_cell_forward.1} parent=1 // loop_header_branch
      %4179 = sbr.rel (%p4177) target = $region96
    $region93: #{discriminator_cell_forward.1} parent=1 // loop_body
      %s4182 = smul.u32 %s4176, 8
      %s4183 = smul.u32 %s4182, 24
      %s4184 = scalar_lea.vmem [#allocation2], %s4183
      %v4185 = vld [vmem:[%s4184] sm:$0xff]
      %v4186 = vld [vmem:[%s4184 + $0x8] sm:$0xff]
      %v4187 = vld [vmem:[%s4184 + $0x10] sm:$0xff]
      %4189 = vset.pattern.permute.xlu0 0
      %4190 = vperm.xlu0 %4189, %v4170
      %v4191 = vpop.permute.xlu0 %4190
      %4194 = vset.pattern.permute.xlu0 0
      %4195 = vperm.xlu0 %4194, %v4171
      %v4196 = vpop.permute.xlu0 %4195
      %4199 = vset.pattern.permute.xlu0 0
      %4200 = vperm.xlu0 %4199, %v4172
      %v4201 = vpop.permute.xlu0 %4200
      %v4203 = vlaneseq
      %v4204 = vshrl.u32 %v4203, 7
      %v4205 = vsub.s32 0, %v4204
      %v4206 = vrot.slane %v4181, %v4205
      %v4207 = vmul.f32 %v4191, %v4206
      %v4208 = vmul.f32 %v4196, %v4206
      %v4209 = vmul.f32 %v4201, %v4206
      %4210 = vset.pattern.permute.xlu0 1
      %4211 = vperm.xlu0 %4210, %v4170
      %v4212 = vpop.permute.xlu0 %4211
      %4214 = vset.pattern.permute.xlu0 1
      %4215 = vperm.xlu0 %4214, %v4171
      %v4216 = vpop.permute.xlu0 %4215
      %4218 = vset.pattern.permute.xlu0 1
      %4219 = vperm.xlu0 %4218, %v4172
      %v4220 = vpop.permute.xlu0 %4219
      %v4222 = vlaneseq
      %v4223 = vshrl.u32 %v4222, 7
      %v4224 = vsub.s32 1, %v4223
      %v4225 = vrot.slane %v4181, %v4224
      %v4226 = vmul.f32 %v4212, %v4225
      %v4227 = vmul.f32 %v4216, %v4225
      %v4228 = vmul.f32 %v4220, %v4225
      %v4229 = vadd.f32 %v4207, %v4226
      %v4230 = vadd.f32 %v4208, %v4227
      %v4231 = vadd.f32 %v4209, %v4228
      %4232 = vset.pattern.permute.xlu0 2
      %4233 = vperm.xlu0 %4232, %v4170
      %v4234 = vpop.permute.xlu0 %4233
      %4236 = vset.pattern.permute.xlu0 2
      %4237 = vperm.xlu0 %4236, %v4171
      %v4238 = vpop.permute.xlu0 %4237
      %4240 = vset.pattern.permute.xlu0 2
      %4241 = vperm.xlu0 %4240, %v4172
      %v4242 = vpop.permute.xlu0 %4241
      %v4244 = vlaneseq
      %v4245 = vshrl.u32 %v4244, 7
      %v4246 = vsub.s32 2, %v4245
      %v4247 = vrot.slane %v4181, %v4246
      %v4248 = vmul.f32 %v4234, %v4247
      %v4249 = vmul.f32 %v4238, %v4247
      %v4250 = vmul.f32 %v4242, %v4247
      %v4251 = vadd.f32 %v4229, %v4248
      %v4252 = vadd.f32 %v4230, %v4249
      %v4253 = vadd.f32 %v4231, %v4250
      %v4254 = vadd.f32 %v4185, %v4251
      %v4255 = vadd.f32 %v4186, %v4252
      %v4256 = vmul.f32 %v4254, 0.5
      %v4257 = vmul.f32 %v4255, 0.5
      %v4258 = vtanh.pop %v4256
      %v4259 = vtanh.pop %v4257
      %v4260 = vmul.f32 %v4258, 0.5
      %v4261 = vmul.f32 %v4259, 0.5
      %v4262 = vadd.f32 %v4260, 0.5
      %v4263 = vadd.f32 %v4261, 0.5
      %4265 = vset.pattern.permute.xlu0 0
      %4266 = vperm.xlu0 %4265, %v4173
      %v4267 = vpop.permute.xlu0 %4266
      %v4269 = vadd.f32 %v4253, %v4267
      %v4270 = vmul.f32 %v4262, %v4269
      %v4271 = vadd.f32 %v4187, %v4270
      %v4272 = vtanh.pop %v4271
      %v4273 = vsub.f32 %v4181, %v4272
      %v4274 = vmul.f32 %v4263, %v4273
      %v4275 = vadd.f32 %v4272, %v4274
      %s4276 = sadd.s32 %s4182, 1
      %s4277 = smul.u32 %s4276, 24
      %s4278 = scalar_lea.vmem [#allocation2], %s4277
      %v4279 = vld [vmem:[%s4278] sm:$0xff]
      %v4280 = vld [vmem:[%s4278 + $0x8] sm:$0xff]
      %v4281 = vld [vmem:[%s4278 + $0x10] sm:$0xff]
      %v4282 = vlaneseq
      %v4283 = vshrl.u32 %v4282, 7
      %v4284 = vsub.s32 0, %v4283
      %v4285 = vrot.slane %v4275, %v4284
      %v4286 = vmul.f32 %v4191, %v4285
      %v4287 = vmul.f32 %v4196, %v4285
      %v4288 = vmul.f32 %v4201, %v4285
      %v4289 = vlaneseq
      %v4290 = vshrl.u32 %v4289, 7
      %v4291 = vsub.s32 1, %v4290
      %v4292 = vrot.slane %v4275, %v4291
      %v4293 = vmul.f32 %v4212, %v4292
      %v4294 = vmul.f32 %v4216, %v4292
      %v4295 = vmul.f32 %v4220, %v4292
      %v4296 = vadd.f32 %v4286, %v4293
      %v4297 = vadd.f32 %v4287, %v4294
      %v4298 = vadd.f32 %v4288, %v4295
      %v4299 = vlaneseq
      %v4300 = vshrl.u32 %v4299, 7
      %v4301 = vsub.s32 2, %v4300
      %v4302 = vrot.slane %v4275, %v4301
      %v4303 = vmul.f32 %v4234, %v4302
      %v4304 = vmul.f32 %v4238, %v4302
      %v4305 = vmul.f32 %v4242, %v4302
      %v4306 = vadd.f32 %v4296, %v4303
      %v4307 = vadd.f32 %v4297, %v4304
      %v4308 = vadd.f32 %v4298, %v4305
      %v4309 = vadd.f32 %v4279, %v4306
      %v4310 = vadd.f32 %v4280, %v4307
      %v4311 = vmul.f32 %v4309, 0.5
      %v4312 = vmul.f32 %v4310, 0.5
      %v4313 = vtanh.pop %v4311
      %v4314 = vtanh.pop %v4312
      %v4315 = vmul.f32 %v4313, 0.5
      %v4316 = vmul.f32 %v4314, 0.5
      %v4317 = vadd.f32 %v4315, 0.5
      %v4318 = vadd.f32 %v4316, 0.5
      %v4319 = vadd.f32 %v4308, %v4267
      %v4320 = vmul.f32 %v4317, %v4319
      %v4321 = vadd.f32 %v4281, %v4320
      %v4322 = vtanh.pop %v4321
      %v4323 = vsub.f32 %v4275, %v4322
      %v4324 = vmul.f32 %v4318, %v4323
      %v4325 = vadd.f32 %v4322, %v4324
      %s4326 = sadd.s32 %s4182, 2
      %s4327 = smul.u32 %s4326, 24
      %s4328 = scalar_lea.vmem [#allocation2], %s4327
      %v4329 = vld [vmem:[%s4328] sm:$0xff]
      %v4330 = vld [vmem:[%s4328 + $0x8] sm:$0xff]
      %v4331 = vld [vmem:[%s4328 + $0x10] sm:$0xff]
      %v4332 = vlaneseq
      %v4333 = vshrl.u32 %v4332, 7
      %v4334 = vsub.s32 0, %v4333
      %v4335 = vrot.slane %v4325, %v4334
      %v4336 = vmul.f32 %v4191, %v4335
      %v4337 = vmul.f32 %v4196, %v4335
      %v4338 = vmul.f32 %v4201, %v4335
      %v4339 = vlaneseq
      %v4340 = vshrl.u32 %v4339, 7
      %v4341 = vsub.s32 1, %v4340
      %v4342 = vrot.slane %v4325, %v4341
      %v4343 = vmul.f32 %v4212, %v4342
      %v4344 = vmul.f32 %v4216, %v4342
      %v4345 = vmul.f32 %v4220, %v4342
      %v4346 = vadd.f32 %v4336, %v4343
      %v4347 = vadd.f32 %v4337, %v4344
      %v4348 = vadd.f32 %v4338, %v4345
      %v4349 = vlaneseq
      %v4350 = vshrl.u32 %v4349, 7
      %v4351 = vsub.s32 2, %v4350
      %v4352 = vrot.slane %v4325, %v4351
      %v4353 = vmul.f32 %v4234, %v4352
      %v4354 = vmul.f32 %v4238, %v4352
      %v4355 = vmul.f32 %v4242, %v4352
      %v4356 = vadd.f32 %v4346, %v4353
      %v4357 = vadd.f32 %v4347, %v4354
      %v4358 = vadd.f32 %v4348, %v4355
      %v4359 = vadd.f32 %v4329, %v4356
      %v4360 = vadd.f32 %v4330, %v4357
      %v4361 = vmul.f32 %v4359, 0.5
      %v4362 = vmul.f32 %v4360, 0.5
      %v4363 = vtanh.pop %v4361
      %v4364 = vtanh.pop %v4362
      %v4365 = vmul.f32 %v4363, 0.5
      %v4366 = vmul.f32 %v4364, 0.5
      %v4367 = vadd.f32 %v4365, 0.5
      %v4368 = vadd.f32 %v4366, 0.5
      %v4369 = vadd.f32 %v4358, %v4267
      %v4370 = vmul.f32 %v4367, %v4369
      %v4371 = vadd.f32 %v4331, %v4370
      %v4372 = vtanh.pop %v4371
      %v4373 = vsub.f32 %v4325, %v4372
      %v4374 = vmul.f32 %v4368, %v4373
      %v4375 = vadd.f32 %v4372, %v4374
      %s4376 = sadd.s32 %s4182, 3
      %s4377 = smul.u32 %s4376, 24
      %s4378 = scalar_lea.vmem [#allocation2], %s4377
      %v4379 = vld [vmem:[%s4378] sm:$0xff]
      %v4380 = vld [vmem:[%s4378 + $0x8] sm:$0xff]
      %v4381 = vld [vmem:[%s4378 + $0x10] sm:$0xff]
      %v4382 = vlaneseq
      %v4383 = vshrl.u32 %v4382, 7
      %v4384 = vsub.s32 0, %v4383
      %v4385 = vrot.slane %v4375, %v4384
      %v4386 = vmul.f32 %v4191, %v4385
      %v4387 = vmul.f32 %v4196, %v4385
      %v4388 = vmul.f32 %v4201, %v4385
      %v4389 = vlaneseq
      %v4390 = vshrl.u32 %v4389, 7
      %v4391 = vsub.s32 1, %v4390
      %v4392 = vrot.slane %v4375, %v4391
      %v4393 = vmul.f32 %v4212, %v4392
      %v4394 = vmul.f32 %v4216, %v4392
      %v4395 = vmul.f32 %v4220, %v4392
      %v4396 = vadd.f32 %v4386, %v4393
      %v4397 = vadd.f32 %v4387, %v4394
      %v4398 = vadd.f32 %v4388, %v4395
      %v4399 = vlaneseq
      %v4400 = vshrl.u32 %v4399, 7
      %v4401 = vsub.s32 2, %v4400
      %v4402 = vrot.slane %v4375, %v4401
      %v4403 = vmul.f32 %v4234, %v4402
      %v4404 = vmul.f32 %v4238, %v4402
      %v4405 = vmul.f32 %v4242, %v4402
      %v4406 = vadd.f32 %v4396, %v4403
      %v4407 = vadd.f32 %v4397, %v4404
      %v4408 = vadd.f32 %v4398, %v4405
      %v4409 = vadd.f32 %v4379, %v4406
      %v4410 = vadd.f32 %v4380, %v4407
      %v4411 = vmul.f32 %v4409, 0.5
      %v4412 = vmul.f32 %v4410, 0.5
      %v4413 = vtanh.pop %v4411
      %v4414 = vtanh.pop %v4412
      %v4415 = vmul.f32 %v4413, 0.5
      %v4416 = vmul.f32 %v4414, 0.5
      %v4417 = vadd.f32 %v4415, 0.5
      %v4418 = vadd.f32 %v4416, 0.5
      %v4419 = vadd.f32 %v4408, %v4267
      %v4420 = vmul.f32 %v4417, %v4419
      %v4421 = vadd.f32 %v4381, %v4420
      %v4422 = vtanh.pop %v4421
      %v4423 = vsub.f32 %v4375, %v4422
      %v4424 = vmul.f32 %v4418, %v4423
      %v4425 = vadd.f32 %v4422, %v4424
      %s4426 = sadd.s32 %s4182, 4
      %s4427 = smul.u32 %s4426, 24
      %s4428 = scalar_lea.vmem [#allocation2], %s4427
      %v4429 = vld [vmem:[%s4428] sm:$0xff]
      %v4430 = vld [vmem:[%s4428 + $0x8] sm:$0xff]
      %v4431 = vld [vmem:[%s4428 + $0x10] sm:$0xff]
      %v4432 = vlaneseq
      %v4433 = vshrl.u32 %v4432, 7
      %v4434 = vsub.s32 0, %v4433
      %v4435 = vrot.slane %v4425, %v4434
      %v4436 = vmul.f32 %v4191, %v4435
      %v4437 = vmul.f32 %v4196, %v4435
      %v4438 = vmul.f32 %v4201, %v4435
      %v4439 = vlaneseq
      %v4440 = vshrl.u32 %v4439, 7
      %v4441 = vsub.s32 1, %v4440
      %v4442 = vrot.slane %v4425, %v4441
      %v4443 = vmul.f32 %v4212, %v4442
      %v4444 = vmul.f32 %v4216, %v4442
      %v4445 = vmul.f32 %v4220, %v4442
      %v4446 = vadd.f32 %v4436, %v4443
      %v4447 = vadd.f32 %v4437, %v4444
      %v4448 = vadd.f32 %v4438, %v4445
      %v4449 = vlaneseq
      %v4450 = vshrl.u32 %v4449, 7
      %v4451 = vsub.s32 2, %v4450
      %v4452 = vrot.slane %v4425, %v4451
      %v4453 = vmul.f32 %v4234, %v4452
      %v4454 = vmul.f32 %v4238, %v4452
      %v4455 = vmul.f32 %v4242, %v4452
      %v4456 = vadd.f32 %v4446, %v4453
      %v4457 = vadd.f32 %v4447, %v4454
      %v4458 = vadd.f32 %v4448, %v4455
      %v4459 = vadd.f32 %v4429, %v4456
      %v4460 = vadd.f32 %v4430, %v4457
      %v4461 = vmul.f32 %v4459, 0.5
      %v4462 = vmul.f32 %v4460, 0.5
      %v4463 = vtanh.pop %v4461
      %v4464 = vtanh.pop %v4462
      %v4465 = vmul.f32 %v4463, 0.5
      %v4466 = vmul.f32 %v4464, 0.5
      %v4467 = vadd.f32 %v4465, 0.5
      %v4468 = vadd.f32 %v4466, 0.5
      %v4469 = vadd.f32 %v4458, %v4267
      %v4470 = vmul.f32 %v4467, %v4469
      %v4471 = vadd.f32 %v4431, %v4470
      %v4472 = vtanh.pop %v4471
      %v4473 = vsub.f32 %v4425, %v4472
      %v4474 = vmul.f32 %v4468, %v4473
      %v4475 = vadd.f32 %v4472, %v4474
      %s4476 = sadd.s32 %s4182, 5
      %s4477 = smul.u32 %s4476, 24
      %s4478 = scalar_lea.vmem [#allocation2], %s4477
      %v4479 = vld [vmem:[%s4478] sm:$0xff]
      %v4480 = vld [vmem:[%s4478 + $0x8] sm:$0xff]
      %v4481 = vld [vmem:[%s4478 + $0x10] sm:$0xff]
      %v4482 = vlaneseq
      %v4483 = vshrl.u32 %v4482, 7
      %v4484 = vsub.s32 0, %v4483
      %v4485 = vrot.slane %v4475, %v4484
      %v4486 = vmul.f32 %v4191, %v4485
      %v4487 = vmul.f32 %v4196, %v4485
      %v4488 = vmul.f32 %v4201, %v4485
      %v4489 = vlaneseq
      %v4490 = vshrl.u32 %v4489, 7
      %v4491 = vsub.s32 1, %v4490
      %v4492 = vrot.slane %v4475, %v4491
      %v4493 = vmul.f32 %v4212, %v4492
      %v4494 = vmul.f32 %v4216, %v4492
      %v4495 = vmul.f32 %v4220, %v4492
      %v4496 = vadd.f32 %v4486, %v4493
      %v4497 = vadd.f32 %v4487, %v4494
      %v4498 = vadd.f32 %v4488, %v4495
      %v4499 = vlaneseq
      %v4500 = vshrl.u32 %v4499, 7
      %v4501 = vsub.s32 2, %v4500
      %v4502 = vrot.slane %v4475, %v4501
      %v4503 = vmul.f32 %v4234, %v4502
      %v4504 = vmul.f32 %v4238, %v4502
      %v4505 = vmul.f32 %v4242, %v4502
      %v4506 = vadd.f32 %v4496, %v4503
      %v4507 = vadd.f32 %v4497, %v4504
      %v4508 = vadd.f32 %v4498, %v4505
      %v4509 = vadd.f32 %v4479, %v4506
      %v4510 = vadd.f32 %v4480, %v4507
      %v4511 = vmul.f32 %v4509, 0.5
      %v4512 = vmul.f32 %v4510, 0.5
      %v4513 = vtanh.pop %v4511
      %v4514 = vtanh.pop %v4512
      %v4515 = vmul.f32 %v4513, 0.5
      %v4516 = vmul.f32 %v4514, 0.5
      %v4517 = vadd.f32 %v4515, 0.5
      %v4518 = vadd.f32 %v4516, 0.5
      %v4519 = vadd.f32 %v4508, %v4267
      %v4520 = vmul.f32 %v4517, %v4519
      %v4521 = vadd.f32 %v4481, %v4520
      %v4522 = vtanh.pop %v4521
      %v4523 = vsub.f32 %v4475, %v4522
      %v4524 = vmul.f32 %v4518, %v4523
      %v4525 = vadd.f32 %v4522, %v4524
      %s4526 = sadd.s32 %s4182, 6
      %s4527 = smul.u32 %s4526, 24
      %s4528 = scalar_lea.vmem [#allocation2], %s4527
      %v4529 = vld [vmem:[%s4528] sm:$0xff]
      %v4530 = vld [vmem:[%s4528 + $0x8] sm:$0xff]
      %v4531 = vld [vmem:[%s4528 + $0x10] sm:$0xff]
      %v4532 = vlaneseq
      %v4533 = vshrl.u32 %v4532, 7
      %v4534 = vsub.s32 0, %v4533
      %v4535 = vrot.slane %v4525, %v4534
      %v4536 = vmul.f32 %v4191, %v4535
      %v4537 = vmul.f32 %v4196, %v4535
      %v4538 = vmul.f32 %v4201, %v4535
      %v4539 = vlaneseq
      %v4540 = vshrl.u32 %v4539, 7
      %v4541 = vsub.s32 1, %v4540
      %v4542 = vrot.slane %v4525, %v4541
      %v4543 = vmul.f32 %v4212, %v4542
      %v4544 = vmul.f32 %v4216, %v4542
      %v4545 = vmul.f32 %v4220, %v4542
      %v4546 = vadd.f32 %v4536, %v4543
      %v4547 = vadd.f32 %v4537, %v4544
      %v4548 = vadd.f32 %v4538, %v4545
      %v4549 = vlaneseq
      %v4550 = vshrl.u32 %v4549, 7
      %v4551 = vsub.s32 2, %v4550
      %v4552 = vrot.slane %v4525, %v4551
      %v4553 = vmul.f32 %v4234, %v4552
      %v4554 = vmul.f32 %v4238, %v4552
      %v4555 = vmul.f32 %v4242, %v4552
      %v4556 = vadd.f32 %v4546, %v4553
      %v4557 = vadd.f32 %v4547, %v4554
      %v4558 = vadd.f32 %v4548, %v4555
      %v4559 = vadd.f32 %v4529, %v4556
      %v4560 = vadd.f32 %v4530, %v4557
      %v4561 = vmul.f32 %v4559, 0.5
      %v4562 = vmul.f32 %v4560, 0.5
      %v4563 = vtanh.pop %v4561
      %v4564 = vtanh.pop %v4562
      %v4565 = vmul.f32 %v4563, 0.5
      %v4566 = vmul.f32 %v4564, 0.5
      %v4567 = vadd.f32 %v4565, 0.5
      %v4568 = vadd.f32 %v4566, 0.5
      %v4569 = vadd.f32 %v4558, %v4267
      %v4570 = vmul.f32 %v4567, %v4569
      %v4571 = vadd.f32 %v4531, %v4570
      %v4572 = vtanh.pop %v4571
      %v4573 = vsub.f32 %v4525, %v4572
      %v4574 = vmul.f32 %v4568, %v4573
      %v4575 = vadd.f32 %v4572, %v4574
      %s4576 = sadd.s32 %s4182, 7
      %s4577 = smul.u32 %s4576, 24
      %s4578 = scalar_lea.vmem [#allocation2], %s4577
      %v4579 = vld [vmem:[%s4578] sm:$0xff]
      %v4580 = vld [vmem:[%s4578 + $0x8] sm:$0xff]
      %v4581 = vld [vmem:[%s4578 + $0x10] sm:$0xff]
      %v4582 = vlaneseq
      %v4583 = vshrl.u32 %v4582, 7
      %v4584 = vsub.s32 0, %v4583
      %v4585 = vrot.slane %v4575, %v4584
      %v4586 = vmul.f32 %v4191, %v4585
      %v4587 = vmul.f32 %v4196, %v4585
      %v4588 = vmul.f32 %v4201, %v4585
      %v4589 = vlaneseq
      %v4590 = vshrl.u32 %v4589, 7
      %v4591 = vsub.s32 1, %v4590
      %v4592 = vrot.slane %v4575, %v4591
      %v4593 = vmul.f32 %v4212, %v4592
      %v4594 = vmul.f32 %v4216, %v4592
      %v4595 = vmul.f32 %v4220, %v4592
      %v4596 = vadd.f32 %v4586, %v4593
      %v4597 = vadd.f32 %v4587, %v4594
      %v4598 = vadd.f32 %v4588, %v4595
      %v4599 = vlaneseq
      %v4600 = vshrl.u32 %v4599, 7
      %v4601 = vsub.s32 2, %v4600
      %v4602 = vrot.slane %v4575, %v4601
      %v4603 = vmul.f32 %v4234, %v4602
      %v4604 = vmul.f32 %v4238, %v4602
      %v4605 = vmul.f32 %v4242, %v4602
      %v4606 = vadd.f32 %v4596, %v4603
      %v4607 = vadd.f32 %v4597, %v4604
      %v4608 = vadd.f32 %v4598, %v4605
      %v4609 = vadd.f32 %v4579, %v4606
      %v4610 = vadd.f32 %v4580, %v4607
      %v4611 = vmul.f32 %v4609, 0.5
      %v4612 = vmul.f32 %v4610, 0.5
      %v4613 = vtanh.pop %v4611
      %v4614 = vtanh.pop %v4612
      %v4615 = vmul.f32 %v4613, 0.5
      %v4616 = vmul.f32 %v4614, 0.5
      %v4617 = vadd.f32 %v4615, 0.5
      %v4618 = vadd.f32 %v4616, 0.5
      %v4619 = vadd.f32 %v4608, %v4267
      %v4620 = vmul.f32 %v4617, %v4619
      %v4621 = vadd.f32 %v4581, %v4620
      %v4622 = vtanh.pop %v4621
      %v4623 = vsub.f32 %v4575, %v4622
      %v4624 = vmul.f32 %v4618, %v4623
      %v4625 = vadd.f32 %v4622, %v4624
    $region94: #{discriminator_cell_forward.1} parent=1 // loop_footer
      %s4180 = sadd.s32 1, %s4176
    $region95: #{discriminator_cell_forward.1} parent=1 // loop_footer_branch
      %4175 = sbr.rel target = $region91
    $region96: #{discriminator_cell_forward.1} parent=1 // loop_exit
      _
    %v4626 = vld [vmem:[%s8] sm:$0xff]
    %v4627 = vld [vmem:[%s8 + $0x8] sm:$0xff]
    %v4628 = vld [vmem:[%s8 + $0x10] sm:$0xff]
    %v4629 = vld [vmem:[%s8 + $0x18] sm:$0xff]
    %v4630 = vld [vmem:[%s8 + $0x20] sm:$0xff]
    %v4631 = vld [vmem:[%s8 + $0x28] sm:$0xff]
    %v4632 = vld [vmem:[%s8 + $0x30] sm:$0xff]
    %v4633 = vld [vmem:[%s8 + $0x38] sm:$0xff]
    %v4634 = vld [vmem:[%s8 + $0x40] sm:$0xff]
    %v4635 = vld [vmem:[%s8 + $0x48] sm:$0xff]
    %v4636 = vld [vmem:[%s8 + $0x50] sm:$0xff]
    %v4637 = vld [vmem:[%s8 + $0x58] sm:$0xff]
    %v4638 = vld [vmem:[%s9] sm:$0xff]
    %v4639 = vld [vmem:[%s9 + $0x8] sm:$0xff]
    %v4640 = vld [vmem:[%s9 + $0x10] sm:$0xff]
    %v4641 = vld [vmem:[%s9 + $0x18] sm:$0xff]
    %v4642 = vld [vmem:[%s9 + $0x20] sm:$0xff]
    %v4643 = vld [vmem:[%s9 + $0x28] sm:$0xff]
    %v4644 = vld [vmem:[%s9 + $0x30] sm:$0xff]
    %v4645 = vld [vmem:[%s9 + $0x38] sm:$0xff]
    %v4646 = vld [vmem:[%s9 + $0x40] sm:$0xff]
    %v4647 = vld [vmem:[%s9 + $0x48] sm:$0xff]
    %v4648 = vld [vmem:[%s9 + $0x50] sm:$0xff]
    %v4649 = vld [vmem:[%s9 + $0x58] sm:$0xff]
    %4651 = vset.pattern.permute.xlu0 0
    %4652 = vperm.xlu0 %4651, %v4638
    %v4653 = vpop.permute.xlu0 %4652
    %4656 = vset.pattern.permute.xlu0 0
    %4657 = vperm.xlu0 %4656, %v4639
    %v4658 = vpop.permute.xlu0 %4657
    %4661 = vset.pattern.permute.xlu0 0
    %4662 = vperm.xlu0 %4661, %v4640
    %v4663 = vpop.permute.xlu0 %4662
    %4666 = vset.pattern.permute.xlu0 0
    %4667 = vperm.xlu0 %4666, %v4641
    %v4668 = vpop.permute.xlu0 %4667
    %4671 = vset.pattern.permute.xlu0 0
    %4672 = vperm.xlu0 %4671, %v4642
    %v4673 = vpop.permute.xlu0 %4672
    %4676 = vset.pattern.permute.xlu0 0
    %4677 = vperm.xlu0 %4676, %v4643
    %v4678 = vpop.permute.xlu0 %4677
    %4681 = vset.pattern.permute.xlu0 0
    %4682 = vperm.xlu0 %4681, %v4644
    %v4683 = vpop.permute.xlu0 %4682
    %4686 = vset.pattern.permute.xlu0 0
    %4687 = vperm.xlu0 %4686, %v4645
    %v4688 = vpop.permute.xlu0 %4687
    %4691 = vset.pattern.permute.xlu0 0
    %4692 = vperm.xlu0 %4691, %v4646
    %v4693 = vpop.permute.xlu0 %4692
    %4696 = vset.pattern.permute.xlu0 0
    %4697 = vperm.xlu0 %4696, %v4647
    %v4698 = vpop.permute.xlu0 %4697
    %4701 = vset.pattern.permute.xlu0 0
    %4702 = vperm.xlu0 %4701, %v4648
    %v4703 = vpop.permute.xlu0 %4702
    %4706 = vset.pattern.permute.xlu0 0
    %4707 = vperm.xlu0 %4706, %v4649
    %v4708 = vpop.permute.xlu0 %4707
    %vm4710 = vcmask 64512
    %v4712 = vsel %vm4710, %v4626, 0
    %v4715 = vsel %vm4710, %v4627, 0
    %v4718 = vsel %vm4710, %v4628, 0
    %v4721 = vsel %vm4710, %v4629, 0
    %v4724 = vsel %vm4710, %v4630, 0
    %v4727 = vsel %vm4710, %v4631, 0
    %v4730 = vsel %vm4710, %v4632, 0
    %v4733 = vsel %vm4710, %v4633, 0
    %v4736 = vsel %vm4710, %v4634, 0
    %v4739 = vsel %vm4710, %v4635, 0
    %v4742 = vsel %vm4710, %v4636, 0
    %v4745 = vsel %vm4710, %v4637, 0
    %4747 = vmatprep.subr.mxu0 0.0
    %4748 = vmatpush1.msra.mxu0 %v4181
    %4749 = vmatprep.subr.mxu0 0.0
    %4750 = vmatpush1.msra.mxu0 0.0
    %4751 = vmatprep.subr.mxu0 0.0
    %4752 = vmatpush1.msra.mxu0 0.0
    %4753 = vmatprep.subr.mxu0 0.0
    %4754 = vmatpush1.msra.mxu0 0.0
    %4755 = vmatprep.subr.mxu0 0.0
    %4756 = vmatpush1.msra.mxu0 0.0
    %4757 = vmatprep.subr.mxu0 0.0
    %4758 = vmatpush1.msra.mxu0 0.0
    %4759 = vmatprep.subr.mxu0 0.0
    %4760 = vmatpush1.msra.mxu0 0.0
    %4761 = vmatprep.subr.mxu0 0.0
    %4762 = vmatpush1.msra.mxu0 0.0
    %4763 = vmatprep.subr.mxu0 0.0
    %4764 = vmatpush1.msra.mxu0 0.0
    %4765 = vmatprep.subr.mxu0 0.0
    %4766 = vmatpush1.msra.mxu0 0.0
    %4767 = vmatprep.subr.mxu0 0.0
    %4768 = vmatpush1.msra.mxu0 0.0
    %4769 = vmatprep.subr.mxu0 0.0
    %4770 = vmatpush1.msra.mxu0 0.0
    %4771 = vmatprep.subr.mxu0 0.0
    %4772 = vmatpush1.msra.mxu0 0.0
    %4773 = vmatprep.subr.mxu0 0.0
    %4774 = vmatpush1.msra.mxu0 0.0
    %4775 = vmatprep.subr.mxu0 0.0
    %4776 = vmatpush1.msra.mxu0 0.0
    %4777 = vmatprep.subr.mxu0 0.0
    %4778 = vmatpush1.msra.mxu0 0.0
    %4779 = vmatprep.subr.mxu0 0.0
    %4780 = vmatpush1.msra.mxu0 0.0
    %4781 = vmatprep.subr.mxu0 0.0
    %4782 = vmatpush1.msra.mxu0 0.0
    %4783 = vmatprep.subr.mxu0 0.0
    %4784 = vmatpush1.msra.mxu0 0.0
    %4785 = vmatprep.subr.mxu0 0.0
    %4786 = vmatpush1.msra.mxu0 0.0
    %4787 = vmatprep.subr.mxu0 0.0
    %4788 = vmatpush1.msra.mxu0 0.0
    %4789 = vmatprep.subr.mxu0 0.0
    %4790 = vmatpush1.msra.mxu0 0.0
    %4791 = vmatprep.subr.mxu0 0.0
    %4792 = vmatpush1.msra.mxu0 0.0
    %4793 = vmatprep.subr.mxu0 0.0
    %4794 = vmatpush1.msra.mxu0 0.0
    %4795 = vmatprep.subr.mxu0 0.0
    %4796 = vmatpush1.msra.mxu0 0.0
    %4797 = vmatprep.subr.mxu0 0.0
    %4798 = vmatpush1.msra.mxu0 0.0
    %4799 = vmatprep.subr.mxu0 0.0
    %4800 = vmatpush1.msra.mxu0 0.0
    %4801 = vmatprep.subr.mxu0 0.0
    %4802 = vmatpush1.msra.mxu0 0.0
    %4803 = vmatprep.subr.mxu0 0.0
    %4804 = vmatpush1.msra.mxu0 0.0
    %4805 = vmatprep.subr.mxu0 0.0
    %4806 = vmatpush1.msra.mxu0 0.0
    %4807 = vmatprep.subr.mxu0 0.0
    %4808 = vmatpush1.msra.mxu0 0.0
    %4809 = vmatprep.subr.mxu0 0.0
    %4810 = vmatpush1.msra.mxu0 0.0
    %4811 = vmatprep.mubr.f32.mxu0 0.0
    %4812 = vmatmul.mubr.f32.gmra.mrb[0].mxu0 %v4712
    %v4813 = vpop.f32.mrb[0].mxu0
    %v4814 = vadd.f32 %v4653, %v4813
    %v4815 = vpop.f32.mrb[0].mxu0
    %4816 = vmatprep.mubr.f32.mxu0 0.0
    %4817 = vmatmul.mubr.f32.gmra.mrb[0].mxu0 %v4715
    %v4818 = vpop.f32.mrb[0].mxu0
    %v4819 = vadd.f32 %v4658, %v4818
    %v4820 = vpop.f32.mrb[0].mxu0
    %4821 = vmatprep.mubr.f32.mxu0 0.0
    %4822 = vmatmul.mubr.f32.gmra.mrb[0].mxu0 %v4718
    %v4823 = vpop.f32.mrb[0].mxu0
    %v4824 = vadd.f32 %v4663, %v4823
    %v4825 = vpop.f32.mrb[0].mxu0
    %4826 = vmatprep.mubr.f32.mxu0 0.0
    %4827 = vmatmul.mubr.f32.gmra.mrb[0].mxu0 %v4721
    %v4828 = vpop.f32.mrb[0].mxu0
    %v4829 = vadd.f32 %v4668, %v4828
    %v4830 = vpop.f32.mrb[0].mxu0
    %4831 = vmatprep.mubr.f32.mxu0 0.0
    %4832 = vmatmul.mubr.f32.gmra.mrb[0].mxu0 %v4724
    %v4833 = vpop.f32.mrb[0].mxu0
    %v4834 = vadd.f32 %v4673, %v4833
    %v4835 = vpop.f32.mrb[0].mxu0
    %4836 = vmatprep.mubr.f32.mxu0 0.0
    %4837 = vmatmul.mubr.f32.gmra.mrb[0].mxu0 %v4727
    %v4838 = vpop.f32.mrb[0].mxu0
    %v4839 = vadd.f32 %v4678, %v4838
    %v4840 = vpop.f32.mrb[0].mxu0
    %4841 = vmatprep.mubr.f32.mxu0 0.0
    %4842 = vmatmul.mubr.f32.gmra.mrb[0].mxu0 %v4730
    %v4843 = vpop.f32.mrb[0].mxu0
    %v4844 = vadd.f32 %v4683, %v4843
    %v4845 = vpop.f32.mrb[0].mxu0
    %4846 = vmatprep.mubr.f32.mxu0 0.0
    %4847 = vmatmul.mubr.f32.gmra.mrb[0].mxu0 %v4733
    %v4848 = vpop.f32.mrb[0].mxu0
    %v4849 = vadd.f32 %v4688, %v4848
    %v4850 = vpop.f32.mrb[0].mxu0
    %4851 = vmatprep.mubr.f32.mxu0 0.0
    %4852 = vmatmul.mubr.f32.gmra.mrb[0].mxu0 %v4736
    %v4853 = vpop.f32.mrb[0].mxu0
    %v4854 = vadd.f32 %v4693, %v4853
    %v4855 = vpop.f32.mrb[0].mxu0
    %4856 = vmatprep.mubr.f32.mxu0 0.0
    %4857 = vmatmul.mubr.f32.gmra.mrb[0].mxu0 %v4739
    %v4858 = vpop.f32.mrb[0].mxu0
    %v4859 = vadd.f32 %v4698, %v4858
    %v4860 = vpop.f32.mrb[0].mxu0
    %4861 = vmatprep.mubr.f32.mxu0 0.0
    %4862 = vmatmul.mubr.f32.gmra.mrb[0].mxu0 %v4742
    %v4863 = vpop.f32.mrb[0].mxu0
    %v4864 = vadd.f32 %v4703, %v4863
    %v4865 = vpop.f32.mrb[0].mxu0
    %4866 = vmatprep.mubr.f32.mxu0 0.0
    %4867 = vmatmul.mubr.f32.gmra.mrb[0].mxu0 %v4745
    %v4868 = vpop.f32.mrb[0].mxu0
    %v4869 = vadd.f32 %v4708, %v4868
    %v4870 = vpop.f32.mrb[0].mxu0
    %4871 = vdwg.mxu0
    %v4872 = vmax.f32 %v4814, 0.0
    %v4873 = vmax.f32 %v4819, 0.0
    %v4874 = vmax.f32 %v4824, 0.0
    %v4875 = vmax.f32 %v4829, 0.0
    %v4876 = vmax.f32 %v4834, 0.0
    %v4877 = vmax.f32 %v4839, 0.0
    %v4878 = vmax.f32 %v4844, 0.0
    %v4879 = vmax.f32 %v4849, 0.0
    %v4880 = vmax.f32 %v4854, 0.0
    %v4881 = vmax.f32 %v4859, 0.0
    %v4882 = vmax.f32 %v4864, 0.0
    %v4883 = vmax.f32 %v4869, 0.0
    %v4884 = vld [vmem:[%s10] sm:$0xff]
    %v4885 = vld [vmem:[%s10 + $0x8] sm:$0xff]
    %v4886 = vld [vmem:[%s11] sm:$0xff]
    %v4887 = vld [vmem:[%s11 + $0x8] sm:$0xff]
    %4889 = vset.pattern.permute.xlu0 0
    %4890 = vperm.xlu0 %4889, %v4886
    %v4891 = vpop.permute.xlu0 %4890
    %4894 = vset.pattern.permute.xlu0 0
    %4895 = vperm.xlu0 %4894, %v4887
    %v4896 = vpop.permute.xlu0 %4895
    %v4899 = vsel %vm976, %v4884, 0
    %v4902 = vsel %vm976, %v4885, 0
    %4904 = vmatprep.subr.mxu0 0.0
    %4905 = vmatpush1.msra.mxu0 %v4872
    %4906 = vmatprep.subr.mxu0 0.0
    %4907 = vmatpush1.msra.mxu0 %v4873
    %4908 = vmatprep.subr.mxu0 0.0
    %4909 = vmatpush1.msra.mxu0 %v4874
    %4910 = vmatprep.subr.mxu0 0.0
    %4911 = vmatpush1.msra.mxu0 %v4875
    %4912 = vmatprep.subr.mxu0 0.0
    %4913 = vmatpush1.msra.mxu0 %v4876
    %4914 = vmatprep.subr.mxu0 0.0
    %4915 = vmatpush1.msra.mxu0 %v4877
    %4916 = vmatprep.subr.mxu0 0.0
    %4917 = vmatpush1.msra.mxu0 %v4878
    %4918 = vmatprep.subr.mxu0 0.0
    %4919 = vmatpush1.msra.mxu0 %v4879
    %4920 = vmatprep.subr.mxu0 0.0
    %4921 = vmatpush1.msra.mxu0 %v4880
    %4922 = vmatprep.subr.mxu0 0.0
    %4923 = vmatpush1.msra.mxu0 %v4881
    %4924 = vmatprep.subr.mxu0 0.0
    %4925 = vmatpush1.msra.mxu0 %v4882
    %4926 = vmatprep.subr.mxu0 0.0
    %4927 = vmatpush1.msra.mxu0 %v4883
    %4928 = vmatprep.subr.mxu0 0.0
    %4929 = vmatpush1.msra.mxu0 0.0
    %4930 = vmatprep.subr.mxu0 0.0
    %4931 = vmatpush1.msra.mxu0 0.0
    %4932 = vmatprep.subr.mxu0 0.0
    %4933 = vmatpush1.msra.mxu0 0.0
    %4934 = vmatprep.subr.mxu0 0.0
    %4935 = vmatpush1.msra.mxu0 0.0
    %4936 = vmatprep.subr.mxu0 0.0
    %4937 = vmatpush1.msra.mxu0 0.0
    %4938 = vmatprep.subr.mxu0 0.0
    %4939 = vmatpush1.msra.mxu0 0.0
    %4940 = vmatprep.subr.mxu0 0.0
    %4941 = vmatpush1.msra.mxu0 0.0
    %4942 = vmatprep.subr.mxu0 0.0
    %4943 = vmatpush1.msra.mxu0 0.0
    %4944 = vmatprep.subr.mxu0 0.0
    %4945 = vmatpush1.msra.mxu0 0.0
    %4946 = vmatprep.subr.mxu0 0.0
    %4947 = vmatpush1.msra.mxu0 0.0
    %4948 = vmatprep.subr.mxu0 0.0
    %4949 = vmatpush1.msra.mxu0 0.0
    %4950 = vmatprep.subr.mxu0 0.0
    %4951 = vmatpush1.msra.mxu0 0.0
    %4952 = vmatprep.subr.mxu0 0.0
    %4953 = vmatpush1.msra.mxu0 0.0
    %4954 = vmatprep.subr.mxu0 0.0
    %4955 = vmatpush1.msra.mxu0 0.0
    %4956 = vmatprep.subr.mxu0 0.0
    %4957 = vmatpush1.msra.mxu0 0.0
    %4958 = vmatprep.subr.mxu0 0.0
    %4959 = vmatpush1.msra.mxu0 0.0
    %4960 = vmatprep.subr.mxu0 0.0
    %4961 = vmatpush1.msra.mxu0 0.0
    %4962 = vmatprep.subr.mxu0 0.0
    %4963 = vmatpush1.msra.mxu0 0.0
    %4964 = vmatprep.subr.mxu0 0.0
    %4965 = vmatpush1.msra.mxu0 0.0
    %4966 = vmatprep.subr.mxu0 0.0
    %4967 = vmatpush1.msra.mxu0 0.0
    %4968 = vmatprep.mubr.f32.mxu0 0.0
    %4969 = vmatmul.mubr.f32.gmra.mrb[0].mxu0 %v4899
    %v4970 = vpop.f32.mrb[0].mxu0
    %v4971 = vadd.f32 %v4891, %v4970
    %v4972 = vpop.f32.mrb[0].mxu0
    %4973 = vmatprep.mubr.f32.mxu0 0.0
    %4974 = vmatmul.mubr.f32.gmra.mrb[0].mxu0 %v4902
    %v4975 = vpop.f32.mrb[0].mxu0
    %v4976 = vadd.f32 %v4896, %v4975
    %v4977 = vpop.f32.mrb[0].mxu0
    %4978 = vdwg.mxu0
    %v4979 = vld [vmem:[%s12] sm:$0xff]
    %v4980 = vld [vmem:[%s12 + $0x8] sm:$0x3]
    %v4981 = vld [vmem:[%s18] sm:$0x1]
    %4983 = vset.pattern.permute.xlu0 0
    %4984 = vperm.xlu0 %4983, %v4979
    %v4985 = vpop.permute.xlu0 %4984
    %4988 = vset.pattern.permute.xlu0 0
    %4989 = vperm.xlu0 %4988, %v4980
    %v4990 = vpop.permute.xlu0 %4989
    %v4993 = vlaneseq
    %v4994 = vshrl.u32 %v4993, 7
    %v4995 = vsub.s32 0, %v4994
    %v4996 = vrot.slane %v4981, %v4995
    %v4998 = vmul.f32 %v4985, %v4996
    %v4999 = vmul.f32 %v4990, %v4996
    %v5000 = vld [vmem:[%s13] sm:$0xff]
    %v5001 = vld [vmem:[%s13 + $0x8] sm:$0x3]
    %vm5002 = vcmask 130048
    %v5004 = vsel %vm5002, %v5000, 0
    %v5007 = vsel %vm5002, %v5001, 0
    %5009 = vmatprep.subr.mxu0 0.0
    %5010 = vmatpush1.msra.mxu0 %v4971
    %5011 = vmatprep.subr.mxu0 0.0
    %5012 = vmatpush1.msra.mxu0 %v4976
    %5013 = vmatprep.subr.mxu0 0.0
    %5014 = vmatpush1.msra.mxu0 0.0
    %5015 = vmatprep.subr.mxu0 0.0
    %5016 = vmatpush1.msra.mxu0 0.0
    %5017 = vmatprep.subr.mxu0 0.0
    %5018 = vmatpush1.msra.mxu0 0.0
    %5019 = vmatprep.subr.mxu0 0.0
    %5020 = vmatpush1.msra.mxu0 0.0
    %5021 = vmatprep.subr.mxu0 0.0
    %5022 = vmatpush1.msra.mxu0 0.0
    %5023 = vmatprep.subr.mxu0 0.0
    %5024 = vmatpush1.msra.mxu0 0.0
    %5025 = vmatprep.subr.mxu0 0.0
    %5026 = vmatpush1.msra.mxu0 0.0
    %5027 = vmatprep.subr.mxu0 0.0
    %5028 = vmatpush1.msra.mxu0 0.0
    %5029 = vmatprep.subr.mxu0 0.0
    %5030 = vmatpush1.msra.mxu0 0.0
    %5031 = vmatprep.subr.mxu0 0.0
    %5032 = vmatpush1.msra.mxu0 0.0
    %5033 = vmatprep.subr.mxu0 0.0
    %5034 = vmatpush1.msra.mxu0 0.0
    %5035 = vmatprep.subr.mxu0 0.0
    %5036 = vmatpush1.msra.mxu0 0.0
    %5037 = vmatprep.subr.mxu0 0.0
    %5038 = vmatpush1.msra.mxu0 0.0
    %5039 = vmatprep.subr.mxu0 0.0
    %5040 = vmatpush1.msra.mxu0 0.0
    %5041 = vmatprep.subr.mxu0 0.0
    %5042 = vmatpush1.msra.mxu0 0.0
    %5043 = vmatprep.subr.mxu0 0.0
    %5044 = vmatpush1.msra.mxu0 0.0
    %5045 = vmatprep.subr.mxu0 0.0
    %5046 = vmatpush1.msra.mxu0 0.0
    %5047 = vmatprep.subr.mxu0 0.0
    %5048 = vmatpush1.msra.mxu0 0.0
    %5049 = vmatprep.subr.mxu0 0.0
    %5050 = vmatpush1.msra.mxu0 0.0
    %5051 = vmatprep.subr.mxu0 0.0
    %5052 = vmatpush1.msra.mxu0 0.0
    %5053 = vmatprep.subr.mxu0 0.0
    %5054 = vmatpush1.msra.mxu0 0.0
    %5055 = vmatprep.subr.mxu0 0.0
    %5056 = vmatpush1.msra.mxu0 0.0
    %5057 = vmatprep.subr.mxu0 0.0
    %5058 = vmatpush1.msra.mxu0 0.0
    %5059 = vmatprep.subr.mxu0 0.0
    %5060 = vmatpush1.msra.mxu0 0.0
    %5061 = vmatprep.subr.mxu0 0.0
    %5062 = vmatpush1.msra.mxu0 0.0
    %5063 = vmatprep.subr.mxu0 0.0
    %5064 = vmatpush1.msra.mxu0 0.0
    %5065 = vmatprep.subr.mxu0 0.0
    %5066 = vmatpush1.msra.mxu0 0.0
    %5067 = vmatprep.subr.mxu0 0.0
    %5068 = vmatpush1.msra.mxu0 0.0
    %5069 = vmatprep.subr.mxu0 0.0
    %5070 = vmatpush1.msra.mxu0 0.0
    %5071 = vmatprep.subr.mxu0 0.0
    %5072 = vmatpush1.msra.mxu0 0.0
    %5073 = vmatprep.mubr.f32.mxu0 0.0
    %5074 = vmatmul.mubr.f32.gmra.mrb[0].mxu0 %v5004
    %v5075 = vpop.f32.mrb[0].mxu0
    %v5076 = vadd.f32 0.0, %v5075
    %v5077 = vpop.f32.mrb[0].mxu0
    %5078 = vmatprep.mubr.f32.mxu0 0.0
    %5079 = vmatmul.mubr.f32.gmra.mrb[0].mxu0 %v5007
    %v5080 = vpop.f32.mrb[0].mxu0
    %v5081 = vadd.f32 0.0, %v5080
    %v5082 = vpop.f32.mrb[0].mxu0
    %5083 = vdwg.mxu0
    %v5084 = vadd.f32 %v4998, %v5076
    %v5085 = vadd.f32 %v4999, %v5081
    %v5086 = vld [vmem:[%s14] sm:$0xff]
    %v5087 = vld [vmem:[%s14 + $0x8] sm:$0x3]
    %5089 = vset.pattern.permute.xlu0 0
    %5090 = vperm.xlu0 %5089, %v5086
    %v5091 = vpop.permute.xlu0 %5090
    %5094 = vset.pattern.permute.xlu0 0
    %5095 = vperm.xlu0 %5094, %v5087
    %v5096 = vpop.permute.xlu0 %5095
    %v5098 = vadd.f32 %v5084, %v5091
    %v5099 = vadd.f32 %v5085, %v5096
    %v5100 = vld [vmem:[%s15] sm:$0xff]
    %v5101 = vld [vmem:[%s15 + $0x8] sm:$0xff]
    %v5102 = vld [vmem:[%s15 + $0x10] sm:$0xff]
    %v5103 = vld [vmem:[%s15 + $0x18] sm:$0xff]
    %v5104 = vld [vmem:[%s15 + $0x20] sm:$0xff]
    %v5105 = vld [vmem:[%s15 + $0x28] sm:$0xff]
    %v5106 = vld [vmem:[%s15 + $0x30] sm:$0xff]
    %v5107 = vld [vmem:[%s15 + $0x38] sm:$0xff]
    %v5108 = vld [vmem:[%s16] sm:$0xff]
    %v5109 = vld [vmem:[%s16 + $0x8] sm:$0xff]
    %v5110 = vld [vmem:[%s16 + $0x10] sm:$0xff]
    %v5111 = vld [vmem:[%s16 + $0x18] sm:$0xff]
    %v5112 = vld [vmem:[%s16 + $0x20] sm:$0xff]
    %v5113 = vld [vmem:[%s16 + $0x28] sm:$0xff]
    %v5114 = vld [vmem:[%s16 + $0x30] sm:$0xff]
    %v5115 = vld [vmem:[%s16 + $0x38] sm:$0xff]
    %v5116 = vld [vmem:[%s19] sm:$0xff]
    %v5117 = vld [vmem:[%s19 + $0x8] sm:$0x3]
    %vm5118 = vcmask 80896
    %v5120 = vsel %vm5118, %v5108, 0
    %v5123 = vsel %vm5118, %v5109, 0
    %v5126 = vsel %vm5118, %v5110, 0
    %v5129 = vsel %vm5118, %v5111, 0
    %v5132 = vsel %vm5118, %v5112, 0
    %v5135 = vsel %vm5118, %v5113, 0
    %v5138 = vsel %vm5118, %v5114, 0
    %v5141 = vsel %vm5118, %v5115, 0
    %vm5143 = vcmask 1041408
    %v5145 = vsel %vm5143, %v5117, 0
    %5147 = vmatprep.subr.mxu0 0.0
    %5148 = vmatpush1.msra.mxu0 %v5116
    %5149 = vmatprep.subr.mxu0 0.0
    %5150 = vmatpush1.msra.mxu0 %v5145
    %5151 = vmatprep.subr.mxu0 0.0
    %5152 = vmatpush1.msra.mxu0 0.0
    %5153 = vmatprep.subr.mxu0 0.0
    %5154 = vmatpush1.msra.mxu0 0.0
    %5155 = vmatprep.subr.mxu0 0.0
    %5156 = vmatpush1.msra.mxu0 0.0
    %5157 = vmatprep.subr.mxu0 0.0
    %5158 = vmatpush1.msra.mxu0 0.0
    %5159 = vmatprep.subr.mxu0 0.0
    %5160 = vmatpush1.msra.mxu0 0.0
    %5161 = vmatprep.subr.mxu0 0.0
    %5162 = vmatpush1.msra.mxu0 0.0
    %5163 = vmatprep.subr.mxu0 0.0
    %5164 = vmatpush1.msra.mxu0 0.0
    %5165 = vmatprep.subr.mxu0 0.0
    %5166 = vmatpush1.msra.mxu0 0.0
    %5167 = vmatprep.subr.mxu0 0.0
    %5168 = vmatpush1.msra.mxu0 0.0
    %5169 = vmatprep.subr.mxu0 0.0
    %5170 = vmatpush1.msra.mxu0 0.0
    %5171 = vmatprep.subr.mxu0 0.0
    %5172 = vmatpush1.msra.mxu0 0.0
    %5173 = vmatprep.subr.mxu0 0.0
    %5174 = vmatpush1.msra.mxu0 0.0
    %5175 = vmatprep.subr.mxu0 0.0
    %5176 = vmatpush1.msra.mxu0 0.0
    %5177 = vmatprep.subr.mxu0 0.0
    %5178 = vmatpush1.msra.mxu0 0.0
    %5179 = vmatprep.subr.mxu0 0.0
    %5180 = vmatpush1.msra.mxu0 0.0
    %5181 = vmatprep.subr.mxu0 0.0
    %5182 = vmatpush1.msra.mxu0 0.0
    %5183 = vmatprep.subr.mxu0 0.0
    %5184 = vmatpush1.msra.mxu0 0.0
    %5185 = vmatprep.subr.mxu0 0.0
    %5186 = vmatpush1.msra.mxu0 0.0
    %5187 = vmatprep.subr.mxu0 0.0
    %5188 = vmatpush1.msra.mxu0 0.0
    %5189 = vmatprep.subr.mxu0 0.0
    %5190 = vmatpush1.msra.mxu0 0.0
    %5191 = vmatprep.subr.mxu0 0.0
    %5192 = vmatpush1.msra.mxu0 0.0
    %5193 = vmatprep.subr.mxu0 0.0
    %5194 = vmatpush1.msra.mxu0 0.0
    %5195 = vmatprep.subr.mxu0 0.0
    %5196 = vmatpush1.msra.mxu0 0.0
    %5197 = vmatprep.subr.mxu0 0.0
    %5198 = vmatpush1.msra.mxu0 0.0
    %5199 = vmatprep.subr.mxu0 0.0
    %5200 = vmatpush1.msra.mxu0 0.0
    %5201 = vmatprep.subr.mxu0 0.0
    %5202 = vmatpush1.msra.mxu0 0.0
    %5203 = vmatprep.subr.mxu0 0.0
    %5204 = vmatpush1.msra.mxu0 0.0
    %5205 = vmatprep.subr.mxu0 0.0
    %5206 = vmatpush1.msra.mxu0 0.0
    %5207 = vmatprep.subr.mxu0 0.0
    %5208 = vmatpush1.msra.mxu0 0.0
    %5209 = vmatprep.subr.mxu0 0.0
    %5210 = vmatpush1.msra.mxu0 0.0
    %5211 = vmatprep.mubr.f32.mxu0 0.0
    %5212 = vmatmul.mubr.f32.gmra.mrb[0].mxu0 %v5120
    %v5213 = vpop.f32.mrb[0].mxu0
    %v5214 = vadd.f32 0.0, %v5213
    %v5215 = vpop.f32.mrb[0].mxu0
    %5216 = vmatprep.mubr.f32.mxu0 0.0
    %5217 = vmatmul.mubr.f32.gmra.mrb[0].mxu0 %v5123
    %v5218 = vpop.f32.mrb[0].mxu0
    %v5219 = vadd.f32 0.0, %v5218
    %v5220 = vpop.f32.mrb[0].mxu0
    %5221 = vmatprep.mubr.f32.mxu0 0.0
    %5222 = vmatmul.mubr.f32.gmra.mrb[0].mxu0 %v5126
    %v5223 = vpop.f32.mrb[0].mxu0
    %v5224 = vadd.f32 0.0, %v5223
    %v5225 = vpop.f32.mrb[0].mxu0
    %5226 = vmatprep.mubr.f32.mxu0 0.0
    %5227 = vmatmul.mubr.f32.gmra.mrb[0].mxu0 %v5129
    %v5228 = vpop.f32.mrb[0].mxu0
    %v5229 = vadd.f32 0.0, %v5228
    %v5230 = vpop.f32.mrb[0].mxu0
    %5231 = vmatprep.mubr.f32.mxu0 0.0
    %5232 = vmatmul.mubr.f32.gmra.mrb[0].mxu0 %v5132
    %v5233 = vpop.f32.mrb[0].mxu0
    %v5234 = vadd.f32 0.0, %v5233
    %v5235 = vpop.f32.mrb[0].mxu0
    %5236 = vmatprep.mubr.f32.mxu0 0.0
    %5237 = vmatmul.mubr.f32.gmra.mrb[0].mxu0 %v5135
    %v5238 = vpop.f32.mrb[0].mxu0
    %v5239 = vadd.f32 0.0, %v5238
    %v5240 = vpop.f32.mrb[0].mxu0
    %5241 = vmatprep.mubr.f32.mxu0 0.0
    %5242 = vmatmul.mubr.f32.gmra.mrb[0].mxu0 %v5138
    %v5243 = vpop.f32.mrb[0].mxu0
    %v5244 = vadd.f32 0.0, %v5243
    %v5245 = vpop.f32.mrb[0].mxu0
    %5246 = vmatprep.mubr.f32.mxu0 0.0
    %5247 = vmatmul.mubr.f32.gmra.mrb[0].mxu0 %v5141
    %v5248 = vpop.f32.mrb[0].mxu0
    %v5249 = vadd.f32 0.0, %v5248
    %v5250 = vpop.f32.mrb[0].mxu0
    %5251 = vdwg.mxu0
    %v5253 = vsel %vm5118, %v5100, 0
    %v5256 = vsel %vm5118, %v5101, 0
    %v5259 = vsel %vm5118, %v5102, 0
    %v5262 = vsel %vm5118, %v5103, 0
    %v5265 = vsel %vm5118, %v5104, 0
    %v5268 = vsel %vm5118, %v5105, 0
    %v5271 = vsel %vm5118, %v5106, 0
    %v5274 = vsel %vm5118, %v5107, 0
    %v5277 = vsel %vm5143, %v5099, 0
    %5279 = vmatprep.subr.mxu0 0.0
    %5280 = vmatpush1.msra.mxu0 %v5098
    %5281 = vmatprep.subr.mxu0 0.0
    %5282 = vmatpush1.msra.mxu0 %v5277
    %5283 = vmatprep.subr.mxu0 0.0
    %5284 = vmatpush1.msra.mxu0 0.0
    %5285 = vmatprep.subr.mxu0 0.0
    %5286 = vmatpush1.msra.mxu0 0.0
    %5287 = vmatprep.subr.mxu0 0.0
    %5288 = vmatpush1.msra.mxu0 0.0
    %5289 = vmatprep.subr.mxu0 0.0
    %5290 = vmatpush1.msra.mxu0 0.0
    %5291 = vmatprep.subr.mxu0 0.0
    %5292 = vmatpush1.msra.mxu0 0.0
    %5293 = vmatprep.subr.mxu0 0.0
    %5294 = vmatpush1.msra.mxu0 0.0
    %5295 = vmatprep.subr.mxu0 0.0
    %5296 = vmatpush1.msra.mxu0 0.0
    %5297 = vmatprep.subr.mxu0 0.0
    %5298 = vmatpush1.msra.mxu0 0.0
    %5299 = vmatprep.subr.mxu0 0.0
    %5300 = vmatpush1.msra.mxu0 0.0
    %5301 = vmatprep.subr.mxu0 0.0
    %5302 = vmatpush1.msra.mxu0 0.0
    %5303 = vmatprep.subr.mxu0 0.0
    %5304 = vmatpush1.msra.mxu0 0.0
    %5305 = vmatprep.subr.mxu0 0.0
    %5306 = vmatpush1.msra.mxu0 0.0
    %5307 = vmatprep.subr.mxu0 0.0
    %5308 = vmatpush1.msra.mxu0 0.0
    %5309 = vmatprep.subr.mxu0 0.0
    %5310 = vmatpush1.msra.mxu0 0.0
    %5311 = vmatprep.subr.mxu0 0.0
    %5312 = vmatpush1.msra.mxu0 0.0
    %5313 = vmatprep.subr.mxu0 0.0
    %5314 = vmatpush1.msra.mxu0 0.0
    %5315 = vmatprep.subr.mxu0 0.0
    %5316 = vmatpush1.msra.mxu0 0.0
    %5317 = vmatprep.subr.mxu0 0.0
    %5318 = vmatpush1.msra.mxu0 0.0
    %5319 = vmatprep.subr.mxu0 0.0
    %5320 = vmatpush1.msra.mxu0 0.0
    %5321 = vmatprep.subr.mxu0 0.0
    %5322 = vmatpush1.msra.mxu0 0.0
    %5323 = vmatprep.subr.mxu0 0.0
    %5324 = vmatpush1.msra.mxu0 0.0
    %5325 = vmatprep.subr.mxu0 0.0
    %5326 = vmatpush1.msra.mxu0 0.0
    %5327 = vmatprep.subr.mxu0 0.0
    %5328 = vmatpush1.msra.mxu0 0.0
    %5329 = vmatprep.subr.mxu0 0.0
    %5330 = vmatpush1.msra.mxu0 0.0
    %5331 = vmatprep.subr.mxu0 0.0
    %5332 = vmatpush1.msra.mxu0 0.0
    %5333 = vmatprep.subr.mxu0 0.0
    %5334 = vmatpush1.msra.mxu0 0.0
    %5335 = vmatprep.subr.mxu0 0.0
    %5336 = vmatpush1.msra.mxu0 0.0
    %5337 = vmatprep.subr.mxu0 0.0
    %5338 = vmatpush1.msra.mxu0 0.0
    %5339 = vmatprep.subr.mxu0 0.0
    %5340 = vmatpush1.msra.mxu0 0.0
    %5341 = vmatprep.subr.mxu0 0.0
    %5342 = vmatpush1.msra.mxu0 0.0
    %5343 = vmatprep.mubr.f32.mxu0 0.0
    %5344 = vmatmul.mubr.f32.gmra.mrb[0].mxu0 %v5253
    %v5345 = vpop.f32.mrb[0].mxu0
    %v5346 = vadd.f32 %v5214, %v5345
    %v5347 = vpop.f32.mrb[0].mxu0
    %5348 = vmatprep.mubr.f32.mxu0 0.0
    %5349 = vmatmul.mubr.f32.gmra.mrb[0].mxu0 %v5256
    %v5350 = vpop.f32.mrb[0].mxu0
    %v5351 = vadd.f32 %v5219, %v5350
    %v5352 = vpop.f32.mrb[0].mxu0
    %5353 = vmatprep.mubr.f32.mxu0 0.0
    %5354 = vmatmul.mubr.f32.gmra.mrb[0].mxu0 %v5259
    %v5355 = vpop.f32.mrb[0].mxu0
    %v5356 = vadd.f32 %v5224, %v5355
    %v5357 = vpop.f32.mrb[0].mxu0
    %5358 = vmatprep.mubr.f32.mxu0 0.0
    %5359 = vmatmul.mubr.f32.gmra.mrb[0].mxu0 %v5262
    %v5360 = vpop.f32.mrb[0].mxu0
    %v5361 = vadd.f32 %v5229, %v5360
    %v5362 = vpop.f32.mrb[0].mxu0
    %5363 = vmatprep.mubr.f32.mxu0 0.0
    %5364 = vmatmul.mubr.f32.gmra.mrb[0].mxu0 %v5265
    %v5365 = vpop.f32.mrb[0].mxu0
    %v5366 = vadd.f32 %v5234, %v5365
    %v5367 = vpop.f32.mrb[0].mxu0
    %5368 = vmatprep.mubr.f32.mxu0 0.0
    %5369 = vmatmul.mubr.f32.gmra.mrb[0].mxu0 %v5268
    %v5370 = vpop.f32.mrb[0].mxu0
    %v5371 = vadd.f32 %v5239, %v5370
    %v5372 = vpop.f32.mrb[0].mxu0
    %5373 = vmatprep.mubr.f32.mxu0 0.0
    %5374 = vmatmul.mubr.f32.gmra.mrb[0].mxu0 %v5271
    %v5375 = vpop.f32.mrb[0].mxu0
    %v5376 = vadd.f32 %v5244, %v5375
    %v5377 = vpop.f32.mrb[0].mxu0
    %5378 = vmatprep.mubr.f32.mxu0 0.0
    %5379 = vmatmul.mubr.f32.gmra.mrb[0].mxu0 %v5274
    %v5380 = vpop.f32.mrb[0].mxu0
    %v5381 = vadd.f32 %v5249, %v5380
    %v5382 = vpop.f32.mrb[0].mxu0
    %5383 = vdwg.mxu0
    %v5384 = vld [vmem:[%s17] sm:$0xff]
    %v5385 = vld [vmem:[%s17 + $0x8] sm:$0xff]
    %v5386 = vld [vmem:[%s17 + $0x10] sm:$0xff]
    %v5387 = vld [vmem:[%s17 + $0x18] sm:$0xff]
    %v5388 = vld [vmem:[%s17 + $0x20] sm:$0xff]
    %v5389 = vld [vmem:[%s17 + $0x28] sm:$0xff]
    %v5390 = vld [vmem:[%s17 + $0x30] sm:$0xff]
    %v5391 = vld [vmem:[%s17 + $0x38] sm:$0xff]
    %5393 = vset.pattern.permute.xlu0 0
    %5394 = vperm.xlu0 %5393, %v5384
    %v5395 = vpop.permute.xlu0 %5394
    %5398 = vset.pattern.permute.xlu0 0
    %5399 = vperm.xlu0 %5398, %v5385
    %v5400 = vpop.permute.xlu0 %5399
    %5403 = vset.pattern.permute.xlu0 0
    %5404 = vperm.xlu0 %5403, %v5386
    %v5405 = vpop.permute.xlu0 %5404
    %5408 = vset.pattern.permute.xlu0 0
    %5409 = vperm.xlu0 %5408, %v5387
    %v5410 = vpop.permute.xlu0 %5409
    %5413 = vset.pattern.permute.xlu0 0
    %5414 = vperm.xlu0 %5413, %v5388
    %v5415 = vpop.permute.xlu0 %5414
    %5418 = vset.pattern.permute.xlu0 0
    %5419 = vperm.xlu0 %5418, %v5389
    %v5420 = vpop.permute.xlu0 %5419
    %5423 = vset.pattern.permute.xlu0 0
    %5424 = vperm.xlu0 %5423, %v5390
    %v5425 = vpop.permute.xlu0 %5424
    %5428 = vset.pattern.permute.xlu0 0
    %5429 = vperm.xlu0 %5428, %v5391
    %v5430 = vpop.permute.xlu0 %5429
    %v5432 = vadd.f32 %v5346, %v5395
    %v5433 = vadd.f32 %v5351, %v5400
    %v5434 = vadd.f32 %v5356, %v5405
    %v5435 = vadd.f32 %v5361, %v5410
    %v5436 = vadd.f32 %v5366, %v5415
    %v5437 = vadd.f32 %v5371, %v5420
    %v5438 = vadd.f32 %v5376, %v5425
    %v5439 = vadd.f32 %v5381, %v5430
    %v5440 = vmul.f32 %v5432, 0.5
    %v5441 = vmul.f32 %v5433, 0.5
    %v5442 = vtanh.pop %v5440
    %v5443 = vtanh.pop %v5441
    %v5444 = vmul.f32 %v5442, 0.5
    %v5445 = vmul.f32 %v5443, 0.5
    %v5446 = vadd.f32 %v5444, 0.5
    %v5447 = vadd.f32 %v5445, 0.5
    %v5448 = vmul.f32 %v5434, 0.5
    %v5449 = vmul.f32 %v5435, 0.5
    %v5450 = vtanh.pop %v5448
    %v5451 = vtanh.pop %v5449
    %v5452 = vmul.f32 %v5450, 0.5
    %v5453 = vmul.f32 %v5451, 0.5
    %v5454 = vadd.f32 %v5452, 0.5
    %v5455 = vadd.f32 %v5453, 0.5
    %v5456 = vtanh.pop %v5436
    %v5457 = vtanh.pop %v5437
    %v5458 = vmul.f32 %v5438, 0.5
    %v5459 = vmul.f32 %v5439, 0.5
    %v5460 = vtanh.pop %v5458
    %v5461 = vtanh.pop %v5459
    %v5462 = vmul.f32 %v5460, 0.5
    %v5463 = vmul.f32 %v5461, 0.5
    %v5464 = vadd.f32 %v5462, 0.5
    %v5465 = vadd.f32 %v5463, 0.5
    %v5466 = vld [vmem:[%s20] sm:$0xff]
    %v5467 = vld [vmem:[%s20 + $0x8] sm:$0xff]
    %v5468 = vmul.f32 %v5454, %v5466
    %v5469 = vmul.f32 %v5455, %v5467
    %v5470 = vmul.f32 %v5446, %v5456
    %v5471 = vmul.f32 %v5447, %v5457
    %v5472 = vadd.f32 %v5468, %v5470
    %v5473 = vadd.f32 %v5469, %v5471
    %v5474 = vtanh.pop %v5472
    %v5475 = vtanh.pop %v5473
    %v5476 = vmul.f32 %v5464, %v5474
    %v5477 = vmul.f32 %v5465, %v5475
    %5478 = vst.msk [vmem:[%s21] sm:$0xff] %vm3785, %v5476
    %5479 = vst.msk [vmem:[%s21 + $0x8] sm:$0xff] %vm3785, %v5477
    %5480 = vst.msk [vmem:[%s22] sm:$0xff] %vm3785, %v5472
    %5481 = vst.msk [vmem:[%s22 + $0x8] sm:$0xff] %vm3785, %v5473
    // Predicated region
    $region97: #{discriminator_cell_forward.1} parent=1 // pred_check
      _
    $region98: #{discriminator_cell_forward.1} parent=1 // pred_check_branch
      %5483 = sbr.rel (0) target = $region100
    $region99: #{discriminator_cell_forward.1} parent=1 // pred_region
      _
    $region100: #{discriminator_cell_forward.1} parent=1 // pred_fallthru
      _
    // Predicated region
    $region101: #{discriminator_cell_forward.1} parent=1 // pred_check
      _
    $region102: #{discriminator_cell_forward.1} parent=1 // pred_check_branch
      %5485 = sbr.rel (0) target = $region104
    $region103: #{discriminator_cell_forward.1} parent=1 // pred_region
      _
    $region104: #{discriminator_cell_forward.1} parent=1 // pred_fallthru
      _
    // Predicated region
    $region105: #{discriminator_cell_forward.1} parent=1 // pred_check
      _
    $region106: #{discriminator_cell_forward.1} parent=1 // pred_check_branch
      %5487 = sbr.rel (0) target = $region108
    $region107: #{discriminator_cell_forward.1} parent=1 // pred_region
      _
    $region108: #{discriminator_cell_forward.1} parent=1 // pred_fallthru
      _
    // Predicated region
    $region109: #{discriminator_cell_forward.1} parent=1 // pred_check
      _
    $region110: #{discriminator_cell_forward.1} parent=1 // pred_check_branch
      %5489 = sbr.rel (0) target = $region112
    $region111: #{discriminator_cell_forward.1} parent=1 // pred_region
      _
    $region112: #{discriminator_cell_forward.1} parent=1 // pred_fallthru
      _
    %5490 = vsyncpa [#allocation5], 1

</llo_original>
